<compile_context>
chip_gen: v7x
topology: tpu7x:2x2x1
jax: 0.10.0
libtpu: 0.0.40
codegen_flags: <defaults>
</compile_context>

<pallas_src>
import math

import jax
import jax.numpy as jnp
from jax.experimental import pallas as pl
from jax.experimental.pallas import tpu as pltpu


def _round_up(n, m):
    return ((n + m - 1) // m) * m


def _num_tensorcores():
    """2 on v7x (two TensorCores per chip), 1 on v5e/v6e. Best-effort detection."""
    try:
        kind = jax.devices()[0].device_kind.lower()
    except Exception:
        return 1
    return 2 if ("v7" in kind or "tpu7" in kind) else 1


_MAX_BLOCK_B = 2048  # rows; ~a few MiB of VMEM per step including double-buffered I/O


def _auto_block_b(B):
    """Pick a batch tile so the grid has 1 step (v5e/v6e) or 2 steps (v7x) for small
    batches, and at most ceil(B/2048) steps for large batches, dividing B exactly
    whenever possible (avoids the wrapper-side pad + slice dispatches)."""
    n_tc = _num_tensorcores()
    if B <= _MAX_BLOCK_B:
        if n_tc >= 2 and B >= 16 and B % 16 == 0:
            return B // 2      # grid=(2,): one step per TensorCore, no wasted steps
        return B               # grid=(1,): zero extra per-step overhead
    # Large batch: biggest block <= cap that divides B, is a multiple of 8, and gives
    # an even step count on 2-TC chips.
    for blk in range(_MAX_BLOCK_B, 7, -8):
        if B % blk == 0 and (n_tc < 2 or (B // blk) % 2 == 0):
            return blk
    return _MAX_BLOCK_B        # fallback; wrapper pads (rare)


def _make_siren_kernel(num_layers, dim_in):
    """Builds a fused kernel: refs = (x, [W_i, b_i] * (num_layers+1), out).

    Weights arrive pre-scaled by their layer_w0; hidden dims are zero-padded to 128
    lanes; the last layer is at its true output width. Body: h = sin(h @ W + b)
    repeated, then a final linear layer.
    """

    def kernel(*refs):
        x_ref = refs[0]
        o_ref = refs[-1]
        x = x_ref[...].astype(jnp.float32)

        # ---- layer 0 (w0 already folded into W0/b0) ----
        w0 = refs[1][...]
        b0 = refs[2][...]
        if dim_in <= 8:
            # K is tiny (e.g. lon/lat = 2): rank-1 VPU broadcast FMAs instead of a
            # degenerate K=2 MXU pass.
            pre = b0
            for k in range(dim_in):
                pre = pre + x[:, k:k + 1] * w0[k:k + 1, :]
        else:
            pre = jnp.dot(x, w0, preferred_element_type=jnp.float32,
                          precision=jax.lax.Precision.HIGHEST) + b0
        h = jnp.sin(pre)

        # ---- hidden layers 1..num_layers-1 ----
        for i in range(1, num_layers):
            w = refs[1 + 2 * i][...]
            b = refs[2 + 2 * i][...]
            h = jnp.sin(jnp.dot(h, w, preferred_element_type=jnp.float32,
                                precision=jax.lax.Precision.HIGHEST) + b)

        # ---- last layer (identity activation), true output width ----
        wl = refs[1 + 2 * num_layers][...]
        bl = refs[2 + 2 * num_layers][...]
        out = jnp.dot(h, wl, preferred_element_type=jnp.float32,
                      precision=jax.lax.Precision.HIGHEST) + bl
        o_ref[...] = out.astype(o_ref.dtype)

    return kernel


def prepare_siren_params(params, *, w0=1.0, w0_initial=30.0, lane=128):
    """One-time parameter prep (do NOT call per forward pass).

    Folds each layer's w0 into (W, b), zero-pads the *hidden* feature dims up to a
    multiple of `lane` (128) for lane-dense vregs / clean MXU tiles, reshapes biases
    to (1, d). The last layer keeps its true output width (dim_out) so the kernel
    writes only real output bytes. Zero padding is exact for the Siren forward
    (sin(0) = 0, zero weight rows/cols contribute nothing).
    """
    num_layers = len(params) - 1
    dim_in = params[0][0].shape[0]
    dim_hidden = params[0][0].shape[1]
    dim_out = params[-1][0].shape[1]
    hp = _round_up(dim_hidden, lane)

    prepped = []
    for i, (W, b) in enumerate(params):
        if i < num_layers:
            layer_w0 = w0_initial if i == 0 else w0
        else:
            layer_w0 = 1.0  # last layer has identity activation; no w0 scaling
        Ws = (layer_w0 * W).astype(jnp.float32)
        bs = (layer_w0 * b).astype(jnp.float32).reshape(1, -1)
        din, dout = Ws.shape
        din_p = din if i == 0 else hp
        dout_p = dim_out if i == num_layers else hp
        Wp = jnp.zeros((din_p, dout_p), jnp.float32).at[:din, :dout].set(Ws)
        bp = jnp.zeros((1, dout_p), jnp.float32).at[:, :dout].set(bs)
        prepped.append((Wp, bp))

    return {"layers": prepped, "num_layers": num_layers,
            "dim_in": dim_in, "dim_out": dim_out}


def siren_net_forward(x, prepared, *, block_b=None):
    """x: (B, dim_in) f32.  prepared: output of prepare_siren_params."""
    layers = prepared["layers"]
    num_layers = prepared["num_layers"]
    dim_in = prepared["dim_in"]
    dim_out = prepared["dim_out"]
    dim_hidden_p = layers[0][0].shape[1]  # lane-padded hidden width (multiple of 128)

    B = x.shape[0]
    x = x.astype(jnp.float32)

    if block_b is None:
        block_b = _auto_block_b(B)
    block_b = max(1, min(block_b, B))
    # Layout rule: second-to-last block dim must be a multiple of 8 unless it equals
    # the full array dim.
    if block_b != B and block_b % 8 != 0:
        block_b = max(8, _round_up(block_b, 8))

    Bp = _round_up(B, block_b)
    if Bp != B:
        # Fallback only: the auto heuristic picks block_b dividing B exactly, so this
        # extra pad dispatch (and the matching slice below) is normally skipped.
        x = jnp.pad(x, ((0, Bp - B), (0, 0)))
    grid = (Bp // block_b,)

    kernel = _make_siren_kernel(num_layers, dim_in)

    # x / out are blocked over the batch; weights & biases are full-array blocks with a
    # constant index_map (fetched once, kept resident across the grid; they are tiny).
    flat_inputs = []
    in_specs = [pl.BlockSpec((block_b, dim_in), lambda i: (i, 0))]
    for (W, b) in layers:
        flat_inputs.append(W)
        in_specs.append(pl.BlockSpec(W.shape, lambda i: (0, 0)))
        flat_inputs.append(b)
        in_specs.append(pl.BlockSpec(b.shape, lambda i: (0, 0)))

    # True-width output: last block dim equals the full array dim (dim_out), so this is
    # legal even when dim_out < 128; saves 8x output HBM writeback and the slice op.
    out_spec = pl.BlockSpec((block_b, dim_out), lambda i: (i, 0))

    # Advisory scheduling hint for XLA when this kernel is embedded in a larger model.
    flops = 2 * Bp * (dim_in * dim_hidden_p
                      + (num_layers - 1) * dim_hidden_p * dim_hidden_p
                      + dim_hidden_p * dim_out)
    transcendentals = Bp * dim_hidden_p * num_layers  # sin per hidden element
    bytes_accessed = 4 * (Bp * dim_in + Bp * dim_out
                          + sum(w.size + b.size for w, b in layers))
    cost = pl.CostEstimate(flops=int(flops),
                           transcendentals=int(transcendentals),
                           bytes_accessed=int(bytes_accessed))

    out = pl.pallas_call(
        kernel,
        out_shape=jax.ShapeDtypeStruct((Bp, dim_out), jnp.float32),
        grid_spec=pltpu.PrefetchScalarGridSpec(
            num_scalar_prefetch=0,
            grid=grid,
            in_specs=in_specs,
            out_specs=out_spec,
        ),
        compiler_params=pltpu.CompilerParams(
            # "parallel" only matters on 2-TC chips (v7x); harmless elsewhere.
            dimension_semantics=("parallel",),
            # Explicit budget with ample headroom; safe on every chip generation
            # (footprint at block_b=2048 is only a few MiB).
            vmem_limit_bytes=32 * 1024 * 1024,
        ),
        cost_estimate=cost,
    )(x, *flat_inputs)

    if Bp != B:
        out = out[:B]
    return out


def init_siren_params(key, dim_in, dim_hidden, dim_out, num_layers,
                      *, w0=1.0, w0_initial=30.0, c=6.0):
    """Reproduces Siren.init_: uniform(-w_std, w_std); first layer w_std = 1/dim_in,
    otherwise w_std = sqrt(c/dim)/layer_w0. Weights returned as (din, dout)."""
    params = []
    for ind in range(num_layers):
        is_first = ind == 0
        layer_w0 = w0_initial if is_first else w0
        din = dim_in if is_first else dim_hidden
        w_std = (1.0 / din) if is_first else (math.sqrt(c / din) / layer_w0)
        key, kw, kb = jax.random.split(key, 3)
        W = jax.random.uniform(kw, (din, dim_hidden), jnp.float32, -w_std, w_std)
        b = jax.random.uniform(kb, (dim_hidden,), jnp.float32, -w_std, w_std)
        params.append((W, b))
    # last layer: dim_hidden -> dim_out, w0 = 1.0, not first
    w_std = math.sqrt(c / dim_hidden) / w0
    key, kw, kb = jax.random.split(key, 3)
    W = jax.random.uniform(kw, (dim_hidden, dim_out), jnp.float32, -w_std, w_std)
    b = jax.random.uniform(kb, (dim_out,), jnp.float32, -w_std, w_std)
    params.append((W, b))
    return params


def siren_net_reference(x, params, *, w0=1.0, w0_initial=30.0):
    """Pure-JAX reference (full f32 matmul precision) for correctness checking."""
    num_layers = len(params) - 1
    h = x
    for i in range(num_layers):
        W, b = params[i]
        layer_w0 = w0_initial if i == 0 else w0
        h = jnp.sin(layer_w0 * (jnp.dot(h, W, precision=jax.lax.Precision.HIGHEST) + b))
    Wl, bl = params[-1]
    return jnp.dot(h, Wl, precision=jax.lax.Precision.HIGHEST) + bl


if __name__ == "__main__":
    # SatCLIP location-encoder style shapes: (lon, lat) inputs, small Siren MLP.
    B = 256
    DIM_IN = 2
    DIM_HIDDEN = 32
    DIM_OUT = 16
    NUM_LAYERS = 2
    W0 = 1.0
    W0_INITIAL = 30.0

    key = jax.random.PRNGKey(0)
    key, kx = jax.random.split(key)
    x = jax.random.uniform(kx, (B, DIM_IN), jnp.float32, -1.0, 1.0)

    params = init_siren_params(key, DIM_IN, DIM_HIDDEN, DIM_OUT, NUM_LAYERS,
                               w0=W0, w0_initial=W0_INITIAL)
    prepared = prepare_siren_params(params, w0=W0, w0_initial=W0_INITIAL)

    out = siren_net_forward(x, prepared)   # grid=(1,) on v5e/v6e, grid=(2,) on v7x
    out = jax.block_until_ready(out)

    ref = siren_net_reference(x, params, w0=W0, w0_initial=W0_INITIAL)
    assert out.shape == (B, DIM_OUT)
    assert jnp.allclose(out, ref, atol=1e-3, rtol=1e-3), "mismatch vs reference"

    print("KERNEL_OK")
</pallas_src>

<mosaic_0001>
module attributes {stable_mosaic.version = 11 : i64} {
  func.func @kernel(%arg0: i32, %arg1: memref<256x2xf32, #tpu.memory_space<vmem>>, %arg2: memref<2x128xf32, #tpu.memory_space<vmem>>, %arg3: memref<1x128xf32, #tpu.memory_space<vmem>>, %arg4: memref<128x128xf32, #tpu.memory_space<vmem>>, %arg5: memref<1x128xf32, #tpu.memory_space<vmem>>, %arg6: memref<128x16xf32, #tpu.memory_space<vmem>>, %arg7: memref<1x16xf32, #tpu.memory_space<vmem>>, %arg8: memref<256x16xf32, #tpu.memory_space<vmem>>) attributes {dimension_semantics = [#tpu.dimension_semantics<parallel>], iteration_bounds = array<i64: 1>, scalar_prefetch = 0 : i64, scratch_operands = 0 : i64, tpu.core_type = #tpu.core_type<tc>, window_params = [{transform_indices = @transform_0, window_bounds = array<i64: 256, 2>}, {pipeline_mode = #tpu.pipeline_mode<synchronous>, transform_indices = @transform_1, window_bounds = array<i64: 2, 128>}, {pipeline_mode = #tpu.pipeline_mode<synchronous>, transform_indices = @transform_2, window_bounds = array<i64: 1, 128>}, {pipeline_mode = #tpu.pipeline_mode<synchronous>, transform_indices = @transform_3, window_bounds = array<i64: 128, 128>}, {pipeline_mode = #tpu.pipeline_mode<synchronous>, transform_indices = @transform_4, window_bounds = array<i64: 1, 128>}, {pipeline_mode = #tpu.pipeline_mode<synchronous>, transform_indices = @transform_5, window_bounds = array<i64: 128, 16>}, {pipeline_mode = #tpu.pipeline_mode<synchronous>, transform_indices = @transform_6, window_bounds = array<i64: 1, 16>}, {transform_indices = @transform_7, window_bounds = array<i64: 256, 16>}]} {
    %c0 = arith.constant 0 : index
    %c0_0 = arith.constant 0 : index
    %0 = vector.load %arg1[%c0, %c0_0] : memref<256x2xf32, #tpu.memory_space<vmem>>, vector<256x2xf32>
    %c0_1 = arith.constant 0 : index
    %c0_2 = arith.constant 0 : index
    %1 = vector.load %arg2[%c0_1, %c0_2] : memref<2x128xf32, #tpu.memory_space<vmem>>, vector<2x128xf32>
    %c0_3 = arith.constant 0 : index
    %c0_4 = arith.constant 0 : index
    %2 = vector.load %arg3[%c0_3, %c0_4] : memref<1x128xf32, #tpu.memory_space<vmem>>, vector<1x128xf32>
    %3 = vector.extract_strided_slice %0 {offsets = [0, 0], sizes = [256, 1], strides = [1, 1]} : vector<256x2xf32> to vector<256x1xf32>
    %4 = vector.extract_strided_slice %1 {offsets = [0, 0], sizes = [1, 128], strides = [1, 1]} : vector<2x128xf32> to vector<1x128xf32>
    %5 = vector.broadcast %3 : vector<256x1xf32> to vector<256x128xf32>
    %6 = vector.broadcast %4 : vector<1x128xf32> to vector<256x128xf32>
    %7 = arith.mulf %5, %6 : vector<256x128xf32>
    %8 = vector.broadcast %2 : vector<1x128xf32> to vector<256x128xf32>
    %9 = arith.addf %8, %7 : vector<256x128xf32>
    %10 = vector.extract_strided_slice %0 {offsets = [0, 1], sizes = [256, 1], strides = [1, 1]} : vector<256x2xf32> to vector<256x1xf32>
    %11 = vector.extract_strided_slice %1 {offsets = [1, 0], sizes = [1, 128], strides = [1, 1]} : vector<2x128xf32> to vector<1x128xf32>
    %12 = vector.broadcast %10 : vector<256x1xf32> to vector<256x128xf32>
    %13 = vector.broadcast %11 : vector<1x128xf32> to vector<256x128xf32>
    %14 = arith.mulf %12, %13 : vector<256x128xf32>
    %15 = arith.addf %9, %14 : vector<256x128xf32>
    %16 = math.sin %15 : vector<256x128xf32>
    %c0_5 = arith.constant 0 : index
    %c0_6 = arith.constant 0 : index
    %17 = vector.load %arg4[%c0_5, %c0_6] : memref<128x128xf32, #tpu.memory_space<vmem>>, vector<128x128xf32>
    %c0_7 = arith.constant 0 : index
    %c0_8 = arith.constant 0 : index
    %18 = vector.load %arg5[%c0_7, %c0_8] : memref<1x128xf32, #tpu.memory_space<vmem>>, vector<1x128xf32>
    %cst = arith.constant dense<0.000000e+00> : vector<256x128xf32>
    %19 = tpu.matmul %16, %17, %cst {dimension_numbers = #tpu.dot_dimension_numbers<[1], [0], [0], [1], [0, 0, 1, 1], [], []>, precision = #tpu.contract_precision<fp32>} : vector<256x128xf32>, vector<128x128xf32>, vector<256x128xf32> -> vector<256x128xf32>
    %20 = vector.broadcast %18 : vector<1x128xf32> to vector<256x128xf32>
    %21 = arith.addf %19, %20 : vector<256x128xf32>
    %22 = math.sin %21 : vector<256x128xf32>
    %c0_9 = arith.constant 0 : index
    %c0_10 = arith.constant 0 : index
    %23 = vector.load %arg6[%c0_9, %c0_10] : memref<128x16xf32, #tpu.memory_space<vmem>>, vector<128x16xf32>
    %c0_11 = arith.constant 0 : index
    %c0_12 = arith.constant 0 : index
    %24 = vector.load %arg7[%c0_11, %c0_12] : memref<1x16xf32, #tpu.memory_space<vmem>>, vector<1x16xf32>
    %cst_13 = arith.constant dense<0.000000e+00> : vector<256x16xf32>
    %25 = tpu.matmul %22, %23, %cst_13 {dimension_numbers = #tpu.dot_dimension_numbers<[1], [0], [0], [1], [0, 0, 1, 1], [], []>, precision = #tpu.contract_precision<fp32>} : vector<256x128xf32>, vector<128x16xf32>, vector<256x16xf32> -> vector<256x16xf32>
    %26 = vector.broadcast %24 : vector<1x16xf32> to vector<256x16xf32>
    %27 = arith.addf %25, %26 : vector<256x16xf32>
    %c0_14 = arith.constant 0 : index
    %c0_15 = arith.constant 0 : index
    %28 = vector.load %arg8[%c0_14, %c0_15] : memref<256x16xf32, #tpu.memory_space<vmem>>, vector<256x16xf32>
    tpu.vector_store %arg8[%c0_14, %c0_15], %27 {strides = array<i32>} : memref<256x16xf32, #tpu.memory_space<vmem>>, vector<256x16xf32>,
    return
  }
  func.func @transform_0(%arg0: i32) -> (i32, i32) {
    %c0_i32 = arith.constant 0 : i32
    %c0_i32_0 = arith.constant 0 : i32
    return %arg0, %c0_i32 : i32, i32
  }
  func.func @transform_1(%arg0: i32) -> (i32, i32) {
    %c0_i32 = arith.constant 0 : i32
    %c0_i32_0 = arith.constant 0 : i32
    %c0_i32_1 = arith.constant 0 : i32
    return %c0_i32, %c0_i32_0 : i32, i32
  }
  func.func @transform_2(%arg0: i32) -> (i32, i32) {
    %c0_i32 = arith.constant 0 : i32
    %c0_i32_0 = arith.constant 0 : i32
    %c0_i32_1 = arith.constant 0 : i32
    return %c0_i32, %c0_i32_0 : i32, i32
  }
  func.func @transform_3(%arg0: i32) -> (i32, i32) {
    %c0_i32 = arith.constant 0 : i32
    %c0_i32_0 = arith.constant 0 : i32
    %c0_i32_1 = arith.constant 0 : i32
    return %c0_i32, %c0_i32_0 : i32, i32
  }
  func.func @transform_4(%arg0: i32) -> (i32, i32) {
    %c0_i32 = arith.constant 0 : i32
    %c0_i32_0 = arith.constant 0 : i32
    %c0_i32_1 = arith.constant 0 : i32
    return %c0_i32, %c0_i32_0 : i32, i32
  }
  func.func @transform_5(%arg0: i32) -> (i32, i32) {
    %c0_i32 = arith.constant 0 : i32
    %c0_i32_0 = arith.constant 0 : i32
    %c0_i32_1 = arith.constant 0 : i32
    return %c0_i32, %c0_i32_0 : i32, i32
  }
  func.func @transform_6(%arg0: i32) -> (i32, i32) {
    %c0_i32 = arith.constant 0 : i32
    %c0_i32_0 = arith.constant 0 : i32
    %c0_i32_1 = arith.constant 0 : i32
    return %c0_i32, %c0_i32_0 : i32, i32
  }
  func.func @transform_7(%arg0: i32) -> (i32, i32) {
    %c0_i32 = arith.constant 0 : i32
    %c0_i32_0 = arith.constant 0 : i32
    return %arg0, %c0_i32 : i32, i32
  }
}

</mosaic_0001>

<llo_original>
// kernel: tpu_custom_call.1
$region0: #{tpu_custom_call.1}
  #allocation0 [shape = 'u32[]', space=smem, size = 0x4, offset = 0x4, fixed_abs, tag = 'smem constant byte address 0x4 - core index']
  #allocation1 [shape = 'u32[144,128]{1,0:T(1,128)}', space=vmem, size = 0x12000, scoped, tag = 'internal scratch']
  %s0 = inlined_call_operand.vmem [shape: f32[256,2], index: 0, kind: input, shape index: {}]
  %s1 = inlined_call_operand.vmem [shape: f32[2,128], index: 1, kind: input, shape index: {}]
  %s2 = inlined_call_operand.vmem [shape: f32[1,128], index: 2, kind: input, shape index: {}]
  %s3 = inlined_call_operand.vmem [shape: f32[128,128], index: 3, kind: input, shape index: {}]
  %s4 = inlined_call_operand.vmem [shape: f32[1,128], index: 4, kind: input, shape index: {}]
  %s5 = inlined_call_operand.vmem [shape: f32[128,16], index: 5, kind: input, shape index: {}]
  %s6 = inlined_call_operand.vmem [shape: f32[1,16], index: 6, kind: input, shape index: {}]
  %s7 = inlined_call_operand.vmem [shape: f32[256,16], index: 7, kind: output, shape index: {}]
  %s8 = sld [smem:[#allocation0]]
  $region38: #{tpu_custom_call.1} parent=0
    _
  %s10 = ssub.s32 1, %s8
  %s11 = scalar_select 0, %s10, %s8
  // Predicated region
  $region2: #{tpu_custom_call.1} parent=0 // pred_check
    _
  $region3: #{tpu_custom_call.1} parent=0 // pred_check_branch
    %13 = sbr.rel (0) target = $region5
  $region4: #{tpu_custom_call.1} parent=0 // pred_region
    _
  $region5: #{tpu_custom_call.1} parent=0 // pred_fallthru
    _
  // Predicated region
  $region6: #{tpu_custom_call.1} parent=0 // pred_check
    _
  $region7: #{tpu_custom_call.1} parent=0 // pred_check_branch
    %15 = sbr.rel (0) target = $region9
  $region8: #{tpu_custom_call.1} parent=0 // pred_region
    _
  $region9: #{tpu_custom_call.1} parent=0 // pred_fallthru
    _
  // Predicated region
  $region10: #{tpu_custom_call.1} parent=0 // pred_check
    _
  $region11: #{tpu_custom_call.1} parent=0 // pred_check_branch
    %17 = sbr.rel (0) target = $region13
  $region12: #{tpu_custom_call.1} parent=0 // pred_region
    _
  $region13: #{tpu_custom_call.1} parent=0 // pred_fallthru
    _
  // Predicated region
  $region14: #{tpu_custom_call.1} parent=0 // pred_check
    _
  $region15: #{tpu_custom_call.1} parent=0 // pred_check_branch
    %19 = sbr.rel (0) target = $region17
  $region16: #{tpu_custom_call.1} parent=0 // pred_region
    _
  $region17: #{tpu_custom_call.1} parent=0 // pred_fallthru
    _
  // Predicated region
  $region18: #{tpu_custom_call.1} parent=0 // pred_check
    _
  $region19: #{tpu_custom_call.1} parent=0 // pred_check_branch
    %21 = sbr.rel (0) target = $region21
  $region20: #{tpu_custom_call.1} parent=0 // pred_region
    _
  $region21: #{tpu_custom_call.1} parent=0 // pred_fallthru
    _
  // Predicated region
  $region22: #{tpu_custom_call.1} parent=0 // pred_check
    _
  $region23: #{tpu_custom_call.1} parent=0 // pred_check_branch
    %23 = sbr.rel (0) target = $region25
  $region24: #{tpu_custom_call.1} parent=0 // pred_region
    _
  $region25: #{tpu_custom_call.1} parent=0 // pred_fallthru
    _
  // Predicated region
  $region26: #{tpu_custom_call.1} parent=0 // pred_check
    _
  $region27: #{tpu_custom_call.1} parent=0 // pred_check_branch
    %25 = sbr.rel (0) target = $region29
  $region28: #{tpu_custom_call.1} parent=0 // pred_region
    _
  $region29: #{tpu_custom_call.1} parent=0 // pred_fallthru
    _
  %v26 = vld [vmem:[%s0] sm:$0xff]
  %v27 = vld [vmem:[%s0 + $0x8] sm:$0xff]
  %v28 = vld [vmem:[%s0 + $0x10] sm:$0xff]
  %v29 = vld [vmem:[%s0 + $0x18] sm:$0xff]
  %v30 = vld [vmem:[%s0 + $0x20] sm:$0xff]
  %v31 = vld [vmem:[%s0 + $0x28] sm:$0xff]
  %v32 = vld [vmem:[%s0 + $0x30] sm:$0xff]
  %v33 = vld [vmem:[%s0 + $0x38] sm:$0xff]
  %v34 = vld [vmem:[%s0 + $0x40] sm:$0xff]
  %v35 = vld [vmem:[%s0 + $0x48] sm:$0xff]
  %v36 = vld [vmem:[%s0 + $0x50] sm:$0xff]
  %v37 = vld [vmem:[%s0 + $0x58] sm:$0xff]
  %v38 = vld [vmem:[%s0 + $0x60] sm:$0xff]
  %v39 = vld [vmem:[%s0 + $0x68] sm:$0xff]
  %v40 = vld [vmem:[%s0 + $0x70] sm:$0xff]
  %v41 = vld [vmem:[%s0 + $0x78] sm:$0xff]
  %v42 = vld [vmem:[%s0 + $0x80] sm:$0xff]
  %v43 = vld [vmem:[%s0 + $0x88] sm:$0xff]
  %v44 = vld [vmem:[%s0 + $0x90] sm:$0xff]
  %v45 = vld [vmem:[%s0 + $0x98] sm:$0xff]
  %v46 = vld [vmem:[%s0 + $0xa0] sm:$0xff]
  %v47 = vld [vmem:[%s0 + $0xa8] sm:$0xff]
  %v48 = vld [vmem:[%s0 + $0xb0] sm:$0xff]
  %v49 = vld [vmem:[%s0 + $0xb8] sm:$0xff]
  %v50 = vld [vmem:[%s0 + $0xc0] sm:$0xff]
  %v51 = vld [vmem:[%s0 + $0xc8] sm:$0xff]
  %v52 = vld [vmem:[%s0 + $0xd0] sm:$0xff]
  %v53 = vld [vmem:[%s0 + $0xd8] sm:$0xff]
  %v54 = vld [vmem:[%s0 + $0xe0] sm:$0xff]
  %v55 = vld [vmem:[%s0 + $0xe8] sm:$0xff]
  %v56 = vld [vmem:[%s0 + $0xf0] sm:$0xff]
  %v57 = vld [vmem:[%s0 + $0xf8] sm:$0xff]
  %v58 = vld [vmem:[%s1] sm:$0x3]
  %v59 = vld [vmem:[%s2] sm:$0x1]
  %61 = vset.pattern.permute.xlu0 0
  %62 = vperm.xlu0 %61, %v26
  %v63 = vpop.permute.xlu0 %62
  %66 = vset.pattern.permute.xlu0 0
  %67 = vperm.xlu0 %66, %v27
  %v68 = vpop.permute.xlu0 %67
  %71 = vset.pattern.permute.xlu0 0
  %72 = vperm.xlu0 %71, %v28
  %v73 = vpop.permute.xlu0 %72
  %76 = vset.pattern.permute.xlu0 0
  %77 = vperm.xlu0 %76, %v29
  %v78 = vpop.permute.xlu0 %77
  %81 = vset.pattern.permute.xlu0 0
  %82 = vperm.xlu0 %81, %v30
  %v83 = vpop.permute.xlu0 %82
  %86 = vset.pattern.permute.xlu0 0
  %87 = vperm.xlu0 %86, %v31
  %v88 = vpop.permute.xlu0 %87
  %91 = vset.pattern.permute.xlu0 0
  %92 = vperm.xlu0 %91, %v32
  %v93 = vpop.permute.xlu0 %92
  %96 = vset.pattern.permute.xlu0 0
  %97 = vperm.xlu0 %96, %v33
  %v98 = vpop.permute.xlu0 %97
  %101 = vset.pattern.permute.xlu0 0
  %102 = vperm.xlu0 %101, %v34
  %v103 = vpop.permute.xlu0 %102
  %106 = vset.pattern.permute.xlu0 0
  %107 = vperm.xlu0 %106, %v35
  %v108 = vpop.permute.xlu0 %107
  %111 = vset.pattern.permute.xlu0 0
  %112 = vperm.xlu0 %111, %v36
  %v113 = vpop.permute.xlu0 %112
  %116 = vset.pattern.permute.xlu0 0
  %117 = vperm.xlu0 %116, %v37
  %v118 = vpop.permute.xlu0 %117
  %121 = vset.pattern.permute.xlu0 0
  %122 = vperm.xlu0 %121, %v38
  %v123 = vpop.permute.xlu0 %122
  %126 = vset.pattern.permute.xlu0 0
  %127 = vperm.xlu0 %126, %v39
  %v128 = vpop.permute.xlu0 %127
  %131 = vset.pattern.permute.xlu0 0
  %132 = vperm.xlu0 %131, %v40
  %v133 = vpop.permute.xlu0 %132
  %136 = vset.pattern.permute.xlu0 0
  %137 = vperm.xlu0 %136, %v41
  %v138 = vpop.permute.xlu0 %137
  %141 = vset.pattern.permute.xlu0 0
  %142 = vperm.xlu0 %141, %v42
  %v143 = vpop.permute.xlu0 %142
  %146 = vset.pattern.permute.xlu0 0
  %147 = vperm.xlu0 %146, %v43
  %v148 = vpop.permute.xlu0 %147
  %151 = vset.pattern.permute.xlu0 0
  %152 = vperm.xlu0 %151, %v44
  %v153 = vpop.permute.xlu0 %152
  %156 = vset.pattern.permute.xlu0 0
  %157 = vperm.xlu0 %156, %v45
  %v158 = vpop.permute.xlu0 %157
  %161 = vset.pattern.permute.xlu0 0
  %162 = vperm.xlu0 %161, %v46
  %v163 = vpop.permute.xlu0 %162
  %166 = vset.pattern.permute.xlu0 0
  %167 = vperm.xlu0 %166, %v47
  %v168 = vpop.permute.xlu0 %167
  %171 = vset.pattern.permute.xlu0 0
  %172 = vperm.xlu0 %171, %v48
  %v173 = vpop.permute.xlu0 %172
  %176 = vset.pattern.permute.xlu0 0
  %177 = vperm.xlu0 %176, %v49
  %v178 = vpop.permute.xlu0 %177
  %181 = vset.pattern.permute.xlu0 0
  %182 = vperm.xlu0 %181, %v50
  %v183 = vpop.permute.xlu0 %182
  %186 = vset.pattern.permute.xlu0 0
  %187 = vperm.xlu0 %186, %v51
  %v188 = vpop.permute.xlu0 %187
  %191 = vset.pattern.permute.xlu0 0
  %192 = vperm.xlu0 %191, %v52
  %v193 = vpop.permute.xlu0 %192
  %196 = vset.pattern.permute.xlu0 0
  %197 = vperm.xlu0 %196, %v53
  %v198 = vpop.permute.xlu0 %197
  %201 = vset.pattern.permute.xlu0 0
  %202 = vperm.xlu0 %201, %v54
  %v203 = vpop.permute.xlu0 %202
  %206 = vset.pattern.permute.xlu0 0
  %207 = vperm.xlu0 %206, %v55
  %v208 = vpop.permute.xlu0 %207
  %211 = vset.pattern.permute.xlu0 0
  %212 = vperm.xlu0 %211, %v56
  %v213 = vpop.permute.xlu0 %212
  %216 = vset.pattern.permute.xlu0 0
  %217 = vperm.xlu0 %216, %v57
  %v218 = vpop.permute.xlu0 %217
  %v220 = vlaneseq
  %v221 = vshrl.u32 %v220, 7
  %v222 = vsub.s32 0, %v221
  %v223 = vrot.slane %v58, %v222
  %v224 = vmul.f32 %v63, %v223
  %v225 = vmul.f32 %v68, %v223
  %v226 = vmul.f32 %v73, %v223
  %v227 = vmul.f32 %v78, %v223
  %v228 = vmul.f32 %v83, %v223
  %v229 = vmul.f32 %v88, %v223
  %v230 = vmul.f32 %v93, %v223
  %v231 = vmul.f32 %v98, %v223
  %v232 = vmul.f32 %v103, %v223
  %v233 = vmul.f32 %v108, %v223
  %v234 = vmul.f32 %v113, %v223
  %v235 = vmul.f32 %v118, %v223
  %v236 = vmul.f32 %v123, %v223
  %v237 = vmul.f32 %v128, %v223
  %v238 = vmul.f32 %v133, %v223
  %v239 = vmul.f32 %v138, %v223
  %v240 = vmul.f32 %v143, %v223
  %v241 = vmul.f32 %v148, %v223
  %v242 = vmul.f32 %v153, %v223
  %v243 = vmul.f32 %v158, %v223
  %v244 = vmul.f32 %v163, %v223
  %v245 = vmul.f32 %v168, %v223
  %v246 = vmul.f32 %v173, %v223
  %v247 = vmul.f32 %v178, %v223
  %v248 = vmul.f32 %v183, %v223
  %v249 = vmul.f32 %v188, %v223
  %v250 = vmul.f32 %v193, %v223
  %v251 = vmul.f32 %v198, %v223
  %v252 = vmul.f32 %v203, %v223
  %v253 = vmul.f32 %v208, %v223
  %v254 = vmul.f32 %v213, %v223
  %v255 = vmul.f32 %v218, %v223
  %v257 = vlaneseq
  %v258 = vshrl.u32 %v257, 7
  %v259 = vsub.s32 0, %v258
  %v260 = vrot.slane %v59, %v259
  %v262 = vadd.f32 %v260, %v224
  %v263 = vadd.f32 %v260, %v225
  %v264 = vadd.f32 %v260, %v226
  %v265 = vadd.f32 %v260, %v227
  %v266 = vadd.f32 %v260, %v228
  %v267 = vadd.f32 %v260, %v229
  %v268 = vadd.f32 %v260, %v230
  %v269 = vadd.f32 %v260, %v231
  %v270 = vadd.f32 %v260, %v232
  %v271 = vadd.f32 %v260, %v233
  %v272 = vadd.f32 %v260, %v234
  %v273 = vadd.f32 %v260, %v235
  %v274 = vadd.f32 %v260, %v236
  %v275 = vadd.f32 %v260, %v237
  %v276 = vadd.f32 %v260, %v238
  %v277 = vadd.f32 %v260, %v239
  %v278 = vadd.f32 %v260, %v240
  %v279 = vadd.f32 %v260, %v241
  %v280 = vadd.f32 %v260, %v242
  %v281 = vadd.f32 %v260, %v243
  %v282 = vadd.f32 %v260, %v244
  %v283 = vadd.f32 %v260, %v245
  %v284 = vadd.f32 %v260, %v246
  %v285 = vadd.f32 %v260, %v247
  %v286 = vadd.f32 %v260, %v248
  %v287 = vadd.f32 %v260, %v249
  %v288 = vadd.f32 %v260, %v250
  %v289 = vadd.f32 %v260, %v251
  %v290 = vadd.f32 %v260, %v252
  %v291 = vadd.f32 %v260, %v253
  %v292 = vadd.f32 %v260, %v254
  %v293 = vadd.f32 %v260, %v255
  %294 = vset.pattern.permute.xlu0 1
  %295 = vperm.xlu0 %294, %v26
  %v296 = vpop.permute.xlu0 %295
  %298 = vset.pattern.permute.xlu0 1
  %299 = vperm.xlu0 %298, %v27
  %v300 = vpop.permute.xlu0 %299
  %302 = vset.pattern.permute.xlu0 1
  %303 = vperm.xlu0 %302, %v28
  %v304 = vpop.permute.xlu0 %303
  %306 = vset.pattern.permute.xlu0 1
  %307 = vperm.xlu0 %306, %v29
  %v308 = vpop.permute.xlu0 %307
  %310 = vset.pattern.permute.xlu0 1
  %311 = vperm.xlu0 %310, %v30
  %v312 = vpop.permute.xlu0 %311
  %314 = vset.pattern.permute.xlu0 1
  %315 = vperm.xlu0 %314, %v31
  %v316 = vpop.permute.xlu0 %315
  %318 = vset.pattern.permute.xlu0 1
  %319 = vperm.xlu0 %318, %v32
  %v320 = vpop.permute.xlu0 %319
  %322 = vset.pattern.permute.xlu0 1
  %323 = vperm.xlu0 %322, %v33
  %v324 = vpop.permute.xlu0 %323
  %326 = vset.pattern.permute.xlu0 1
  %327 = vperm.xlu0 %326, %v34
  %v328 = vpop.permute.xlu0 %327
  %330 = vset.pattern.permute.xlu0 1
  %331 = vperm.xlu0 %330, %v35
  %v332 = vpop.permute.xlu0 %331
  %334 = vset.pattern.permute.xlu0 1
  %335 = vperm.xlu0 %334, %v36
  %v336 = vpop.permute.xlu0 %335
  %338 = vset.pattern.permute.xlu0 1
  %339 = vperm.xlu0 %338, %v37
  %v340 = vpop.permute.xlu0 %339
  %342 = vset.pattern.permute.xlu0 1
  %343 = vperm.xlu0 %342, %v38
  %v344 = vpop.permute.xlu0 %343
  %346 = vset.pattern.permute.xlu0 1
  %347 = vperm.xlu0 %346, %v39
  %v348 = vpop.permute.xlu0 %347
  %350 = vset.pattern.permute.xlu0 1
  %351 = vperm.xlu0 %350, %v40
  %v352 = vpop.permute.xlu0 %351
  %354 = vset.pattern.permute.xlu0 1
  %355 = vperm.xlu0 %354, %v41
  %v356 = vpop.permute.xlu0 %355
  %358 = vset.pattern.permute.xlu0 1
  %359 = vperm.xlu0 %358, %v42
  %v360 = vpop.permute.xlu0 %359
  %362 = vset.pattern.permute.xlu0 1
  %363 = vperm.xlu0 %362, %v43
  %v364 = vpop.permute.xlu0 %363
  %366 = vset.pattern.permute.xlu0 1
  %367 = vperm.xlu0 %366, %v44
  %v368 = vpop.permute.xlu0 %367
  %370 = vset.pattern.permute.xlu0 1
  %371 = vperm.xlu0 %370, %v45
  %v372 = vpop.permute.xlu0 %371
  %374 = vset.pattern.permute.xlu0 1
  %375 = vperm.xlu0 %374, %v46
  %v376 = vpop.permute.xlu0 %375
  %378 = vset.pattern.permute.xlu0 1
  %379 = vperm.xlu0 %378, %v47
  %v380 = vpop.permute.xlu0 %379
  %382 = vset.pattern.permute.xlu0 1
  %383 = vperm.xlu0 %382, %v48
  %v384 = vpop.permute.xlu0 %383
  %386 = vset.pattern.permute.xlu0 1
  %387 = vperm.xlu0 %386, %v49
  %v388 = vpop.permute.xlu0 %387
  %390 = vset.pattern.permute.xlu0 1
  %391 = vperm.xlu0 %390, %v50
  %v392 = vpop.permute.xlu0 %391
  %394 = vset.pattern.permute.xlu0 1
  %395 = vperm.xlu0 %394, %v51
  %v396 = vpop.permute.xlu0 %395
  %398 = vset.pattern.permute.xlu0 1
  %399 = vperm.xlu0 %398, %v52
  %v400 = vpop.permute.xlu0 %399
  %402 = vset.pattern.permute.xlu0 1
  %403 = vperm.xlu0 %402, %v53
  %v404 = vpop.permute.xlu0 %403
  %406 = vset.pattern.permute.xlu0 1
  %407 = vperm.xlu0 %406, %v54
  %v408 = vpop.permute.xlu0 %407
  %410 = vset.pattern.permute.xlu0 1
  %411 = vperm.xlu0 %410, %v55
  %v412 = vpop.permute.xlu0 %411
  %414 = vset.pattern.permute.xlu0 1
  %415 = vperm.xlu0 %414, %v56
  %v416 = vpop.permute.xlu0 %415
  %418 = vset.pattern.permute.xlu0 1
  %419 = vperm.xlu0 %418, %v57
  %v420 = vpop.permute.xlu0 %419
  %v422 = vlaneseq
  %v423 = vshrl.u32 %v422, 7
  %v424 = vsub.s32 1, %v423
  %v425 = vrot.slane %v58, %v424
  %v426 = vmul.f32 %v296, %v425
  %v427 = vmul.f32 %v300, %v425
  %v428 = vmul.f32 %v304, %v425
  %v429 = vmul.f32 %v308, %v425
  %v430 = vmul.f32 %v312, %v425
  %v431 = vmul.f32 %v316, %v425
  %v432 = vmul.f32 %v320, %v425
  %v433 = vmul.f32 %v324, %v425
  %v434 = vmul.f32 %v328, %v425
  %v435 = vmul.f32 %v332, %v425
  %v436 = vmul.f32 %v336, %v425
  %v437 = vmul.f32 %v340, %v425
  %v438 = vmul.f32 %v344, %v425
  %v439 = vmul.f32 %v348, %v425
  %v440 = vmul.f32 %v352, %v425
  %v441 = vmul.f32 %v356, %v425
  %v442 = vmul.f32 %v360, %v425
  %v443 = vmul.f32 %v364, %v425
  %v444 = vmul.f32 %v368, %v425
  %v445 = vmul.f32 %v372, %v425
  %v446 = vmul.f32 %v376, %v425
  %v447 = vmul.f32 %v380, %v425
  %v448 = vmul.f32 %v384, %v425
  %v449 = vmul.f32 %v388, %v425
  %v450 = vmul.f32 %v392, %v425
  %v451 = vmul.f32 %v396, %v425
  %v452 = vmul.f32 %v400, %v425
  %v453 = vmul.f32 %v404, %v425
  %v454 = vmul.f32 %v408, %v425
  %v455 = vmul.f32 %v412, %v425
  %v456 = vmul.f32 %v416, %v425
  %v457 = vmul.f32 %v420, %v425
  %v458 = vadd.f32 %v262, %v426
  %v459 = vadd.f32 %v263, %v427
  %v460 = vadd.f32 %v264, %v428
  %v461 = vadd.f32 %v265, %v429
  %v462 = vadd.f32 %v266, %v430
  %v463 = vadd.f32 %v267, %v431
  %v464 = vadd.f32 %v268, %v432
  %v465 = vadd.f32 %v269, %v433
  %v466 = vadd.f32 %v270, %v434
  %v467 = vadd.f32 %v271, %v435
  %v468 = vadd.f32 %v272, %v436
  %v469 = vadd.f32 %v273, %v437
  %v470 = vadd.f32 %v274, %v438
  %v471 = vadd.f32 %v275, %v439
  %v472 = vadd.f32 %v276, %v440
  %v473 = vadd.f32 %v277, %v441
  %v474 = vadd.f32 %v278, %v442
  %v475 = vadd.f32 %v279, %v443
  %v476 = vadd.f32 %v280, %v444
  %v477 = vadd.f32 %v281, %v445
  %v478 = vadd.f32 %v282, %v446
  %v479 = vadd.f32 %v283, %v447
  %v480 = vadd.f32 %v284, %v448
  %v481 = vadd.f32 %v285, %v449
  %v482 = vadd.f32 %v286, %v450
  %v483 = vadd.f32 %v287, %v451
  %v484 = vadd.f32 %v288, %v452
  %v485 = vadd.f32 %v289, %v453
  %v486 = vadd.f32 %v290, %v454
  %v487 = vadd.f32 %v291, %v455
  %v488 = vadd.f32 %v292, %v456
  %v489 = vadd.f32 %v293, %v457
  %v490 = vand.u32 2147483647, %v458
  %vm491 = vcmp.le.f32.partialorder %v490, 0.7853982
  %vm492 = vcmp.lt.s32.totalorder %v458, 0
  %v493 = vand.u32 %v458, 2139095040
  %v494 = vshrl.u32 %v493, 23
  %v495 = vsub.s32 %v494, 127
  %v496 = vand.u32 2147483647, %v458
  %v497 = vand.u32 %v496, 8388607
  %v498 = vor.u32 %v497, 8388608
  %v499 = vsub.s32 0, %v498
  %v500 = vadd.s32 %v495, 1
  %vm501 = vcmp.gt.s32.totalorder %v500, 0
  %v502 = vsel %vm501, %v500, 0
  %v503 = vshrl.u32 %v502, 5
  %v504 = vand.u32 %v502, 31
  %v505 = vsub.s32 32, %v504
  %v506 = vshrl.u32 683565275, %v505
  %v507 = vshll.u32 683565275, %v504
  %v508 = vshrl.u32 2475754826, %v505
  %v509 = vor.u32 %v507, %v508
  %v510 = vshll.u32 2475754826, %v504
  %v511 = vshrl.u32 2131351028, %v505
  %v512 = vor.u32 %v510, %v511
  %v513 = vshll.u32 2131351028, %v504
  %v514 = vshrl.u32 2102212464, %v505
  %v515 = vor.u32 %v513, %v514
  %v516 = vshll.u32 2102212464, %v504
  %v517 = vshrl.u32 920167782, %v505
  %v518 = vor.u32 %v516, %v517
  %v519 = vshll.u32 920167782, %v504
  %v520 = vshrl.u32 1326507024, %v505
  %v521 = vor.u32 %v519, %v520
  %vm522 = vcmp.lt.s32.totalorder %v503, 1
  %vm523 = vcmp.lt.s32.totalorder %v503, 2
  %vm524 = vcmp.lt.s32.totalorder %v503, 3
  %vm525 = vcmp.lt.s32.totalorder %v503, 4
  %v526 = vsel %vm522, %v506, %v509
  %v527 = vsel %vm525, %v515, 2102212464
  %v528 = vsel %vm524, %v512, %v527
  %v529 = vsel %vm523, %v526, %v528
  %v530 = vsel %vm522, %v509, %v512
  %v531 = vsel %vm525, %v518, 920167782
  %v532 = vsel %vm524, %v515, %v531
  %v533 = vsel %vm523, %v530, %v532
  %v534 = vsel %vm522, %v512, %v515
  %v535 = vsel %vm525, %v521, 1326507024
  %v536 = vsel %vm524, %v518, %v535
  %v537 = vsel %vm523, %v534, %v536
  %v538 = vshll.u32 %v498, 8
  %v539 = vmul.u32.u64.compose %v538, %v537
  %v540 = vextract.low.u32 %v539
  %v541 = vextract.high.u32 %v539
  %v542 = vmul.u32.u64.compose %v538, %v533
  %v543 = vextract.low.u32 %v542
  %v544 = vextract.high.u32 %v542
  %v545 = vmul.u32 %v538, %v529
  %v546 = vadd.s32 %v541, %v543
  %vm547 = vc.u32 %v541, %v543
  %v548 = vadd.s32 %v544, 1
  %v549 = vsel %vm547, %v548, %v544
  %v550 = vadd.s32 %v545, %v549
  %v551 = vadd.s32 %v550, 536870912
  %v552 = vshrl.u32 %v551, 30
  %v553 = vshll.u32 %v552, 30
  %v554 = vsub.s32 %v550, %v553
  %vm555 = vcmp.lt.s32.totalorder %v554, 0
  %v556 = vsub.s32 0, %v554
  %v557 = vsel %vm555, %v556, %v554
  %v558 = vclz %v557
  %v559 = vsub.s32 %v558, 2
  %vm560 = vcmp.gt.s32.totalorder 0, %v559
  %v561 = vsel %vm560, 0, %v559
  %v562 = vsub.s32 32, %v561
  %v563 = vshll.u32 %v554, %v561
  %v564 = vshrl.u32 %v546, %v562
  %v565 = vor.u32 %v563, %v564
  %v566 = vsub.s32 4294967266, %v561
  %v567 = vadd.s32 %v566, 127
  %v568 = vshll.u32 %v567, 23
  %v569 = vor.u32 4788187, %v568
  %v570 = vand.u32 2147483647, %v569
  %v572 = vcvt.s32.f32 %v565
  %v573 = vmul.f32 %v572, %v570
  %v574 = vxor.u32 %v573, 2147483648
  %v575 = vsel %vm492, %v574, %v573
  %v576 = vsub.s32 4, %v552
  %v577 = vsel %vm492, %v576, %v552
  %v578 = vsel %vm491, %v458, %v575
  %v579 = vsel %vm491, 0, %v577
  %v580 = vcosq.f32.pop %v578
  %v581 = vsinq.f32.pop %v578
  %vm582 = vweird.f32 %v458
  %v583 = vadd.s32 %v579, 3
  %v584 = vand.u32 %v583, 3
  %vm585 = vcmp.lt.s32.totalorder %v584, 2
  %vm586 = vcmp.eq.s32.totalorder %v584, 0
  %v587 = vxor.u32 %v581, 2147483648
  %v588 = vsel %vm586, %v580, %v587
  %vm589 = vcmp.eq.s32.totalorder %v584, 2
  %v590 = vxor.u32 %v580, 2147483648
  %v591 = vsel %vm589, %v590, %v581
  %v592 = vsel %vm585, %v588, %v591
  %v593 = vsel %vm582, nan, %v592
  %v594 = vand.u32 2147483647, %v459
  %vm595 = vcmp.le.f32.partialorder %v594, 0.7853982
  %vm596 = vcmp.lt.s32.totalorder %v459, 0
  %v597 = vand.u32 %v459, 2139095040
  %v598 = vshrl.u32 %v597, 23
  %v599 = vsub.s32 %v598, 127
  %v600 = vand.u32 2147483647, %v459
  %v601 = vand.u32 %v600, 8388607
  %v602 = vor.u32 %v601, 8388608
  %v603 = vsub.s32 0, %v602
  %v604 = vadd.s32 %v599, 1
  %vm605 = vcmp.gt.s32.totalorder %v604, 0
  %v606 = vsel %vm605, %v604, 0
  %v607 = vshrl.u32 %v606, 5
  %v608 = vand.u32 %v606, 31
  %v609 = vsub.s32 32, %v608
  %v610 = vshrl.u32 683565275, %v609
  %v611 = vshll.u32 683565275, %v608
  %v612 = vshrl.u32 2475754826, %v609
  %v613 = vor.u32 %v611, %v612
  %v614 = vshll.u32 2475754826, %v608
  %v615 = vshrl.u32 2131351028, %v609
  %v616 = vor.u32 %v614, %v615
  %v617 = vshll.u32 2131351028, %v608
  %v618 = vshrl.u32 2102212464, %v609
  %v619 = vor.u32 %v617, %v618
  %v620 = vshll.u32 2102212464, %v608
  %v621 = vshrl.u32 920167782, %v609
  %v622 = vor.u32 %v620, %v621
  %v623 = vshll.u32 920167782, %v608
  %v624 = vshrl.u32 1326507024, %v609
  %v625 = vor.u32 %v623, %v624
  %vm626 = vcmp.lt.s32.totalorder %v607, 1
  %vm627 = vcmp.lt.s32.totalorder %v607, 2
  %vm628 = vcmp.lt.s32.totalorder %v607, 3
  %vm629 = vcmp.lt.s32.totalorder %v607, 4
  %v630 = vsel %vm626, %v610, %v613
  %v631 = vsel %vm629, %v619, 2102212464
  %v632 = vsel %vm628, %v616, %v631
  %v633 = vsel %vm627, %v630, %v632
  %v634 = vsel %vm626, %v613, %v616
  %v635 = vsel %vm629, %v622, 920167782
  %v636 = vsel %vm628, %v619, %v635
  %v637 = vsel %vm627, %v634, %v636
  %v638 = vsel %vm626, %v616, %v619
  %v639 = vsel %vm629, %v625, 1326507024
  %v640 = vsel %vm628, %v622, %v639
  %v641 = vsel %vm627, %v638, %v640
  %v642 = vshll.u32 %v602, 8
  %v643 = vmul.u32.u64.compose %v642, %v641
  %v644 = vextract.low.u32 %v643
  %v645 = vextract.high.u32 %v643
  %v646 = vmul.u32.u64.compose %v642, %v637
  %v647 = vextract.low.u32 %v646
  %v648 = vextract.high.u32 %v646
  %v649 = vmul.u32 %v642, %v633
  %v650 = vadd.s32 %v645, %v647
  %vm651 = vc.u32 %v645, %v647
  %v652 = vadd.s32 %v648, 1
  %v653 = vsel %vm651, %v652, %v648
  %v654 = vadd.s32 %v649, %v653
  %v655 = vadd.s32 %v654, 536870912
  %v656 = vshrl.u32 %v655, 30
  %v657 = vshll.u32 %v656, 30
  %v658 = vsub.s32 %v654, %v657
  %vm659 = vcmp.lt.s32.totalorder %v658, 0
  %v660 = vsub.s32 0, %v658
  %v661 = vsel %vm659, %v660, %v658
  %v662 = vclz %v661
  %v663 = vsub.s32 %v662, 2
  %vm664 = vcmp.gt.s32.totalorder 0, %v663
  %v665 = vsel %vm664, 0, %v663
  %v666 = vsub.s32 32, %v665
  %v667 = vshll.u32 %v658, %v665
  %v668 = vshrl.u32 %v650, %v666
  %v669 = vor.u32 %v667, %v668
  %v670 = vsub.s32 4294967266, %v665
  %v671 = vadd.s32 %v670, 127
  %v672 = vshll.u32 %v671, 23
  %v673 = vor.u32 4788187, %v672
  %v674 = vand.u32 2147483647, %v673
  %v676 = vcvt.s32.f32 %v669
  %v677 = vmul.f32 %v676, %v674
  %v678 = vxor.u32 %v677, 2147483648
  %v679 = vsel %vm596, %v678, %v677
  %v680 = vsub.s32 4, %v656
  %v681 = vsel %vm596, %v680, %v656
  %v682 = vsel %vm595, %v459, %v679
  %v683 = vsel %vm595, 0, %v681
  %v684 = vcosq.f32.pop %v682
  %v685 = vsinq.f32.pop %v682
  %vm686 = vweird.f32 %v459
  %v687 = vadd.s32 %v683, 3
  %v688 = vand.u32 %v687, 3
  %vm689 = vcmp.lt.s32.totalorder %v688, 2
  %vm690 = vcmp.eq.s32.totalorder %v688, 0
  %v691 = vxor.u32 %v685, 2147483648
  %v692 = vsel %vm690, %v684, %v691
  %vm693 = vcmp.eq.s32.totalorder %v688, 2
  %v694 = vxor.u32 %v684, 2147483648
  %v695 = vsel %vm693, %v694, %v685
  %v696 = vsel %vm689, %v692, %v695
  %v697 = vsel %vm686, nan, %v696
  %v698 = vand.u32 2147483647, %v460
  %vm699 = vcmp.le.f32.partialorder %v698, 0.7853982
  %vm700 = vcmp.lt.s32.totalorder %v460, 0
  %v701 = vand.u32 %v460, 2139095040
  %v702 = vshrl.u32 %v701, 23
  %v703 = vsub.s32 %v702, 127
  %v704 = vand.u32 2147483647, %v460
  %v705 = vand.u32 %v704, 8388607
  %v706 = vor.u32 %v705, 8388608
  %v707 = vsub.s32 0, %v706
  %v708 = vadd.s32 %v703, 1
  %vm709 = vcmp.gt.s32.totalorder %v708, 0
  %v710 = vsel %vm709, %v708, 0
  %v711 = vshrl.u32 %v710, 5
  %v712 = vand.u32 %v710, 31
  %v713 = vsub.s32 32, %v712
  %v714 = vshrl.u32 683565275, %v713
  %v715 = vshll.u32 683565275, %v712
  %v716 = vshrl.u32 2475754826, %v713
  %v717 = vor.u32 %v715, %v716
  %v718 = vshll.u32 2475754826, %v712
  %v719 = vshrl.u32 2131351028, %v713
  %v720 = vor.u32 %v718, %v719
  %v721 = vshll.u32 2131351028, %v712
  %v722 = vshrl.u32 2102212464, %v713
  %v723 = vor.u32 %v721, %v722
  %v724 = vshll.u32 2102212464, %v712
  %v725 = vshrl.u32 920167782, %v713
  %v726 = vor.u32 %v724, %v725
  %v727 = vshll.u32 920167782, %v712
  %v728 = vshrl.u32 1326507024, %v713
  %v729 = vor.u32 %v727, %v728
  %vm730 = vcmp.lt.s32.totalorder %v711, 1
  %vm731 = vcmp.lt.s32.totalorder %v711, 2
  %vm732 = vcmp.lt.s32.totalorder %v711, 3
  %vm733 = vcmp.lt.s32.totalorder %v711, 4
  %v734 = vsel %vm730, %v714, %v717
  %v735 = vsel %vm733, %v723, 2102212464
  %v736 = vsel %vm732, %v720, %v735
  %v737 = vsel %vm731, %v734, %v736
  %v738 = vsel %vm730, %v717, %v720
  %v739 = vsel %vm733, %v726, 920167782
  %v740 = vsel %vm732, %v723, %v739
  %v741 = vsel %vm731, %v738, %v740
  %v742 = vsel %vm730, %v720, %v723
  %v743 = vsel %vm733, %v729, 1326507024
  %v744 = vsel %vm732, %v726, %v743
  %v745 = vsel %vm731, %v742, %v744
  %v746 = vshll.u32 %v706, 8
  %v747 = vmul.u32.u64.compose %v746, %v745
  %v748 = vextract.low.u32 %v747
  %v749 = vextract.high.u32 %v747
  %v750 = vmul.u32.u64.compose %v746, %v741
  %v751 = vextract.low.u32 %v750
  %v752 = vextract.high.u32 %v750
  %v753 = vmul.u32 %v746, %v737
  %v754 = vadd.s32 %v749, %v751
  %vm755 = vc.u32 %v749, %v751
  %v756 = vadd.s32 %v752, 1
  %v757 = vsel %vm755, %v756, %v752
  %v758 = vadd.s32 %v753, %v757
  %v759 = vadd.s32 %v758, 536870912
  %v760 = vshrl.u32 %v759, 30
  %v761 = vshll.u32 %v760, 30
  %v762 = vsub.s32 %v758, %v761
  %vm763 = vcmp.lt.s32.totalorder %v762, 0
  %v764 = vsub.s32 0, %v762
  %v765 = vsel %vm763, %v764, %v762
  %v766 = vclz %v765
  %v767 = vsub.s32 %v766, 2
  %vm768 = vcmp.gt.s32.totalorder 0, %v767
  %v769 = vsel %vm768, 0, %v767
  %v770 = vsub.s32 32, %v769
  %v771 = vshll.u32 %v762, %v769
  %v772 = vshrl.u32 %v754, %v770
  %v773 = vor.u32 %v771, %v772
  %v774 = vsub.s32 4294967266, %v769
  %v775 = vadd.s32 %v774, 127
  %v776 = vshll.u32 %v775, 23
  %v777 = vor.u32 4788187, %v776
  %v778 = vand.u32 2147483647, %v777
  %v780 = vcvt.s32.f32 %v773
  %v781 = vmul.f32 %v780, %v778
  %v782 = vxor.u32 %v781, 2147483648
  %v783 = vsel %vm700, %v782, %v781
  %v784 = vsub.s32 4, %v760
  %v785 = vsel %vm700, %v784, %v760
  %v786 = vsel %vm699, %v460, %v783
  %v787 = vsel %vm699, 0, %v785
  %v788 = vcosq.f32.pop %v786
  %v789 = vsinq.f32.pop %v786
  %vm790 = vweird.f32 %v460
  %v791 = vadd.s32 %v787, 3
  %v792 = vand.u32 %v791, 3
  %vm793 = vcmp.lt.s32.totalorder %v792, 2
  %vm794 = vcmp.eq.s32.totalorder %v792, 0
  %v795 = vxor.u32 %v789, 2147483648
  %v796 = vsel %vm794, %v788, %v795
  %vm797 = vcmp.eq.s32.totalorder %v792, 2
  %v798 = vxor.u32 %v788, 2147483648
  %v799 = vsel %vm797, %v798, %v789
  %v800 = vsel %vm793, %v796, %v799
  %v801 = vsel %vm790, nan, %v800
  %v802 = vand.u32 2147483647, %v461
  %vm803 = vcmp.le.f32.partialorder %v802, 0.7853982
  %vm804 = vcmp.lt.s32.totalorder %v461, 0
  %v805 = vand.u32 %v461, 2139095040
  %v806 = vshrl.u32 %v805, 23
  %v807 = vsub.s32 %v806, 127
  %v808 = vand.u32 2147483647, %v461
  %v809 = vand.u32 %v808, 8388607
  %v810 = vor.u32 %v809, 8388608
  %v811 = vsub.s32 0, %v810
  %v812 = vadd.s32 %v807, 1
  %vm813 = vcmp.gt.s32.totalorder %v812, 0
  %v814 = vsel %vm813, %v812, 0
  %v815 = vshrl.u32 %v814, 5
  %v816 = vand.u32 %v814, 31
  %v817 = vsub.s32 32, %v816
  %v818 = vshrl.u32 683565275, %v817
  %v819 = vshll.u32 683565275, %v816
  %v820 = vshrl.u32 2475754826, %v817
  %v821 = vor.u32 %v819, %v820
  %v822 = vshll.u32 2475754826, %v816
  %v823 = vshrl.u32 2131351028, %v817
  %v824 = vor.u32 %v822, %v823
  %v825 = vshll.u32 2131351028, %v816
  %v826 = vshrl.u32 2102212464, %v817
  %v827 = vor.u32 %v825, %v826
  %v828 = vshll.u32 2102212464, %v816
  %v829 = vshrl.u32 920167782, %v817
  %v830 = vor.u32 %v828, %v829
  %v831 = vshll.u32 920167782, %v816
  %v832 = vshrl.u32 1326507024, %v817
  %v833 = vor.u32 %v831, %v832
  %vm834 = vcmp.lt.s32.totalorder %v815, 1
  %vm835 = vcmp.lt.s32.totalorder %v815, 2
  %vm836 = vcmp.lt.s32.totalorder %v815, 3
  %vm837 = vcmp.lt.s32.totalorder %v815, 4
  %v838 = vsel %vm834, %v818, %v821
  %v839 = vsel %vm837, %v827, 2102212464
  %v840 = vsel %vm836, %v824, %v839
  %v841 = vsel %vm835, %v838, %v840
  %v842 = vsel %vm834, %v821, %v824
  %v843 = vsel %vm837, %v830, 920167782
  %v844 = vsel %vm836, %v827, %v843
  %v845 = vsel %vm835, %v842, %v844
  %v846 = vsel %vm834, %v824, %v827
  %v847 = vsel %vm837, %v833, 1326507024
  %v848 = vsel %vm836, %v830, %v847
  %v849 = vsel %vm835, %v846, %v848
  %v850 = vshll.u32 %v810, 8
  %v851 = vmul.u32.u64.compose %v850, %v849
  %v852 = vextract.low.u32 %v851
  %v853 = vextract.high.u32 %v851
  %v854 = vmul.u32.u64.compose %v850, %v845
  %v855 = vextract.low.u32 %v854
  %v856 = vextract.high.u32 %v854
  %v857 = vmul.u32 %v850, %v841
  %v858 = vadd.s32 %v853, %v855
  %vm859 = vc.u32 %v853, %v855
  %v860 = vadd.s32 %v856, 1
  %v861 = vsel %vm859, %v860, %v856
  %v862 = vadd.s32 %v857, %v861
  %v863 = vadd.s32 %v862, 536870912
  %v864 = vshrl.u32 %v863, 30
  %v865 = vshll.u32 %v864, 30
  %v866 = vsub.s32 %v862, %v865
  %vm867 = vcmp.lt.s32.totalorder %v866, 0
  %v868 = vsub.s32 0, %v866
  %v869 = vsel %vm867, %v868, %v866
  %v870 = vclz %v869
  %v871 = vsub.s32 %v870, 2
  %vm872 = vcmp.gt.s32.totalorder 0, %v871
  %v873 = vsel %vm872, 0, %v871
  %v874 = vsub.s32 32, %v873
  %v875 = vshll.u32 %v866, %v873
  %v876 = vshrl.u32 %v858, %v874
  %v877 = vor.u32 %v875, %v876
  %v878 = vsub.s32 4294967266, %v873
  %v879 = vadd.s32 %v878, 127
  %v880 = vshll.u32 %v879, 23
  %v881 = vor.u32 4788187, %v880
  %v882 = vand.u32 2147483647, %v881
  %v884 = vcvt.s32.f32 %v877
  %v885 = vmul.f32 %v884, %v882
  %v886 = vxor.u32 %v885, 2147483648
  %v887 = vsel %vm804, %v886, %v885
  %v888 = vsub.s32 4, %v864
  %v889 = vsel %vm804, %v888, %v864
  %v890 = vsel %vm803, %v461, %v887
  %v891 = vsel %vm803, 0, %v889
  %v892 = vcosq.f32.pop %v890
  %v893 = vsinq.f32.pop %v890
  %vm894 = vweird.f32 %v461
  %v895 = vadd.s32 %v891, 3
  %v896 = vand.u32 %v895, 3
  %vm897 = vcmp.lt.s32.totalorder %v896, 2
  %vm898 = vcmp.eq.s32.totalorder %v896, 0
  %v899 = vxor.u32 %v893, 2147483648
  %v900 = vsel %vm898, %v892, %v899
  %vm901 = vcmp.eq.s32.totalorder %v896, 2
  %v902 = vxor.u32 %v892, 2147483648
  %v903 = vsel %vm901, %v902, %v893
  %v904 = vsel %vm897, %v900, %v903
  %v905 = vsel %vm894, nan, %v904
  %v906 = vand.u32 2147483647, %v462
  %vm907 = vcmp.le.f32.partialorder %v906, 0.7853982
  %vm908 = vcmp.lt.s32.totalorder %v462, 0
  %v909 = vand.u32 %v462, 2139095040
  %v910 = vshrl.u32 %v909, 23
  %v911 = vsub.s32 %v910, 127
  %v912 = vand.u32 2147483647, %v462
  %v913 = vand.u32 %v912, 8388607
  %v914 = vor.u32 %v913, 8388608
  %v915 = vsub.s32 0, %v914
  %v916 = vadd.s32 %v911, 1
  %vm917 = vcmp.gt.s32.totalorder %v916, 0
  %v918 = vsel %vm917, %v916, 0
  %v919 = vshrl.u32 %v918, 5
  %v920 = vand.u32 %v918, 31
  %v921 = vsub.s32 32, %v920
  %v922 = vshrl.u32 683565275, %v921
  %v923 = vshll.u32 683565275, %v920
  %v924 = vshrl.u32 2475754826, %v921
  %v925 = vor.u32 %v923, %v924
  %v926 = vshll.u32 2475754826, %v920
  %v927 = vshrl.u32 2131351028, %v921
  %v928 = vor.u32 %v926, %v927
  %v929 = vshll.u32 2131351028, %v920
  %v930 = vshrl.u32 2102212464, %v921
  %v931 = vor.u32 %v929, %v930
  %v932 = vshll.u32 2102212464, %v920
  %v933 = vshrl.u32 920167782, %v921
  %v934 = vor.u32 %v932, %v933
  %v935 = vshll.u32 920167782, %v920
  %v936 = vshrl.u32 1326507024, %v921
  %v937 = vor.u32 %v935, %v936
  %vm938 = vcmp.lt.s32.totalorder %v919, 1
  %vm939 = vcmp.lt.s32.totalorder %v919, 2
  %vm940 = vcmp.lt.s32.totalorder %v919, 3
  %vm941 = vcmp.lt.s32.totalorder %v919, 4
  %v942 = vsel %vm938, %v922, %v925
  %v943 = vsel %vm941, %v931, 2102212464
  %v944 = vsel %vm940, %v928, %v943
  %v945 = vsel %vm939, %v942, %v944
  %v946 = vsel %vm938, %v925, %v928
  %v947 = vsel %vm941, %v934, 920167782
  %v948 = vsel %vm940, %v931, %v947
  %v949 = vsel %vm939, %v946, %v948
  %v950 = vsel %vm938, %v928, %v931
  %v951 = vsel %vm941, %v937, 1326507024
  %v952 = vsel %vm940, %v934, %v951
  %v953 = vsel %vm939, %v950, %v952
  %v954 = vshll.u32 %v914, 8
  %v955 = vmul.u32.u64.compose %v954, %v953
  %v956 = vextract.low.u32 %v955
  %v957 = vextract.high.u32 %v955
  %v958 = vmul.u32.u64.compose %v954, %v949
  %v959 = vextract.low.u32 %v958
  %v960 = vextract.high.u32 %v958
  %v961 = vmul.u32 %v954, %v945
  %v962 = vadd.s32 %v957, %v959
  %vm963 = vc.u32 %v957, %v959
  %v964 = vadd.s32 %v960, 1
  %v965 = vsel %vm963, %v964, %v960
  %v966 = vadd.s32 %v961, %v965
  %v967 = vadd.s32 %v966, 536870912
  %v968 = vshrl.u32 %v967, 30
  %v969 = vshll.u32 %v968, 30
  %v970 = vsub.s32 %v966, %v969
  %vm971 = vcmp.lt.s32.totalorder %v970, 0
  %v972 = vsub.s32 0, %v970
  %v973 = vsel %vm971, %v972, %v970
  %v974 = vclz %v973
  %v975 = vsub.s32 %v974, 2
  %vm976 = vcmp.gt.s32.totalorder 0, %v975
  %v977 = vsel %vm976, 0, %v975
  %v978 = vsub.s32 32, %v977
  %v979 = vshll.u32 %v970, %v977
  %v980 = vshrl.u32 %v962, %v978
  %v981 = vor.u32 %v979, %v980
  %v982 = vsub.s32 4294967266, %v977
  %v983 = vadd.s32 %v982, 127
  %v984 = vshll.u32 %v983, 23
  %v985 = vor.u32 4788187, %v984
  %v986 = vand.u32 2147483647, %v985
  %v988 = vcvt.s32.f32 %v981
  %v989 = vmul.f32 %v988, %v986
  %v990 = vxor.u32 %v989, 2147483648
  %v991 = vsel %vm908, %v990, %v989
  %v992 = vsub.s32 4, %v968
  %v993 = vsel %vm908, %v992, %v968
  %v994 = vsel %vm907, %v462, %v991
  %v995 = vsel %vm907, 0, %v993
  %v996 = vcosq.f32.pop %v994
  %v997 = vsinq.f32.pop %v994
  %vm998 = vweird.f32 %v462
  %v999 = vadd.s32 %v995, 3
  %v1000 = vand.u32 %v999, 3
  %vm1001 = vcmp.lt.s32.totalorder %v1000, 2
  %vm1002 = vcmp.eq.s32.totalorder %v1000, 0
  %v1003 = vxor.u32 %v997, 2147483648
  %v1004 = vsel %vm1002, %v996, %v1003
  %vm1005 = vcmp.eq.s32.totalorder %v1000, 2
  %v1006 = vxor.u32 %v996, 2147483648
  %v1007 = vsel %vm1005, %v1006, %v997
  %v1008 = vsel %vm1001, %v1004, %v1007
  %v1009 = vsel %vm998, nan, %v1008
  %v1010 = vand.u32 2147483647, %v463
  %vm1011 = vcmp.le.f32.partialorder %v1010, 0.7853982
  %vm1012 = vcmp.lt.s32.totalorder %v463, 0
  %v1013 = vand.u32 %v463, 2139095040
  %v1014 = vshrl.u32 %v1013, 23
  %v1015 = vsub.s32 %v1014, 127
  %v1016 = vand.u32 2147483647, %v463
  %v1017 = vand.u32 %v1016, 8388607
  %v1018 = vor.u32 %v1017, 8388608
  %v1019 = vsub.s32 0, %v1018
  %v1020 = vadd.s32 %v1015, 1
  %vm1021 = vcmp.gt.s32.totalorder %v1020, 0
  %v1022 = vsel %vm1021, %v1020, 0
  %v1023 = vshrl.u32 %v1022, 5
  %v1024 = vand.u32 %v1022, 31
  %v1025 = vsub.s32 32, %v1024
  %v1026 = vshrl.u32 683565275, %v1025
  %v1027 = vshll.u32 683565275, %v1024
  %v1028 = vshrl.u32 2475754826, %v1025
  %v1029 = vor.u32 %v1027, %v1028
  %v1030 = vshll.u32 2475754826, %v1024
  %v1031 = vshrl.u32 2131351028, %v1025
  %v1032 = vor.u32 %v1030, %v1031
  %v1033 = vshll.u32 2131351028, %v1024
  %v1034 = vshrl.u32 2102212464, %v1025
  %v1035 = vor.u32 %v1033, %v1034
  %v1036 = vshll.u32 2102212464, %v1024
  %v1037 = vshrl.u32 920167782, %v1025
  %v1038 = vor.u32 %v1036, %v1037
  %v1039 = vshll.u32 920167782, %v1024
  %v1040 = vshrl.u32 1326507024, %v1025
  %v1041 = vor.u32 %v1039, %v1040
  %vm1042 = vcmp.lt.s32.totalorder %v1023, 1
  %vm1043 = vcmp.lt.s32.totalorder %v1023, 2
  %vm1044 = vcmp.lt.s32.totalorder %v1023, 3
  %vm1045 = vcmp.lt.s32.totalorder %v1023, 4
  %v1046 = vsel %vm1042, %v1026, %v1029
  %v1047 = vsel %vm1045, %v1035, 2102212464
  %v1048 = vsel %vm1044, %v1032, %v1047
  %v1049 = vsel %vm1043, %v1046, %v1048
  %v1050 = vsel %vm1042, %v1029, %v1032
  %v1051 = vsel %vm1045, %v1038, 920167782
  %v1052 = vsel %vm1044, %v1035, %v1051
  %v1053 = vsel %vm1043, %v1050, %v1052
  %v1054 = vsel %vm1042, %v1032, %v1035
  %v1055 = vsel %vm1045, %v1041, 1326507024
  %v1056 = vsel %vm1044, %v1038, %v1055
  %v1057 = vsel %vm1043, %v1054, %v1056
  %v1058 = vshll.u32 %v1018, 8
  %v1059 = vmul.u32.u64.compose %v1058, %v1057
  %v1060 = vextract.low.u32 %v1059
  %v1061 = vextract.high.u32 %v1059
  %v1062 = vmul.u32.u64.compose %v1058, %v1053
  %v1063 = vextract.low.u32 %v1062
  %v1064 = vextract.high.u32 %v1062
  %v1065 = vmul.u32 %v1058, %v1049
  %v1066 = vadd.s32 %v1061, %v1063
  %vm1067 = vc.u32 %v1061, %v1063
  %v1068 = vadd.s32 %v1064, 1
  %v1069 = vsel %vm1067, %v1068, %v1064
  %v1070 = vadd.s32 %v1065, %v1069
  %v1071 = vadd.s32 %v1070, 536870912
  %v1072 = vshrl.u32 %v1071, 30
  %v1073 = vshll.u32 %v1072, 30
  %v1074 = vsub.s32 %v1070, %v1073
  %vm1075 = vcmp.lt.s32.totalorder %v1074, 0
  %v1076 = vsub.s32 0, %v1074
  %v1077 = vsel %vm1075, %v1076, %v1074
  %v1078 = vclz %v1077
  %v1079 = vsub.s32 %v1078, 2
  %vm1080 = vcmp.gt.s32.totalorder 0, %v1079
  %v1081 = vsel %vm1080, 0, %v1079
  %v1082 = vsub.s32 32, %v1081
  %v1083 = vshll.u32 %v1074, %v1081
  %v1084 = vshrl.u32 %v1066, %v1082
  %v1085 = vor.u32 %v1083, %v1084
  %v1086 = vsub.s32 4294967266, %v1081
  %v1087 = vadd.s32 %v1086, 127
  %v1088 = vshll.u32 %v1087, 23
  %v1089 = vor.u32 4788187, %v1088
  %v1090 = vand.u32 2147483647, %v1089
  %v1092 = vcvt.s32.f32 %v1085
  %v1093 = vmul.f32 %v1092, %v1090
  %v1094 = vxor.u32 %v1093, 2147483648
  %v1095 = vsel %vm1012, %v1094, %v1093
  %v1096 = vsub.s32 4, %v1072
  %v1097 = vsel %vm1012, %v1096, %v1072
  %v1098 = vsel %vm1011, %v463, %v1095
  %v1099 = vsel %vm1011, 0, %v1097
  %v1100 = vcosq.f32.pop %v1098
  %v1101 = vsinq.f32.pop %v1098
  %vm1102 = vweird.f32 %v463
  %v1103 = vadd.s32 %v1099, 3
  %v1104 = vand.u32 %v1103, 3
  %vm1105 = vcmp.lt.s32.totalorder %v1104, 2
  %vm1106 = vcmp.eq.s32.totalorder %v1104, 0
  %v1107 = vxor.u32 %v1101, 2147483648
  %v1108 = vsel %vm1106, %v1100, %v1107
  %vm1109 = vcmp.eq.s32.totalorder %v1104, 2
  %v1110 = vxor.u32 %v1100, 2147483648
  %v1111 = vsel %vm1109, %v1110, %v1101
  %v1112 = vsel %vm1105, %v1108, %v1111
  %v1113 = vsel %vm1102, nan, %v1112
  %v1114 = vand.u32 2147483647, %v464
  %vm1115 = vcmp.le.f32.partialorder %v1114, 0.7853982
  %vm1116 = vcmp.lt.s32.totalorder %v464, 0
  %v1117 = vand.u32 %v464, 2139095040
  %v1118 = vshrl.u32 %v1117, 23
  %v1119 = vsub.s32 %v1118, 127
  %v1120 = vand.u32 2147483647, %v464
  %v1121 = vand.u32 %v1120, 8388607
  %v1122 = vor.u32 %v1121, 8388608
  %v1123 = vsub.s32 0, %v1122
  %v1124 = vadd.s32 %v1119, 1
  %vm1125 = vcmp.gt.s32.totalorder %v1124, 0
  %v1126 = vsel %vm1125, %v1124, 0
  %v1127 = vshrl.u32 %v1126, 5
  %v1128 = vand.u32 %v1126, 31
  %v1129 = vsub.s32 32, %v1128
  %v1130 = vshrl.u32 683565275, %v1129
  %v1131 = vshll.u32 683565275, %v1128
  %v1132 = vshrl.u32 2475754826, %v1129
  %v1133 = vor.u32 %v1131, %v1132
  %v1134 = vshll.u32 2475754826, %v1128
  %v1135 = vshrl.u32 2131351028, %v1129
  %v1136 = vor.u32 %v1134, %v1135
  %v1137 = vshll.u32 2131351028, %v1128
  %v1138 = vshrl.u32 2102212464, %v1129
  %v1139 = vor.u32 %v1137, %v1138
  %v1140 = vshll.u32 2102212464, %v1128
  %v1141 = vshrl.u32 920167782, %v1129
  %v1142 = vor.u32 %v1140, %v1141
  %v1143 = vshll.u32 920167782, %v1128
  %v1144 = vshrl.u32 1326507024, %v1129
  %v1145 = vor.u32 %v1143, %v1144
  %vm1146 = vcmp.lt.s32.totalorder %v1127, 1
  %vm1147 = vcmp.lt.s32.totalorder %v1127, 2
  %vm1148 = vcmp.lt.s32.totalorder %v1127, 3
  %vm1149 = vcmp.lt.s32.totalorder %v1127, 4
  %v1150 = vsel %vm1146, %v1130, %v1133
  %v1151 = vsel %vm1149, %v1139, 2102212464
  %v1152 = vsel %vm1148, %v1136, %v1151
  %v1153 = vsel %vm1147, %v1150, %v1152
  %v1154 = vsel %vm1146, %v1133, %v1136
  %v1155 = vsel %vm1149, %v1142, 920167782
  %v1156 = vsel %vm1148, %v1139, %v1155
  %v1157 = vsel %vm1147, %v1154, %v1156
  %v1158 = vsel %vm1146, %v1136, %v1139
  %v1159 = vsel %vm1149, %v1145, 1326507024
  %v1160 = vsel %vm1148, %v1142, %v1159
  %v1161 = vsel %vm1147, %v1158, %v1160
  %v1162 = vshll.u32 %v1122, 8
  %v1163 = vmul.u32.u64.compose %v1162, %v1161
  %v1164 = vextract.low.u32 %v1163
  %v1165 = vextract.high.u32 %v1163
  %v1166 = vmul.u32.u64.compose %v1162, %v1157
  %v1167 = vextract.low.u32 %v1166
  %v1168 = vextract.high.u32 %v1166
  %v1169 = vmul.u32 %v1162, %v1153
  %v1170 = vadd.s32 %v1165, %v1167
  %vm1171 = vc.u32 %v1165, %v1167
  %v1172 = vadd.s32 %v1168, 1
  %v1173 = vsel %vm1171, %v1172, %v1168
  %v1174 = vadd.s32 %v1169, %v1173
  %v1175 = vadd.s32 %v1174, 536870912
  %v1176 = vshrl.u32 %v1175, 30
  %v1177 = vshll.u32 %v1176, 30
  %v1178 = vsub.s32 %v1174, %v1177
  %vm1179 = vcmp.lt.s32.totalorder %v1178, 0
  %v1180 = vsub.s32 0, %v1178
  %v1181 = vsel %vm1179, %v1180, %v1178
  %v1182 = vclz %v1181
  %v1183 = vsub.s32 %v1182, 2
  %vm1184 = vcmp.gt.s32.totalorder 0, %v1183
  %v1185 = vsel %vm1184, 0, %v1183
  %v1186 = vsub.s32 32, %v1185
  %v1187 = vshll.u32 %v1178, %v1185
  %v1188 = vshrl.u32 %v1170, %v1186
  %v1189 = vor.u32 %v1187, %v1188
  %v1190 = vsub.s32 4294967266, %v1185
  %v1191 = vadd.s32 %v1190, 127
  %v1192 = vshll.u32 %v1191, 23
  %v1193 = vor.u32 4788187, %v1192
  %v1194 = vand.u32 2147483647, %v1193
  %v1196 = vcvt.s32.f32 %v1189
  %v1197 = vmul.f32 %v1196, %v1194
  %v1198 = vxor.u32 %v1197, 2147483648
  %v1199 = vsel %vm1116, %v1198, %v1197
  %v1200 = vsub.s32 4, %v1176
  %v1201 = vsel %vm1116, %v1200, %v1176
  %v1202 = vsel %vm1115, %v464, %v1199
  %v1203 = vsel %vm1115, 0, %v1201
  %v1204 = vcosq.f32.pop %v1202
  %v1205 = vsinq.f32.pop %v1202
  %vm1206 = vweird.f32 %v464
  %v1207 = vadd.s32 %v1203, 3
  %v1208 = vand.u32 %v1207, 3
  %vm1209 = vcmp.lt.s32.totalorder %v1208, 2
  %vm1210 = vcmp.eq.s32.totalorder %v1208, 0
  %v1211 = vxor.u32 %v1205, 2147483648
  %v1212 = vsel %vm1210, %v1204, %v1211
  %vm1213 = vcmp.eq.s32.totalorder %v1208, 2
  %v1214 = vxor.u32 %v1204, 2147483648
  %v1215 = vsel %vm1213, %v1214, %v1205
  %v1216 = vsel %vm1209, %v1212, %v1215
  %v1217 = vsel %vm1206, nan, %v1216
  %v1218 = vand.u32 2147483647, %v465
  %vm1219 = vcmp.le.f32.partialorder %v1218, 0.7853982
  %vm1220 = vcmp.lt.s32.totalorder %v465, 0
  %v1221 = vand.u32 %v465, 2139095040
  %v1222 = vshrl.u32 %v1221, 23
  %v1223 = vsub.s32 %v1222, 127
  %v1224 = vand.u32 2147483647, %v465
  %v1225 = vand.u32 %v1224, 8388607
  %v1226 = vor.u32 %v1225, 8388608
  %v1227 = vsub.s32 0, %v1226
  %v1228 = vadd.s32 %v1223, 1
  %vm1229 = vcmp.gt.s32.totalorder %v1228, 0
  %v1230 = vsel %vm1229, %v1228, 0
  %v1231 = vshrl.u32 %v1230, 5
  %v1232 = vand.u32 %v1230, 31
  %v1233 = vsub.s32 32, %v1232
  %v1234 = vshrl.u32 683565275, %v1233
  %v1235 = vshll.u32 683565275, %v1232
  %v1236 = vshrl.u32 2475754826, %v1233
  %v1237 = vor.u32 %v1235, %v1236
  %v1238 = vshll.u32 2475754826, %v1232
  %v1239 = vshrl.u32 2131351028, %v1233
  %v1240 = vor.u32 %v1238, %v1239
  %v1241 = vshll.u32 2131351028, %v1232
  %v1242 = vshrl.u32 2102212464, %v1233
  %v1243 = vor.u32 %v1241, %v1242
  %v1244 = vshll.u32 2102212464, %v1232
  %v1245 = vshrl.u32 920167782, %v1233
  %v1246 = vor.u32 %v1244, %v1245
  %v1247 = vshll.u32 920167782, %v1232
  %v1248 = vshrl.u32 1326507024, %v1233
  %v1249 = vor.u32 %v1247, %v1248
  %vm1250 = vcmp.lt.s32.totalorder %v1231, 1
  %vm1251 = vcmp.lt.s32.totalorder %v1231, 2
  %vm1252 = vcmp.lt.s32.totalorder %v1231, 3
  %vm1253 = vcmp.lt.s32.totalorder %v1231, 4
  %v1254 = vsel %vm1250, %v1234, %v1237
  %v1255 = vsel %vm1253, %v1243, 2102212464
  %v1256 = vsel %vm1252, %v1240, %v1255
  %v1257 = vsel %vm1251, %v1254, %v1256
  %v1258 = vsel %vm1250, %v1237, %v1240
  %v1259 = vsel %vm1253, %v1246, 920167782
  %v1260 = vsel %vm1252, %v1243, %v1259
  %v1261 = vsel %vm1251, %v1258, %v1260
  %v1262 = vsel %vm1250, %v1240, %v1243
  %v1263 = vsel %vm1253, %v1249, 1326507024
  %v1264 = vsel %vm1252, %v1246, %v1263
  %v1265 = vsel %vm1251, %v1262, %v1264
  %v1266 = vshll.u32 %v1226, 8
  %v1267 = vmul.u32.u64.compose %v1266, %v1265
  %v1268 = vextract.low.u32 %v1267
  %v1269 = vextract.high.u32 %v1267
  %v1270 = vmul.u32.u64.compose %v1266, %v1261
  %v1271 = vextract.low.u32 %v1270
  %v1272 = vextract.high.u32 %v1270
  %v1273 = vmul.u32 %v1266, %v1257
  %v1274 = vadd.s32 %v1269, %v1271
  %vm1275 = vc.u32 %v1269, %v1271
  %v1276 = vadd.s32 %v1272, 1
  %v1277 = vsel %vm1275, %v1276, %v1272
  %v1278 = vadd.s32 %v1273, %v1277
  %v1279 = vadd.s32 %v1278, 536870912
  %v1280 = vshrl.u32 %v1279, 30
  %v1281 = vshll.u32 %v1280, 30
  %v1282 = vsub.s32 %v1278, %v1281
  %vm1283 = vcmp.lt.s32.totalorder %v1282, 0
  %v1284 = vsub.s32 0, %v1282
  %v1285 = vsel %vm1283, %v1284, %v1282
  %v1286 = vclz %v1285
  %v1287 = vsub.s32 %v1286, 2
  %vm1288 = vcmp.gt.s32.totalorder 0, %v1287
  %v1289 = vsel %vm1288, 0, %v1287
  %v1290 = vsub.s32 32, %v1289
  %v1291 = vshll.u32 %v1282, %v1289
  %v1292 = vshrl.u32 %v1274, %v1290
  %v1293 = vor.u32 %v1291, %v1292
  %v1294 = vsub.s32 4294967266, %v1289
  %v1295 = vadd.s32 %v1294, 127
  %v1296 = vshll.u32 %v1295, 23
  %v1297 = vor.u32 4788187, %v1296
  %v1298 = vand.u32 2147483647, %v1297
  %v1300 = vcvt.s32.f32 %v1293
  %v1301 = vmul.f32 %v1300, %v1298
  %v1302 = vxor.u32 %v1301, 2147483648
  %v1303 = vsel %vm1220, %v1302, %v1301
  %v1304 = vsub.s32 4, %v1280
  %v1305 = vsel %vm1220, %v1304, %v1280
  %v1306 = vsel %vm1219, %v465, %v1303
  %v1307 = vsel %vm1219, 0, %v1305
  %v1308 = vcosq.f32.pop %v1306
  %v1309 = vsinq.f32.pop %v1306
  %vm1310 = vweird.f32 %v465
  %v1311 = vadd.s32 %v1307, 3
  %v1312 = vand.u32 %v1311, 3
  %vm1313 = vcmp.lt.s32.totalorder %v1312, 2
  %vm1314 = vcmp.eq.s32.totalorder %v1312, 0
  %v1315 = vxor.u32 %v1309, 2147483648
  %v1316 = vsel %vm1314, %v1308, %v1315
  %vm1317 = vcmp.eq.s32.totalorder %v1312, 2
  %v1318 = vxor.u32 %v1308, 2147483648
  %v1319 = vsel %vm1317, %v1318, %v1309
  %v1320 = vsel %vm1313, %v1316, %v1319
  %v1321 = vsel %vm1310, nan, %v1320
  %v1322 = vand.u32 2147483647, %v466
  %vm1323 = vcmp.le.f32.partialorder %v1322, 0.7853982
  %vm1324 = vcmp.lt.s32.totalorder %v466, 0
  %v1325 = vand.u32 %v466, 2139095040
  %v1326 = vshrl.u32 %v1325, 23
  %v1327 = vsub.s32 %v1326, 127
  %v1328 = vand.u32 2147483647, %v466
  %v1329 = vand.u32 %v1328, 8388607
  %v1330 = vor.u32 %v1329, 8388608
  %v1331 = vsub.s32 0, %v1330
  %v1332 = vadd.s32 %v1327, 1
  %vm1333 = vcmp.gt.s32.totalorder %v1332, 0
  %v1334 = vsel %vm1333, %v1332, 0
  %v1335 = vshrl.u32 %v1334, 5
  %v1336 = vand.u32 %v1334, 31
  %v1337 = vsub.s32 32, %v1336
  %v1338 = vshrl.u32 683565275, %v1337
  %v1339 = vshll.u32 683565275, %v1336
  %v1340 = vshrl.u32 2475754826, %v1337
  %v1341 = vor.u32 %v1339, %v1340
  %v1342 = vshll.u32 2475754826, %v1336
  %v1343 = vshrl.u32 2131351028, %v1337
  %v1344 = vor.u32 %v1342, %v1343
  %v1345 = vshll.u32 2131351028, %v1336
  %v1346 = vshrl.u32 2102212464, %v1337
  %v1347 = vor.u32 %v1345, %v1346
  %v1348 = vshll.u32 2102212464, %v1336
  %v1349 = vshrl.u32 920167782, %v1337
  %v1350 = vor.u32 %v1348, %v1349
  %v1351 = vshll.u32 920167782, %v1336
  %v1352 = vshrl.u32 1326507024, %v1337
  %v1353 = vor.u32 %v1351, %v1352
  %vm1354 = vcmp.lt.s32.totalorder %v1335, 1
  %vm1355 = vcmp.lt.s32.totalorder %v1335, 2
  %vm1356 = vcmp.lt.s32.totalorder %v1335, 3
  %vm1357 = vcmp.lt.s32.totalorder %v1335, 4
  %v1358 = vsel %vm1354, %v1338, %v1341
  %v1359 = vsel %vm1357, %v1347, 2102212464
  %v1360 = vsel %vm1356, %v1344, %v1359
  %v1361 = vsel %vm1355, %v1358, %v1360
  %v1362 = vsel %vm1354, %v1341, %v1344
  %v1363 = vsel %vm1357, %v1350, 920167782
  %v1364 = vsel %vm1356, %v1347, %v1363
  %v1365 = vsel %vm1355, %v1362, %v1364
  %v1366 = vsel %vm1354, %v1344, %v1347
  %v1367 = vsel %vm1357, %v1353, 1326507024
  %v1368 = vsel %vm1356, %v1350, %v1367
  %v1369 = vsel %vm1355, %v1366, %v1368
  %v1370 = vshll.u32 %v1330, 8
  %v1371 = vmul.u32.u64.compose %v1370, %v1369
  %v1372 = vextract.low.u32 %v1371
  %v1373 = vextract.high.u32 %v1371
  %v1374 = vmul.u32.u64.compose %v1370, %v1365
  %v1375 = vextract.low.u32 %v1374
  %v1376 = vextract.high.u32 %v1374
  %v1377 = vmul.u32 %v1370, %v1361
  %v1378 = vadd.s32 %v1373, %v1375
  %vm1379 = vc.u32 %v1373, %v1375
  %v1380 = vadd.s32 %v1376, 1
  %v1381 = vsel %vm1379, %v1380, %v1376
  %v1382 = vadd.s32 %v1377, %v1381
  %v1383 = vadd.s32 %v1382, 536870912
  %v1384 = vshrl.u32 %v1383, 30
  %v1385 = vshll.u32 %v1384, 30
  %v1386 = vsub.s32 %v1382, %v1385
  %vm1387 = vcmp.lt.s32.totalorder %v1386, 0
  %v1388 = vsub.s32 0, %v1386
  %v1389 = vsel %vm1387, %v1388, %v1386
  %v1390 = vclz %v1389
  %v1391 = vsub.s32 %v1390, 2
  %vm1392 = vcmp.gt.s32.totalorder 0, %v1391
  %v1393 = vsel %vm1392, 0, %v1391
  %v1394 = vsub.s32 32, %v1393
  %v1395 = vshll.u32 %v1386, %v1393
  %v1396 = vshrl.u32 %v1378, %v1394
  %v1397 = vor.u32 %v1395, %v1396
  %v1398 = vsub.s32 4294967266, %v1393
  %v1399 = vadd.s32 %v1398, 127
  %v1400 = vshll.u32 %v1399, 23
  %v1401 = vor.u32 4788187, %v1400
  %v1402 = vand.u32 2147483647, %v1401
  %v1404 = vcvt.s32.f32 %v1397
  %v1405 = vmul.f32 %v1404, %v1402
  %v1406 = vxor.u32 %v1405, 2147483648
  %v1407 = vsel %vm1324, %v1406, %v1405
  %v1408 = vsub.s32 4, %v1384
  %v1409 = vsel %vm1324, %v1408, %v1384
  %v1410 = vsel %vm1323, %v466, %v1407
  %v1411 = vsel %vm1323, 0, %v1409
  %v1412 = vcosq.f32.pop %v1410
  %v1413 = vsinq.f32.pop %v1410
  %vm1414 = vweird.f32 %v466
  %v1415 = vadd.s32 %v1411, 3
  %v1416 = vand.u32 %v1415, 3
  %vm1417 = vcmp.lt.s32.totalorder %v1416, 2
  %vm1418 = vcmp.eq.s32.totalorder %v1416, 0
  %v1419 = vxor.u32 %v1413, 2147483648
  %v1420 = vsel %vm1418, %v1412, %v1419
  %vm1421 = vcmp.eq.s32.totalorder %v1416, 2
  %v1422 = vxor.u32 %v1412, 2147483648
  %v1423 = vsel %vm1421, %v1422, %v1413
  %v1424 = vsel %vm1417, %v1420, %v1423
  %v1425 = vsel %vm1414, nan, %v1424
  %v1426 = vand.u32 2147483647, %v467
  %vm1427 = vcmp.le.f32.partialorder %v1426, 0.7853982
  %vm1428 = vcmp.lt.s32.totalorder %v467, 0
  %v1429 = vand.u32 %v467, 2139095040
  %v1430 = vshrl.u32 %v1429, 23
  %v1431 = vsub.s32 %v1430, 127
  %v1432 = vand.u32 2147483647, %v467
  %v1433 = vand.u32 %v1432, 8388607
  %v1434 = vor.u32 %v1433, 8388608
  %v1435 = vsub.s32 0, %v1434
  %v1436 = vadd.s32 %v1431, 1
  %vm1437 = vcmp.gt.s32.totalorder %v1436, 0
  %v1438 = vsel %vm1437, %v1436, 0
  %v1439 = vshrl.u32 %v1438, 5
  %v1440 = vand.u32 %v1438, 31
  %v1441 = vsub.s32 32, %v1440
  %v1442 = vshrl.u32 683565275, %v1441
  %v1443 = vshll.u32 683565275, %v1440
  %v1444 = vshrl.u32 2475754826, %v1441
  %v1445 = vor.u32 %v1443, %v1444
  %v1446 = vshll.u32 2475754826, %v1440
  %v1447 = vshrl.u32 2131351028, %v1441
  %v1448 = vor.u32 %v1446, %v1447
  %v1449 = vshll.u32 2131351028, %v1440
  %v1450 = vshrl.u32 2102212464, %v1441
  %v1451 = vor.u32 %v1449, %v1450
  %v1452 = vshll.u32 2102212464, %v1440
  %v1453 = vshrl.u32 920167782, %v1441
  %v1454 = vor.u32 %v1452, %v1453
  %v1455 = vshll.u32 920167782, %v1440
  %v1456 = vshrl.u32 1326507024, %v1441
  %v1457 = vor.u32 %v1455, %v1456
  %vm1458 = vcmp.lt.s32.totalorder %v1439, 1
  %vm1459 = vcmp.lt.s32.totalorder %v1439, 2
  %vm1460 = vcmp.lt.s32.totalorder %v1439, 3
  %vm1461 = vcmp.lt.s32.totalorder %v1439, 4
  %v1462 = vsel %vm1458, %v1442, %v1445
  %v1463 = vsel %vm1461, %v1451, 2102212464
  %v1464 = vsel %vm1460, %v1448, %v1463
  %v1465 = vsel %vm1459, %v1462, %v1464
  %v1466 = vsel %vm1458, %v1445, %v1448
  %v1467 = vsel %vm1461, %v1454, 920167782
  %v1468 = vsel %vm1460, %v1451, %v1467
  %v1469 = vsel %vm1459, %v1466, %v1468
  %v1470 = vsel %vm1458, %v1448, %v1451
  %v1471 = vsel %vm1461, %v1457, 1326507024
  %v1472 = vsel %vm1460, %v1454, %v1471
  %v1473 = vsel %vm1459, %v1470, %v1472
  %v1474 = vshll.u32 %v1434, 8
  %v1475 = vmul.u32.u64.compose %v1474, %v1473
  %v1476 = vextract.low.u32 %v1475
  %v1477 = vextract.high.u32 %v1475
  %v1478 = vmul.u32.u64.compose %v1474, %v1469
  %v1479 = vextract.low.u32 %v1478
  %v1480 = vextract.high.u32 %v1478
  %v1481 = vmul.u32 %v1474, %v1465
  %v1482 = vadd.s32 %v1477, %v1479
  %vm1483 = vc.u32 %v1477, %v1479
  %v1484 = vadd.s32 %v1480, 1
  %v1485 = vsel %vm1483, %v1484, %v1480
  %v1486 = vadd.s32 %v1481, %v1485
  %v1487 = vadd.s32 %v1486, 536870912
  %v1488 = vshrl.u32 %v1487, 30
  %v1489 = vshll.u32 %v1488, 30
  %v1490 = vsub.s32 %v1486, %v1489
  %vm1491 = vcmp.lt.s32.totalorder %v1490, 0
  %v1492 = vsub.s32 0, %v1490
  %v1493 = vsel %vm1491, %v1492, %v1490
  %v1494 = vclz %v1493
  %v1495 = vsub.s32 %v1494, 2
  %vm1496 = vcmp.gt.s32.totalorder 0, %v1495
  %v1497 = vsel %vm1496, 0, %v1495
  %v1498 = vsub.s32 32, %v1497
  %v1499 = vshll.u32 %v1490, %v1497
  %v1500 = vshrl.u32 %v1482, %v1498
  %v1501 = vor.u32 %v1499, %v1500
  %v1502 = vsub.s32 4294967266, %v1497
  %v1503 = vadd.s32 %v1502, 127
  %v1504 = vshll.u32 %v1503, 23
  %v1505 = vor.u32 4788187, %v1504
  %v1506 = vand.u32 2147483647, %v1505
  %v1508 = vcvt.s32.f32 %v1501
  %v1509 = vmul.f32 %v1508, %v1506
  %v1510 = vxor.u32 %v1509, 2147483648
  %v1511 = vsel %vm1428, %v1510, %v1509
  %v1512 = vsub.s32 4, %v1488
  %v1513 = vsel %vm1428, %v1512, %v1488
  %v1514 = vsel %vm1427, %v467, %v1511
  %v1515 = vsel %vm1427, 0, %v1513
  %v1516 = vcosq.f32.pop %v1514
  %v1517 = vsinq.f32.pop %v1514
  %vm1518 = vweird.f32 %v467
  %v1519 = vadd.s32 %v1515, 3
  %v1520 = vand.u32 %v1519, 3
  %vm1521 = vcmp.lt.s32.totalorder %v1520, 2
  %vm1522 = vcmp.eq.s32.totalorder %v1520, 0
  %v1523 = vxor.u32 %v1517, 2147483648
  %v1524 = vsel %vm1522, %v1516, %v1523
  %vm1525 = vcmp.eq.s32.totalorder %v1520, 2
  %v1526 = vxor.u32 %v1516, 2147483648
  %v1527 = vsel %vm1525, %v1526, %v1517
  %v1528 = vsel %vm1521, %v1524, %v1527
  %v1529 = vsel %vm1518, nan, %v1528
  %v1530 = vand.u32 2147483647, %v468
  %vm1531 = vcmp.le.f32.partialorder %v1530, 0.7853982
  %vm1532 = vcmp.lt.s32.totalorder %v468, 0
  %v1533 = vand.u32 %v468, 2139095040
  %v1534 = vshrl.u32 %v1533, 23
  %v1535 = vsub.s32 %v1534, 127
  %v1536 = vand.u32 2147483647, %v468
  %v1537 = vand.u32 %v1536, 8388607
  %v1538 = vor.u32 %v1537, 8388608
  %v1539 = vsub.s32 0, %v1538
  %v1540 = vadd.s32 %v1535, 1
  %vm1541 = vcmp.gt.s32.totalorder %v1540, 0
  %v1542 = vsel %vm1541, %v1540, 0
  %v1543 = vshrl.u32 %v1542, 5
  %v1544 = vand.u32 %v1542, 31
  %v1545 = vsub.s32 32, %v1544
  %v1546 = vshrl.u32 683565275, %v1545
  %v1547 = vshll.u32 683565275, %v1544
  %v1548 = vshrl.u32 2475754826, %v1545
  %v1549 = vor.u32 %v1547, %v1548
  %v1550 = vshll.u32 2475754826, %v1544
  %v1551 = vshrl.u32 2131351028, %v1545
  %v1552 = vor.u32 %v1550, %v1551
  %v1553 = vshll.u32 2131351028, %v1544
  %v1554 = vshrl.u32 2102212464, %v1545
  %v1555 = vor.u32 %v1553, %v1554
  %v1556 = vshll.u32 2102212464, %v1544
  %v1557 = vshrl.u32 920167782, %v1545
  %v1558 = vor.u32 %v1556, %v1557
  %v1559 = vshll.u32 920167782, %v1544
  %v1560 = vshrl.u32 1326507024, %v1545
  %v1561 = vor.u32 %v1559, %v1560
  %vm1562 = vcmp.lt.s32.totalorder %v1543, 1
  %vm1563 = vcmp.lt.s32.totalorder %v1543, 2
  %vm1564 = vcmp.lt.s32.totalorder %v1543, 3
  %vm1565 = vcmp.lt.s32.totalorder %v1543, 4
  %v1566 = vsel %vm1562, %v1546, %v1549
  %v1567 = vsel %vm1565, %v1555, 2102212464
  %v1568 = vsel %vm1564, %v1552, %v1567
  %v1569 = vsel %vm1563, %v1566, %v1568
  %v1570 = vsel %vm1562, %v1549, %v1552
  %v1571 = vsel %vm1565, %v1558, 920167782
  %v1572 = vsel %vm1564, %v1555, %v1571
  %v1573 = vsel %vm1563, %v1570, %v1572
  %v1574 = vsel %vm1562, %v1552, %v1555
  %v1575 = vsel %vm1565, %v1561, 1326507024
  %v1576 = vsel %vm1564, %v1558, %v1575
  %v1577 = vsel %vm1563, %v1574, %v1576
  %v1578 = vshll.u32 %v1538, 8
  %v1579 = vmul.u32.u64.compose %v1578, %v1577
  %v1580 = vextract.low.u32 %v1579
  %v1581 = vextract.high.u32 %v1579
  %v1582 = vmul.u32.u64.compose %v1578, %v1573
  %v1583 = vextract.low.u32 %v1582
  %v1584 = vextract.high.u32 %v1582
  %v1585 = vmul.u32 %v1578, %v1569
  %v1586 = vadd.s32 %v1581, %v1583
  %vm1587 = vc.u32 %v1581, %v1583
  %v1588 = vadd.s32 %v1584, 1
  %v1589 = vsel %vm1587, %v1588, %v1584
  %v1590 = vadd.s32 %v1585, %v1589
  %v1591 = vadd.s32 %v1590, 536870912
  %v1592 = vshrl.u32 %v1591, 30
  %v1593 = vshll.u32 %v1592, 30
  %v1594 = vsub.s32 %v1590, %v1593
  %vm1595 = vcmp.lt.s32.totalorder %v1594, 0
  %v1596 = vsub.s32 0, %v1594
  %v1597 = vsel %vm1595, %v1596, %v1594
  %v1598 = vclz %v1597
  %v1599 = vsub.s32 %v1598, 2
  %vm1600 = vcmp.gt.s32.totalorder 0, %v1599
  %v1601 = vsel %vm1600, 0, %v1599
  %v1602 = vsub.s32 32, %v1601
  %v1603 = vshll.u32 %v1594, %v1601
  %v1604 = vshrl.u32 %v1586, %v1602
  %v1605 = vor.u32 %v1603, %v1604
  %v1606 = vsub.s32 4294967266, %v1601
  %v1607 = vadd.s32 %v1606, 127
  %v1608 = vshll.u32 %v1607, 23
  %v1609 = vor.u32 4788187, %v1608
  %v1610 = vand.u32 2147483647, %v1609
  %v1612 = vcvt.s32.f32 %v1605
  %v1613 = vmul.f32 %v1612, %v1610
  %v1614 = vxor.u32 %v1613, 2147483648
  %v1615 = vsel %vm1532, %v1614, %v1613
  %v1616 = vsub.s32 4, %v1592
  %v1617 = vsel %vm1532, %v1616, %v1592
  %v1618 = vsel %vm1531, %v468, %v1615
  %v1619 = vsel %vm1531, 0, %v1617
  %v1620 = vcosq.f32.pop %v1618
  %v1621 = vsinq.f32.pop %v1618
  %vm1622 = vweird.f32 %v468
  %v1623 = vadd.s32 %v1619, 3
  %v1624 = vand.u32 %v1623, 3
  %vm1625 = vcmp.lt.s32.totalorder %v1624, 2
  %vm1626 = vcmp.eq.s32.totalorder %v1624, 0
  %v1627 = vxor.u32 %v1621, 2147483648
  %v1628 = vsel %vm1626, %v1620, %v1627
  %vm1629 = vcmp.eq.s32.totalorder %v1624, 2
  %v1630 = vxor.u32 %v1620, 2147483648
  %v1631 = vsel %vm1629, %v1630, %v1621
  %v1632 = vsel %vm1625, %v1628, %v1631
  %v1633 = vsel %vm1622, nan, %v1632
  %v1634 = vand.u32 2147483647, %v469
  %vm1635 = vcmp.le.f32.partialorder %v1634, 0.7853982
  %vm1636 = vcmp.lt.s32.totalorder %v469, 0
  %v1637 = vand.u32 %v469, 2139095040
  %v1638 = vshrl.u32 %v1637, 23
  %v1639 = vsub.s32 %v1638, 127
  %v1640 = vand.u32 2147483647, %v469
  %v1641 = vand.u32 %v1640, 8388607
  %v1642 = vor.u32 %v1641, 8388608
  %v1643 = vsub.s32 0, %v1642
  %v1644 = vadd.s32 %v1639, 1
  %vm1645 = vcmp.gt.s32.totalorder %v1644, 0
  %v1646 = vsel %vm1645, %v1644, 0
  %v1647 = vshrl.u32 %v1646, 5
  %v1648 = vand.u32 %v1646, 31
  %v1649 = vsub.s32 32, %v1648
  %v1650 = vshrl.u32 683565275, %v1649
  %v1651 = vshll.u32 683565275, %v1648
  %v1652 = vshrl.u32 2475754826, %v1649
  %v1653 = vor.u32 %v1651, %v1652
  %v1654 = vshll.u32 2475754826, %v1648
  %v1655 = vshrl.u32 2131351028, %v1649
  %v1656 = vor.u32 %v1654, %v1655
  %v1657 = vshll.u32 2131351028, %v1648
  %v1658 = vshrl.u32 2102212464, %v1649
  %v1659 = vor.u32 %v1657, %v1658
  %v1660 = vshll.u32 2102212464, %v1648
  %v1661 = vshrl.u32 920167782, %v1649
  %v1662 = vor.u32 %v1660, %v1661
  %v1663 = vshll.u32 920167782, %v1648
  %v1664 = vshrl.u32 1326507024, %v1649
  %v1665 = vor.u32 %v1663, %v1664
  %vm1666 = vcmp.lt.s32.totalorder %v1647, 1
  %vm1667 = vcmp.lt.s32.totalorder %v1647, 2
  %vm1668 = vcmp.lt.s32.totalorder %v1647, 3
  %vm1669 = vcmp.lt.s32.totalorder %v1647, 4
  %v1670 = vsel %vm1666, %v1650, %v1653
  %v1671 = vsel %vm1669, %v1659, 2102212464
  %v1672 = vsel %vm1668, %v1656, %v1671
  %v1673 = vsel %vm1667, %v1670, %v1672
  %v1674 = vsel %vm1666, %v1653, %v1656
  %v1675 = vsel %vm1669, %v1662, 920167782
  %v1676 = vsel %vm1668, %v1659, %v1675
  %v1677 = vsel %vm1667, %v1674, %v1676
  %v1678 = vsel %vm1666, %v1656, %v1659
  %v1679 = vsel %vm1669, %v1665, 1326507024
  %v1680 = vsel %vm1668, %v1662, %v1679
  %v1681 = vsel %vm1667, %v1678, %v1680
  %v1682 = vshll.u32 %v1642, 8
  %v1683 = vmul.u32.u64.compose %v1682, %v1681
  %v1684 = vextract.low.u32 %v1683
  %v1685 = vextract.high.u32 %v1683
  %v1686 = vmul.u32.u64.compose %v1682, %v1677
  %v1687 = vextract.low.u32 %v1686
  %v1688 = vextract.high.u32 %v1686
  %v1689 = vmul.u32 %v1682, %v1673
  %v1690 = vadd.s32 %v1685, %v1687
  %vm1691 = vc.u32 %v1685, %v1687
  %v1692 = vadd.s32 %v1688, 1
  %v1693 = vsel %vm1691, %v1692, %v1688
  %v1694 = vadd.s32 %v1689, %v1693
  %v1695 = vadd.s32 %v1694, 536870912
  %v1696 = vshrl.u32 %v1695, 30
  %v1697 = vshll.u32 %v1696, 30
  %v1698 = vsub.s32 %v1694, %v1697
  %vm1699 = vcmp.lt.s32.totalorder %v1698, 0
  %v1700 = vsub.s32 0, %v1698
  %v1701 = vsel %vm1699, %v1700, %v1698
  %v1702 = vclz %v1701
  %v1703 = vsub.s32 %v1702, 2
  %vm1704 = vcmp.gt.s32.totalorder 0, %v1703
  %v1705 = vsel %vm1704, 0, %v1703
  %v1706 = vsub.s32 32, %v1705
  %v1707 = vshll.u32 %v1698, %v1705
  %v1708 = vshrl.u32 %v1690, %v1706
  %v1709 = vor.u32 %v1707, %v1708
  %v1710 = vsub.s32 4294967266, %v1705
  %v1711 = vadd.s32 %v1710, 127
  %v1712 = vshll.u32 %v1711, 23
  %v1713 = vor.u32 4788187, %v1712
  %v1714 = vand.u32 2147483647, %v1713
  %v1716 = vcvt.s32.f32 %v1709
  %v1717 = vmul.f32 %v1716, %v1714
  %v1718 = vxor.u32 %v1717, 2147483648
  %v1719 = vsel %vm1636, %v1718, %v1717
  %v1720 = vsub.s32 4, %v1696
  %v1721 = vsel %vm1636, %v1720, %v1696
  %v1722 = vsel %vm1635, %v469, %v1719
  %v1723 = vsel %vm1635, 0, %v1721
  %v1724 = vcosq.f32.pop %v1722
  %v1725 = vsinq.f32.pop %v1722
  %vm1726 = vweird.f32 %v469
  %v1727 = vadd.s32 %v1723, 3
  %v1728 = vand.u32 %v1727, 3
  %vm1729 = vcmp.lt.s32.totalorder %v1728, 2
  %vm1730 = vcmp.eq.s32.totalorder %v1728, 0
  %v1731 = vxor.u32 %v1725, 2147483648
  %v1732 = vsel %vm1730, %v1724, %v1731
  %vm1733 = vcmp.eq.s32.totalorder %v1728, 2
  %v1734 = vxor.u32 %v1724, 2147483648
  %v1735 = vsel %vm1733, %v1734, %v1725
  %v1736 = vsel %vm1729, %v1732, %v1735
  %v1737 = vsel %vm1726, nan, %v1736
  %v1738 = vand.u32 2147483647, %v470
  %vm1739 = vcmp.le.f32.partialorder %v1738, 0.7853982
  %vm1740 = vcmp.lt.s32.totalorder %v470, 0
  %v1741 = vand.u32 %v470, 2139095040
  %v1742 = vshrl.u32 %v1741, 23
  %v1743 = vsub.s32 %v1742, 127
  %v1744 = vand.u32 2147483647, %v470
  %v1745 = vand.u32 %v1744, 8388607
  %v1746 = vor.u32 %v1745, 8388608
  %v1747 = vsub.s32 0, %v1746
  %v1748 = vadd.s32 %v1743, 1
  %vm1749 = vcmp.gt.s32.totalorder %v1748, 0
  %v1750 = vsel %vm1749, %v1748, 0
  %v1751 = vshrl.u32 %v1750, 5
  %v1752 = vand.u32 %v1750, 31
  %v1753 = vsub.s32 32, %v1752
  %v1754 = vshrl.u32 683565275, %v1753
  %v1755 = vshll.u32 683565275, %v1752
  %v1756 = vshrl.u32 2475754826, %v1753
  %v1757 = vor.u32 %v1755, %v1756
  %v1758 = vshll.u32 2475754826, %v1752
  %v1759 = vshrl.u32 2131351028, %v1753
  %v1760 = vor.u32 %v1758, %v1759
  %v1761 = vshll.u32 2131351028, %v1752
  %v1762 = vshrl.u32 2102212464, %v1753
  %v1763 = vor.u32 %v1761, %v1762
  %v1764 = vshll.u32 2102212464, %v1752
  %v1765 = vshrl.u32 920167782, %v1753
  %v1766 = vor.u32 %v1764, %v1765
  %v1767 = vshll.u32 920167782, %v1752
  %v1768 = vshrl.u32 1326507024, %v1753
  %v1769 = vor.u32 %v1767, %v1768
  %vm1770 = vcmp.lt.s32.totalorder %v1751, 1
  %vm1771 = vcmp.lt.s32.totalorder %v1751, 2
  %vm1772 = vcmp.lt.s32.totalorder %v1751, 3
  %vm1773 = vcmp.lt.s32.totalorder %v1751, 4
  %v1774 = vsel %vm1770, %v1754, %v1757
  %v1775 = vsel %vm1773, %v1763, 2102212464
  %v1776 = vsel %vm1772, %v1760, %v1775
  %v1777 = vsel %vm1771, %v1774, %v1776
  %v1778 = vsel %vm1770, %v1757, %v1760
  %v1779 = vsel %vm1773, %v1766, 920167782
  %v1780 = vsel %vm1772, %v1763, %v1779
  %v1781 = vsel %vm1771, %v1778, %v1780
  %v1782 = vsel %vm1770, %v1760, %v1763
  %v1783 = vsel %vm1773, %v1769, 1326507024
  %v1784 = vsel %vm1772, %v1766, %v1783
  %v1785 = vsel %vm1771, %v1782, %v1784
  %v1786 = vshll.u32 %v1746, 8
  %v1787 = vmul.u32.u64.compose %v1786, %v1785
  %v1788 = vextract.low.u32 %v1787
  %v1789 = vextract.high.u32 %v1787
  %v1790 = vmul.u32.u64.compose %v1786, %v1781
  %v1791 = vextract.low.u32 %v1790
  %v1792 = vextract.high.u32 %v1790
  %v1793 = vmul.u32 %v1786, %v1777
  %v1794 = vadd.s32 %v1789, %v1791
  %vm1795 = vc.u32 %v1789, %v1791
  %v1796 = vadd.s32 %v1792, 1
  %v1797 = vsel %vm1795, %v1796, %v1792
  %v1798 = vadd.s32 %v1793, %v1797
  %v1799 = vadd.s32 %v1798, 536870912
  %v1800 = vshrl.u32 %v1799, 30
  %v1801 = vshll.u32 %v1800, 30
  %v1802 = vsub.s32 %v1798, %v1801
  %vm1803 = vcmp.lt.s32.totalorder %v1802, 0
  %v1804 = vsub.s32 0, %v1802
  %v1805 = vsel %vm1803, %v1804, %v1802
  %v1806 = vclz %v1805
  %v1807 = vsub.s32 %v1806, 2
  %vm1808 = vcmp.gt.s32.totalorder 0, %v1807
  %v1809 = vsel %vm1808, 0, %v1807
  %v1810 = vsub.s32 32, %v1809
  %v1811 = vshll.u32 %v1802, %v1809
  %v1812 = vshrl.u32 %v1794, %v1810
  %v1813 = vor.u32 %v1811, %v1812
  %v1814 = vsub.s32 4294967266, %v1809
  %v1815 = vadd.s32 %v1814, 127
  %v1816 = vshll.u32 %v1815, 23
  %v1817 = vor.u32 4788187, %v1816
  %v1818 = vand.u32 2147483647, %v1817
  %v1820 = vcvt.s32.f32 %v1813
  %v1821 = vmul.f32 %v1820, %v1818
  %v1822 = vxor.u32 %v1821, 2147483648
  %v1823 = vsel %vm1740, %v1822, %v1821
  %v1824 = vsub.s32 4, %v1800
  %v1825 = vsel %vm1740, %v1824, %v1800
  %v1826 = vsel %vm1739, %v470, %v1823
  %v1827 = vsel %vm1739, 0, %v1825
  %v1828 = vcosq.f32.pop %v1826
  %v1829 = vsinq.f32.pop %v1826
  %vm1830 = vweird.f32 %v470
  %v1831 = vadd.s32 %v1827, 3
  %v1832 = vand.u32 %v1831, 3
  %vm1833 = vcmp.lt.s32.totalorder %v1832, 2
  %vm1834 = vcmp.eq.s32.totalorder %v1832, 0
  %v1835 = vxor.u32 %v1829, 2147483648
  %v1836 = vsel %vm1834, %v1828, %v1835
  %vm1837 = vcmp.eq.s32.totalorder %v1832, 2
  %v1838 = vxor.u32 %v1828, 2147483648
  %v1839 = vsel %vm1837, %v1838, %v1829
  %v1840 = vsel %vm1833, %v1836, %v1839
  %v1841 = vsel %vm1830, nan, %v1840
  %v1842 = vand.u32 2147483647, %v471
  %vm1843 = vcmp.le.f32.partialorder %v1842, 0.7853982
  %vm1844 = vcmp.lt.s32.totalorder %v471, 0
  %v1845 = vand.u32 %v471, 2139095040
  %v1846 = vshrl.u32 %v1845, 23
  %v1847 = vsub.s32 %v1846, 127
  %v1848 = vand.u32 2147483647, %v471
  %v1849 = vand.u32 %v1848, 8388607
  %v1850 = vor.u32 %v1849, 8388608
  %v1851 = vsub.s32 0, %v1850
  %v1852 = vadd.s32 %v1847, 1
  %vm1853 = vcmp.gt.s32.totalorder %v1852, 0
  %v1854 = vsel %vm1853, %v1852, 0
  %v1855 = vshrl.u32 %v1854, 5
  %v1856 = vand.u32 %v1854, 31
  %v1857 = vsub.s32 32, %v1856
  %v1858 = vshrl.u32 683565275, %v1857
  %v1859 = vshll.u32 683565275, %v1856
  %v1860 = vshrl.u32 2475754826, %v1857
  %v1861 = vor.u32 %v1859, %v1860
  %v1862 = vshll.u32 2475754826, %v1856
  %v1863 = vshrl.u32 2131351028, %v1857
  %v1864 = vor.u32 %v1862, %v1863
  %v1865 = vshll.u32 2131351028, %v1856
  %v1866 = vshrl.u32 2102212464, %v1857
  %v1867 = vor.u32 %v1865, %v1866
  %v1868 = vshll.u32 2102212464, %v1856
  %v1869 = vshrl.u32 920167782, %v1857
  %v1870 = vor.u32 %v1868, %v1869
  %v1871 = vshll.u32 920167782, %v1856
  %v1872 = vshrl.u32 1326507024, %v1857
  %v1873 = vor.u32 %v1871, %v1872
  %vm1874 = vcmp.lt.s32.totalorder %v1855, 1
  %vm1875 = vcmp.lt.s32.totalorder %v1855, 2
  %vm1876 = vcmp.lt.s32.totalorder %v1855, 3
  %vm1877 = vcmp.lt.s32.totalorder %v1855, 4
  %v1878 = vsel %vm1874, %v1858, %v1861
  %v1879 = vsel %vm1877, %v1867, 2102212464
  %v1880 = vsel %vm1876, %v1864, %v1879
  %v1881 = vsel %vm1875, %v1878, %v1880
  %v1882 = vsel %vm1874, %v1861, %v1864
  %v1883 = vsel %vm1877, %v1870, 920167782
  %v1884 = vsel %vm1876, %v1867, %v1883
  %v1885 = vsel %vm1875, %v1882, %v1884
  %v1886 = vsel %vm1874, %v1864, %v1867
  %v1887 = vsel %vm1877, %v1873, 1326507024
  %v1888 = vsel %vm1876, %v1870, %v1887
  %v1889 = vsel %vm1875, %v1886, %v1888
  %v1890 = vshll.u32 %v1850, 8
  %v1891 = vmul.u32.u64.compose %v1890, %v1889
  %v1892 = vextract.low.u32 %v1891
  %v1893 = vextract.high.u32 %v1891
  %v1894 = vmul.u32.u64.compose %v1890, %v1885
  %v1895 = vextract.low.u32 %v1894
  %v1896 = vextract.high.u32 %v1894
  %v1897 = vmul.u32 %v1890, %v1881
  %v1898 = vadd.s32 %v1893, %v1895
  %vm1899 = vc.u32 %v1893, %v1895
  %v1900 = vadd.s32 %v1896, 1
  %v1901 = vsel %vm1899, %v1900, %v1896
  %v1902 = vadd.s32 %v1897, %v1901
  %v1903 = vadd.s32 %v1902, 536870912
  %v1904 = vshrl.u32 %v1903, 30
  %v1905 = vshll.u32 %v1904, 30
  %v1906 = vsub.s32 %v1902, %v1905
  %vm1907 = vcmp.lt.s32.totalorder %v1906, 0
  %v1908 = vsub.s32 0, %v1906
  %v1909 = vsel %vm1907, %v1908, %v1906
  %v1910 = vclz %v1909
  %v1911 = vsub.s32 %v1910, 2
  %vm1912 = vcmp.gt.s32.totalorder 0, %v1911
  %v1913 = vsel %vm1912, 0, %v1911
  %v1914 = vsub.s32 32, %v1913
  %v1915 = vshll.u32 %v1906, %v1913
  %v1916 = vshrl.u32 %v1898, %v1914
  %v1917 = vor.u32 %v1915, %v1916
  %v1918 = vsub.s32 4294967266, %v1913
  %v1919 = vadd.s32 %v1918, 127
  %v1920 = vshll.u32 %v1919, 23
  %v1921 = vor.u32 4788187, %v1920
  %v1922 = vand.u32 2147483647, %v1921
  %v1924 = vcvt.s32.f32 %v1917
  %v1925 = vmul.f32 %v1924, %v1922
  %v1926 = vxor.u32 %v1925, 2147483648
  %v1927 = vsel %vm1844, %v1926, %v1925
  %v1928 = vsub.s32 4, %v1904
  %v1929 = vsel %vm1844, %v1928, %v1904
  %v1930 = vsel %vm1843, %v471, %v1927
  %v1931 = vsel %vm1843, 0, %v1929
  %v1932 = vcosq.f32.pop %v1930
  %v1933 = vsinq.f32.pop %v1930
  %vm1934 = vweird.f32 %v471
  %v1935 = vadd.s32 %v1931, 3
  %v1936 = vand.u32 %v1935, 3
  %vm1937 = vcmp.lt.s32.totalorder %v1936, 2
  %vm1938 = vcmp.eq.s32.totalorder %v1936, 0
  %v1939 = vxor.u32 %v1933, 2147483648
  %v1940 = vsel %vm1938, %v1932, %v1939
  %vm1941 = vcmp.eq.s32.totalorder %v1936, 2
  %v1942 = vxor.u32 %v1932, 2147483648
  %v1943 = vsel %vm1941, %v1942, %v1933
  %v1944 = vsel %vm1937, %v1940, %v1943
  %v1945 = vsel %vm1934, nan, %v1944
  %v1946 = vand.u32 2147483647, %v472
  %vm1947 = vcmp.le.f32.partialorder %v1946, 0.7853982
  %vm1948 = vcmp.lt.s32.totalorder %v472, 0
  %v1949 = vand.u32 %v472, 2139095040
  %v1950 = vshrl.u32 %v1949, 23
  %v1951 = vsub.s32 %v1950, 127
  %v1952 = vand.u32 2147483647, %v472
  %v1953 = vand.u32 %v1952, 8388607
  %v1954 = vor.u32 %v1953, 8388608
  %v1955 = vsub.s32 0, %v1954
  %v1956 = vadd.s32 %v1951, 1
  %vm1957 = vcmp.gt.s32.totalorder %v1956, 0
  %v1958 = vsel %vm1957, %v1956, 0
  %v1959 = vshrl.u32 %v1958, 5
  %v1960 = vand.u32 %v1958, 31
  %v1961 = vsub.s32 32, %v1960
  %v1962 = vshrl.u32 683565275, %v1961
  %v1963 = vshll.u32 683565275, %v1960
  %v1964 = vshrl.u32 2475754826, %v1961
  %v1965 = vor.u32 %v1963, %v1964
  %v1966 = vshll.u32 2475754826, %v1960
  %v1967 = vshrl.u32 2131351028, %v1961
  %v1968 = vor.u32 %v1966, %v1967
  %v1969 = vshll.u32 2131351028, %v1960
  %v1970 = vshrl.u32 2102212464, %v1961
  %v1971 = vor.u32 %v1969, %v1970
  %v1972 = vshll.u32 2102212464, %v1960
  %v1973 = vshrl.u32 920167782, %v1961
  %v1974 = vor.u32 %v1972, %v1973
  %v1975 = vshll.u32 920167782, %v1960
  %v1976 = vshrl.u32 1326507024, %v1961
  %v1977 = vor.u32 %v1975, %v1976
  %vm1978 = vcmp.lt.s32.totalorder %v1959, 1
  %vm1979 = vcmp.lt.s32.totalorder %v1959, 2
  %vm1980 = vcmp.lt.s32.totalorder %v1959, 3
  %vm1981 = vcmp.lt.s32.totalorder %v1959, 4
  %v1982 = vsel %vm1978, %v1962, %v1965
  %v1983 = vsel %vm1981, %v1971, 2102212464
  %v1984 = vsel %vm1980, %v1968, %v1983
  %v1985 = vsel %vm1979, %v1982, %v1984
  %v1986 = vsel %vm1978, %v1965, %v1968
  %v1987 = vsel %vm1981, %v1974, 920167782
  %v1988 = vsel %vm1980, %v1971, %v1987
  %v1989 = vsel %vm1979, %v1986, %v1988
  %v1990 = vsel %vm1978, %v1968, %v1971
  %v1991 = vsel %vm1981, %v1977, 1326507024
  %v1992 = vsel %vm1980, %v1974, %v1991
  %v1993 = vsel %vm1979, %v1990, %v1992
  %v1994 = vshll.u32 %v1954, 8
  %v1995 = vmul.u32.u64.compose %v1994, %v1993
  %v1996 = vextract.low.u32 %v1995
  %v1997 = vextract.high.u32 %v1995
  %v1998 = vmul.u32.u64.compose %v1994, %v1989
  %v1999 = vextract.low.u32 %v1998
  %v2000 = vextract.high.u32 %v1998
  %v2001 = vmul.u32 %v1994, %v1985
  %v2002 = vadd.s32 %v1997, %v1999
  %vm2003 = vc.u32 %v1997, %v1999
  %v2004 = vadd.s32 %v2000, 1
  %v2005 = vsel %vm2003, %v2004, %v2000
  %v2006 = vadd.s32 %v2001, %v2005
  %v2007 = vadd.s32 %v2006, 536870912
  %v2008 = vshrl.u32 %v2007, 30
  %v2009 = vshll.u32 %v2008, 30
  %v2010 = vsub.s32 %v2006, %v2009
  %vm2011 = vcmp.lt.s32.totalorder %v2010, 0
  %v2012 = vsub.s32 0, %v2010
  %v2013 = vsel %vm2011, %v2012, %v2010
  %v2014 = vclz %v2013
  %v2015 = vsub.s32 %v2014, 2
  %vm2016 = vcmp.gt.s32.totalorder 0, %v2015
  %v2017 = vsel %vm2016, 0, %v2015
  %v2018 = vsub.s32 32, %v2017
  %v2019 = vshll.u32 %v2010, %v2017
  %v2020 = vshrl.u32 %v2002, %v2018
  %v2021 = vor.u32 %v2019, %v2020
  %v2022 = vsub.s32 4294967266, %v2017
  %v2023 = vadd.s32 %v2022, 127
  %v2024 = vshll.u32 %v2023, 23
  %v2025 = vor.u32 4788187, %v2024
  %v2026 = vand.u32 2147483647, %v2025
  %v2028 = vcvt.s32.f32 %v2021
  %v2029 = vmul.f32 %v2028, %v2026
  %v2030 = vxor.u32 %v2029, 2147483648
  %v2031 = vsel %vm1948, %v2030, %v2029
  %v2032 = vsub.s32 4, %v2008
  %v2033 = vsel %vm1948, %v2032, %v2008
  %v2034 = vsel %vm1947, %v472, %v2031
  %v2035 = vsel %vm1947, 0, %v2033
  %v2036 = vcosq.f32.pop %v2034
  %v2037 = vsinq.f32.pop %v2034
  %vm2038 = vweird.f32 %v472
  %v2039 = vadd.s32 %v2035, 3
  %v2040 = vand.u32 %v2039, 3
  %vm2041 = vcmp.lt.s32.totalorder %v2040, 2
  %vm2042 = vcmp.eq.s32.totalorder %v2040, 0
  %v2043 = vxor.u32 %v2037, 2147483648
  %v2044 = vsel %vm2042, %v2036, %v2043
  %vm2045 = vcmp.eq.s32.totalorder %v2040, 2
  %v2046 = vxor.u32 %v2036, 2147483648
  %v2047 = vsel %vm2045, %v2046, %v2037
  %v2048 = vsel %vm2041, %v2044, %v2047
  %v2049 = vsel %vm2038, nan, %v2048
  %v2050 = vand.u32 2147483647, %v473
  %vm2051 = vcmp.le.f32.partialorder %v2050, 0.7853982
  %vm2052 = vcmp.lt.s32.totalorder %v473, 0
  %v2053 = vand.u32 %v473, 2139095040
  %v2054 = vshrl.u32 %v2053, 23
  %v2055 = vsub.s32 %v2054, 127
  %v2056 = vand.u32 2147483647, %v473
  %v2057 = vand.u32 %v2056, 8388607
  %v2058 = vor.u32 %v2057, 8388608
  %v2059 = vsub.s32 0, %v2058
  %v2060 = vadd.s32 %v2055, 1
  %vm2061 = vcmp.gt.s32.totalorder %v2060, 0
  %v2062 = vsel %vm2061, %v2060, 0
  %v2063 = vshrl.u32 %v2062, 5
  %v2064 = vand.u32 %v2062, 31
  %v2065 = vsub.s32 32, %v2064
  %v2066 = vshrl.u32 683565275, %v2065
  %v2067 = vshll.u32 683565275, %v2064
  %v2068 = vshrl.u32 2475754826, %v2065
  %v2069 = vor.u32 %v2067, %v2068
  %v2070 = vshll.u32 2475754826, %v2064
  %v2071 = vshrl.u32 2131351028, %v2065
  %v2072 = vor.u32 %v2070, %v2071
  %v2073 = vshll.u32 2131351028, %v2064
  %v2074 = vshrl.u32 2102212464, %v2065
  %v2075 = vor.u32 %v2073, %v2074
  %v2076 = vshll.u32 2102212464, %v2064
  %v2077 = vshrl.u32 920167782, %v2065
  %v2078 = vor.u32 %v2076, %v2077
  %v2079 = vshll.u32 920167782, %v2064
  %v2080 = vshrl.u32 1326507024, %v2065
  %v2081 = vor.u32 %v2079, %v2080
  %vm2082 = vcmp.lt.s32.totalorder %v2063, 1
  %vm2083 = vcmp.lt.s32.totalorder %v2063, 2
  %vm2084 = vcmp.lt.s32.totalorder %v2063, 3
  %vm2085 = vcmp.lt.s32.totalorder %v2063, 4
  %v2086 = vsel %vm2082, %v2066, %v2069
  %v2087 = vsel %vm2085, %v2075, 2102212464
  %v2088 = vsel %vm2084, %v2072, %v2087
  %v2089 = vsel %vm2083, %v2086, %v2088
  %v2090 = vsel %vm2082, %v2069, %v2072
  %v2091 = vsel %vm2085, %v2078, 920167782
  %v2092 = vsel %vm2084, %v2075, %v2091
  %v2093 = vsel %vm2083, %v2090, %v2092
  %v2094 = vsel %vm2082, %v2072, %v2075
  %v2095 = vsel %vm2085, %v2081, 1326507024
  %v2096 = vsel %vm2084, %v2078, %v2095
  %v2097 = vsel %vm2083, %v2094, %v2096
  %v2098 = vshll.u32 %v2058, 8
  %v2099 = vmul.u32.u64.compose %v2098, %v2097
  %v2100 = vextract.low.u32 %v2099
  %v2101 = vextract.high.u32 %v2099
  %v2102 = vmul.u32.u64.compose %v2098, %v2093
  %v2103 = vextract.low.u32 %v2102
  %v2104 = vextract.high.u32 %v2102
  %v2105 = vmul.u32 %v2098, %v2089
  %v2106 = vadd.s32 %v2101, %v2103
  %vm2107 = vc.u32 %v2101, %v2103
  %v2108 = vadd.s32 %v2104, 1
  %v2109 = vsel %vm2107, %v2108, %v2104
  %v2110 = vadd.s32 %v2105, %v2109
  %v2111 = vadd.s32 %v2110, 536870912
  %v2112 = vshrl.u32 %v2111, 30
  %v2113 = vshll.u32 %v2112, 30
  %v2114 = vsub.s32 %v2110, %v2113
  %vm2115 = vcmp.lt.s32.totalorder %v2114, 0
  %v2116 = vsub.s32 0, %v2114
  %v2117 = vsel %vm2115, %v2116, %v2114
  %v2118 = vclz %v2117
  %v2119 = vsub.s32 %v2118, 2
  %vm2120 = vcmp.gt.s32.totalorder 0, %v2119
  %v2121 = vsel %vm2120, 0, %v2119
  %v2122 = vsub.s32 32, %v2121
  %v2123 = vshll.u32 %v2114, %v2121
  %v2124 = vshrl.u32 %v2106, %v2122
  %v2125 = vor.u32 %v2123, %v2124
  %v2126 = vsub.s32 4294967266, %v2121
  %v2127 = vadd.s32 %v2126, 127
  %v2128 = vshll.u32 %v2127, 23
  %v2129 = vor.u32 4788187, %v2128
  %v2130 = vand.u32 2147483647, %v2129
  %v2132 = vcvt.s32.f32 %v2125
  %v2133 = vmul.f32 %v2132, %v2130
  %v2134 = vxor.u32 %v2133, 2147483648
  %v2135 = vsel %vm2052, %v2134, %v2133
  %v2136 = vsub.s32 4, %v2112
  %v2137 = vsel %vm2052, %v2136, %v2112
  %v2138 = vsel %vm2051, %v473, %v2135
  %v2139 = vsel %vm2051, 0, %v2137
  %v2140 = vcosq.f32.pop %v2138
  %v2141 = vsinq.f32.pop %v2138
  %vm2142 = vweird.f32 %v473
  %v2143 = vadd.s32 %v2139, 3
  %v2144 = vand.u32 %v2143, 3
  %vm2145 = vcmp.lt.s32.totalorder %v2144, 2
  %vm2146 = vcmp.eq.s32.totalorder %v2144, 0
  %v2147 = vxor.u32 %v2141, 2147483648
  %v2148 = vsel %vm2146, %v2140, %v2147
  %vm2149 = vcmp.eq.s32.totalorder %v2144, 2
  %v2150 = vxor.u32 %v2140, 2147483648
  %v2151 = vsel %vm2149, %v2150, %v2141
  %v2152 = vsel %vm2145, %v2148, %v2151
  %v2153 = vsel %vm2142, nan, %v2152
  %v2154 = vand.u32 2147483647, %v474
  %vm2155 = vcmp.le.f32.partialorder %v2154, 0.7853982
  %vm2156 = vcmp.lt.s32.totalorder %v474, 0
  %v2157 = vand.u32 %v474, 2139095040
  %v2158 = vshrl.u32 %v2157, 23
  %v2159 = vsub.s32 %v2158, 127
  %v2160 = vand.u32 2147483647, %v474
  %v2161 = vand.u32 %v2160, 8388607
  %v2162 = vor.u32 %v2161, 8388608
  %v2163 = vsub.s32 0, %v2162
  %v2164 = vadd.s32 %v2159, 1
  %vm2165 = vcmp.gt.s32.totalorder %v2164, 0
  %v2166 = vsel %vm2165, %v2164, 0
  %v2167 = vshrl.u32 %v2166, 5
  %v2168 = vand.u32 %v2166, 31
  %v2169 = vsub.s32 32, %v2168
  %v2170 = vshrl.u32 683565275, %v2169
  %v2171 = vshll.u32 683565275, %v2168
  %v2172 = vshrl.u32 2475754826, %v2169
  %v2173 = vor.u32 %v2171, %v2172
  %v2174 = vshll.u32 2475754826, %v2168
  %v2175 = vshrl.u32 2131351028, %v2169
  %v2176 = vor.u32 %v2174, %v2175
  %v2177 = vshll.u32 2131351028, %v2168
  %v2178 = vshrl.u32 2102212464, %v2169
  %v2179 = vor.u32 %v2177, %v2178
  %v2180 = vshll.u32 2102212464, %v2168
  %v2181 = vshrl.u32 920167782, %v2169
  %v2182 = vor.u32 %v2180, %v2181
  %v2183 = vshll.u32 920167782, %v2168
  %v2184 = vshrl.u32 1326507024, %v2169
  %v2185 = vor.u32 %v2183, %v2184
  %vm2186 = vcmp.lt.s32.totalorder %v2167, 1
  %vm2187 = vcmp.lt.s32.totalorder %v2167, 2
  %vm2188 = vcmp.lt.s32.totalorder %v2167, 3
  %vm2189 = vcmp.lt.s32.totalorder %v2167, 4
  %v2190 = vsel %vm2186, %v2170, %v2173
  %v2191 = vsel %vm2189, %v2179, 2102212464
  %v2192 = vsel %vm2188, %v2176, %v2191
  %v2193 = vsel %vm2187, %v2190, %v2192
  %v2194 = vsel %vm2186, %v2173, %v2176
  %v2195 = vsel %vm2189, %v2182, 920167782
  %v2196 = vsel %vm2188, %v2179, %v2195
  %v2197 = vsel %vm2187, %v2194, %v2196
  %v2198 = vsel %vm2186, %v2176, %v2179
  %v2199 = vsel %vm2189, %v2185, 1326507024
  %v2200 = vsel %vm2188, %v2182, %v2199
  %v2201 = vsel %vm2187, %v2198, %v2200
  %v2202 = vshll.u32 %v2162, 8
  %v2203 = vmul.u32.u64.compose %v2202, %v2201
  %v2204 = vextract.low.u32 %v2203
  %v2205 = vextract.high.u32 %v2203
  %v2206 = vmul.u32.u64.compose %v2202, %v2197
  %v2207 = vextract.low.u32 %v2206
  %v2208 = vextract.high.u32 %v2206
  %v2209 = vmul.u32 %v2202, %v2193
  %v2210 = vadd.s32 %v2205, %v2207
  %vm2211 = vc.u32 %v2205, %v2207
  %v2212 = vadd.s32 %v2208, 1
  %v2213 = vsel %vm2211, %v2212, %v2208
  %v2214 = vadd.s32 %v2209, %v2213
  %v2215 = vadd.s32 %v2214, 536870912
  %v2216 = vshrl.u32 %v2215, 30
  %v2217 = vshll.u32 %v2216, 30
  %v2218 = vsub.s32 %v2214, %v2217
  %vm2219 = vcmp.lt.s32.totalorder %v2218, 0
  %v2220 = vsub.s32 0, %v2218
  %v2221 = vsel %vm2219, %v2220, %v2218
  %v2222 = vclz %v2221
  %v2223 = vsub.s32 %v2222, 2
  %vm2224 = vcmp.gt.s32.totalorder 0, %v2223
  %v2225 = vsel %vm2224, 0, %v2223
  %v2226 = vsub.s32 32, %v2225
  %v2227 = vshll.u32 %v2218, %v2225
  %v2228 = vshrl.u32 %v2210, %v2226
  %v2229 = vor.u32 %v2227, %v2228
  %v2230 = vsub.s32 4294967266, %v2225
  %v2231 = vadd.s32 %v2230, 127
  %v2232 = vshll.u32 %v2231, 23
  %v2233 = vor.u32 4788187, %v2232
  %v2234 = vand.u32 2147483647, %v2233
  %v2236 = vcvt.s32.f32 %v2229
  %v2237 = vmul.f32 %v2236, %v2234
  %v2238 = vxor.u32 %v2237, 2147483648
  %v2239 = vsel %vm2156, %v2238, %v2237
  %v2240 = vsub.s32 4, %v2216
  %v2241 = vsel %vm2156, %v2240, %v2216
  %v2242 = vsel %vm2155, %v474, %v2239
  %v2243 = vsel %vm2155, 0, %v2241
  %v2244 = vcosq.f32.pop %v2242
  %v2245 = vsinq.f32.pop %v2242
  %vm2246 = vweird.f32 %v474
  %v2247 = vadd.s32 %v2243, 3
  %v2248 = vand.u32 %v2247, 3
  %vm2249 = vcmp.lt.s32.totalorder %v2248, 2
  %vm2250 = vcmp.eq.s32.totalorder %v2248, 0
  %v2251 = vxor.u32 %v2245, 2147483648
  %v2252 = vsel %vm2250, %v2244, %v2251
  %vm2253 = vcmp.eq.s32.totalorder %v2248, 2
  %v2254 = vxor.u32 %v2244, 2147483648
  %v2255 = vsel %vm2253, %v2254, %v2245
  %v2256 = vsel %vm2249, %v2252, %v2255
  %v2257 = vsel %vm2246, nan, %v2256
  %v2258 = vand.u32 2147483647, %v475
  %vm2259 = vcmp.le.f32.partialorder %v2258, 0.7853982
  %vm2260 = vcmp.lt.s32.totalorder %v475, 0
  %v2261 = vand.u32 %v475, 2139095040
  %v2262 = vshrl.u32 %v2261, 23
  %v2263 = vsub.s32 %v2262, 127
  %v2264 = vand.u32 2147483647, %v475
  %v2265 = vand.u32 %v2264, 8388607
  %v2266 = vor.u32 %v2265, 8388608
  %v2267 = vsub.s32 0, %v2266
  %v2268 = vadd.s32 %v2263, 1
  %vm2269 = vcmp.gt.s32.totalorder %v2268, 0
  %v2270 = vsel %vm2269, %v2268, 0
  %v2271 = vshrl.u32 %v2270, 5
  %v2272 = vand.u32 %v2270, 31
  %v2273 = vsub.s32 32, %v2272
  %v2274 = vshrl.u32 683565275, %v2273
  %v2275 = vshll.u32 683565275, %v2272
  %v2276 = vshrl.u32 2475754826, %v2273
  %v2277 = vor.u32 %v2275, %v2276
  %v2278 = vshll.u32 2475754826, %v2272
  %v2279 = vshrl.u32 2131351028, %v2273
  %v2280 = vor.u32 %v2278, %v2279
  %v2281 = vshll.u32 2131351028, %v2272
  %v2282 = vshrl.u32 2102212464, %v2273
  %v2283 = vor.u32 %v2281, %v2282
  %v2284 = vshll.u32 2102212464, %v2272
  %v2285 = vshrl.u32 920167782, %v2273
  %v2286 = vor.u32 %v2284, %v2285
  %v2287 = vshll.u32 920167782, %v2272
  %v2288 = vshrl.u32 1326507024, %v2273
  %v2289 = vor.u32 %v2287, %v2288
  %vm2290 = vcmp.lt.s32.totalorder %v2271, 1
  %vm2291 = vcmp.lt.s32.totalorder %v2271, 2
  %vm2292 = vcmp.lt.s32.totalorder %v2271, 3
  %vm2293 = vcmp.lt.s32.totalorder %v2271, 4
  %v2294 = vsel %vm2290, %v2274, %v2277
  %v2295 = vsel %vm2293, %v2283, 2102212464
  %v2296 = vsel %vm2292, %v2280, %v2295
  %v2297 = vsel %vm2291, %v2294, %v2296
  %v2298 = vsel %vm2290, %v2277, %v2280
  %v2299 = vsel %vm2293, %v2286, 920167782
  %v2300 = vsel %vm2292, %v2283, %v2299
  %v2301 = vsel %vm2291, %v2298, %v2300
  %v2302 = vsel %vm2290, %v2280, %v2283
  %v2303 = vsel %vm2293, %v2289, 1326507024
  %v2304 = vsel %vm2292, %v2286, %v2303
  %v2305 = vsel %vm2291, %v2302, %v2304
  %v2306 = vshll.u32 %v2266, 8
  %v2307 = vmul.u32.u64.compose %v2306, %v2305
  %v2308 = vextract.low.u32 %v2307
  %v2309 = vextract.high.u32 %v2307
  %v2310 = vmul.u32.u64.compose %v2306, %v2301
  %v2311 = vextract.low.u32 %v2310
  %v2312 = vextract.high.u32 %v2310
  %v2313 = vmul.u32 %v2306, %v2297
  %v2314 = vadd.s32 %v2309, %v2311
  %vm2315 = vc.u32 %v2309, %v2311
  %v2316 = vadd.s32 %v2312, 1
  %v2317 = vsel %vm2315, %v2316, %v2312
  %v2318 = vadd.s32 %v2313, %v2317
  %v2319 = vadd.s32 %v2318, 536870912
  %v2320 = vshrl.u32 %v2319, 30
  %v2321 = vshll.u32 %v2320, 30
  %v2322 = vsub.s32 %v2318, %v2321
  %vm2323 = vcmp.lt.s32.totalorder %v2322, 0
  %v2324 = vsub.s32 0, %v2322
  %v2325 = vsel %vm2323, %v2324, %v2322
  %v2326 = vclz %v2325
  %v2327 = vsub.s32 %v2326, 2
  %vm2328 = vcmp.gt.s32.totalorder 0, %v2327
  %v2329 = vsel %vm2328, 0, %v2327
  %v2330 = vsub.s32 32, %v2329
  %v2331 = vshll.u32 %v2322, %v2329
  %v2332 = vshrl.u32 %v2314, %v2330
  %v2333 = vor.u32 %v2331, %v2332
  %v2334 = vsub.s32 4294967266, %v2329
  %v2335 = vadd.s32 %v2334, 127
  %v2336 = vshll.u32 %v2335, 23
  %v2337 = vor.u32 4788187, %v2336
  %v2338 = vand.u32 2147483647, %v2337
  %v2340 = vcvt.s32.f32 %v2333
  %v2341 = vmul.f32 %v2340, %v2338
  %v2342 = vxor.u32 %v2341, 2147483648
  %v2343 = vsel %vm2260, %v2342, %v2341
  %v2344 = vsub.s32 4, %v2320
  %v2345 = vsel %vm2260, %v2344, %v2320
  %v2346 = vsel %vm2259, %v475, %v2343
  %v2347 = vsel %vm2259, 0, %v2345
  %v2348 = vcosq.f32.pop %v2346
  %v2349 = vsinq.f32.pop %v2346
  %vm2350 = vweird.f32 %v475
  %v2351 = vadd.s32 %v2347, 3
  %v2352 = vand.u32 %v2351, 3
  %vm2353 = vcmp.lt.s32.totalorder %v2352, 2
  %vm2354 = vcmp.eq.s32.totalorder %v2352, 0
  %v2355 = vxor.u32 %v2349, 2147483648
  %v2356 = vsel %vm2354, %v2348, %v2355
  %vm2357 = vcmp.eq.s32.totalorder %v2352, 2
  %v2358 = vxor.u32 %v2348, 2147483648
  %v2359 = vsel %vm2357, %v2358, %v2349
  %v2360 = vsel %vm2353, %v2356, %v2359
  %v2361 = vsel %vm2350, nan, %v2360
  %v2362 = vand.u32 2147483647, %v476
  %vm2363 = vcmp.le.f32.partialorder %v2362, 0.7853982
  %vm2364 = vcmp.lt.s32.totalorder %v476, 0
  %v2365 = vand.u32 %v476, 2139095040
  %v2366 = vshrl.u32 %v2365, 23
  %v2367 = vsub.s32 %v2366, 127
  %v2368 = vand.u32 2147483647, %v476
  %v2369 = vand.u32 %v2368, 8388607
  %v2370 = vor.u32 %v2369, 8388608
  %v2371 = vsub.s32 0, %v2370
  %v2372 = vadd.s32 %v2367, 1
  %vm2373 = vcmp.gt.s32.totalorder %v2372, 0
  %v2374 = vsel %vm2373, %v2372, 0
  %v2375 = vshrl.u32 %v2374, 5
  %v2376 = vand.u32 %v2374, 31
  %v2377 = vsub.s32 32, %v2376
  %v2378 = vshrl.u32 683565275, %v2377
  %v2379 = vshll.u32 683565275, %v2376
  %v2380 = vshrl.u32 2475754826, %v2377
  %v2381 = vor.u32 %v2379, %v2380
  %v2382 = vshll.u32 2475754826, %v2376
  %v2383 = vshrl.u32 2131351028, %v2377
  %v2384 = vor.u32 %v2382, %v2383
  %v2385 = vshll.u32 2131351028, %v2376
  %v2386 = vshrl.u32 2102212464, %v2377
  %v2387 = vor.u32 %v2385, %v2386
  %v2388 = vshll.u32 2102212464, %v2376
  %v2389 = vshrl.u32 920167782, %v2377
  %v2390 = vor.u32 %v2388, %v2389
  %v2391 = vshll.u32 920167782, %v2376
  %v2392 = vshrl.u32 1326507024, %v2377
  %v2393 = vor.u32 %v2391, %v2392
  %vm2394 = vcmp.lt.s32.totalorder %v2375, 1
  %vm2395 = vcmp.lt.s32.totalorder %v2375, 2
  %vm2396 = vcmp.lt.s32.totalorder %v2375, 3
  %vm2397 = vcmp.lt.s32.totalorder %v2375, 4
  %v2398 = vsel %vm2394, %v2378, %v2381
  %v2399 = vsel %vm2397, %v2387, 2102212464
  %v2400 = vsel %vm2396, %v2384, %v2399
  %v2401 = vsel %vm2395, %v2398, %v2400
  %v2402 = vsel %vm2394, %v2381, %v2384
  %v2403 = vsel %vm2397, %v2390, 920167782
  %v2404 = vsel %vm2396, %v2387, %v2403
  %v2405 = vsel %vm2395, %v2402, %v2404
  %v2406 = vsel %vm2394, %v2384, %v2387
  %v2407 = vsel %vm2397, %v2393, 1326507024
  %v2408 = vsel %vm2396, %v2390, %v2407
  %v2409 = vsel %vm2395, %v2406, %v2408
  %v2410 = vshll.u32 %v2370, 8
  %v2411 = vmul.u32.u64.compose %v2410, %v2409
  %v2412 = vextract.low.u32 %v2411
  %v2413 = vextract.high.u32 %v2411
  %v2414 = vmul.u32.u64.compose %v2410, %v2405
  %v2415 = vextract.low.u32 %v2414
  %v2416 = vextract.high.u32 %v2414
  %v2417 = vmul.u32 %v2410, %v2401
  %v2418 = vadd.s32 %v2413, %v2415
  %vm2419 = vc.u32 %v2413, %v2415
  %v2420 = vadd.s32 %v2416, 1
  %v2421 = vsel %vm2419, %v2420, %v2416
  %v2422 = vadd.s32 %v2417, %v2421
  %v2423 = vadd.s32 %v2422, 536870912
  %v2424 = vshrl.u32 %v2423, 30
  %v2425 = vshll.u32 %v2424, 30
  %v2426 = vsub.s32 %v2422, %v2425
  %vm2427 = vcmp.lt.s32.totalorder %v2426, 0
  %v2428 = vsub.s32 0, %v2426
  %v2429 = vsel %vm2427, %v2428, %v2426
  %v2430 = vclz %v2429
  %v2431 = vsub.s32 %v2430, 2
  %vm2432 = vcmp.gt.s32.totalorder 0, %v2431
  %v2433 = vsel %vm2432, 0, %v2431
  %v2434 = vsub.s32 32, %v2433
  %v2435 = vshll.u32 %v2426, %v2433
  %v2436 = vshrl.u32 %v2418, %v2434
  %v2437 = vor.u32 %v2435, %v2436
  %v2438 = vsub.s32 4294967266, %v2433
  %v2439 = vadd.s32 %v2438, 127
  %v2440 = vshll.u32 %v2439, 23
  %v2441 = vor.u32 4788187, %v2440
  %v2442 = vand.u32 2147483647, %v2441
  %v2444 = vcvt.s32.f32 %v2437
  %v2445 = vmul.f32 %v2444, %v2442
  %v2446 = vxor.u32 %v2445, 2147483648
  %v2447 = vsel %vm2364, %v2446, %v2445
  %v2448 = vsub.s32 4, %v2424
  %v2449 = vsel %vm2364, %v2448, %v2424
  %v2450 = vsel %vm2363, %v476, %v2447
  %v2451 = vsel %vm2363, 0, %v2449
  %v2452 = vcosq.f32.pop %v2450
  %v2453 = vsinq.f32.pop %v2450
  %vm2454 = vweird.f32 %v476
  %v2455 = vadd.s32 %v2451, 3
  %v2456 = vand.u32 %v2455, 3
  %vm2457 = vcmp.lt.s32.totalorder %v2456, 2
  %vm2458 = vcmp.eq.s32.totalorder %v2456, 0
  %v2459 = vxor.u32 %v2453, 2147483648
  %v2460 = vsel %vm2458, %v2452, %v2459
  %vm2461 = vcmp.eq.s32.totalorder %v2456, 2
  %v2462 = vxor.u32 %v2452, 2147483648
  %v2463 = vsel %vm2461, %v2462, %v2453
  %v2464 = vsel %vm2457, %v2460, %v2463
  %v2465 = vsel %vm2454, nan, %v2464
  %v2466 = vand.u32 2147483647, %v477
  %vm2467 = vcmp.le.f32.partialorder %v2466, 0.7853982
  %vm2468 = vcmp.lt.s32.totalorder %v477, 0
  %v2469 = vand.u32 %v477, 2139095040
  %v2470 = vshrl.u32 %v2469, 23
  %v2471 = vsub.s32 %v2470, 127
  %v2472 = vand.u32 2147483647, %v477
  %v2473 = vand.u32 %v2472, 8388607
  %v2474 = vor.u32 %v2473, 8388608
  %v2475 = vsub.s32 0, %v2474
  %v2476 = vadd.s32 %v2471, 1
  %vm2477 = vcmp.gt.s32.totalorder %v2476, 0
  %v2478 = vsel %vm2477, %v2476, 0
  %v2479 = vshrl.u32 %v2478, 5
  %v2480 = vand.u32 %v2478, 31
  %v2481 = vsub.s32 32, %v2480
  %v2482 = vshrl.u32 683565275, %v2481
  %v2483 = vshll.u32 683565275, %v2480
  %v2484 = vshrl.u32 2475754826, %v2481
  %v2485 = vor.u32 %v2483, %v2484
  %v2486 = vshll.u32 2475754826, %v2480
  %v2487 = vshrl.u32 2131351028, %v2481
  %v2488 = vor.u32 %v2486, %v2487
  %v2489 = vshll.u32 2131351028, %v2480
  %v2490 = vshrl.u32 2102212464, %v2481
  %v2491 = vor.u32 %v2489, %v2490
  %v2492 = vshll.u32 2102212464, %v2480
  %v2493 = vshrl.u32 920167782, %v2481
  %v2494 = vor.u32 %v2492, %v2493
  %v2495 = vshll.u32 920167782, %v2480
  %v2496 = vshrl.u32 1326507024, %v2481
  %v2497 = vor.u32 %v2495, %v2496
  %vm2498 = vcmp.lt.s32.totalorder %v2479, 1
  %vm2499 = vcmp.lt.s32.totalorder %v2479, 2
  %vm2500 = vcmp.lt.s32.totalorder %v2479, 3
  %vm2501 = vcmp.lt.s32.totalorder %v2479, 4
  %v2502 = vsel %vm2498, %v2482, %v2485
  %v2503 = vsel %vm2501, %v2491, 2102212464
  %v2504 = vsel %vm2500, %v2488, %v2503
  %v2505 = vsel %vm2499, %v2502, %v2504
  %v2506 = vsel %vm2498, %v2485, %v2488
  %v2507 = vsel %vm2501, %v2494, 920167782
  %v2508 = vsel %vm2500, %v2491, %v2507
  %v2509 = vsel %vm2499, %v2506, %v2508
  %v2510 = vsel %vm2498, %v2488, %v2491
  %v2511 = vsel %vm2501, %v2497, 1326507024
  %v2512 = vsel %vm2500, %v2494, %v2511
  %v2513 = vsel %vm2499, %v2510, %v2512
  %v2514 = vshll.u32 %v2474, 8
  %v2515 = vmul.u32.u64.compose %v2514, %v2513
  %v2516 = vextract.low.u32 %v2515
  %v2517 = vextract.high.u32 %v2515
  %v2518 = vmul.u32.u64.compose %v2514, %v2509
  %v2519 = vextract.low.u32 %v2518
  %v2520 = vextract.high.u32 %v2518
  %v2521 = vmul.u32 %v2514, %v2505
  %v2522 = vadd.s32 %v2517, %v2519
  %vm2523 = vc.u32 %v2517, %v2519
  %v2524 = vadd.s32 %v2520, 1
  %v2525 = vsel %vm2523, %v2524, %v2520
  %v2526 = vadd.s32 %v2521, %v2525
  %v2527 = vadd.s32 %v2526, 536870912
  %v2528 = vshrl.u32 %v2527, 30
  %v2529 = vshll.u32 %v2528, 30
  %v2530 = vsub.s32 %v2526, %v2529
  %vm2531 = vcmp.lt.s32.totalorder %v2530, 0
  %v2532 = vsub.s32 0, %v2530
  %v2533 = vsel %vm2531, %v2532, %v2530
  %v2534 = vclz %v2533
  %v2535 = vsub.s32 %v2534, 2
  %vm2536 = vcmp.gt.s32.totalorder 0, %v2535
  %v2537 = vsel %vm2536, 0, %v2535
  %v2538 = vsub.s32 32, %v2537
  %v2539 = vshll.u32 %v2530, %v2537
  %v2540 = vshrl.u32 %v2522, %v2538
  %v2541 = vor.u32 %v2539, %v2540
  %v2542 = vsub.s32 4294967266, %v2537
  %v2543 = vadd.s32 %v2542, 127
  %v2544 = vshll.u32 %v2543, 23
  %v2545 = vor.u32 4788187, %v2544
  %v2546 = vand.u32 2147483647, %v2545
  %v2548 = vcvt.s32.f32 %v2541
  %v2549 = vmul.f32 %v2548, %v2546
  %v2550 = vxor.u32 %v2549, 2147483648
  %v2551 = vsel %vm2468, %v2550, %v2549
  %v2552 = vsub.s32 4, %v2528
  %v2553 = vsel %vm2468, %v2552, %v2528
  %v2554 = vsel %vm2467, %v477, %v2551
  %v2555 = vsel %vm2467, 0, %v2553
  %v2556 = vcosq.f32.pop %v2554
  %v2557 = vsinq.f32.pop %v2554
  %vm2558 = vweird.f32 %v477
  %v2559 = vadd.s32 %v2555, 3
  %v2560 = vand.u32 %v2559, 3
  %vm2561 = vcmp.lt.s32.totalorder %v2560, 2
  %vm2562 = vcmp.eq.s32.totalorder %v2560, 0
  %v2563 = vxor.u32 %v2557, 2147483648
  %v2564 = vsel %vm2562, %v2556, %v2563
  %vm2565 = vcmp.eq.s32.totalorder %v2560, 2
  %v2566 = vxor.u32 %v2556, 2147483648
  %v2567 = vsel %vm2565, %v2566, %v2557
  %v2568 = vsel %vm2561, %v2564, %v2567
  %v2569 = vsel %vm2558, nan, %v2568
  %v2570 = vand.u32 2147483647, %v478
  %vm2571 = vcmp.le.f32.partialorder %v2570, 0.7853982
  %vm2572 = vcmp.lt.s32.totalorder %v478, 0
  %v2573 = vand.u32 %v478, 2139095040
  %v2574 = vshrl.u32 %v2573, 23
  %v2575 = vsub.s32 %v2574, 127
  %v2576 = vand.u32 2147483647, %v478
  %v2577 = vand.u32 %v2576, 8388607
  %v2578 = vor.u32 %v2577, 8388608
  %v2579 = vsub.s32 0, %v2578
  %v2580 = vadd.s32 %v2575, 1
  %vm2581 = vcmp.gt.s32.totalorder %v2580, 0
  %v2582 = vsel %vm2581, %v2580, 0
  %v2583 = vshrl.u32 %v2582, 5
  %v2584 = vand.u32 %v2582, 31
  %v2585 = vsub.s32 32, %v2584
  %v2586 = vshrl.u32 683565275, %v2585
  %v2587 = vshll.u32 683565275, %v2584
  %v2588 = vshrl.u32 2475754826, %v2585
  %v2589 = vor.u32 %v2587, %v2588
  %v2590 = vshll.u32 2475754826, %v2584
  %v2591 = vshrl.u32 2131351028, %v2585
  %v2592 = vor.u32 %v2590, %v2591
  %v2593 = vshll.u32 2131351028, %v2584
  %v2594 = vshrl.u32 2102212464, %v2585
  %v2595 = vor.u32 %v2593, %v2594
  %v2596 = vshll.u32 2102212464, %v2584
  %v2597 = vshrl.u32 920167782, %v2585
  %v2598 = vor.u32 %v2596, %v2597
  %v2599 = vshll.u32 920167782, %v2584
  %v2600 = vshrl.u32 1326507024, %v2585
  %v2601 = vor.u32 %v2599, %v2600
  %vm2602 = vcmp.lt.s32.totalorder %v2583, 1
  %vm2603 = vcmp.lt.s32.totalorder %v2583, 2
  %vm2604 = vcmp.lt.s32.totalorder %v2583, 3
  %vm2605 = vcmp.lt.s32.totalorder %v2583, 4
  %v2606 = vsel %vm2602, %v2586, %v2589
  %v2607 = vsel %vm2605, %v2595, 2102212464
  %v2608 = vsel %vm2604, %v2592, %v2607
  %v2609 = vsel %vm2603, %v2606, %v2608
  %v2610 = vsel %vm2602, %v2589, %v2592
  %v2611 = vsel %vm2605, %v2598, 920167782
  %v2612 = vsel %vm2604, %v2595, %v2611
  %v2613 = vsel %vm2603, %v2610, %v2612
  %v2614 = vsel %vm2602, %v2592, %v2595
  %v2615 = vsel %vm2605, %v2601, 1326507024
  %v2616 = vsel %vm2604, %v2598, %v2615
  %v2617 = vsel %vm2603, %v2614, %v2616
  %v2618 = vshll.u32 %v2578, 8
  %v2619 = vmul.u32.u64.compose %v2618, %v2617
  %v2620 = vextract.low.u32 %v2619
  %v2621 = vextract.high.u32 %v2619
  %v2622 = vmul.u32.u64.compose %v2618, %v2613
  %v2623 = vextract.low.u32 %v2622
  %v2624 = vextract.high.u32 %v2622
  %v2625 = vmul.u32 %v2618, %v2609
  %v2626 = vadd.s32 %v2621, %v2623
  %vm2627 = vc.u32 %v2621, %v2623
  %v2628 = vadd.s32 %v2624, 1
  %v2629 = vsel %vm2627, %v2628, %v2624
  %v2630 = vadd.s32 %v2625, %v2629
  %v2631 = vadd.s32 %v2630, 536870912
  %v2632 = vshrl.u32 %v2631, 30
  %v2633 = vshll.u32 %v2632, 30
  %v2634 = vsub.s32 %v2630, %v2633
  %vm2635 = vcmp.lt.s32.totalorder %v2634, 0
  %v2636 = vsub.s32 0, %v2634
  %v2637 = vsel %vm2635, %v2636, %v2634
  %v2638 = vclz %v2637
  %v2639 = vsub.s32 %v2638, 2
  %vm2640 = vcmp.gt.s32.totalorder 0, %v2639
  %v2641 = vsel %vm2640, 0, %v2639
  %v2642 = vsub.s32 32, %v2641
  %v2643 = vshll.u32 %v2634, %v2641
  %v2644 = vshrl.u32 %v2626, %v2642
  %v2645 = vor.u32 %v2643, %v2644
  %v2646 = vsub.s32 4294967266, %v2641
  %v2647 = vadd.s32 %v2646, 127
  %v2648 = vshll.u32 %v2647, 23
  %v2649 = vor.u32 4788187, %v2648
  %v2650 = vand.u32 2147483647, %v2649
  %v2652 = vcvt.s32.f32 %v2645
  %v2653 = vmul.f32 %v2652, %v2650
  %v2654 = vxor.u32 %v2653, 2147483648
  %v2655 = vsel %vm2572, %v2654, %v2653
  %v2656 = vsub.s32 4, %v2632
  %v2657 = vsel %vm2572, %v2656, %v2632
  %v2658 = vsel %vm2571, %v478, %v2655
  %v2659 = vsel %vm2571, 0, %v2657
  %v2660 = vcosq.f32.pop %v2658
  %v2661 = vsinq.f32.pop %v2658
  %vm2662 = vweird.f32 %v478
  %v2663 = vadd.s32 %v2659, 3
  %v2664 = vand.u32 %v2663, 3
  %vm2665 = vcmp.lt.s32.totalorder %v2664, 2
  %vm2666 = vcmp.eq.s32.totalorder %v2664, 0
  %v2667 = vxor.u32 %v2661, 2147483648
  %v2668 = vsel %vm2666, %v2660, %v2667
  %vm2669 = vcmp.eq.s32.totalorder %v2664, 2
  %v2670 = vxor.u32 %v2660, 2147483648
  %v2671 = vsel %vm2669, %v2670, %v2661
  %v2672 = vsel %vm2665, %v2668, %v2671
  %v2673 = vsel %vm2662, nan, %v2672
  %v2674 = vand.u32 2147483647, %v479
  %vm2675 = vcmp.le.f32.partialorder %v2674, 0.7853982
  %vm2676 = vcmp.lt.s32.totalorder %v479, 0
  %v2677 = vand.u32 %v479, 2139095040
  %v2678 = vshrl.u32 %v2677, 23
  %v2679 = vsub.s32 %v2678, 127
  %v2680 = vand.u32 2147483647, %v479
  %v2681 = vand.u32 %v2680, 8388607
  %v2682 = vor.u32 %v2681, 8388608
  %v2683 = vsub.s32 0, %v2682
  %v2684 = vadd.s32 %v2679, 1
  %vm2685 = vcmp.gt.s32.totalorder %v2684, 0
  %v2686 = vsel %vm2685, %v2684, 0
  %v2687 = vshrl.u32 %v2686, 5
  %v2688 = vand.u32 %v2686, 31
  %v2689 = vsub.s32 32, %v2688
  %v2690 = vshrl.u32 683565275, %v2689
  %v2691 = vshll.u32 683565275, %v2688
  %v2692 = vshrl.u32 2475754826, %v2689
  %v2693 = vor.u32 %v2691, %v2692
  %v2694 = vshll.u32 2475754826, %v2688
  %v2695 = vshrl.u32 2131351028, %v2689
  %v2696 = vor.u32 %v2694, %v2695
  %v2697 = vshll.u32 2131351028, %v2688
  %v2698 = vshrl.u32 2102212464, %v2689
  %v2699 = vor.u32 %v2697, %v2698
  %v2700 = vshll.u32 2102212464, %v2688
  %v2701 = vshrl.u32 920167782, %v2689
  %v2702 = vor.u32 %v2700, %v2701
  %v2703 = vshll.u32 920167782, %v2688
  %v2704 = vshrl.u32 1326507024, %v2689
  %v2705 = vor.u32 %v2703, %v2704
  %vm2706 = vcmp.lt.s32.totalorder %v2687, 1
  %vm2707 = vcmp.lt.s32.totalorder %v2687, 2
  %vm2708 = vcmp.lt.s32.totalorder %v2687, 3
  %vm2709 = vcmp.lt.s32.totalorder %v2687, 4
  %v2710 = vsel %vm2706, %v2690, %v2693
  %v2711 = vsel %vm2709, %v2699, 2102212464
  %v2712 = vsel %vm2708, %v2696, %v2711
  %v2713 = vsel %vm2707, %v2710, %v2712
  %v2714 = vsel %vm2706, %v2693, %v2696
  %v2715 = vsel %vm2709, %v2702, 920167782
  %v2716 = vsel %vm2708, %v2699, %v2715
  %v2717 = vsel %vm2707, %v2714, %v2716
  %v2718 = vsel %vm2706, %v2696, %v2699
  %v2719 = vsel %vm2709, %v2705, 1326507024
  %v2720 = vsel %vm2708, %v2702, %v2719
  %v2721 = vsel %vm2707, %v2718, %v2720
  %v2722 = vshll.u32 %v2682, 8
  %v2723 = vmul.u32.u64.compose %v2722, %v2721
  %v2724 = vextract.low.u32 %v2723
  %v2725 = vextract.high.u32 %v2723
  %v2726 = vmul.u32.u64.compose %v2722, %v2717
  %v2727 = vextract.low.u32 %v2726
  %v2728 = vextract.high.u32 %v2726
  %v2729 = vmul.u32 %v2722, %v2713
  %v2730 = vadd.s32 %v2725, %v2727
  %vm2731 = vc.u32 %v2725, %v2727
  %v2732 = vadd.s32 %v2728, 1
  %v2733 = vsel %vm2731, %v2732, %v2728
  %v2734 = vadd.s32 %v2729, %v2733
  %v2735 = vadd.s32 %v2734, 536870912
  %v2736 = vshrl.u32 %v2735, 30
  %v2737 = vshll.u32 %v2736, 30
  %v2738 = vsub.s32 %v2734, %v2737
  %vm2739 = vcmp.lt.s32.totalorder %v2738, 0
  %v2740 = vsub.s32 0, %v2738
  %v2741 = vsel %vm2739, %v2740, %v2738
  %v2742 = vclz %v2741
  %v2743 = vsub.s32 %v2742, 2
  %vm2744 = vcmp.gt.s32.totalorder 0, %v2743
  %v2745 = vsel %vm2744, 0, %v2743
  %v2746 = vsub.s32 32, %v2745
  %v2747 = vshll.u32 %v2738, %v2745
  %v2748 = vshrl.u32 %v2730, %v2746
  %v2749 = vor.u32 %v2747, %v2748
  %v2750 = vsub.s32 4294967266, %v2745
  %v2751 = vadd.s32 %v2750, 127
  %v2752 = vshll.u32 %v2751, 23
  %v2753 = vor.u32 4788187, %v2752
  %v2754 = vand.u32 2147483647, %v2753
  %v2756 = vcvt.s32.f32 %v2749
  %v2757 = vmul.f32 %v2756, %v2754
  %v2758 = vxor.u32 %v2757, 2147483648
  %v2759 = vsel %vm2676, %v2758, %v2757
  %v2760 = vsub.s32 4, %v2736
  %v2761 = vsel %vm2676, %v2760, %v2736
  %v2762 = vsel %vm2675, %v479, %v2759
  %v2763 = vsel %vm2675, 0, %v2761
  %v2764 = vcosq.f32.pop %v2762
  %v2765 = vsinq.f32.pop %v2762
  %vm2766 = vweird.f32 %v479
  %v2767 = vadd.s32 %v2763, 3
  %v2768 = vand.u32 %v2767, 3
  %vm2769 = vcmp.lt.s32.totalorder %v2768, 2
  %vm2770 = vcmp.eq.s32.totalorder %v2768, 0
  %v2771 = vxor.u32 %v2765, 2147483648
  %v2772 = vsel %vm2770, %v2764, %v2771
  %vm2773 = vcmp.eq.s32.totalorder %v2768, 2
  %v2774 = vxor.u32 %v2764, 2147483648
  %v2775 = vsel %vm2773, %v2774, %v2765
  %v2776 = vsel %vm2769, %v2772, %v2775
  %v2777 = vsel %vm2766, nan, %v2776
  %v2778 = vand.u32 2147483647, %v480
  %vm2779 = vcmp.le.f32.partialorder %v2778, 0.7853982
  %vm2780 = vcmp.lt.s32.totalorder %v480, 0
  %v2781 = vand.u32 %v480, 2139095040
  %v2782 = vshrl.u32 %v2781, 23
  %v2783 = vsub.s32 %v2782, 127
  %v2784 = vand.u32 2147483647, %v480
  %v2785 = vand.u32 %v2784, 8388607
  %v2786 = vor.u32 %v2785, 8388608
  %v2787 = vsub.s32 0, %v2786
  %v2788 = vadd.s32 %v2783, 1
  %vm2789 = vcmp.gt.s32.totalorder %v2788, 0
  %v2790 = vsel %vm2789, %v2788, 0
  %v2791 = vshrl.u32 %v2790, 5
  %v2792 = vand.u32 %v2790, 31
  %v2793 = vsub.s32 32, %v2792
  %v2794 = vshrl.u32 683565275, %v2793
  %v2795 = vshll.u32 683565275, %v2792
  %v2796 = vshrl.u32 2475754826, %v2793
  %v2797 = vor.u32 %v2795, %v2796
  %v2798 = vshll.u32 2475754826, %v2792
  %v2799 = vshrl.u32 2131351028, %v2793
  %v2800 = vor.u32 %v2798, %v2799
  %v2801 = vshll.u32 2131351028, %v2792
  %v2802 = vshrl.u32 2102212464, %v2793
  %v2803 = vor.u32 %v2801, %v2802
  %v2804 = vshll.u32 2102212464, %v2792
  %v2805 = vshrl.u32 920167782, %v2793
  %v2806 = vor.u32 %v2804, %v2805
  %v2807 = vshll.u32 920167782, %v2792
  %v2808 = vshrl.u32 1326507024, %v2793
  %v2809 = vor.u32 %v2807, %v2808
  %vm2810 = vcmp.lt.s32.totalorder %v2791, 1
  %vm2811 = vcmp.lt.s32.totalorder %v2791, 2
  %vm2812 = vcmp.lt.s32.totalorder %v2791, 3
  %vm2813 = vcmp.lt.s32.totalorder %v2791, 4
  %v2814 = vsel %vm2810, %v2794, %v2797
  %v2815 = vsel %vm2813, %v2803, 2102212464
  %v2816 = vsel %vm2812, %v2800, %v2815
  %v2817 = vsel %vm2811, %v2814, %v2816
  %v2818 = vsel %vm2810, %v2797, %v2800
  %v2819 = vsel %vm2813, %v2806, 920167782
  %v2820 = vsel %vm2812, %v2803, %v2819
  %v2821 = vsel %vm2811, %v2818, %v2820
  %v2822 = vsel %vm2810, %v2800, %v2803
  %v2823 = vsel %vm2813, %v2809, 1326507024
  %v2824 = vsel %vm2812, %v2806, %v2823
  %v2825 = vsel %vm2811, %v2822, %v2824
  %v2826 = vshll.u32 %v2786, 8
  %v2827 = vmul.u32.u64.compose %v2826, %v2825
  %v2828 = vextract.low.u32 %v2827
  %v2829 = vextract.high.u32 %v2827
  %v2830 = vmul.u32.u64.compose %v2826, %v2821
  %v2831 = vextract.low.u32 %v2830
  %v2832 = vextract.high.u32 %v2830
  %v2833 = vmul.u32 %v2826, %v2817
  %v2834 = vadd.s32 %v2829, %v2831
  %vm2835 = vc.u32 %v2829, %v2831
  %v2836 = vadd.s32 %v2832, 1
  %v2837 = vsel %vm2835, %v2836, %v2832
  %v2838 = vadd.s32 %v2833, %v2837
  %v2839 = vadd.s32 %v2838, 536870912
  %v2840 = vshrl.u32 %v2839, 30
  %v2841 = vshll.u32 %v2840, 30
  %v2842 = vsub.s32 %v2838, %v2841
  %vm2843 = vcmp.lt.s32.totalorder %v2842, 0
  %v2844 = vsub.s32 0, %v2842
  %v2845 = vsel %vm2843, %v2844, %v2842
  %v2846 = vclz %v2845
  %v2847 = vsub.s32 %v2846, 2
  %vm2848 = vcmp.gt.s32.totalorder 0, %v2847
  %v2849 = vsel %vm2848, 0, %v2847
  %v2850 = vsub.s32 32, %v2849
  %v2851 = vshll.u32 %v2842, %v2849
  %v2852 = vshrl.u32 %v2834, %v2850
  %v2853 = vor.u32 %v2851, %v2852
  %v2854 = vsub.s32 4294967266, %v2849
  %v2855 = vadd.s32 %v2854, 127
  %v2856 = vshll.u32 %v2855, 23
  %v2857 = vor.u32 4788187, %v2856
  %v2858 = vand.u32 2147483647, %v2857
  %v2860 = vcvt.s32.f32 %v2853
  %v2861 = vmul.f32 %v2860, %v2858
  %v2862 = vxor.u32 %v2861, 2147483648
  %v2863 = vsel %vm2780, %v2862, %v2861
  %v2864 = vsub.s32 4, %v2840
  %v2865 = vsel %vm2780, %v2864, %v2840
  %v2866 = vsel %vm2779, %v480, %v2863
  %v2867 = vsel %vm2779, 0, %v2865
  %v2868 = vcosq.f32.pop %v2866
  %v2869 = vsinq.f32.pop %v2866
  %vm2870 = vweird.f32 %v480
  %v2871 = vadd.s32 %v2867, 3
  %v2872 = vand.u32 %v2871, 3
  %vm2873 = vcmp.lt.s32.totalorder %v2872, 2
  %vm2874 = vcmp.eq.s32.totalorder %v2872, 0
  %v2875 = vxor.u32 %v2869, 2147483648
  %v2876 = vsel %vm2874, %v2868, %v2875
  %vm2877 = vcmp.eq.s32.totalorder %v2872, 2
  %v2878 = vxor.u32 %v2868, 2147483648
  %v2879 = vsel %vm2877, %v2878, %v2869
  %v2880 = vsel %vm2873, %v2876, %v2879
  %v2881 = vsel %vm2870, nan, %v2880
  %v2882 = vand.u32 2147483647, %v481
  %vm2883 = vcmp.le.f32.partialorder %v2882, 0.7853982
  %vm2884 = vcmp.lt.s32.totalorder %v481, 0
  %v2885 = vand.u32 %v481, 2139095040
  %v2886 = vshrl.u32 %v2885, 23
  %v2887 = vsub.s32 %v2886, 127
  %v2888 = vand.u32 2147483647, %v481
  %v2889 = vand.u32 %v2888, 8388607
  %v2890 = vor.u32 %v2889, 8388608
  %v2891 = vsub.s32 0, %v2890
  %v2892 = vadd.s32 %v2887, 1
  %vm2893 = vcmp.gt.s32.totalorder %v2892, 0
  %v2894 = vsel %vm2893, %v2892, 0
  %v2895 = vshrl.u32 %v2894, 5
  %v2896 = vand.u32 %v2894, 31
  %v2897 = vsub.s32 32, %v2896
  %v2898 = vshrl.u32 683565275, %v2897
  %v2899 = vshll.u32 683565275, %v2896
  %v2900 = vshrl.u32 2475754826, %v2897
  %v2901 = vor.u32 %v2899, %v2900
  %v2902 = vshll.u32 2475754826, %v2896
  %v2903 = vshrl.u32 2131351028, %v2897
  %v2904 = vor.u32 %v2902, %v2903
  %v2905 = vshll.u32 2131351028, %v2896
  %v2906 = vshrl.u32 2102212464, %v2897
  %v2907 = vor.u32 %v2905, %v2906
  %v2908 = vshll.u32 2102212464, %v2896
  %v2909 = vshrl.u32 920167782, %v2897
  %v2910 = vor.u32 %v2908, %v2909
  %v2911 = vshll.u32 920167782, %v2896
  %v2912 = vshrl.u32 1326507024, %v2897
  %v2913 = vor.u32 %v2911, %v2912
  %vm2914 = vcmp.lt.s32.totalorder %v2895, 1
  %vm2915 = vcmp.lt.s32.totalorder %v2895, 2
  %vm2916 = vcmp.lt.s32.totalorder %v2895, 3
  %vm2917 = vcmp.lt.s32.totalorder %v2895, 4
  %v2918 = vsel %vm2914, %v2898, %v2901
  %v2919 = vsel %vm2917, %v2907, 2102212464
  %v2920 = vsel %vm2916, %v2904, %v2919
  %v2921 = vsel %vm2915, %v2918, %v2920
  %v2922 = vsel %vm2914, %v2901, %v2904
  %v2923 = vsel %vm2917, %v2910, 920167782
  %v2924 = vsel %vm2916, %v2907, %v2923
  %v2925 = vsel %vm2915, %v2922, %v2924
  %v2926 = vsel %vm2914, %v2904, %v2907
  %v2927 = vsel %vm2917, %v2913, 1326507024
  %v2928 = vsel %vm2916, %v2910, %v2927
  %v2929 = vsel %vm2915, %v2926, %v2928
  %v2930 = vshll.u32 %v2890, 8
  %v2931 = vmul.u32.u64.compose %v2930, %v2929
  %v2932 = vextract.low.u32 %v2931
  %v2933 = vextract.high.u32 %v2931
  %v2934 = vmul.u32.u64.compose %v2930, %v2925
  %v2935 = vextract.low.u32 %v2934
  %v2936 = vextract.high.u32 %v2934
  %v2937 = vmul.u32 %v2930, %v2921
  %v2938 = vadd.s32 %v2933, %v2935
  %vm2939 = vc.u32 %v2933, %v2935
  %v2940 = vadd.s32 %v2936, 1
  %v2941 = vsel %vm2939, %v2940, %v2936
  %v2942 = vadd.s32 %v2937, %v2941
  %v2943 = vadd.s32 %v2942, 536870912
  %v2944 = vshrl.u32 %v2943, 30
  %v2945 = vshll.u32 %v2944, 30
  %v2946 = vsub.s32 %v2942, %v2945
  %vm2947 = vcmp.lt.s32.totalorder %v2946, 0
  %v2948 = vsub.s32 0, %v2946
  %v2949 = vsel %vm2947, %v2948, %v2946
  %v2950 = vclz %v2949
  %v2951 = vsub.s32 %v2950, 2
  %vm2952 = vcmp.gt.s32.totalorder 0, %v2951
  %v2953 = vsel %vm2952, 0, %v2951
  %v2954 = vsub.s32 32, %v2953
  %v2955 = vshll.u32 %v2946, %v2953
  %v2956 = vshrl.u32 %v2938, %v2954
  %v2957 = vor.u32 %v2955, %v2956
  %v2958 = vsub.s32 4294967266, %v2953
  %v2959 = vadd.s32 %v2958, 127
  %v2960 = vshll.u32 %v2959, 23
  %v2961 = vor.u32 4788187, %v2960
  %v2962 = vand.u32 2147483647, %v2961
  %v2964 = vcvt.s32.f32 %v2957
  %v2965 = vmul.f32 %v2964, %v2962
  %v2966 = vxor.u32 %v2965, 2147483648
  %v2967 = vsel %vm2884, %v2966, %v2965
  %v2968 = vsub.s32 4, %v2944
  %v2969 = vsel %vm2884, %v2968, %v2944
  %v2970 = vsel %vm2883, %v481, %v2967
  %v2971 = vsel %vm2883, 0, %v2969
  %v2972 = vcosq.f32.pop %v2970
  %v2973 = vsinq.f32.pop %v2970
  %vm2974 = vweird.f32 %v481
  %v2975 = vadd.s32 %v2971, 3
  %v2976 = vand.u32 %v2975, 3
  %vm2977 = vcmp.lt.s32.totalorder %v2976, 2
  %vm2978 = vcmp.eq.s32.totalorder %v2976, 0
  %v2979 = vxor.u32 %v2973, 2147483648
  %v2980 = vsel %vm2978, %v2972, %v2979
  %vm2981 = vcmp.eq.s32.totalorder %v2976, 2
  %v2982 = vxor.u32 %v2972, 2147483648
  %v2983 = vsel %vm2981, %v2982, %v2973
  %v2984 = vsel %vm2977, %v2980, %v2983
  %v2985 = vsel %vm2974, nan, %v2984
  %v2986 = vand.u32 2147483647, %v482
  %vm2987 = vcmp.le.f32.partialorder %v2986, 0.7853982
  %vm2988 = vcmp.lt.s32.totalorder %v482, 0
  %v2989 = vand.u32 %v482, 2139095040
  %v2990 = vshrl.u32 %v2989, 23
  %v2991 = vsub.s32 %v2990, 127
  %v2992 = vand.u32 2147483647, %v482
  %v2993 = vand.u32 %v2992, 8388607
  %v2994 = vor.u32 %v2993, 8388608
  %v2995 = vsub.s32 0, %v2994
  %v2996 = vadd.s32 %v2991, 1
  %vm2997 = vcmp.gt.s32.totalorder %v2996, 0
  %v2998 = vsel %vm2997, %v2996, 0
  %v2999 = vshrl.u32 %v2998, 5
  %v3000 = vand.u32 %v2998, 31
  %v3001 = vsub.s32 32, %v3000
  %v3002 = vshrl.u32 683565275, %v3001
  %v3003 = vshll.u32 683565275, %v3000
  %v3004 = vshrl.u32 2475754826, %v3001
  %v3005 = vor.u32 %v3003, %v3004
  %v3006 = vshll.u32 2475754826, %v3000
  %v3007 = vshrl.u32 2131351028, %v3001
  %v3008 = vor.u32 %v3006, %v3007
  %v3009 = vshll.u32 2131351028, %v3000
  %v3010 = vshrl.u32 2102212464, %v3001
  %v3011 = vor.u32 %v3009, %v3010
  %v3012 = vshll.u32 2102212464, %v3000
  %v3013 = vshrl.u32 920167782, %v3001
  %v3014 = vor.u32 %v3012, %v3013
  %v3015 = vshll.u32 920167782, %v3000
  %v3016 = vshrl.u32 1326507024, %v3001
  %v3017 = vor.u32 %v3015, %v3016
  %vm3018 = vcmp.lt.s32.totalorder %v2999, 1
  %vm3019 = vcmp.lt.s32.totalorder %v2999, 2
  %vm3020 = vcmp.lt.s32.totalorder %v2999, 3
  %vm3021 = vcmp.lt.s32.totalorder %v2999, 4
  %v3022 = vsel %vm3018, %v3002, %v3005
  %v3023 = vsel %vm3021, %v3011, 2102212464
  %v3024 = vsel %vm3020, %v3008, %v3023
  %v3025 = vsel %vm3019, %v3022, %v3024
  %v3026 = vsel %vm3018, %v3005, %v3008
  %v3027 = vsel %vm3021, %v3014, 920167782
  %v3028 = vsel %vm3020, %v3011, %v3027
  %v3029 = vsel %vm3019, %v3026, %v3028
  %v3030 = vsel %vm3018, %v3008, %v3011
  %v3031 = vsel %vm3021, %v3017, 1326507024
  %v3032 = vsel %vm3020, %v3014, %v3031
  %v3033 = vsel %vm3019, %v3030, %v3032
  %v3034 = vshll.u32 %v2994, 8
  %v3035 = vmul.u32.u64.compose %v3034, %v3033
  %v3036 = vextract.low.u32 %v3035
  %v3037 = vextract.high.u32 %v3035
  %v3038 = vmul.u32.u64.compose %v3034, %v3029
  %v3039 = vextract.low.u32 %v3038
  %v3040 = vextract.high.u32 %v3038
  %v3041 = vmul.u32 %v3034, %v3025
  %v3042 = vadd.s32 %v3037, %v3039
  %vm3043 = vc.u32 %v3037, %v3039
  %v3044 = vadd.s32 %v3040, 1
  %v3045 = vsel %vm3043, %v3044, %v3040
  %v3046 = vadd.s32 %v3041, %v3045
  %v3047 = vadd.s32 %v3046, 536870912
  %v3048 = vshrl.u32 %v3047, 30
  %v3049 = vshll.u32 %v3048, 30
  %v3050 = vsub.s32 %v3046, %v3049
  %vm3051 = vcmp.lt.s32.totalorder %v3050, 0
  %v3052 = vsub.s32 0, %v3050
  %v3053 = vsel %vm3051, %v3052, %v3050
  %v3054 = vclz %v3053
  %v3055 = vsub.s32 %v3054, 2
  %vm3056 = vcmp.gt.s32.totalorder 0, %v3055
  %v3057 = vsel %vm3056, 0, %v3055
  %v3058 = vsub.s32 32, %v3057
  %v3059 = vshll.u32 %v3050, %v3057
  %v3060 = vshrl.u32 %v3042, %v3058
  %v3061 = vor.u32 %v3059, %v3060
  %v3062 = vsub.s32 4294967266, %v3057
  %v3063 = vadd.s32 %v3062, 127
  %v3064 = vshll.u32 %v3063, 23
  %v3065 = vor.u32 4788187, %v3064
  %v3066 = vand.u32 2147483647, %v3065
  %v3068 = vcvt.s32.f32 %v3061
  %v3069 = vmul.f32 %v3068, %v3066
  %v3070 = vxor.u32 %v3069, 2147483648
  %v3071 = vsel %vm2988, %v3070, %v3069
  %v3072 = vsub.s32 4, %v3048
  %v3073 = vsel %vm2988, %v3072, %v3048
  %v3074 = vsel %vm2987, %v482, %v3071
  %v3075 = vsel %vm2987, 0, %v3073
  %v3076 = vcosq.f32.pop %v3074
  %v3077 = vsinq.f32.pop %v3074
  %vm3078 = vweird.f32 %v482
  %v3079 = vadd.s32 %v3075, 3
  %v3080 = vand.u32 %v3079, 3
  %vm3081 = vcmp.lt.s32.totalorder %v3080, 2
  %vm3082 = vcmp.eq.s32.totalorder %v3080, 0
  %v3083 = vxor.u32 %v3077, 2147483648
  %v3084 = vsel %vm3082, %v3076, %v3083
  %vm3085 = vcmp.eq.s32.totalorder %v3080, 2
  %v3086 = vxor.u32 %v3076, 2147483648
  %v3087 = vsel %vm3085, %v3086, %v3077
  %v3088 = vsel %vm3081, %v3084, %v3087
  %v3089 = vsel %vm3078, nan, %v3088
  %v3090 = vand.u32 2147483647, %v483
  %vm3091 = vcmp.le.f32.partialorder %v3090, 0.7853982
  %vm3092 = vcmp.lt.s32.totalorder %v483, 0
  %v3093 = vand.u32 %v483, 2139095040
  %v3094 = vshrl.u32 %v3093, 23
  %v3095 = vsub.s32 %v3094, 127
  %v3096 = vand.u32 2147483647, %v483
  %v3097 = vand.u32 %v3096, 8388607
  %v3098 = vor.u32 %v3097, 8388608
  %v3099 = vsub.s32 0, %v3098
  %v3100 = vadd.s32 %v3095, 1
  %vm3101 = vcmp.gt.s32.totalorder %v3100, 0
  %v3102 = vsel %vm3101, %v3100, 0
  %v3103 = vshrl.u32 %v3102, 5
  %v3104 = vand.u32 %v3102, 31
  %v3105 = vsub.s32 32, %v3104
  %v3106 = vshrl.u32 683565275, %v3105
  %v3107 = vshll.u32 683565275, %v3104
  %v3108 = vshrl.u32 2475754826, %v3105
  %v3109 = vor.u32 %v3107, %v3108
  %v3110 = vshll.u32 2475754826, %v3104
  %v3111 = vshrl.u32 2131351028, %v3105
  %v3112 = vor.u32 %v3110, %v3111
  %v3113 = vshll.u32 2131351028, %v3104
  %v3114 = vshrl.u32 2102212464, %v3105
  %v3115 = vor.u32 %v3113, %v3114
  %v3116 = vshll.u32 2102212464, %v3104
  %v3117 = vshrl.u32 920167782, %v3105
  %v3118 = vor.u32 %v3116, %v3117
  %v3119 = vshll.u32 920167782, %v3104
  %v3120 = vshrl.u32 1326507024, %v3105
  %v3121 = vor.u32 %v3119, %v3120
  %vm3122 = vcmp.lt.s32.totalorder %v3103, 1
  %vm3123 = vcmp.lt.s32.totalorder %v3103, 2
  %vm3124 = vcmp.lt.s32.totalorder %v3103, 3
  %vm3125 = vcmp.lt.s32.totalorder %v3103, 4
  %v3126 = vsel %vm3122, %v3106, %v3109
  %v3127 = vsel %vm3125, %v3115, 2102212464
  %v3128 = vsel %vm3124, %v3112, %v3127
  %v3129 = vsel %vm3123, %v3126, %v3128
  %v3130 = vsel %vm3122, %v3109, %v3112
  %v3131 = vsel %vm3125, %v3118, 920167782
  %v3132 = vsel %vm3124, %v3115, %v3131
  %v3133 = vsel %vm3123, %v3130, %v3132
  %v3134 = vsel %vm3122, %v3112, %v3115
  %v3135 = vsel %vm3125, %v3121, 1326507024
  %v3136 = vsel %vm3124, %v3118, %v3135
  %v3137 = vsel %vm3123, %v3134, %v3136
  %v3138 = vshll.u32 %v3098, 8
  %v3139 = vmul.u32.u64.compose %v3138, %v3137
  %v3140 = vextract.low.u32 %v3139
  %v3141 = vextract.high.u32 %v3139
  %v3142 = vmul.u32.u64.compose %v3138, %v3133
  %v3143 = vextract.low.u32 %v3142
  %v3144 = vextract.high.u32 %v3142
  %v3145 = vmul.u32 %v3138, %v3129
  %v3146 = vadd.s32 %v3141, %v3143
  %vm3147 = vc.u32 %v3141, %v3143
  %v3148 = vadd.s32 %v3144, 1
  %v3149 = vsel %vm3147, %v3148, %v3144
  %v3150 = vadd.s32 %v3145, %v3149
  %v3151 = vadd.s32 %v3150, 536870912
  %v3152 = vshrl.u32 %v3151, 30
  %v3153 = vshll.u32 %v3152, 30
  %v3154 = vsub.s32 %v3150, %v3153
  %vm3155 = vcmp.lt.s32.totalorder %v3154, 0
  %v3156 = vsub.s32 0, %v3154
  %v3157 = vsel %vm3155, %v3156, %v3154
  %v3158 = vclz %v3157
  %v3159 = vsub.s32 %v3158, 2
  %vm3160 = vcmp.gt.s32.totalorder 0, %v3159
  %v3161 = vsel %vm3160, 0, %v3159
  %v3162 = vsub.s32 32, %v3161
  %v3163 = vshll.u32 %v3154, %v3161
  %v3164 = vshrl.u32 %v3146, %v3162
  %v3165 = vor.u32 %v3163, %v3164
  %v3166 = vsub.s32 4294967266, %v3161
  %v3167 = vadd.s32 %v3166, 127
  %v3168 = vshll.u32 %v3167, 23
  %v3169 = vor.u32 4788187, %v3168
  %v3170 = vand.u32 2147483647, %v3169
  %v3172 = vcvt.s32.f32 %v3165
  %v3173 = vmul.f32 %v3172, %v3170
  %v3174 = vxor.u32 %v3173, 2147483648
  %v3175 = vsel %vm3092, %v3174, %v3173
  %v3176 = vsub.s32 4, %v3152
  %v3177 = vsel %vm3092, %v3176, %v3152
  %v3178 = vsel %vm3091, %v483, %v3175
  %v3179 = vsel %vm3091, 0, %v3177
  %v3180 = vcosq.f32.pop %v3178
  %v3181 = vsinq.f32.pop %v3178
  %vm3182 = vweird.f32 %v483
  %v3183 = vadd.s32 %v3179, 3
  %v3184 = vand.u32 %v3183, 3
  %vm3185 = vcmp.lt.s32.totalorder %v3184, 2
  %vm3186 = vcmp.eq.s32.totalorder %v3184, 0
  %v3187 = vxor.u32 %v3181, 2147483648
  %v3188 = vsel %vm3186, %v3180, %v3187
  %vm3189 = vcmp.eq.s32.totalorder %v3184, 2
  %v3190 = vxor.u32 %v3180, 2147483648
  %v3191 = vsel %vm3189, %v3190, %v3181
  %v3192 = vsel %vm3185, %v3188, %v3191
  %v3193 = vsel %vm3182, nan, %v3192
  %v3194 = vand.u32 2147483647, %v484
  %vm3195 = vcmp.le.f32.partialorder %v3194, 0.7853982
  %vm3196 = vcmp.lt.s32.totalorder %v484, 0
  %v3197 = vand.u32 %v484, 2139095040
  %v3198 = vshrl.u32 %v3197, 23
  %v3199 = vsub.s32 %v3198, 127
  %v3200 = vand.u32 2147483647, %v484
  %v3201 = vand.u32 %v3200, 8388607
  %v3202 = vor.u32 %v3201, 8388608
  %v3203 = vsub.s32 0, %v3202
  %v3204 = vadd.s32 %v3199, 1
  %vm3205 = vcmp.gt.s32.totalorder %v3204, 0
  %v3206 = vsel %vm3205, %v3204, 0
  %v3207 = vshrl.u32 %v3206, 5
  %v3208 = vand.u32 %v3206, 31
  %v3209 = vsub.s32 32, %v3208
  %v3210 = vshrl.u32 683565275, %v3209
  %v3211 = vshll.u32 683565275, %v3208
  %v3212 = vshrl.u32 2475754826, %v3209
  %v3213 = vor.u32 %v3211, %v3212
  %v3214 = vshll.u32 2475754826, %v3208
  %v3215 = vshrl.u32 2131351028, %v3209
  %v3216 = vor.u32 %v3214, %v3215
  %v3217 = vshll.u32 2131351028, %v3208
  %v3218 = vshrl.u32 2102212464, %v3209
  %v3219 = vor.u32 %v3217, %v3218
  %v3220 = vshll.u32 2102212464, %v3208
  %v3221 = vshrl.u32 920167782, %v3209
  %v3222 = vor.u32 %v3220, %v3221
  %v3223 = vshll.u32 920167782, %v3208
  %v3224 = vshrl.u32 1326507024, %v3209
  %v3225 = vor.u32 %v3223, %v3224
  %vm3226 = vcmp.lt.s32.totalorder %v3207, 1
  %vm3227 = vcmp.lt.s32.totalorder %v3207, 2
  %vm3228 = vcmp.lt.s32.totalorder %v3207, 3
  %vm3229 = vcmp.lt.s32.totalorder %v3207, 4
  %v3230 = vsel %vm3226, %v3210, %v3213
  %v3231 = vsel %vm3229, %v3219, 2102212464
  %v3232 = vsel %vm3228, %v3216, %v3231
  %v3233 = vsel %vm3227, %v3230, %v3232
  %v3234 = vsel %vm3226, %v3213, %v3216
  %v3235 = vsel %vm3229, %v3222, 920167782
  %v3236 = vsel %vm3228, %v3219, %v3235
  %v3237 = vsel %vm3227, %v3234, %v3236
  %v3238 = vsel %vm3226, %v3216, %v3219
  %v3239 = vsel %vm3229, %v3225, 1326507024
  %v3240 = vsel %vm3228, %v3222, %v3239
  %v3241 = vsel %vm3227, %v3238, %v3240
  %v3242 = vshll.u32 %v3202, 8
  %v3243 = vmul.u32.u64.compose %v3242, %v3241
  %v3244 = vextract.low.u32 %v3243
  %v3245 = vextract.high.u32 %v3243
  %v3246 = vmul.u32.u64.compose %v3242, %v3237
  %v3247 = vextract.low.u32 %v3246
  %v3248 = vextract.high.u32 %v3246
  %v3249 = vmul.u32 %v3242, %v3233
  %v3250 = vadd.s32 %v3245, %v3247
  %vm3251 = vc.u32 %v3245, %v3247
  %v3252 = vadd.s32 %v3248, 1
  %v3253 = vsel %vm3251, %v3252, %v3248
  %v3254 = vadd.s32 %v3249, %v3253
  %v3255 = vadd.s32 %v3254, 536870912
  %v3256 = vshrl.u32 %v3255, 30
  %v3257 = vshll.u32 %v3256, 30
  %v3258 = vsub.s32 %v3254, %v3257
  %vm3259 = vcmp.lt.s32.totalorder %v3258, 0
  %v3260 = vsub.s32 0, %v3258
  %v3261 = vsel %vm3259, %v3260, %v3258
  %v3262 = vclz %v3261
  %v3263 = vsub.s32 %v3262, 2
  %vm3264 = vcmp.gt.s32.totalorder 0, %v3263
  %v3265 = vsel %vm3264, 0, %v3263
  %v3266 = vsub.s32 32, %v3265
  %v3267 = vshll.u32 %v3258, %v3265
  %v3268 = vshrl.u32 %v3250, %v3266
  %v3269 = vor.u32 %v3267, %v3268
  %v3270 = vsub.s32 4294967266, %v3265
  %v3271 = vadd.s32 %v3270, 127
  %v3272 = vshll.u32 %v3271, 23
  %v3273 = vor.u32 4788187, %v3272
  %v3274 = vand.u32 2147483647, %v3273
  %v3276 = vcvt.s32.f32 %v3269
  %v3277 = vmul.f32 %v3276, %v3274
  %v3278 = vxor.u32 %v3277, 2147483648
  %v3279 = vsel %vm3196, %v3278, %v3277
  %v3280 = vsub.s32 4, %v3256
  %v3281 = vsel %vm3196, %v3280, %v3256
  %v3282 = vsel %vm3195, %v484, %v3279
  %v3283 = vsel %vm3195, 0, %v3281
  %v3284 = vcosq.f32.pop %v3282
  %v3285 = vsinq.f32.pop %v3282
  %vm3286 = vweird.f32 %v484
  %v3287 = vadd.s32 %v3283, 3
  %v3288 = vand.u32 %v3287, 3
  %vm3289 = vcmp.lt.s32.totalorder %v3288, 2
  %vm3290 = vcmp.eq.s32.totalorder %v3288, 0
  %v3291 = vxor.u32 %v3285, 2147483648
  %v3292 = vsel %vm3290, %v3284, %v3291
  %vm3293 = vcmp.eq.s32.totalorder %v3288, 2
  %v3294 = vxor.u32 %v3284, 2147483648
  %v3295 = vsel %vm3293, %v3294, %v3285
  %v3296 = vsel %vm3289, %v3292, %v3295
  %v3297 = vsel %vm3286, nan, %v3296
  %v3298 = vand.u32 2147483647, %v485
  %vm3299 = vcmp.le.f32.partialorder %v3298, 0.7853982
  %vm3300 = vcmp.lt.s32.totalorder %v485, 0
  %v3301 = vand.u32 %v485, 2139095040
  %v3302 = vshrl.u32 %v3301, 23
  %v3303 = vsub.s32 %v3302, 127
  %v3304 = vand.u32 2147483647, %v485
  %v3305 = vand.u32 %v3304, 8388607
  %v3306 = vor.u32 %v3305, 8388608
  %v3307 = vsub.s32 0, %v3306
  %v3308 = vadd.s32 %v3303, 1
  %vm3309 = vcmp.gt.s32.totalorder %v3308, 0
  %v3310 = vsel %vm3309, %v3308, 0
  %v3311 = vshrl.u32 %v3310, 5
  %v3312 = vand.u32 %v3310, 31
  %v3313 = vsub.s32 32, %v3312
  %v3314 = vshrl.u32 683565275, %v3313
  %v3315 = vshll.u32 683565275, %v3312
  %v3316 = vshrl.u32 2475754826, %v3313
  %v3317 = vor.u32 %v3315, %v3316
  %v3318 = vshll.u32 2475754826, %v3312
  %v3319 = vshrl.u32 2131351028, %v3313
  %v3320 = vor.u32 %v3318, %v3319
  %v3321 = vshll.u32 2131351028, %v3312
  %v3322 = vshrl.u32 2102212464, %v3313
  %v3323 = vor.u32 %v3321, %v3322
  %v3324 = vshll.u32 2102212464, %v3312
  %v3325 = vshrl.u32 920167782, %v3313
  %v3326 = vor.u32 %v3324, %v3325
  %v3327 = vshll.u32 920167782, %v3312
  %v3328 = vshrl.u32 1326507024, %v3313
  %v3329 = vor.u32 %v3327, %v3328
  %vm3330 = vcmp.lt.s32.totalorder %v3311, 1
  %vm3331 = vcmp.lt.s32.totalorder %v3311, 2
  %vm3332 = vcmp.lt.s32.totalorder %v3311, 3
  %vm3333 = vcmp.lt.s32.totalorder %v3311, 4
  %v3334 = vsel %vm3330, %v3314, %v3317
  %v3335 = vsel %vm3333, %v3323, 2102212464
  %v3336 = vsel %vm3332, %v3320, %v3335
  %v3337 = vsel %vm3331, %v3334, %v3336
  %v3338 = vsel %vm3330, %v3317, %v3320
  %v3339 = vsel %vm3333, %v3326, 920167782
  %v3340 = vsel %vm3332, %v3323, %v3339
  %v3341 = vsel %vm3331, %v3338, %v3340
  %v3342 = vsel %vm3330, %v3320, %v3323
  %v3343 = vsel %vm3333, %v3329, 1326507024
  %v3344 = vsel %vm3332, %v3326, %v3343
  %v3345 = vsel %vm3331, %v3342, %v3344
  %v3346 = vshll.u32 %v3306, 8
  %v3347 = vmul.u32.u64.compose %v3346, %v3345
  %v3348 = vextract.low.u32 %v3347
  %v3349 = vextract.high.u32 %v3347
  %v3350 = vmul.u32.u64.compose %v3346, %v3341
  %v3351 = vextract.low.u32 %v3350
  %v3352 = vextract.high.u32 %v3350
  %v3353 = vmul.u32 %v3346, %v3337
  %v3354 = vadd.s32 %v3349, %v3351
  %vm3355 = vc.u32 %v3349, %v3351
  %v3356 = vadd.s32 %v3352, 1
  %v3357 = vsel %vm3355, %v3356, %v3352
  %v3358 = vadd.s32 %v3353, %v3357
  %v3359 = vadd.s32 %v3358, 536870912
  %v3360 = vshrl.u32 %v3359, 30
  %v3361 = vshll.u32 %v3360, 30
  %v3362 = vsub.s32 %v3358, %v3361
  %vm3363 = vcmp.lt.s32.totalorder %v3362, 0
  %v3364 = vsub.s32 0, %v3362
  %v3365 = vsel %vm3363, %v3364, %v3362
  %v3366 = vclz %v3365
  %v3367 = vsub.s32 %v3366, 2
  %vm3368 = vcmp.gt.s32.totalorder 0, %v3367
  %v3369 = vsel %vm3368, 0, %v3367
  %v3370 = vsub.s32 32, %v3369
  %v3371 = vshll.u32 %v3362, %v3369
  %v3372 = vshrl.u32 %v3354, %v3370
  %v3373 = vor.u32 %v3371, %v3372
  %v3374 = vsub.s32 4294967266, %v3369
  %v3375 = vadd.s32 %v3374, 127
  %v3376 = vshll.u32 %v3375, 23
  %v3377 = vor.u32 4788187, %v3376
  %v3378 = vand.u32 2147483647, %v3377
  %v3380 = vcvt.s32.f32 %v3373
  %v3381 = vmul.f32 %v3380, %v3378
  %v3382 = vxor.u32 %v3381, 2147483648
  %v3383 = vsel %vm3300, %v3382, %v3381
  %v3384 = vsub.s32 4, %v3360
  %v3385 = vsel %vm3300, %v3384, %v3360
  %v3386 = vsel %vm3299, %v485, %v3383
  %v3387 = vsel %vm3299, 0, %v3385
  %v3388 = vcosq.f32.pop %v3386
  %v3389 = vsinq.f32.pop %v3386
  %vm3390 = vweird.f32 %v485
  %v3391 = vadd.s32 %v3387, 3
  %v3392 = vand.u32 %v3391, 3
  %vm3393 = vcmp.lt.s32.totalorder %v3392, 2
  %vm3394 = vcmp.eq.s32.totalorder %v3392, 0
  %v3395 = vxor.u32 %v3389, 2147483648
  %v3396 = vsel %vm3394, %v3388, %v3395
  %vm3397 = vcmp.eq.s32.totalorder %v3392, 2
  %v3398 = vxor.u32 %v3388, 2147483648
  %v3399 = vsel %vm3397, %v3398, %v3389
  %v3400 = vsel %vm3393, %v3396, %v3399
  %v3401 = vsel %vm3390, nan, %v3400
  %v3402 = vand.u32 2147483647, %v486
  %vm3403 = vcmp.le.f32.partialorder %v3402, 0.7853982
  %vm3404 = vcmp.lt.s32.totalorder %v486, 0
  %v3405 = vand.u32 %v486, 2139095040
  %v3406 = vshrl.u32 %v3405, 23
  %v3407 = vsub.s32 %v3406, 127
  %v3408 = vand.u32 2147483647, %v486
  %v3409 = vand.u32 %v3408, 8388607
  %v3410 = vor.u32 %v3409, 8388608
  %v3411 = vsub.s32 0, %v3410
  %v3412 = vadd.s32 %v3407, 1
  %vm3413 = vcmp.gt.s32.totalorder %v3412, 0
  %v3414 = vsel %vm3413, %v3412, 0
  %v3415 = vshrl.u32 %v3414, 5
  %v3416 = vand.u32 %v3414, 31
  %v3417 = vsub.s32 32, %v3416
  %v3418 = vshrl.u32 683565275, %v3417
  %v3419 = vshll.u32 683565275, %v3416
  %v3420 = vshrl.u32 2475754826, %v3417
  %v3421 = vor.u32 %v3419, %v3420
  %v3422 = vshll.u32 2475754826, %v3416
  %v3423 = vshrl.u32 2131351028, %v3417
  %v3424 = vor.u32 %v3422, %v3423
  %v3425 = vshll.u32 2131351028, %v3416
  %v3426 = vshrl.u32 2102212464, %v3417
  %v3427 = vor.u32 %v3425, %v3426
  %v3428 = vshll.u32 2102212464, %v3416
  %v3429 = vshrl.u32 920167782, %v3417
  %v3430 = vor.u32 %v3428, %v3429
  %v3431 = vshll.u32 920167782, %v3416
  %v3432 = vshrl.u32 1326507024, %v3417
  %v3433 = vor.u32 %v3431, %v3432
  %vm3434 = vcmp.lt.s32.totalorder %v3415, 1
  %vm3435 = vcmp.lt.s32.totalorder %v3415, 2
  %vm3436 = vcmp.lt.s32.totalorder %v3415, 3
  %vm3437 = vcmp.lt.s32.totalorder %v3415, 4
  %v3438 = vsel %vm3434, %v3418, %v3421
  %v3439 = vsel %vm3437, %v3427, 2102212464
  %v3440 = vsel %vm3436, %v3424, %v3439
  %v3441 = vsel %vm3435, %v3438, %v3440
  %v3442 = vsel %vm3434, %v3421, %v3424
  %v3443 = vsel %vm3437, %v3430, 920167782
  %v3444 = vsel %vm3436, %v3427, %v3443
  %v3445 = vsel %vm3435, %v3442, %v3444
  %v3446 = vsel %vm3434, %v3424, %v3427
  %v3447 = vsel %vm3437, %v3433, 1326507024
  %v3448 = vsel %vm3436, %v3430, %v3447
  %v3449 = vsel %vm3435, %v3446, %v3448
  %v3450 = vshll.u32 %v3410, 8
  %v3451 = vmul.u32.u64.compose %v3450, %v3449
  %v3452 = vextract.low.u32 %v3451
  %v3453 = vextract.high.u32 %v3451
  %v3454 = vmul.u32.u64.compose %v3450, %v3445
  %v3455 = vextract.low.u32 %v3454
  %v3456 = vextract.high.u32 %v3454
  %v3457 = vmul.u32 %v3450, %v3441
  %v3458 = vadd.s32 %v3453, %v3455
  %vm3459 = vc.u32 %v3453, %v3455
  %v3460 = vadd.s32 %v3456, 1
  %v3461 = vsel %vm3459, %v3460, %v3456
  %v3462 = vadd.s32 %v3457, %v3461
  %v3463 = vadd.s32 %v3462, 536870912
  %v3464 = vshrl.u32 %v3463, 30
  %v3465 = vshll.u32 %v3464, 30
  %v3466 = vsub.s32 %v3462, %v3465
  %vm3467 = vcmp.lt.s32.totalorder %v3466, 0
  %v3468 = vsub.s32 0, %v3466
  %v3469 = vsel %vm3467, %v3468, %v3466
  %v3470 = vclz %v3469
  %v3471 = vsub.s32 %v3470, 2
  %vm3472 = vcmp.gt.s32.totalorder 0, %v3471
  %v3473 = vsel %vm3472, 0, %v3471
  %v3474 = vsub.s32 32, %v3473
  %v3475 = vshll.u32 %v3466, %v3473
  %v3476 = vshrl.u32 %v3458, %v3474
  %v3477 = vor.u32 %v3475, %v3476
  %v3478 = vsub.s32 4294967266, %v3473
  %v3479 = vadd.s32 %v3478, 127
  %v3480 = vshll.u32 %v3479, 23
  %v3481 = vor.u32 4788187, %v3480
  %v3482 = vand.u32 2147483647, %v3481
  %v3484 = vcvt.s32.f32 %v3477
  %v3485 = vmul.f32 %v3484, %v3482
  %v3486 = vxor.u32 %v3485, 2147483648
  %v3487 = vsel %vm3404, %v3486, %v3485
  %v3488 = vsub.s32 4, %v3464
  %v3489 = vsel %vm3404, %v3488, %v3464
  %v3490 = vsel %vm3403, %v486, %v3487
  %v3491 = vsel %vm3403, 0, %v3489
  %v3492 = vcosq.f32.pop %v3490
  %v3493 = vsinq.f32.pop %v3490
  %vm3494 = vweird.f32 %v486
  %v3495 = vadd.s32 %v3491, 3
  %v3496 = vand.u32 %v3495, 3
  %vm3497 = vcmp.lt.s32.totalorder %v3496, 2
  %vm3498 = vcmp.eq.s32.totalorder %v3496, 0
  %v3499 = vxor.u32 %v3493, 2147483648
  %v3500 = vsel %vm3498, %v3492, %v3499
  %vm3501 = vcmp.eq.s32.totalorder %v3496, 2
  %v3502 = vxor.u32 %v3492, 2147483648
  %v3503 = vsel %vm3501, %v3502, %v3493
  %v3504 = vsel %vm3497, %v3500, %v3503
  %v3505 = vsel %vm3494, nan, %v3504
  %v3506 = vand.u32 2147483647, %v487
  %vm3507 = vcmp.le.f32.partialorder %v3506, 0.7853982
  %vm3508 = vcmp.lt.s32.totalorder %v487, 0
  %v3509 = vand.u32 %v487, 2139095040
  %v3510 = vshrl.u32 %v3509, 23
  %v3511 = vsub.s32 %v3510, 127
  %v3512 = vand.u32 2147483647, %v487
  %v3513 = vand.u32 %v3512, 8388607
  %v3514 = vor.u32 %v3513, 8388608
  %v3515 = vsub.s32 0, %v3514
  %v3516 = vadd.s32 %v3511, 1
  %vm3517 = vcmp.gt.s32.totalorder %v3516, 0
  %v3518 = vsel %vm3517, %v3516, 0
  %v3519 = vshrl.u32 %v3518, 5
  %v3520 = vand.u32 %v3518, 31
  %v3521 = vsub.s32 32, %v3520
  %v3522 = vshrl.u32 683565275, %v3521
  %v3523 = vshll.u32 683565275, %v3520
  %v3524 = vshrl.u32 2475754826, %v3521
  %v3525 = vor.u32 %v3523, %v3524
  %v3526 = vshll.u32 2475754826, %v3520
  %v3527 = vshrl.u32 2131351028, %v3521
  %v3528 = vor.u32 %v3526, %v3527
  %v3529 = vshll.u32 2131351028, %v3520
  %v3530 = vshrl.u32 2102212464, %v3521
  %v3531 = vor.u32 %v3529, %v3530
  %v3532 = vshll.u32 2102212464, %v3520
  %v3533 = vshrl.u32 920167782, %v3521
  %v3534 = vor.u32 %v3532, %v3533
  %v3535 = vshll.u32 920167782, %v3520
  %v3536 = vshrl.u32 1326507024, %v3521
  %v3537 = vor.u32 %v3535, %v3536
  %vm3538 = vcmp.lt.s32.totalorder %v3519, 1
  %vm3539 = vcmp.lt.s32.totalorder %v3519, 2
  %vm3540 = vcmp.lt.s32.totalorder %v3519, 3
  %vm3541 = vcmp.lt.s32.totalorder %v3519, 4
  %v3542 = vsel %vm3538, %v3522, %v3525
  %v3543 = vsel %vm3541, %v3531, 2102212464
  %v3544 = vsel %vm3540, %v3528, %v3543
  %v3545 = vsel %vm3539, %v3542, %v3544
  %v3546 = vsel %vm3538, %v3525, %v3528
  %v3547 = vsel %vm3541, %v3534, 920167782
  %v3548 = vsel %vm3540, %v3531, %v3547
  %v3549 = vsel %vm3539, %v3546, %v3548
  %v3550 = vsel %vm3538, %v3528, %v3531
  %v3551 = vsel %vm3541, %v3537, 1326507024
  %v3552 = vsel %vm3540, %v3534, %v3551
  %v3553 = vsel %vm3539, %v3550, %v3552
  %v3554 = vshll.u32 %v3514, 8
  %v3555 = vmul.u32.u64.compose %v3554, %v3553
  %v3556 = vextract.low.u32 %v3555
  %v3557 = vextract.high.u32 %v3555
  %v3558 = vmul.u32.u64.compose %v3554, %v3549
  %v3559 = vextract.low.u32 %v3558
  %v3560 = vextract.high.u32 %v3558
  %v3561 = vmul.u32 %v3554, %v3545
  %v3562 = vadd.s32 %v3557, %v3559
  %vm3563 = vc.u32 %v3557, %v3559
  %v3564 = vadd.s32 %v3560, 1
  %v3565 = vsel %vm3563, %v3564, %v3560
  %v3566 = vadd.s32 %v3561, %v3565
  %v3567 = vadd.s32 %v3566, 536870912
  %v3568 = vshrl.u32 %v3567, 30
  %v3569 = vshll.u32 %v3568, 30
  %v3570 = vsub.s32 %v3566, %v3569
  %vm3571 = vcmp.lt.s32.totalorder %v3570, 0
  %v3572 = vsub.s32 0, %v3570
  %v3573 = vsel %vm3571, %v3572, %v3570
  %v3574 = vclz %v3573
  %v3575 = vsub.s32 %v3574, 2
  %vm3576 = vcmp.gt.s32.totalorder 0, %v3575
  %v3577 = vsel %vm3576, 0, %v3575
  %v3578 = vsub.s32 32, %v3577
  %v3579 = vshll.u32 %v3570, %v3577
  %v3580 = vshrl.u32 %v3562, %v3578
  %v3581 = vor.u32 %v3579, %v3580
  %v3582 = vsub.s32 4294967266, %v3577
  %v3583 = vadd.s32 %v3582, 127
  %v3584 = vshll.u32 %v3583, 23
  %v3585 = vor.u32 4788187, %v3584
  %v3586 = vand.u32 2147483647, %v3585
  %v3588 = vcvt.s32.f32 %v3581
  %v3589 = vmul.f32 %v3588, %v3586
  %v3590 = vxor.u32 %v3589, 2147483648
  %v3591 = vsel %vm3508, %v3590, %v3589
  %v3592 = vsub.s32 4, %v3568
  %v3593 = vsel %vm3508, %v3592, %v3568
  %v3594 = vsel %vm3507, %v487, %v3591
  %v3595 = vsel %vm3507, 0, %v3593
  %v3596 = vcosq.f32.pop %v3594
  %v3597 = vsinq.f32.pop %v3594
  %vm3598 = vweird.f32 %v487
  %v3599 = vadd.s32 %v3595, 3
  %v3600 = vand.u32 %v3599, 3
  %vm3601 = vcmp.lt.s32.totalorder %v3600, 2
  %vm3602 = vcmp.eq.s32.totalorder %v3600, 0
  %v3603 = vxor.u32 %v3597, 2147483648
  %v3604 = vsel %vm3602, %v3596, %v3603
  %vm3605 = vcmp.eq.s32.totalorder %v3600, 2
  %v3606 = vxor.u32 %v3596, 2147483648
  %v3607 = vsel %vm3605, %v3606, %v3597
  %v3608 = vsel %vm3601, %v3604, %v3607
  %v3609 = vsel %vm3598, nan, %v3608
  %v3610 = vand.u32 2147483647, %v488
  %vm3611 = vcmp.le.f32.partialorder %v3610, 0.7853982
  %vm3612 = vcmp.lt.s32.totalorder %v488, 0
  %v3613 = vand.u32 %v488, 2139095040
  %v3614 = vshrl.u32 %v3613, 23
  %v3615 = vsub.s32 %v3614, 127
  %v3616 = vand.u32 2147483647, %v488
  %v3617 = vand.u32 %v3616, 8388607
  %v3618 = vor.u32 %v3617, 8388608
  %v3619 = vsub.s32 0, %v3618
  %v3620 = vadd.s32 %v3615, 1
  %vm3621 = vcmp.gt.s32.totalorder %v3620, 0
  %v3622 = vsel %vm3621, %v3620, 0
  %v3623 = vshrl.u32 %v3622, 5
  %v3624 = vand.u32 %v3622, 31
  %v3625 = vsub.s32 32, %v3624
  %v3626 = vshrl.u32 683565275, %v3625
  %v3627 = vshll.u32 683565275, %v3624
  %v3628 = vshrl.u32 2475754826, %v3625
  %v3629 = vor.u32 %v3627, %v3628
  %v3630 = vshll.u32 2475754826, %v3624
  %v3631 = vshrl.u32 2131351028, %v3625
  %v3632 = vor.u32 %v3630, %v3631
  %v3633 = vshll.u32 2131351028, %v3624
  %v3634 = vshrl.u32 2102212464, %v3625
  %v3635 = vor.u32 %v3633, %v3634
  %v3636 = vshll.u32 2102212464, %v3624
  %v3637 = vshrl.u32 920167782, %v3625
  %v3638 = vor.u32 %v3636, %v3637
  %v3639 = vshll.u32 920167782, %v3624
  %v3640 = vshrl.u32 1326507024, %v3625
  %v3641 = vor.u32 %v3639, %v3640
  %vm3642 = vcmp.lt.s32.totalorder %v3623, 1
  %vm3643 = vcmp.lt.s32.totalorder %v3623, 2
  %vm3644 = vcmp.lt.s32.totalorder %v3623, 3
  %vm3645 = vcmp.lt.s32.totalorder %v3623, 4
  %v3646 = vsel %vm3642, %v3626, %v3629
  %v3647 = vsel %vm3645, %v3635, 2102212464
  %v3648 = vsel %vm3644, %v3632, %v3647
  %v3649 = vsel %vm3643, %v3646, %v3648
  %v3650 = vsel %vm3642, %v3629, %v3632
  %v3651 = vsel %vm3645, %v3638, 920167782
  %v3652 = vsel %vm3644, %v3635, %v3651
  %v3653 = vsel %vm3643, %v3650, %v3652
  %v3654 = vsel %vm3642, %v3632, %v3635
  %v3655 = vsel %vm3645, %v3641, 1326507024
  %v3656 = vsel %vm3644, %v3638, %v3655
  %v3657 = vsel %vm3643, %v3654, %v3656
  %v3658 = vshll.u32 %v3618, 8
  %v3659 = vmul.u32.u64.compose %v3658, %v3657
  %v3660 = vextract.low.u32 %v3659
  %v3661 = vextract.high.u32 %v3659
  %v3662 = vmul.u32.u64.compose %v3658, %v3653
  %v3663 = vextract.low.u32 %v3662
  %v3664 = vextract.high.u32 %v3662
  %v3665 = vmul.u32 %v3658, %v3649
  %v3666 = vadd.s32 %v3661, %v3663
  %vm3667 = vc.u32 %v3661, %v3663
  %v3668 = vadd.s32 %v3664, 1
  %v3669 = vsel %vm3667, %v3668, %v3664
  %v3670 = vadd.s32 %v3665, %v3669
  %v3671 = vadd.s32 %v3670, 536870912
  %v3672 = vshrl.u32 %v3671, 30
  %v3673 = vshll.u32 %v3672, 30
  %v3674 = vsub.s32 %v3670, %v3673
  %vm3675 = vcmp.lt.s32.totalorder %v3674, 0
  %v3676 = vsub.s32 0, %v3674
  %v3677 = vsel %vm3675, %v3676, %v3674
  %v3678 = vclz %v3677
  %v3679 = vsub.s32 %v3678, 2
  %vm3680 = vcmp.gt.s32.totalorder 0, %v3679
  %v3681 = vsel %vm3680, 0, %v3679
  %v3682 = vsub.s32 32, %v3681
  %v3683 = vshll.u32 %v3674, %v3681
  %v3684 = vshrl.u32 %v3666, %v3682
  %v3685 = vor.u32 %v3683, %v3684
  %v3686 = vsub.s32 4294967266, %v3681
  %v3687 = vadd.s32 %v3686, 127
  %v3688 = vshll.u32 %v3687, 23
  %v3689 = vor.u32 4788187, %v3688
  %v3690 = vand.u32 2147483647, %v3689
  %v3692 = vcvt.s32.f32 %v3685
  %v3693 = vmul.f32 %v3692, %v3690
  %v3694 = vxor.u32 %v3693, 2147483648
  %v3695 = vsel %vm3612, %v3694, %v3693
  %v3696 = vsub.s32 4, %v3672
  %v3697 = vsel %vm3612, %v3696, %v3672
  %v3698 = vsel %vm3611, %v488, %v3695
  %v3699 = vsel %vm3611, 0, %v3697
  %v3700 = vcosq.f32.pop %v3698
  %v3701 = vsinq.f32.pop %v3698
  %vm3702 = vweird.f32 %v488
  %v3703 = vadd.s32 %v3699, 3
  %v3704 = vand.u32 %v3703, 3
  %vm3705 = vcmp.lt.s32.totalorder %v3704, 2
  %vm3706 = vcmp.eq.s32.totalorder %v3704, 0
  %v3707 = vxor.u32 %v3701, 2147483648
  %v3708 = vsel %vm3706, %v3700, %v3707
  %vm3709 = vcmp.eq.s32.totalorder %v3704, 2
  %v3710 = vxor.u32 %v3700, 2147483648
  %v3711 = vsel %vm3709, %v3710, %v3701
  %v3712 = vsel %vm3705, %v3708, %v3711
  %v3713 = vsel %vm3702, nan, %v3712
  %v3714 = vand.u32 2147483647, %v489
  %vm3715 = vcmp.le.f32.partialorder %v3714, 0.7853982
  %vm3716 = vcmp.lt.s32.totalorder %v489, 0
  %v3717 = vand.u32 %v489, 2139095040
  %v3718 = vshrl.u32 %v3717, 23
  %v3719 = vsub.s32 %v3718, 127
  %v3720 = vand.u32 2147483647, %v489
  %v3721 = vand.u32 %v3720, 8388607
  %v3722 = vor.u32 %v3721, 8388608
  %v3723 = vsub.s32 0, %v3722
  %v3724 = vadd.s32 %v3719, 1
  %vm3725 = vcmp.gt.s32.totalorder %v3724, 0
  %v3726 = vsel %vm3725, %v3724, 0
  %v3727 = vshrl.u32 %v3726, 5
  %v3728 = vand.u32 %v3726, 31
  %v3729 = vsub.s32 32, %v3728
  %v3730 = vshrl.u32 683565275, %v3729
  %v3731 = vshll.u32 683565275, %v3728
  %v3732 = vshrl.u32 2475754826, %v3729
  %v3733 = vor.u32 %v3731, %v3732
  %v3734 = vshll.u32 2475754826, %v3728
  %v3735 = vshrl.u32 2131351028, %v3729
  %v3736 = vor.u32 %v3734, %v3735
  %v3737 = vshll.u32 2131351028, %v3728
  %v3738 = vshrl.u32 2102212464, %v3729
  %v3739 = vor.u32 %v3737, %v3738
  %v3740 = vshll.u32 2102212464, %v3728
  %v3741 = vshrl.u32 920167782, %v3729
  %v3742 = vor.u32 %v3740, %v3741
  %v3743 = vshll.u32 920167782, %v3728
  %v3744 = vshrl.u32 1326507024, %v3729
  %v3745 = vor.u32 %v3743, %v3744
  %vm3746 = vcmp.lt.s32.totalorder %v3727, 1
  %vm3747 = vcmp.lt.s32.totalorder %v3727, 2
  %vm3748 = vcmp.lt.s32.totalorder %v3727, 3
  %vm3749 = vcmp.lt.s32.totalorder %v3727, 4
  %v3750 = vsel %vm3746, %v3730, %v3733
  %v3751 = vsel %vm3749, %v3739, 2102212464
  %v3752 = vsel %vm3748, %v3736, %v3751
  %v3753 = vsel %vm3747, %v3750, %v3752
  %v3754 = vsel %vm3746, %v3733, %v3736
  %v3755 = vsel %vm3749, %v3742, 920167782
  %v3756 = vsel %vm3748, %v3739, %v3755
  %v3757 = vsel %vm3747, %v3754, %v3756
  %v3758 = vsel %vm3746, %v3736, %v3739
  %v3759 = vsel %vm3749, %v3745, 1326507024
  %v3760 = vsel %vm3748, %v3742, %v3759
  %v3761 = vsel %vm3747, %v3758, %v3760
  %v3762 = vshll.u32 %v3722, 8
  %v3763 = vmul.u32.u64.compose %v3762, %v3761
  %v3764 = vextract.low.u32 %v3763
  %v3765 = vextract.high.u32 %v3763
  %v3766 = vmul.u32.u64.compose %v3762, %v3757
  %v3767 = vextract.low.u32 %v3766
  %v3768 = vextract.high.u32 %v3766
  %v3769 = vmul.u32 %v3762, %v3753
  %v3770 = vadd.s32 %v3765, %v3767
  %vm3771 = vc.u32 %v3765, %v3767
  %v3772 = vadd.s32 %v3768, 1
  %v3773 = vsel %vm3771, %v3772, %v3768
  %v3774 = vadd.s32 %v3769, %v3773
  %v3775 = vadd.s32 %v3774, 536870912
  %v3776 = vshrl.u32 %v3775, 30
  %v3777 = vshll.u32 %v3776, 30
  %v3778 = vsub.s32 %v3774, %v3777
  %vm3779 = vcmp.lt.s32.totalorder %v3778, 0
  %v3780 = vsub.s32 0, %v3778
  %v3781 = vsel %vm3779, %v3780, %v3778
  %v3782 = vclz %v3781
  %v3783 = vsub.s32 %v3782, 2
  %vm3784 = vcmp.gt.s32.totalorder 0, %v3783
  %v3785 = vsel %vm3784, 0, %v3783
  %v3786 = vsub.s32 32, %v3785
  %v3787 = vshll.u32 %v3778, %v3785
  %v3788 = vshrl.u32 %v3770, %v3786
  %v3789 = vor.u32 %v3787, %v3788
  %v3790 = vsub.s32 4294967266, %v3785
  %v3791 = vadd.s32 %v3790, 127
  %v3792 = vshll.u32 %v3791, 23
  %v3793 = vor.u32 4788187, %v3792
  %v3794 = vand.u32 2147483647, %v3793
  %v3796 = vcvt.s32.f32 %v3789
  %v3797 = vmul.f32 %v3796, %v3794
  %v3798 = vxor.u32 %v3797, 2147483648
  %v3799 = vsel %vm3716, %v3798, %v3797
  %v3800 = vsub.s32 4, %v3776
  %v3801 = vsel %vm3716, %v3800, %v3776
  %v3802 = vsel %vm3715, %v489, %v3799
  %v3803 = vsel %vm3715, 0, %v3801
  %v3804 = vcosq.f32.pop %v3802
  %v3805 = vsinq.f32.pop %v3802
  %vm3806 = vweird.f32 %v489
  %v3807 = vadd.s32 %v3803, 3
  %v3808 = vand.u32 %v3807, 3
  %vm3809 = vcmp.lt.s32.totalorder %v3808, 2
  %vm3810 = vcmp.eq.s32.totalorder %v3808, 0
  %v3811 = vxor.u32 %v3805, 2147483648
  %v3812 = vsel %vm3810, %v3804, %v3811
  %vm3813 = vcmp.eq.s32.totalorder %v3808, 2
  %v3814 = vxor.u32 %v3804, 2147483648
  %v3815 = vsel %vm3813, %v3814, %v3805
  %v3816 = vsel %vm3809, %v3812, %v3815
  %v3817 = vsel %vm3806, nan, %v3816
  %v3818 = vld [vmem:[%s3] sm:$0xff]
  %v3819 = vld [vmem:[%s3 + $0x8] sm:$0xff]
  %v3820 = vld [vmem:[%s3 + $0x10] sm:$0xff]
  %v3821 = vld [vmem:[%s3 + $0x18] sm:$0xff]
  %v3822 = vld [vmem:[%s3 + $0x20] sm:$0xff]
  %v3823 = vld [vmem:[%s3 + $0x28] sm:$0xff]
  %v3824 = vld [vmem:[%s3 + $0x30] sm:$0xff]
  %v3825 = vld [vmem:[%s3 + $0x38] sm:$0xff]
  %v3826 = vld [vmem:[%s3 + $0x40] sm:$0xff]
  %v3827 = vld [vmem:[%s3 + $0x48] sm:$0xff]
  %v3828 = vld [vmem:[%s3 + $0x50] sm:$0xff]
  %v3829 = vld [vmem:[%s3 + $0x58] sm:$0xff]
  %v3830 = vld [vmem:[%s3 + $0x60] sm:$0xff]
  %v3831 = vld [vmem:[%s3 + $0x68] sm:$0xff]
  %v3832 = vld [vmem:[%s3 + $0x70] sm:$0xff]
  %v3833 = vld [vmem:[%s3 + $0x78] sm:$0xff]
  %v3834 = vld [vmem:[%s4] sm:$0x1]
  %v3836 = vlaneseq
  %v3837 = vshrl.u32 %v3836, 7
  %v3838 = vsub.s32 0, %v3837
  %v3839 = vrot.slane %v3834, %v3838
  %3841 = vmatprep.subr.mxu0 0.0
  %v3842 = vand.u32 %v3818, 4294901760
  %3843 = vmatpush1.msra.mxu0 %v3842
  %3844 = vmatprep.subr.mxu0 0.0
  %v3845 = vand.u32 %v3819, 4294901760
  %3846 = vmatpush1.msra.mxu0 %v3845
  %3847 = vmatprep.subr.mxu0 0.0
  %v3848 = vand.u32 %v3820, 4294901760
  %3849 = vmatpush1.msra.mxu0 %v3848
  %3850 = vmatprep.subr.mxu0 0.0
  %v3851 = vand.u32 %v3821, 4294901760
  %3852 = vmatpush1.msra.mxu0 %v3851
  %3853 = vmatprep.subr.mxu0 0.0
  %v3854 = vand.u32 %v3822, 4294901760
  %3855 = vmatpush1.msra.mxu0 %v3854
  %3856 = vmatprep.subr.mxu0 0.0
  %v3857 = vand.u32 %v3823, 4294901760
  %3858 = vmatpush1.msra.mxu0 %v3857
  %3859 = vmatprep.subr.mxu0 0.0
  %v3860 = vand.u32 %v3824, 4294901760
  %3861 = vmatpush1.msra.mxu0 %v3860
  %3862 = vmatprep.subr.mxu0 0.0
  %v3863 = vand.u32 %v3825, 4294901760
  %3864 = vmatpush1.msra.mxu0 %v3863
  %3865 = vmatprep.subr.mxu0 0.0
  %v3866 = vand.u32 %v3826, 4294901760
  %3867 = vmatpush1.msra.mxu0 %v3866
  %3868 = vmatprep.subr.mxu0 0.0
  %v3869 = vand.u32 %v3827, 4294901760
  %3870 = vmatpush1.msra.mxu0 %v3869
  %3871 = vmatprep.subr.mxu0 0.0
  %v3872 = vand.u32 %v3828, 4294901760
  %3873 = vmatpush1.msra.mxu0 %v3872
  %3874 = vmatprep.subr.mxu0 0.0
  %v3875 = vand.u32 %v3829, 4294901760
  %3876 = vmatpush1.msra.mxu0 %v3875
  %3877 = vmatprep.subr.mxu0 0.0
  %v3878 = vand.u32 %v3830, 4294901760
  %3879 = vmatpush1.msra.mxu0 %v3878
  %3880 = vmatprep.subr.mxu0 0.0
  %v3881 = vand.u32 %v3831, 4294901760
  %3882 = vmatpush1.msra.mxu0 %v3881
  %3883 = vmatprep.subr.mxu0 0.0
  %v3884 = vand.u32 %v3832, 4294901760
  %3885 = vmatpush1.msra.mxu0 %v3884
  %3886 = vmatprep.subr.mxu0 0.0
  %v3887 = vand.u32 %v3833, 4294901760
  %3888 = vmatpush1.msra.mxu0 %v3887
  %3889 = vmatprep.subr.mxu0 0.0
  %3890 = vmatpush1.msra.mxu0 0.0
  %3891 = vmatprep.subr.mxu0 0.0
  %3892 = vmatpush1.msra.mxu0 0.0
  %3893 = vmatprep.subr.mxu0 0.0
  %3894 = vmatpush1.msra.mxu0 0.0
  %3895 = vmatprep.subr.mxu0 0.0
  %3896 = vmatpush1.msra.mxu0 0.0
  %3897 = vmatprep.subr.mxu0 0.0
  %3898 = vmatpush1.msra.mxu0 0.0
  %3899 = vmatprep.subr.mxu0 0.0
  %3900 = vmatpush1.msra.mxu0 0.0
  %3901 = vmatprep.subr.mxu0 0.0
  %3902 = vmatpush1.msra.mxu0 0.0
  %3903 = vmatprep.subr.mxu0 0.0
  %3904 = vmatpush1.msra.mxu0 0.0
  %3905 = vmatprep.subr.mxu0 0.0
  %3906 = vmatpush1.msra.mxu0 0.0
  %3907 = vmatprep.subr.mxu0 0.0
  %3908 = vmatpush1.msra.mxu0 0.0
  %3909 = vmatprep.subr.mxu0 0.0
  %3910 = vmatpush1.msra.mxu0 0.0
  %3911 = vmatprep.subr.mxu0 0.0
  %3912 = vmatpush1.msra.mxu0 0.0
  %3913 = vmatprep.subr.mxu0 0.0
  %3914 = vmatpush1.msra.mxu0 0.0
  %3915 = vmatprep.subr.mxu0 0.0
  %3916 = vmatpush1.msra.mxu0 0.0
  %3917 = vmatprep.subr.mxu0 0.0
  %3918 = vmatpush1.msra.mxu0 0.0
  %3919 = vmatprep.subr.mxu0 0.0
  %3920 = vmatpush1.msra.mxu0 0.0
  %3921 = vmatprep.mubr.f32.mxu0 0.0
  %v3922 = vand.u32 %v593, 4294901760
  %v3923 = vsub.f32 %v593, %v3922
  %v3924 = vand.u32 %v3923, 4294901760
  %v3925 = vsub.f32 %v3923, %v3924
  %v3926 = vand.u32 %v3925, 4294901760
  %3927 = vmatmul.mubr.f32.gmra.mrb[0].mxu0 %v3926
  %v3928 = vpop.f32.mrb[0].mxu0
  %v3929 = vadd.f32 %v3839, %v3928
  %v3930 = vpop.f32.mrb[0].mxu0
  %3931 = vmatprep.mubr.f32.mxu0 0.0
  %v3932 = vand.u32 %v697, 4294901760
  %v3933 = vsub.f32 %v697, %v3932
  %v3934 = vand.u32 %v3933, 4294901760
  %v3935 = vsub.f32 %v3933, %v3934
  %v3936 = vand.u32 %v3935, 4294901760
  %3937 = vmatmul.mubr.f32.gmra.mrb[0].mxu0 %v3936
  %v3938 = vpop.f32.mrb[0].mxu0
  %v3939 = vadd.f32 %v3839, %v3938
  %v3940 = vpop.f32.mrb[0].mxu0
  %3941 = vmatprep.mubr.f32.mxu0 0.0
  %v3942 = vand.u32 %v801, 4294901760
  %v3943 = vsub.f32 %v801, %v3942
  %v3944 = vand.u32 %v3943, 4294901760
  %v3945 = vsub.f32 %v3943, %v3944
  %v3946 = vand.u32 %v3945, 4294901760
  %3947 = vmatmul.mubr.f32.gmra.mrb[0].mxu0 %v3946
  %v3948 = vpop.f32.mrb[0].mxu0
  %v3949 = vadd.f32 %v3839, %v3948
  %v3950 = vpop.f32.mrb[0].mxu0
  %3951 = vmatprep.mubr.f32.mxu0 0.0
  %v3952 = vand.u32 %v905, 4294901760
  %v3953 = vsub.f32 %v905, %v3952
  %v3954 = vand.u32 %v3953, 4294901760
  %v3955 = vsub.f32 %v3953, %v3954
  %v3956 = vand.u32 %v3955, 4294901760
  %3957 = vmatmul.mubr.f32.gmra.mrb[0].mxu0 %v3956
  %v3958 = vpop.f32.mrb[0].mxu0
  %v3959 = vadd.f32 %v3839, %v3958
  %v3960 = vpop.f32.mrb[0].mxu0
  %3961 = vmatprep.mubr.f32.mxu0 0.0
  %v3962 = vand.u32 %v1009, 4294901760
  %v3963 = vsub.f32 %v1009, %v3962
  %v3964 = vand.u32 %v3963, 4294901760
  %v3965 = vsub.f32 %v3963, %v3964
  %v3966 = vand.u32 %v3965, 4294901760
  %3967 = vmatmul.mubr.f32.gmra.mrb[0].mxu0 %v3966
  %v3968 = vpop.f32.mrb[0].mxu0
  %v3969 = vadd.f32 %v3839, %v3968
  %v3970 = vpop.f32.mrb[0].mxu0
  %3971 = vmatprep.mubr.f32.mxu0 0.0
  %v3972 = vand.u32 %v1113, 4294901760
  %v3973 = vsub.f32 %v1113, %v3972
  %v3974 = vand.u32 %v3973, 4294901760
  %v3975 = vsub.f32 %v3973, %v3974
  %v3976 = vand.u32 %v3975, 4294901760
  %3977 = vmatmul.mubr.f32.gmra.mrb[0].mxu0 %v3976
  %v3978 = vpop.f32.mrb[0].mxu0
  %v3979 = vadd.f32 %v3839, %v3978
  %v3980 = vpop.f32.mrb[0].mxu0
  %3981 = vmatprep.mubr.f32.mxu0 0.0
  %v3982 = vand.u32 %v1217, 4294901760
  %v3983 = vsub.f32 %v1217, %v3982
  %v3984 = vand.u32 %v3983, 4294901760
  %v3985 = vsub.f32 %v3983, %v3984
  %v3986 = vand.u32 %v3985, 4294901760
  %3987 = vmatmul.mubr.f32.gmra.mrb[0].mxu0 %v3986
  %v3988 = vpop.f32.mrb[0].mxu0
  %v3989 = vadd.f32 %v3839, %v3988
  %v3990 = vpop.f32.mrb[0].mxu0
  %3991 = vmatprep.mubr.f32.mxu0 0.0
  %v3992 = vand.u32 %v1321, 4294901760
  %v3993 = vsub.f32 %v1321, %v3992
  %v3994 = vand.u32 %v3993, 4294901760
  %v3995 = vsub.f32 %v3993, %v3994
  %v3996 = vand.u32 %v3995, 4294901760
  %3997 = vmatmul.mubr.f32.gmra.mrb[0].mxu0 %v3996
  %v3998 = vpop.f32.mrb[0].mxu0
  %v3999 = vadd.f32 %v3839, %v3998
  %v4000 = vpop.f32.mrb[0].mxu0
  %4001 = vmatprep.mubr.f32.mxu0 0.0
  %v4002 = vand.u32 %v1425, 4294901760
  %v4003 = vsub.f32 %v1425, %v4002
  %v4004 = vand.u32 %v4003, 4294901760
  %v4005 = vsub.f32 %v4003, %v4004
  %v4006 = vand.u32 %v4005, 4294901760
  %4007 = vmatmul.mubr.f32.gmra.mrb[0].mxu0 %v4006
  %v4008 = vpop.f32.mrb[0].mxu0
  %v4009 = vadd.f32 %v3839, %v4008
  %v4010 = vpop.f32.mrb[0].mxu0
  %4011 = vmatprep.mubr.f32.mxu0 0.0
  %v4012 = vand.u32 %v1529, 4294901760
  %v4013 = vsub.f32 %v1529, %v4012
  %v4014 = vand.u32 %v4013, 4294901760
  %v4015 = vsub.f32 %v4013, %v4014
  %v4016 = vand.u32 %v4015, 4294901760
  %4017 = vmatmul.mubr.f32.gmra.mrb[0].mxu0 %v4016
  %v4018 = vpop.f32.mrb[0].mxu0
  %v4019 = vadd.f32 %v3839, %v4018
  %v4020 = vpop.f32.mrb[0].mxu0
  %4021 = vmatprep.mubr.f32.mxu0 0.0
  %v4022 = vand.u32 %v1633, 4294901760
  %v4023 = vsub.f32 %v1633, %v4022
  %v4024 = vand.u32 %v4023, 4294901760
  %v4025 = vsub.f32 %v4023, %v4024
  %v4026 = vand.u32 %v4025, 4294901760
  %4027 = vmatmul.mubr.f32.gmra.mrb[0].mxu0 %v4026
  %v4028 = vpop.f32.mrb[0].mxu0
  %v4029 = vadd.f32 %v3839, %v4028
  %v4030 = vpop.f32.mrb[0].mxu0
  %4031 = vmatprep.mubr.f32.mxu0 0.0
  %v4032 = vand.u32 %v1737, 4294901760
  %v4033 = vsub.f32 %v1737, %v4032
  %v4034 = vand.u32 %v4033, 4294901760
  %v4035 = vsub.f32 %v4033, %v4034
  %v4036 = vand.u32 %v4035, 4294901760
  %4037 = vmatmul.mubr.f32.gmra.mrb[0].mxu0 %v4036
  %v4038 = vpop.f32.mrb[0].mxu0
  %v4039 = vadd.f32 %v3839, %v4038
  %v4040 = vpop.f32.mrb[0].mxu0
  %4041 = vmatprep.mubr.f32.mxu0 0.0
  %v4042 = vand.u32 %v1841, 4294901760
  %v4043 = vsub.f32 %v1841, %v4042
  %v4044 = vand.u32 %v4043, 4294901760
  %v4045 = vsub.f32 %v4043, %v4044
  %v4046 = vand.u32 %v4045, 4294901760
  %4047 = vmatmul.mubr.f32.gmra.mrb[0].mxu0 %v4046
  %v4048 = vpop.f32.mrb[0].mxu0
  %v4049 = vadd.f32 %v3839, %v4048
  %v4050 = vpop.f32.mrb[0].mxu0
  %4051 = vmatprep.mubr.f32.mxu0 0.0
  %v4052 = vand.u32 %v1945, 4294901760
  %v4053 = vsub.f32 %v1945, %v4052
  %v4054 = vand.u32 %v4053, 4294901760
  %v4055 = vsub.f32 %v4053, %v4054
  %v4056 = vand.u32 %v4055, 4294901760
  %4057 = vmatmul.mubr.f32.gmra.mrb[0].mxu0 %v4056
  %v4058 = vpop.f32.mrb[0].mxu0
  %v4059 = vadd.f32 %v3839, %v4058
  %v4060 = vpop.f32.mrb[0].mxu0
  %4061 = vmatprep.mubr.f32.mxu0 0.0
  %v4062 = vand.u32 %v2049, 4294901760
  %v4063 = vsub.f32 %v2049, %v4062
  %v4064 = vand.u32 %v4063, 4294901760
  %v4065 = vsub.f32 %v4063, %v4064
  %v4066 = vand.u32 %v4065, 4294901760
  %4067 = vmatmul.mubr.f32.gmra.mrb[0].mxu0 %v4066
  %v4068 = vpop.f32.mrb[0].mxu0
  %v4069 = vadd.f32 %v3839, %v4068
  %v4070 = vpop.f32.mrb[0].mxu0
  %4071 = vmatprep.mubr.f32.mxu0 0.0
  %v4072 = vand.u32 %v2153, 4294901760
  %v4073 = vsub.f32 %v2153, %v4072
  %v4074 = vand.u32 %v4073, 4294901760
  %v4075 = vsub.f32 %v4073, %v4074
  %v4076 = vand.u32 %v4075, 4294901760
  %4077 = vmatmul.mubr.f32.gmra.mrb[0].mxu0 %v4076
  %v4078 = vpop.f32.mrb[0].mxu0
  %v4079 = vadd.f32 %v3839, %v4078
  %v4080 = vpop.f32.mrb[0].mxu0
  %4081 = vmatprep.mubr.f32.mxu0 0.0
  %v4082 = vand.u32 %v2257, 4294901760
  %v4083 = vsub.f32 %v2257, %v4082
  %v4084 = vand.u32 %v4083, 4294901760
  %v4085 = vsub.f32 %v4083, %v4084
  %v4086 = vand.u32 %v4085, 4294901760
  %4087 = vmatmul.mubr.f32.gmra.mrb[0].mxu0 %v4086
  %v4088 = vpop.f32.mrb[0].mxu0
  %v4089 = vadd.f32 %v3839, %v4088
  %v4090 = vpop.f32.mrb[0].mxu0
  %4091 = vmatprep.mubr.f32.mxu0 0.0
  %v4092 = vand.u32 %v2361, 4294901760
  %v4093 = vsub.f32 %v2361, %v4092
  %v4094 = vand.u32 %v4093, 4294901760
  %v4095 = vsub.f32 %v4093, %v4094
  %v4096 = vand.u32 %v4095, 4294901760
  %4097 = vmatmul.mubr.f32.gmra.mrb[0].mxu0 %v4096
  %v4098 = vpop.f32.mrb[0].mxu0
  %v4099 = vadd.f32 %v3839, %v4098
  %v4100 = vpop.f32.mrb[0].mxu0
  %4101 = vmatprep.mubr.f32.mxu0 0.0
  %v4102 = vand.u32 %v2465, 4294901760
  %v4103 = vsub.f32 %v2465, %v4102
  %v4104 = vand.u32 %v4103, 4294901760
  %v4105 = vsub.f32 %v4103, %v4104
  %v4106 = vand.u32 %v4105, 4294901760
  %4107 = vmatmul.mubr.f32.gmra.mrb[0].mxu0 %v4106
  %v4108 = vpop.f32.mrb[0].mxu0
  %v4109 = vadd.f32 %v3839, %v4108
  %v4110 = vpop.f32.mrb[0].mxu0
  %4111 = vmatprep.mubr.f32.mxu0 0.0
  %v4112 = vand.u32 %v2569, 4294901760
  %v4113 = vsub.f32 %v2569, %v4112
  %v4114 = vand.u32 %v4113, 4294901760
  %v4115 = vsub.f32 %v4113, %v4114
  %v4116 = vand.u32 %v4115, 4294901760
  %4117 = vmatmul.mubr.f32.gmra.mrb[0].mxu0 %v4116
  %v4118 = vpop.f32.mrb[0].mxu0
  %v4119 = vadd.f32 %v3839, %v4118
  %v4120 = vpop.f32.mrb[0].mxu0
  %4121 = vmatprep.mubr.f32.mxu0 0.0
  %v4122 = vand.u32 %v2673, 4294901760
  %v4123 = vsub.f32 %v2673, %v4122
  %v4124 = vand.u32 %v4123, 4294901760
  %v4125 = vsub.f32 %v4123, %v4124
  %v4126 = vand.u32 %v4125, 4294901760
  %4127 = vmatmul.mubr.f32.gmra.mrb[0].mxu0 %v4126
  %v4128 = vpop.f32.mrb[0].mxu0
  %v4129 = vadd.f32 %v3839, %v4128
  %v4130 = vpop.f32.mrb[0].mxu0
  %4131 = vmatprep.mubr.f32.mxu0 0.0
  %v4132 = vand.u32 %v2777, 4294901760
  %v4133 = vsub.f32 %v2777, %v4132
  %v4134 = vand.u32 %v4133, 4294901760
  %v4135 = vsub.f32 %v4133, %v4134
  %v4136 = vand.u32 %v4135, 4294901760
  %4137 = vmatmul.mubr.f32.gmra.mrb[0].mxu0 %v4136
  %v4138 = vpop.f32.mrb[0].mxu0
  %v4139 = vadd.f32 %v3839, %v4138
  %v4140 = vpop.f32.mrb[0].mxu0
  %4141 = vmatprep.mubr.f32.mxu0 0.0
  %v4142 = vand.u32 %v2881, 4294901760
  %v4143 = vsub.f32 %v2881, %v4142
  %v4144 = vand.u32 %v4143, 4294901760
  %v4145 = vsub.f32 %v4143, %v4144
  %v4146 = vand.u32 %v4145, 4294901760
  %4147 = vmatmul.mubr.f32.gmra.mrb[0].mxu0 %v4146
  %v4148 = vpop.f32.mrb[0].mxu0
  %v4149 = vadd.f32 %v3839, %v4148
  %v4150 = vpop.f32.mrb[0].mxu0
  %4151 = vmatprep.mubr.f32.mxu0 0.0
  %v4152 = vand.u32 %v2985, 4294901760
  %v4153 = vsub.f32 %v2985, %v4152
  %v4154 = vand.u32 %v4153, 4294901760
  %v4155 = vsub.f32 %v4153, %v4154
  %v4156 = vand.u32 %v4155, 4294901760
  %4157 = vmatmul.mubr.f32.gmra.mrb[0].mxu0 %v4156
  %v4158 = vpop.f32.mrb[0].mxu0
  %v4159 = vadd.f32 %v3839, %v4158
  %v4160 = vpop.f32.mrb[0].mxu0
  %4161 = vmatprep.mubr.f32.mxu0 0.0
  %v4162 = vand.u32 %v3089, 4294901760
  %v4163 = vsub.f32 %v3089, %v4162
  %v4164 = vand.u32 %v4163, 4294901760
  %v4165 = vsub.f32 %v4163, %v4164
  %v4166 = vand.u32 %v4165, 4294901760
  %4167 = vmatmul.mubr.f32.gmra.mrb[0].mxu0 %v4166
  %v4168 = vpop.f32.mrb[0].mxu0
  %v4169 = vadd.f32 %v3839, %v4168
  %v4170 = vpop.f32.mrb[0].mxu0
  %4171 = vmatprep.mubr.f32.mxu0 0.0
  %v4172 = vand.u32 %v3193, 4294901760
  %v4173 = vsub.f32 %v3193, %v4172
  %v4174 = vand.u32 %v4173, 4294901760
  %v4175 = vsub.f32 %v4173, %v4174
  %v4176 = vand.u32 %v4175, 4294901760
  %4177 = vmatmul.mubr.f32.gmra.mrb[0].mxu0 %v4176
  %v4178 = vpop.f32.mrb[0].mxu0
  %v4179 = vadd.f32 %v3839, %v4178
  %v4180 = vpop.f32.mrb[0].mxu0
  %4181 = vmatprep.mubr.f32.mxu0 0.0
  %v4182 = vand.u32 %v3297, 4294901760
  %v4183 = vsub.f32 %v3297, %v4182
  %v4184 = vand.u32 %v4183, 4294901760
  %v4185 = vsub.f32 %v4183, %v4184
  %v4186 = vand.u32 %v4185, 4294901760
  %4187 = vmatmul.mubr.f32.gmra.mrb[0].mxu0 %v4186
  %v4188 = vpop.f32.mrb[0].mxu0
  %v4189 = vadd.f32 %v3839, %v4188
  %v4190 = vpop.f32.mrb[0].mxu0
  %4191 = vmatprep.mubr.f32.mxu0 0.0
  %v4192 = vand.u32 %v3401, 4294901760
  %v4193 = vsub.f32 %v3401, %v4192
  %v4194 = vand.u32 %v4193, 4294901760
  %v4195 = vsub.f32 %v4193, %v4194
  %v4196 = vand.u32 %v4195, 4294901760
  %4197 = vmatmul.mubr.f32.gmra.mrb[0].mxu0 %v4196
  %v4198 = vpop.f32.mrb[0].mxu0
  %v4199 = vadd.f32 %v3839, %v4198
  %v4200 = vpop.f32.mrb[0].mxu0
  %4201 = vmatprep.mubr.f32.mxu0 0.0
  %v4202 = vand.u32 %v3505, 4294901760
  %v4203 = vsub.f32 %v3505, %v4202
  %v4204 = vand.u32 %v4203, 4294901760
  %v4205 = vsub.f32 %v4203, %v4204
  %v4206 = vand.u32 %v4205, 4294901760
  %4207 = vmatmul.mubr.f32.gmra.mrb[0].mxu0 %v4206
  %v4208 = vpop.f32.mrb[0].mxu0
  %v4209 = vadd.f32 %v3839, %v4208
  %v4210 = vpop.f32.mrb[0].mxu0
  %4211 = vmatprep.mubr.f32.mxu0 0.0
  %v4212 = vand.u32 %v3609, 4294901760
  %v4213 = vsub.f32 %v3609, %v4212
  %v4214 = vand.u32 %v4213, 4294901760
  %v4215 = vsub.f32 %v4213, %v4214
  %v4216 = vand.u32 %v4215, 4294901760
  %4217 = vmatmul.mubr.f32.gmra.mrb[0].mxu0 %v4216
  %v4218 = vpop.f32.mrb[0].mxu0
  %v4219 = vadd.f32 %v3839, %v4218
  %v4220 = vpop.f32.mrb[0].mxu0
  %4221 = vmatprep.mubr.f32.mxu0 0.0
  %v4222 = vand.u32 %v3713, 4294901760
  %v4223 = vsub.f32 %v3713, %v4222
  %v4224 = vand.u32 %v4223, 4294901760
  %v4225 = vsub.f32 %v4223, %v4224
  %v4226 = vand.u32 %v4225, 4294901760
  %4227 = vmatmul.mubr.f32.gmra.mrb[0].mxu0 %v4226
  %v4228 = vpop.f32.mrb[0].mxu0
  %v4229 = vadd.f32 %v3839, %v4228
  %v4230 = vpop.f32.mrb[0].mxu0
  %4231 = vmatprep.mubr.f32.mxu0 0.0
  %v4232 = vand.u32 %v3817, 4294901760
  %v4233 = vsub.f32 %v3817, %v4232
  %v4234 = vand.u32 %v4233, 4294901760
  %v4235 = vsub.f32 %v4233, %v4234
  %v4236 = vand.u32 %v4235, 4294901760
  %4237 = vmatmul.mubr.f32.gmra.mrb[0].mxu0 %v4236
  %v4238 = vpop.f32.mrb[0].mxu0
  %v4239 = vadd.f32 %v3839, %v4238
  %v4240 = vpop.f32.mrb[0].mxu0
  %4241 = vdwg.mxu0
  %4242 = vmatprep.subr.mxu0 0.0
  %v4243 = vand.u32 %v3818, 4294901760
  %v4244 = vsub.f32 %v3818, %v4243
  %v4245 = vand.u32 %v4244, 4294901760
  %v4246 = vsub.f32 %v4244, %v4245
  %v4247 = vand.u32 %v4246, 4294901760
  %4248 = vmatpush1.msra.mxu0 %v4247
  %4249 = vmatprep.subr.mxu0 0.0
  %v4250 = vand.u32 %v3819, 4294901760
  %v4251 = vsub.f32 %v3819, %v4250
  %v4252 = vand.u32 %v4251, 4294901760
  %v4253 = vsub.f32 %v4251, %v4252
  %v4254 = vand.u32 %v4253, 4294901760
  %4255 = vmatpush1.msra.mxu0 %v4254
  %4256 = vmatprep.subr.mxu0 0.0
  %v4257 = vand.u32 %v3820, 4294901760
  %v4258 = vsub.f32 %v3820, %v4257
  %v4259 = vand.u32 %v4258, 4294901760
  %v4260 = vsub.f32 %v4258, %v4259
  %v4261 = vand.u32 %v4260, 4294901760
  %4262 = vmatpush1.msra.mxu0 %v4261
  %4263 = vmatprep.subr.mxu0 0.0
  %v4264 = vand.u32 %v3821, 4294901760
  %v4265 = vsub.f32 %v3821, %v4264
  %v4266 = vand.u32 %v4265, 4294901760
  %v4267 = vsub.f32 %v4265, %v4266
  %v4268 = vand.u32 %v4267, 4294901760
  %4269 = vmatpush1.msra.mxu0 %v4268
  %4270 = vmatprep.subr.mxu0 0.0
  %v4271 = vand.u32 %v3822, 4294901760
  %v4272 = vsub.f32 %v3822, %v4271
  %v4273 = vand.u32 %v4272, 4294901760
  %v4274 = vsub.f32 %v4272, %v4273
  %v4275 = vand.u32 %v4274, 4294901760
  %4276 = vmatpush1.msra.mxu0 %v4275
  %4277 = vmatprep.subr.mxu0 0.0
  %v4278 = vand.u32 %v3823, 4294901760
  %v4279 = vsub.f32 %v3823, %v4278
  %v4280 = vand.u32 %v4279, 4294901760
  %v4281 = vsub.f32 %v4279, %v4280
  %v4282 = vand.u32 %v4281, 4294901760
  %4283 = vmatpush1.msra.mxu0 %v4282
  %4284 = vmatprep.subr.mxu0 0.0
  %v4285 = vand.u32 %v3824, 4294901760
  %v4286 = vsub.f32 %v3824, %v4285
  %v4287 = vand.u32 %v4286, 4294901760
  %v4288 = vsub.f32 %v4286, %v4287
  %v4289 = vand.u32 %v4288, 4294901760
  %4290 = vmatpush1.msra.mxu0 %v4289
  %4291 = vmatprep.subr.mxu0 0.0
  %v4292 = vand.u32 %v3825, 4294901760
  %v4293 = vsub.f32 %v3825, %v4292
  %v4294 = vand.u32 %v4293, 4294901760
  %v4295 = vsub.f32 %v4293, %v4294
  %v4296 = vand.u32 %v4295, 4294901760
  %4297 = vmatpush1.msra.mxu0 %v4296
  %4298 = vmatprep.subr.mxu0 0.0
  %v4299 = vand.u32 %v3826, 4294901760
  %v4300 = vsub.f32 %v3826, %v4299
  %v4301 = vand.u32 %v4300, 4294901760
  %v4302 = vsub.f32 %v4300, %v4301
  %v4303 = vand.u32 %v4302, 4294901760
  %4304 = vmatpush1.msra.mxu0 %v4303
  %4305 = vmatprep.subr.mxu0 0.0
  %v4306 = vand.u32 %v3827, 4294901760
  %v4307 = vsub.f32 %v3827, %v4306
  %v4308 = vand.u32 %v4307, 4294901760
  %v4309 = vsub.f32 %v4307, %v4308
  %v4310 = vand.u32 %v4309, 4294901760
  %4311 = vmatpush1.msra.mxu0 %v4310
  %4312 = vmatprep.subr.mxu0 0.0
  %v4313 = vand.u32 %v3828, 4294901760
  %v4314 = vsub.f32 %v3828, %v4313
  %v4315 = vand.u32 %v4314, 4294901760
  %v4316 = vsub.f32 %v4314, %v4315
  %v4317 = vand.u32 %v4316, 4294901760
  %4318 = vmatpush1.msra.mxu0 %v4317
  %4319 = vmatprep.subr.mxu0 0.0
  %v4320 = vand.u32 %v3829, 4294901760
  %v4321 = vsub.f32 %v3829, %v4320
  %v4322 = vand.u32 %v4321, 4294901760
  %v4323 = vsub.f32 %v4321, %v4322
  %v4324 = vand.u32 %v4323, 4294901760
  %4325 = vmatpush1.msra.mxu0 %v4324
  %4326 = vmatprep.subr.mxu0 0.0
  %v4327 = vand.u32 %v3830, 4294901760
  %v4328 = vsub.f32 %v3830, %v4327
  %v4329 = vand.u32 %v4328, 4294901760
  %v4330 = vsub.f32 %v4328, %v4329
  %v4331 = vand.u32 %v4330, 4294901760
  %4332 = vmatpush1.msra.mxu0 %v4331
  %4333 = vmatprep.subr.mxu0 0.0
  %v4334 = vand.u32 %v3831, 4294901760
  %v4335 = vsub.f32 %v3831, %v4334
  %v4336 = vand.u32 %v4335, 4294901760
  %v4337 = vsub.f32 %v4335, %v4336
  %v4338 = vand.u32 %v4337, 4294901760
  %4339 = vmatpush1.msra.mxu0 %v4338
  %4340 = vmatprep.subr.mxu0 0.0
  %v4341 = vand.u32 %v3832, 4294901760
  %v4342 = vsub.f32 %v3832, %v4341
  %v4343 = vand.u32 %v4342, 4294901760
  %v4344 = vsub.f32 %v4342, %v4343
  %v4345 = vand.u32 %v4344, 4294901760
  %4346 = vmatpush1.msra.mxu0 %v4345
  %4347 = vmatprep.subr.mxu0 0.0
  %v4348 = vand.u32 %v3833, 4294901760
  %v4349 = vsub.f32 %v3833, %v4348
  %v4350 = vand.u32 %v4349, 4294901760
  %v4351 = vsub.f32 %v4349, %v4350
  %v4352 = vand.u32 %v4351, 4294901760
  %4353 = vmatpush1.msra.mxu0 %v4352
  %4354 = vmatprep.subr.mxu0 0.0
  %4355 = vmatpush1.msra.mxu0 0.0
  %4356 = vmatprep.subr.mxu0 0.0
  %4357 = vmatpush1.msra.mxu0 0.0
  %4358 = vmatprep.subr.mxu0 0.0
  %4359 = vmatpush1.msra.mxu0 0.0
  %4360 = vmatprep.subr.mxu0 0.0
  %4361 = vmatpush1.msra.mxu0 0.0
  %4362 = vmatprep.subr.mxu0 0.0
  %4363 = vmatpush1.msra.mxu0 0.0
  %4364 = vmatprep.subr.mxu0 0.0
  %4365 = vmatpush1.msra.mxu0 0.0
  %4366 = vmatprep.subr.mxu0 0.0
  %4367 = vmatpush1.msra.mxu0 0.0
  %4368 = vmatprep.subr.mxu0 0.0
  %4369 = vmatpush1.msra.mxu0 0.0
  %4370 = vmatprep.subr.mxu0 0.0
  %4371 = vmatpush1.msra.mxu0 0.0
  %4372 = vmatprep.subr.mxu0 0.0
  %4373 = vmatpush1.msra.mxu0 0.0
  %4374 = vmatprep.subr.mxu0 0.0
  %4375 = vmatpush1.msra.mxu0 0.0
  %4376 = vmatprep.subr.mxu0 0.0
  %4377 = vmatpush1.msra.mxu0 0.0
  %4378 = vmatprep.subr.mxu0 0.0
  %4379 = vmatpush1.msra.mxu0 0.0
  %4380 = vmatprep.subr.mxu0 0.0
  %4381 = vmatpush1.msra.mxu0 0.0
  %4382 = vmatprep.subr.mxu0 0.0
  %4383 = vmatpush1.msra.mxu0 0.0
  %4384 = vmatprep.subr.mxu0 0.0
  %4385 = vmatpush1.msra.mxu0 0.0
  %4386 = vmatprep.mubr.f32.mxu0 0.0
  %v4387 = vand.u32 %v593, 4294901760
  %4388 = vmatmul.mubr.f32.gmra.mrb[0].mxu0 %v4387
  %v4389 = vpop.f32.mrb[0].mxu0
  %v4390 = vadd.f32 %v3929, %v4389
  %v4391 = vpop.f32.mrb[0].mxu0
  %4392 = vmatprep.mubr.f32.mxu0 0.0
  %v4393 = vand.u32 %v697, 4294901760
  %4394 = vmatmul.mubr.f32.gmra.mrb[0].mxu0 %v4393
  %v4395 = vpop.f32.mrb[0].mxu0
  %v4396 = vadd.f32 %v3939, %v4395
  %v4397 = vpop.f32.mrb[0].mxu0
  %4398 = vmatprep.mubr.f32.mxu0 0.0
  %v4399 = vand.u32 %v801, 4294901760
  %4400 = vmatmul.mubr.f32.gmra.mrb[0].mxu0 %v4399
  %v4401 = vpop.f32.mrb[0].mxu0
  %v4402 = vadd.f32 %v3949, %v4401
  %v4403 = vpop.f32.mrb[0].mxu0
  %4404 = vmatprep.mubr.f32.mxu0 0.0
  %v4405 = vand.u32 %v905, 4294901760
  %4406 = vmatmul.mubr.f32.gmra.mrb[0].mxu0 %v4405
  %v4407 = vpop.f32.mrb[0].mxu0
  %v4408 = vadd.f32 %v3959, %v4407
  %v4409 = vpop.f32.mrb[0].mxu0
  %4410 = vmatprep.mubr.f32.mxu0 0.0
  %v4411 = vand.u32 %v1009, 4294901760
  %4412 = vmatmul.mubr.f32.gmra.mrb[0].mxu0 %v4411
  %v4413 = vpop.f32.mrb[0].mxu0
  %v4414 = vadd.f32 %v3969, %v4413
  %v4415 = vpop.f32.mrb[0].mxu0
  %4416 = vmatprep.mubr.f32.mxu0 0.0
  %v4417 = vand.u32 %v1113, 4294901760
  %4418 = vmatmul.mubr.f32.gmra.mrb[0].mxu0 %v4417
  %v4419 = vpop.f32.mrb[0].mxu0
  %v4420 = vadd.f32 %v3979, %v4419
  %v4421 = vpop.f32.mrb[0].mxu0
  %4422 = vmatprep.mubr.f32.mxu0 0.0
  %v4423 = vand.u32 %v1217, 4294901760
  %4424 = vmatmul.mubr.f32.gmra.mrb[0].mxu0 %v4423
  %v4425 = vpop.f32.mrb[0].mxu0
  %v4426 = vadd.f32 %v3989, %v4425
  %v4427 = vpop.f32.mrb[0].mxu0
  %4428 = vmatprep.mubr.f32.mxu0 0.0
  %v4429 = vand.u32 %v1321, 4294901760
  %4430 = vmatmul.mubr.f32.gmra.mrb[0].mxu0 %v4429
  %v4431 = vpop.f32.mrb[0].mxu0
  %v4432 = vadd.f32 %v3999, %v4431
  %v4433 = vpop.f32.mrb[0].mxu0
  %4434 = vmatprep.mubr.f32.mxu0 0.0
  %v4435 = vand.u32 %v1425, 4294901760
  %4436 = vmatmul.mubr.f32.gmra.mrb[0].mxu0 %v4435
  %v4437 = vpop.f32.mrb[0].mxu0
  %v4438 = vadd.f32 %v4009, %v4437
  %v4439 = vpop.f32.mrb[0].mxu0
  %4440 = vmatprep.mubr.f32.mxu0 0.0
  %v4441 = vand.u32 %v1529, 4294901760
  %4442 = vmatmul.mubr.f32.gmra.mrb[0].mxu0 %v4441
  %v4443 = vpop.f32.mrb[0].mxu0
  %v4444 = vadd.f32 %v4019, %v4443
  %v4445 = vpop.f32.mrb[0].mxu0
  %4446 = vmatprep.mubr.f32.mxu0 0.0
  %v4447 = vand.u32 %v1633, 4294901760
  %4448 = vmatmul.mubr.f32.gmra.mrb[0].mxu0 %v4447
  %v4449 = vpop.f32.mrb[0].mxu0
  %v4450 = vadd.f32 %v4029, %v4449
  %v4451 = vpop.f32.mrb[0].mxu0
  %4452 = vmatprep.mubr.f32.mxu0 0.0
  %v4453 = vand.u32 %v1737, 4294901760
  %4454 = vmatmul.mubr.f32.gmra.mrb[0].mxu0 %v4453
  %v4455 = vpop.f32.mrb[0].mxu0
  %v4456 = vadd.f32 %v4039, %v4455
  %v4457 = vpop.f32.mrb[0].mxu0
  %4458 = vmatprep.mubr.f32.mxu0 0.0
  %v4459 = vand.u32 %v1841, 4294901760
  %4460 = vmatmul.mubr.f32.gmra.mrb[0].mxu0 %v4459
  %v4461 = vpop.f32.mrb[0].mxu0
  %v4462 = vadd.f32 %v4049, %v4461
  %v4463 = vpop.f32.mrb[0].mxu0
  %4464 = vmatprep.mubr.f32.mxu0 0.0
  %v4465 = vand.u32 %v1945, 4294901760
  %4466 = vmatmul.mubr.f32.gmra.mrb[0].mxu0 %v4465
  %v4467 = vpop.f32.mrb[0].mxu0
  %v4468 = vadd.f32 %v4059, %v4467
  %v4469 = vpop.f32.mrb[0].mxu0
  %4470 = vmatprep.mubr.f32.mxu0 0.0
  %v4471 = vand.u32 %v2049, 4294901760
  %4472 = vmatmul.mubr.f32.gmra.mrb[0].mxu0 %v4471
  %v4473 = vpop.f32.mrb[0].mxu0
  %v4474 = vadd.f32 %v4069, %v4473
  %v4475 = vpop.f32.mrb[0].mxu0
  %4476 = vmatprep.mubr.f32.mxu0 0.0
  %v4477 = vand.u32 %v2153, 4294901760
  %4478 = vmatmul.mubr.f32.gmra.mrb[0].mxu0 %v4477
  %v4479 = vpop.f32.mrb[0].mxu0
  %v4480 = vadd.f32 %v4079, %v4479
  %v4481 = vpop.f32.mrb[0].mxu0
  %4482 = vmatprep.mubr.f32.mxu0 0.0
  %v4483 = vand.u32 %v2257, 4294901760
  %4484 = vmatmul.mubr.f32.gmra.mrb[0].mxu0 %v4483
  %v4485 = vpop.f32.mrb[0].mxu0
  %v4486 = vadd.f32 %v4089, %v4485
  %v4487 = vpop.f32.mrb[0].mxu0
  %4488 = vmatprep.mubr.f32.mxu0 0.0
  %v4489 = vand.u32 %v2361, 4294901760
  %4490 = vmatmul.mubr.f32.gmra.mrb[0].mxu0 %v4489
  %v4491 = vpop.f32.mrb[0].mxu0
  %v4492 = vadd.f32 %v4099, %v4491
  %v4493 = vpop.f32.mrb[0].mxu0
  %4494 = vmatprep.mubr.f32.mxu0 0.0
  %v4495 = vand.u32 %v2465, 4294901760
  %4496 = vmatmul.mubr.f32.gmra.mrb[0].mxu0 %v4495
  %v4497 = vpop.f32.mrb[0].mxu0
  %v4498 = vadd.f32 %v4109, %v4497
  %v4499 = vpop.f32.mrb[0].mxu0
  %4500 = vmatprep.mubr.f32.mxu0 0.0
  %v4501 = vand.u32 %v2569, 4294901760
  %4502 = vmatmul.mubr.f32.gmra.mrb[0].mxu0 %v4501
  %v4503 = vpop.f32.mrb[0].mxu0
  %v4504 = vadd.f32 %v4119, %v4503
  %v4505 = vpop.f32.mrb[0].mxu0
  %4506 = vmatprep.mubr.f32.mxu0 0.0
  %v4507 = vand.u32 %v2673, 4294901760
  %4508 = vmatmul.mubr.f32.gmra.mrb[0].mxu0 %v4507
  %v4509 = vpop.f32.mrb[0].mxu0
  %v4510 = vadd.f32 %v4129, %v4509
  %v4511 = vpop.f32.mrb[0].mxu0
  %4512 = vmatprep.mubr.f32.mxu0 0.0
  %v4513 = vand.u32 %v2777, 4294901760
  %4514 = vmatmul.mubr.f32.gmra.mrb[0].mxu0 %v4513
  %v4515 = vpop.f32.mrb[0].mxu0
  %v4516 = vadd.f32 %v4139, %v4515
  %v4517 = vpop.f32.mrb[0].mxu0
  %4518 = vmatprep.mubr.f32.mxu0 0.0
  %v4519 = vand.u32 %v2881, 4294901760
  %4520 = vmatmul.mubr.f32.gmra.mrb[0].mxu0 %v4519
  %v4521 = vpop.f32.mrb[0].mxu0
  %v4522 = vadd.f32 %v4149, %v4521
  %v4523 = vpop.f32.mrb[0].mxu0
  %4524 = vmatprep.mubr.f32.mxu0 0.0
  %v4525 = vand.u32 %v2985, 4294901760
  %4526 = vmatmul.mubr.f32.gmra.mrb[0].mxu0 %v4525
  %v4527 = vpop.f32.mrb[0].mxu0
  %v4528 = vadd.f32 %v4159, %v4527
  %v4529 = vpop.f32.mrb[0].mxu0
  %4530 = vmatprep.mubr.f32.mxu0 0.0
  %v4531 = vand.u32 %v3089, 4294901760
  %4532 = vmatmul.mubr.f32.gmra.mrb[0].mxu0 %v4531
  %v4533 = vpop.f32.mrb[0].mxu0
  %v4534 = vadd.f32 %v4169, %v4533
  %v4535 = vpop.f32.mrb[0].mxu0
  %4536 = vmatprep.mubr.f32.mxu0 0.0
  %v4537 = vand.u32 %v3193, 4294901760
  %4538 = vmatmul.mubr.f32.gmra.mrb[0].mxu0 %v4537
  %v4539 = vpop.f32.mrb[0].mxu0
  %v4540 = vadd.f32 %v4179, %v4539
  %v4541 = vpop.f32.mrb[0].mxu0
  %4542 = vmatprep.mubr.f32.mxu0 0.0
  %v4543 = vand.u32 %v3297, 4294901760
  %4544 = vmatmul.mubr.f32.gmra.mrb[0].mxu0 %v4543
  %v4545 = vpop.f32.mrb[0].mxu0
  %v4546 = vadd.f32 %v4189, %v4545
  %v4547 = vpop.f32.mrb[0].mxu0
  %4548 = vmatprep.mubr.f32.mxu0 0.0
  %v4549 = vand.u32 %v3401, 4294901760
  %4550 = vmatmul.mubr.f32.gmra.mrb[0].mxu0 %v4549
  %v4551 = vpop.f32.mrb[0].mxu0
  %v4552 = vadd.f32 %v4199, %v4551
  %v4553 = vpop.f32.mrb[0].mxu0
  %4554 = vmatprep.mubr.f32.mxu0 0.0
  %v4555 = vand.u32 %v3505, 4294901760
  %4556 = vmatmul.mubr.f32.gmra.mrb[0].mxu0 %v4555
  %v4557 = vpop.f32.mrb[0].mxu0
  %v4558 = vadd.f32 %v4209, %v4557
  %v4559 = vpop.f32.mrb[0].mxu0
  %4560 = vmatprep.mubr.f32.mxu0 0.0
  %v4561 = vand.u32 %v3609, 4294901760
  %4562 = vmatmul.mubr.f32.gmra.mrb[0].mxu0 %v4561
  %v4563 = vpop.f32.mrb[0].mxu0
  %v4564 = vadd.f32 %v4219, %v4563
  %v4565 = vpop.f32.mrb[0].mxu0
  %4566 = vmatprep.mubr.f32.mxu0 0.0
  %v4567 = vand.u32 %v3713, 4294901760
  %4568 = vmatmul.mubr.f32.gmra.mrb[0].mxu0 %v4567
  %v4569 = vpop.f32.mrb[0].mxu0
  %v4570 = vadd.f32 %v4229, %v4569
  %v4571 = vpop.f32.mrb[0].mxu0
  %4572 = vmatprep.mubr.f32.mxu0 0.0
  %v4573 = vand.u32 %v3817, 4294901760
  %4574 = vmatmul.mubr.f32.gmra.mrb[0].mxu0 %v4573
  %v4575 = vpop.f32.mrb[0].mxu0
  %v4576 = vadd.f32 %v4239, %v4575
  %v4577 = vpop.f32.mrb[0].mxu0
  %4578 = vdwg.mxu0
  %4579 = vmatprep.subr.mxu0 0.0
  %v4580 = vand.u32 %v3818, 4294901760
  %v4581 = vsub.f32 %v3818, %v4580
  %4582 = vmatpush1.msra.mxu0 %v4581
  %4583 = vmatprep.subr.mxu0 0.0
  %v4584 = vand.u32 %v3819, 4294901760
  %v4585 = vsub.f32 %v3819, %v4584
  %4586 = vmatpush1.msra.mxu0 %v4585
  %4587 = vmatprep.subr.mxu0 0.0
  %v4588 = vand.u32 %v3820, 4294901760
  %v4589 = vsub.f32 %v3820, %v4588
  %4590 = vmatpush1.msra.mxu0 %v4589
  %4591 = vmatprep.subr.mxu0 0.0
  %v4592 = vand.u32 %v3821, 4294901760
  %v4593 = vsub.f32 %v3821, %v4592
  %4594 = vmatpush1.msra.mxu0 %v4593
  %4595 = vmatprep.subr.mxu0 0.0
  %v4596 = vand.u32 %v3822, 4294901760
  %v4597 = vsub.f32 %v3822, %v4596
  %4598 = vmatpush1.msra.mxu0 %v4597
  %4599 = vmatprep.subr.mxu0 0.0
  %v4600 = vand.u32 %v3823, 4294901760
  %v4601 = vsub.f32 %v3823, %v4600
  %4602 = vmatpush1.msra.mxu0 %v4601
  %4603 = vmatprep.subr.mxu0 0.0
  %v4604 = vand.u32 %v3824, 4294901760
  %v4605 = vsub.f32 %v3824, %v4604
  %4606 = vmatpush1.msra.mxu0 %v4605
  %4607 = vmatprep.subr.mxu0 0.0
  %v4608 = vand.u32 %v3825, 4294901760
  %v4609 = vsub.f32 %v3825, %v4608
  %4610 = vmatpush1.msra.mxu0 %v4609
  %4611 = vmatprep.subr.mxu0 0.0
  %v4612 = vand.u32 %v3826, 4294901760
  %v4613 = vsub.f32 %v3826, %v4612
  %4614 = vmatpush1.msra.mxu0 %v4613
  %4615 = vmatprep.subr.mxu0 0.0
  %v4616 = vand.u32 %v3827, 4294901760
  %v4617 = vsub.f32 %v3827, %v4616
  %4618 = vmatpush1.msra.mxu0 %v4617
  %4619 = vmatprep.subr.mxu0 0.0
  %v4620 = vand.u32 %v3828, 4294901760
  %v4621 = vsub.f32 %v3828, %v4620
  %4622 = vmatpush1.msra.mxu0 %v4621
  %4623 = vmatprep.subr.mxu0 0.0
  %v4624 = vand.u32 %v3829, 4294901760
  %v4625 = vsub.f32 %v3829, %v4624
  %4626 = vmatpush1.msra.mxu0 %v4625
  %4627 = vmatprep.subr.mxu0 0.0
  %v4628 = vand.u32 %v3830, 4294901760
  %v4629 = vsub.f32 %v3830, %v4628
  %4630 = vmatpush1.msra.mxu0 %v4629
  %4631 = vmatprep.subr.mxu0 0.0
  %v4632 = vand.u32 %v3831, 4294901760
  %v4633 = vsub.f32 %v3831, %v4632
  %4634 = vmatpush1.msra.mxu0 %v4633
  %4635 = vmatprep.subr.mxu0 0.0
  %v4636 = vand.u32 %v3832, 4294901760
  %v4637 = vsub.f32 %v3832, %v4636
  %4638 = vmatpush1.msra.mxu0 %v4637
  %4639 = vmatprep.subr.mxu0 0.0
  %v4640 = vand.u32 %v3833, 4294901760
  %v4641 = vsub.f32 %v3833, %v4640
  %4642 = vmatpush1.msra.mxu0 %v4641
  %4643 = vmatprep.subr.mxu0 0.0
  %4644 = vmatpush1.msra.mxu0 0.0
  %4645 = vmatprep.subr.mxu0 0.0
  %4646 = vmatpush1.msra.mxu0 0.0
  %4647 = vmatprep.subr.mxu0 0.0
  %4648 = vmatpush1.msra.mxu0 0.0
  %4649 = vmatprep.subr.mxu0 0.0
  %4650 = vmatpush1.msra.mxu0 0.0
  %4651 = vmatprep.subr.mxu0 0.0
  %4652 = vmatpush1.msra.mxu0 0.0
  %4653 = vmatprep.subr.mxu0 0.0
  %4654 = vmatpush1.msra.mxu0 0.0
  %4655 = vmatprep.subr.mxu0 0.0
  %4656 = vmatpush1.msra.mxu0 0.0
  %4657 = vmatprep.subr.mxu0 0.0
  %4658 = vmatpush1.msra.mxu0 0.0
  %4659 = vmatprep.subr.mxu0 0.0
  %4660 = vmatpush1.msra.mxu0 0.0
  %4661 = vmatprep.subr.mxu0 0.0
  %4662 = vmatpush1.msra.mxu0 0.0
  %4663 = vmatprep.subr.mxu0 0.0
  %4664 = vmatpush1.msra.mxu0 0.0
  %4665 = vmatprep.subr.mxu0 0.0
  %4666 = vmatpush1.msra.mxu0 0.0
  %4667 = vmatprep.subr.mxu0 0.0
  %4668 = vmatpush1.msra.mxu0 0.0
  %4669 = vmatprep.subr.mxu0 0.0
  %4670 = vmatpush1.msra.mxu0 0.0
  %4671 = vmatprep.subr.mxu0 0.0
  %4672 = vmatpush1.msra.mxu0 0.0
  %4673 = vmatprep.subr.mxu0 0.0
  %4674 = vmatpush1.msra.mxu0 0.0
  %4675 = vmatprep.mubr.f32.mxu0 0.0
  %v4676 = vand.u32 %v593, 4294901760
  %v4677 = vsub.f32 %v593, %v4676
  %4678 = vmatmul.mubr.f32.gmra.mrb[0].mxu0 %v4677
  %v4679 = vpop.f32.mrb[0].mxu0
  %v4680 = vadd.f32 %v4390, %v4679
  %v4681 = vpop.f32.mrb[0].mxu0
  %4682 = vmatprep.mubr.f32.mxu0 0.0
  %v4683 = vand.u32 %v697, 4294901760
  %v4684 = vsub.f32 %v697, %v4683
  %4685 = vmatmul.mubr.f32.gmra.mrb[0].mxu0 %v4684
  %v4686 = vpop.f32.mrb[0].mxu0
  %v4687 = vadd.f32 %v4396, %v4686
  %v4688 = vpop.f32.mrb[0].mxu0
  %4689 = vmatprep.mubr.f32.mxu0 0.0
  %v4690 = vand.u32 %v801, 4294901760
  %v4691 = vsub.f32 %v801, %v4690
  %4692 = vmatmul.mubr.f32.gmra.mrb[0].mxu0 %v4691
  %v4693 = vpop.f32.mrb[0].mxu0
  %v4694 = vadd.f32 %v4402, %v4693
  %v4695 = vpop.f32.mrb[0].mxu0
  %4696 = vmatprep.mubr.f32.mxu0 0.0
  %v4697 = vand.u32 %v905, 4294901760
  %v4698 = vsub.f32 %v905, %v4697
  %4699 = vmatmul.mubr.f32.gmra.mrb[0].mxu0 %v4698
  %v4700 = vpop.f32.mrb[0].mxu0
  %v4701 = vadd.f32 %v4408, %v4700
  %v4702 = vpop.f32.mrb[0].mxu0
  %4703 = vmatprep.mubr.f32.mxu0 0.0
  %v4704 = vand.u32 %v1009, 4294901760
  %v4705 = vsub.f32 %v1009, %v4704
  %4706 = vmatmul.mubr.f32.gmra.mrb[0].mxu0 %v4705
  %v4707 = vpop.f32.mrb[0].mxu0
  %v4708 = vadd.f32 %v4414, %v4707
  %v4709 = vpop.f32.mrb[0].mxu0
  %4710 = vmatprep.mubr.f32.mxu0 0.0
  %v4711 = vand.u32 %v1113, 4294901760
  %v4712 = vsub.f32 %v1113, %v4711
  %4713 = vmatmul.mubr.f32.gmra.mrb[0].mxu0 %v4712
  %v4714 = vpop.f32.mrb[0].mxu0
  %v4715 = vadd.f32 %v4420, %v4714
  %v4716 = vpop.f32.mrb[0].mxu0
  %4717 = vmatprep.mubr.f32.mxu0 0.0
  %v4718 = vand.u32 %v1217, 4294901760
  %v4719 = vsub.f32 %v1217, %v4718
  %4720 = vmatmul.mubr.f32.gmra.mrb[0].mxu0 %v4719
  %v4721 = vpop.f32.mrb[0].mxu0
  %v4722 = vadd.f32 %v4426, %v4721
  %v4723 = vpop.f32.mrb[0].mxu0
  %4724 = vmatprep.mubr.f32.mxu0 0.0
  %v4725 = vand.u32 %v1321, 4294901760
  %v4726 = vsub.f32 %v1321, %v4725
  %4727 = vmatmul.mubr.f32.gmra.mrb[0].mxu0 %v4726
  %v4728 = vpop.f32.mrb[0].mxu0
  %v4729 = vadd.f32 %v4432, %v4728
  %v4730 = vpop.f32.mrb[0].mxu0
  %4731 = vmatprep.mubr.f32.mxu0 0.0
  %v4732 = vand.u32 %v1425, 4294901760
  %v4733 = vsub.f32 %v1425, %v4732
  %4734 = vmatmul.mubr.f32.gmra.mrb[0].mxu0 %v4733
  %v4735 = vpop.f32.mrb[0].mxu0
  %v4736 = vadd.f32 %v4438, %v4735
  %v4737 = vpop.f32.mrb[0].mxu0
  %4738 = vmatprep.mubr.f32.mxu0 0.0
  %v4739 = vand.u32 %v1529, 4294901760
  %v4740 = vsub.f32 %v1529, %v4739
  %4741 = vmatmul.mubr.f32.gmra.mrb[0].mxu0 %v4740
  %v4742 = vpop.f32.mrb[0].mxu0
  %v4743 = vadd.f32 %v4444, %v4742
  %v4744 = vpop.f32.mrb[0].mxu0
  %4745 = vmatprep.mubr.f32.mxu0 0.0
  %v4746 = vand.u32 %v1633, 4294901760
  %v4747 = vsub.f32 %v1633, %v4746
  %4748 = vmatmul.mubr.f32.gmra.mrb[0].mxu0 %v4747
  %v4749 = vpop.f32.mrb[0].mxu0
  %v4750 = vadd.f32 %v4450, %v4749
  %v4751 = vpop.f32.mrb[0].mxu0
  %4752 = vmatprep.mubr.f32.mxu0 0.0
  %v4753 = vand.u32 %v1737, 4294901760
  %v4754 = vsub.f32 %v1737, %v4753
  %4755 = vmatmul.mubr.f32.gmra.mrb[0].mxu0 %v4754
  %v4756 = vpop.f32.mrb[0].mxu0
  %v4757 = vadd.f32 %v4456, %v4756
  %v4758 = vpop.f32.mrb[0].mxu0
  %4759 = vmatprep.mubr.f32.mxu0 0.0
  %v4760 = vand.u32 %v1841, 4294901760
  %v4761 = vsub.f32 %v1841, %v4760
  %4762 = vmatmul.mubr.f32.gmra.mrb[0].mxu0 %v4761
  %v4763 = vpop.f32.mrb[0].mxu0
  %v4764 = vadd.f32 %v4462, %v4763
  %v4765 = vpop.f32.mrb[0].mxu0
  %4766 = vmatprep.mubr.f32.mxu0 0.0
  %v4767 = vand.u32 %v1945, 4294901760
  %v4768 = vsub.f32 %v1945, %v4767
  %4769 = vmatmul.mubr.f32.gmra.mrb[0].mxu0 %v4768
  %v4770 = vpop.f32.mrb[0].mxu0
  %v4771 = vadd.f32 %v4468, %v4770
  %v4772 = vpop.f32.mrb[0].mxu0
  %4773 = vmatprep.mubr.f32.mxu0 0.0
  %v4774 = vand.u32 %v2049, 4294901760
  %v4775 = vsub.f32 %v2049, %v4774
  %4776 = vmatmul.mubr.f32.gmra.mrb[0].mxu0 %v4775
  %v4777 = vpop.f32.mrb[0].mxu0
  %v4778 = vadd.f32 %v4474, %v4777
  %v4779 = vpop.f32.mrb[0].mxu0
  %4780 = vmatprep.mubr.f32.mxu0 0.0
  %v4781 = vand.u32 %v2153, 4294901760
  %v4782 = vsub.f32 %v2153, %v4781
  %4783 = vmatmul.mubr.f32.gmra.mrb[0].mxu0 %v4782
  %v4784 = vpop.f32.mrb[0].mxu0
  %v4785 = vadd.f32 %v4480, %v4784
  %v4786 = vpop.f32.mrb[0].mxu0
  %4787 = vmatprep.mubr.f32.mxu0 0.0
  %v4788 = vand.u32 %v2257, 4294901760
  %v4789 = vsub.f32 %v2257, %v4788
  %4790 = vmatmul.mubr.f32.gmra.mrb[0].mxu0 %v4789
  %v4791 = vpop.f32.mrb[0].mxu0
  %v4792 = vadd.f32 %v4486, %v4791
  %v4793 = vpop.f32.mrb[0].mxu0
  %4794 = vmatprep.mubr.f32.mxu0 0.0
  %v4795 = vand.u32 %v2361, 4294901760
  %v4796 = vsub.f32 %v2361, %v4795
  %4797 = vmatmul.mubr.f32.gmra.mrb[0].mxu0 %v4796
  %v4798 = vpop.f32.mrb[0].mxu0
  %v4799 = vadd.f32 %v4492, %v4798
  %v4800 = vpop.f32.mrb[0].mxu0
  %4801 = vmatprep.mubr.f32.mxu0 0.0
  %v4802 = vand.u32 %v2465, 4294901760
  %v4803 = vsub.f32 %v2465, %v4802
  %4804 = vmatmul.mubr.f32.gmra.mrb[0].mxu0 %v4803
  %v4805 = vpop.f32.mrb[0].mxu0
  %v4806 = vadd.f32 %v4498, %v4805
  %v4807 = vpop.f32.mrb[0].mxu0
  %4808 = vmatprep.mubr.f32.mxu0 0.0
  %v4809 = vand.u32 %v2569, 4294901760
  %v4810 = vsub.f32 %v2569, %v4809
  %4811 = vmatmul.mubr.f32.gmra.mrb[0].mxu0 %v4810
  %v4812 = vpop.f32.mrb[0].mxu0
  %v4813 = vadd.f32 %v4504, %v4812
  %v4814 = vpop.f32.mrb[0].mxu0
  %4815 = vmatprep.mubr.f32.mxu0 0.0
  %v4816 = vand.u32 %v2673, 4294901760
  %v4817 = vsub.f32 %v2673, %v4816
  %4818 = vmatmul.mubr.f32.gmra.mrb[0].mxu0 %v4817
  %v4819 = vpop.f32.mrb[0].mxu0
  %v4820 = vadd.f32 %v4510, %v4819
  %v4821 = vpop.f32.mrb[0].mxu0
  %4822 = vmatprep.mubr.f32.mxu0 0.0
  %v4823 = vand.u32 %v2777, 4294901760
  %v4824 = vsub.f32 %v2777, %v4823
  %4825 = vmatmul.mubr.f32.gmra.mrb[0].mxu0 %v4824
  %v4826 = vpop.f32.mrb[0].mxu0
  %v4827 = vadd.f32 %v4516, %v4826
  %v4828 = vpop.f32.mrb[0].mxu0
  %4829 = vmatprep.mubr.f32.mxu0 0.0
  %v4830 = vand.u32 %v2881, 4294901760
  %v4831 = vsub.f32 %v2881, %v4830
  %4832 = vmatmul.mubr.f32.gmra.mrb[0].mxu0 %v4831
  %v4833 = vpop.f32.mrb[0].mxu0
  %v4834 = vadd.f32 %v4522, %v4833
  %v4835 = vpop.f32.mrb[0].mxu0
  %4836 = vmatprep.mubr.f32.mxu0 0.0
  %v4837 = vand.u32 %v2985, 4294901760
  %v4838 = vsub.f32 %v2985, %v4837
  %4839 = vmatmul.mubr.f32.gmra.mrb[0].mxu0 %v4838
  %v4840 = vpop.f32.mrb[0].mxu0
  %v4841 = vadd.f32 %v4528, %v4840
  %v4842 = vpop.f32.mrb[0].mxu0
  %4843 = vmatprep.mubr.f32.mxu0 0.0
  %v4844 = vand.u32 %v3089, 4294901760
  %v4845 = vsub.f32 %v3089, %v4844
  %4846 = vmatmul.mubr.f32.gmra.mrb[0].mxu0 %v4845
  %v4847 = vpop.f32.mrb[0].mxu0
  %v4848 = vadd.f32 %v4534, %v4847
  %v4849 = vpop.f32.mrb[0].mxu0
  %4850 = vmatprep.mubr.f32.mxu0 0.0
  %v4851 = vand.u32 %v3193, 4294901760
  %v4852 = vsub.f32 %v3193, %v4851
  %4853 = vmatmul.mubr.f32.gmra.mrb[0].mxu0 %v4852
  %v4854 = vpop.f32.mrb[0].mxu0
  %v4855 = vadd.f32 %v4540, %v4854
  %v4856 = vpop.f32.mrb[0].mxu0
  %4857 = vmatprep.mubr.f32.mxu0 0.0
  %v4858 = vand.u32 %v3297, 4294901760
  %v4859 = vsub.f32 %v3297, %v4858
  %4860 = vmatmul.mubr.f32.gmra.mrb[0].mxu0 %v4859
  %v4861 = vpop.f32.mrb[0].mxu0
  %v4862 = vadd.f32 %v4546, %v4861
  %v4863 = vpop.f32.mrb[0].mxu0
  %4864 = vmatprep.mubr.f32.mxu0 0.0
  %v4865 = vand.u32 %v3401, 4294901760
  %v4866 = vsub.f32 %v3401, %v4865
  %4867 = vmatmul.mubr.f32.gmra.mrb[0].mxu0 %v4866
  %v4868 = vpop.f32.mrb[0].mxu0
  %v4869 = vadd.f32 %v4552, %v4868
  %v4870 = vpop.f32.mrb[0].mxu0
  %4871 = vmatprep.mubr.f32.mxu0 0.0
  %v4872 = vand.u32 %v3505, 4294901760
  %v4873 = vsub.f32 %v3505, %v4872
  %4874 = vmatmul.mubr.f32.gmra.mrb[0].mxu0 %v4873
  %v4875 = vpop.f32.mrb[0].mxu0
  %v4876 = vadd.f32 %v4558, %v4875
  %v4877 = vpop.f32.mrb[0].mxu0
  %4878 = vmatprep.mubr.f32.mxu0 0.0
  %v4879 = vand.u32 %v3609, 4294901760
  %v4880 = vsub.f32 %v3609, %v4879
  %4881 = vmatmul.mubr.f32.gmra.mrb[0].mxu0 %v4880
  %v4882 = vpop.f32.mrb[0].mxu0
  %v4883 = vadd.f32 %v4564, %v4882
  %v4884 = vpop.f32.mrb[0].mxu0
  %4885 = vmatprep.mubr.f32.mxu0 0.0
  %v4886 = vand.u32 %v3713, 4294901760
  %v4887 = vsub.f32 %v3713, %v4886
  %4888 = vmatmul.mubr.f32.gmra.mrb[0].mxu0 %v4887
  %v4889 = vpop.f32.mrb[0].mxu0
  %v4890 = vadd.f32 %v4570, %v4889
  %v4891 = vpop.f32.mrb[0].mxu0
  %4892 = vmatprep.mubr.f32.mxu0 0.0
  %v4893 = vand.u32 %v3817, 4294901760
  %v4894 = vsub.f32 %v3817, %v4893
  %4895 = vmatmul.mubr.f32.gmra.mrb[0].mxu0 %v4894
  %v4896 = vpop.f32.mrb[0].mxu0
  %v4897 = vadd.f32 %v4576, %v4896
  %v4898 = vpop.f32.mrb[0].mxu0
  %4899 = vdwg.mxu0
  %4900 = vmatprep.subr.mxu0 0.0
  %v4901 = vand.u32 %v3818, 4294901760
  %4902 = vmatpush1.msra.mxu0 %v4901
  %4903 = vmatprep.subr.mxu0 0.0
  %v4904 = vand.u32 %v3819, 4294901760
  %4905 = vmatpush1.msra.mxu0 %v4904
  %4906 = vmatprep.subr.mxu0 0.0
  %v4907 = vand.u32 %v3820, 4294901760
  %4908 = vmatpush1.msra.mxu0 %v4907
  %4909 = vmatprep.subr.mxu0 0.0
  %v4910 = vand.u32 %v3821, 4294901760
  %4911 = vmatpush1.msra.mxu0 %v4910
  %4912 = vmatprep.subr.mxu0 0.0
  %v4913 = vand.u32 %v3822, 4294901760
  %4914 = vmatpush1.msra.mxu0 %v4913
  %4915 = vmatprep.subr.mxu0 0.0
  %v4916 = vand.u32 %v3823, 4294901760
  %4917 = vmatpush1.msra.mxu0 %v4916
  %4918 = vmatprep.subr.mxu0 0.0
  %v4919 = vand.u32 %v3824, 4294901760
  %4920 = vmatpush1.msra.mxu0 %v4919
  %4921 = vmatprep.subr.mxu0 0.0
  %v4922 = vand.u32 %v3825, 4294901760
  %4923 = vmatpush1.msra.mxu0 %v4922
  %4924 = vmatprep.subr.mxu0 0.0
  %v4925 = vand.u32 %v3826, 4294901760
  %4926 = vmatpush1.msra.mxu0 %v4925
  %4927 = vmatprep.subr.mxu0 0.0
  %v4928 = vand.u32 %v3827, 4294901760
  %4929 = vmatpush1.msra.mxu0 %v4928
  %4930 = vmatprep.subr.mxu0 0.0
  %v4931 = vand.u32 %v3828, 4294901760
  %4932 = vmatpush1.msra.mxu0 %v4931
  %4933 = vmatprep.subr.mxu0 0.0
  %v4934 = vand.u32 %v3829, 4294901760
  %4935 = vmatpush1.msra.mxu0 %v4934
  %4936 = vmatprep.subr.mxu0 0.0
  %v4937 = vand.u32 %v3830, 4294901760
  %4938 = vmatpush1.msra.mxu0 %v4937
  %4939 = vmatprep.subr.mxu0 0.0
  %v4940 = vand.u32 %v3831, 4294901760
  %4941 = vmatpush1.msra.mxu0 %v4940
  %4942 = vmatprep.subr.mxu0 0.0
  %v4943 = vand.u32 %v3832, 4294901760
  %4944 = vmatpush1.msra.mxu0 %v4943
  %4945 = vmatprep.subr.mxu0 0.0
  %v4946 = vand.u32 %v3833, 4294901760
  %4947 = vmatpush1.msra.mxu0 %v4946
  %4948 = vmatprep.subr.mxu0 0.0
  %4949 = vmatpush1.msra.mxu0 0.0
  %4950 = vmatprep.subr.mxu0 0.0
  %4951 = vmatpush1.msra.mxu0 0.0
  %4952 = vmatprep.subr.mxu0 0.0
  %4953 = vmatpush1.msra.mxu0 0.0
  %4954 = vmatprep.subr.mxu0 0.0
  %4955 = vmatpush1.msra.mxu0 0.0
  %4956 = vmatprep.subr.mxu0 0.0
  %4957 = vmatpush1.msra.mxu0 0.0
  %4958 = vmatprep.subr.mxu0 0.0
  %4959 = vmatpush1.msra.mxu0 0.0
  %4960 = vmatprep.subr.mxu0 0.0
  %4961 = vmatpush1.msra.mxu0 0.0
  %4962 = vmatprep.subr.mxu0 0.0
  %4963 = vmatpush1.msra.mxu0 0.0
  %4964 = vmatprep.subr.mxu0 0.0
  %4965 = vmatpush1.msra.mxu0 0.0
  %4966 = vmatprep.subr.mxu0 0.0
  %4967 = vmatpush1.msra.mxu0 0.0
  %4968 = vmatprep.subr.mxu0 0.0
  %4969 = vmatpush1.msra.mxu0 0.0
  %4970 = vmatprep.subr.mxu0 0.0
  %4971 = vmatpush1.msra.mxu0 0.0
  %4972 = vmatprep.subr.mxu0 0.0
  %4973 = vmatpush1.msra.mxu0 0.0
  %4974 = vmatprep.subr.mxu0 0.0
  %4975 = vmatpush1.msra.mxu0 0.0
  %4976 = vmatprep.subr.mxu0 0.0
  %4977 = vmatpush1.msra.mxu0 0.0
  %4978 = vmatprep.subr.mxu0 0.0
  %4979 = vmatpush1.msra.mxu0 0.0
  %4980 = vmatprep.mubr.f32.mxu0 0.0
  %v4981 = vand.u32 %v593, 4294901760
  %v4982 = vsub.f32 %v593, %v4981
  %v4983 = vand.u32 %v4982, 4294901760
  %4984 = vmatmul.mubr.f32.gmra.mrb[0].mxu0 %v4983
  %v4985 = vpop.f32.mrb[0].mxu0
  %v4986 = vadd.f32 %v4680, %v4985
  %v4987 = vpop.f32.mrb[0].mxu0
  %4988 = vmatprep.mubr.f32.mxu0 0.0
  %v4989 = vand.u32 %v697, 4294901760
  %v4990 = vsub.f32 %v697, %v4989
  %v4991 = vand.u32 %v4990, 4294901760
  %4992 = vmatmul.mubr.f32.gmra.mrb[0].mxu0 %v4991
  %v4993 = vpop.f32.mrb[0].mxu0
  %v4994 = vadd.f32 %v4687, %v4993
  %v4995 = vpop.f32.mrb[0].mxu0
  %4996 = vmatprep.mubr.f32.mxu0 0.0
  %v4997 = vand.u32 %v801, 4294901760
  %v4998 = vsub.f32 %v801, %v4997
  %v4999 = vand.u32 %v4998, 4294901760
  %5000 = vmatmul.mubr.f32.gmra.mrb[0].mxu0 %v4999
  %v5001 = vpop.f32.mrb[0].mxu0
  %v5002 = vadd.f32 %v4694, %v5001
  %v5003 = vpop.f32.mrb[0].mxu0
  %5004 = vmatprep.mubr.f32.mxu0 0.0
  %v5005 = vand.u32 %v905, 4294901760
  %v5006 = vsub.f32 %v905, %v5005
  %v5007 = vand.u32 %v5006, 4294901760
  %5008 = vmatmul.mubr.f32.gmra.mrb[0].mxu0 %v5007
  %v5009 = vpop.f32.mrb[0].mxu0
  %v5010 = vadd.f32 %v4701, %v5009
  %v5011 = vpop.f32.mrb[0].mxu0
  %5012 = vmatprep.mubr.f32.mxu0 0.0
  %v5013 = vand.u32 %v1009, 4294901760
  %v5014 = vsub.f32 %v1009, %v5013
  %v5015 = vand.u32 %v5014, 4294901760
  %5016 = vmatmul.mubr.f32.gmra.mrb[0].mxu0 %v5015
  %v5017 = vpop.f32.mrb[0].mxu0
  %v5018 = vadd.f32 %v4708, %v5017
  %v5019 = vpop.f32.mrb[0].mxu0
  %5020 = vmatprep.mubr.f32.mxu0 0.0
  %v5021 = vand.u32 %v1113, 4294901760
  %v5022 = vsub.f32 %v1113, %v5021
  %v5023 = vand.u32 %v5022, 4294901760
  %5024 = vmatmul.mubr.f32.gmra.mrb[0].mxu0 %v5023
  %v5025 = vpop.f32.mrb[0].mxu0
  %v5026 = vadd.f32 %v4715, %v5025
  %v5027 = vpop.f32.mrb[0].mxu0
  %5028 = vmatprep.mubr.f32.mxu0 0.0
  %v5029 = vand.u32 %v1217, 4294901760
  %v5030 = vsub.f32 %v1217, %v5029
  %v5031 = vand.u32 %v5030, 4294901760
  %5032 = vmatmul.mubr.f32.gmra.mrb[0].mxu0 %v5031
  %v5033 = vpop.f32.mrb[0].mxu0
  %v5034 = vadd.f32 %v4722, %v5033
  %v5035 = vpop.f32.mrb[0].mxu0
  %5036 = vmatprep.mubr.f32.mxu0 0.0
  %v5037 = vand.u32 %v1321, 4294901760
  %v5038 = vsub.f32 %v1321, %v5037
  %v5039 = vand.u32 %v5038, 4294901760
  %5040 = vmatmul.mubr.f32.gmra.mrb[0].mxu0 %v5039
  %v5041 = vpop.f32.mrb[0].mxu0
  %v5042 = vadd.f32 %v4729, %v5041
  %v5043 = vpop.f32.mrb[0].mxu0
  %5044 = vmatprep.mubr.f32.mxu0 0.0
  %v5045 = vand.u32 %v1425, 4294901760
  %v5046 = vsub.f32 %v1425, %v5045
  %v5047 = vand.u32 %v5046, 4294901760
  %5048 = vmatmul.mubr.f32.gmra.mrb[0].mxu0 %v5047
  %v5049 = vpop.f32.mrb[0].mxu0
  %v5050 = vadd.f32 %v4736, %v5049
  %v5051 = vpop.f32.mrb[0].mxu0
  %5052 = vmatprep.mubr.f32.mxu0 0.0
  %v5053 = vand.u32 %v1529, 4294901760
  %v5054 = vsub.f32 %v1529, %v5053
  %v5055 = vand.u32 %v5054, 4294901760
  %5056 = vmatmul.mubr.f32.gmra.mrb[0].mxu0 %v5055
  %v5057 = vpop.f32.mrb[0].mxu0
  %v5058 = vadd.f32 %v4743, %v5057
  %v5059 = vpop.f32.mrb[0].mxu0
  %5060 = vmatprep.mubr.f32.mxu0 0.0
  %v5061 = vand.u32 %v1633, 4294901760
  %v5062 = vsub.f32 %v1633, %v5061
  %v5063 = vand.u32 %v5062, 4294901760
  %5064 = vmatmul.mubr.f32.gmra.mrb[0].mxu0 %v5063
  %v5065 = vpop.f32.mrb[0].mxu0
  %v5066 = vadd.f32 %v4750, %v5065
  %v5067 = vpop.f32.mrb[0].mxu0
  %5068 = vmatprep.mubr.f32.mxu0 0.0
  %v5069 = vand.u32 %v1737, 4294901760
  %v5070 = vsub.f32 %v1737, %v5069
  %v5071 = vand.u32 %v5070, 4294901760
  %5072 = vmatmul.mubr.f32.gmra.mrb[0].mxu0 %v5071
  %v5073 = vpop.f32.mrb[0].mxu0
  %v5074 = vadd.f32 %v4757, %v5073
  %v5075 = vpop.f32.mrb[0].mxu0
  %5076 = vmatprep.mubr.f32.mxu0 0.0
  %v5077 = vand.u32 %v1841, 4294901760
  %v5078 = vsub.f32 %v1841, %v5077
  %v5079 = vand.u32 %v5078, 4294901760
  %5080 = vmatmul.mubr.f32.gmra.mrb[0].mxu0 %v5079
  %v5081 = vpop.f32.mrb[0].mxu0
  %v5082 = vadd.f32 %v4764, %v5081
  %v5083 = vpop.f32.mrb[0].mxu0
  %5084 = vmatprep.mubr.f32.mxu0 0.0
  %v5085 = vand.u32 %v1945, 4294901760
  %v5086 = vsub.f32 %v1945, %v5085
  %v5087 = vand.u32 %v5086, 4294901760
  %5088 = vmatmul.mubr.f32.gmra.mrb[0].mxu0 %v5087
  %v5089 = vpop.f32.mrb[0].mxu0
  %v5090 = vadd.f32 %v4771, %v5089
  %v5091 = vpop.f32.mrb[0].mxu0
  %5092 = vmatprep.mubr.f32.mxu0 0.0
  %v5093 = vand.u32 %v2049, 4294901760
  %v5094 = vsub.f32 %v2049, %v5093
  %v5095 = vand.u32 %v5094, 4294901760
  %5096 = vmatmul.mubr.f32.gmra.mrb[0].mxu0 %v5095
  %v5097 = vpop.f32.mrb[0].mxu0
  %v5098 = vadd.f32 %v4778, %v5097
  %v5099 = vpop.f32.mrb[0].mxu0
  %5100 = vmatprep.mubr.f32.mxu0 0.0
  %v5101 = vand.u32 %v2153, 4294901760
  %v5102 = vsub.f32 %v2153, %v5101
  %v5103 = vand.u32 %v5102, 4294901760
  %5104 = vmatmul.mubr.f32.gmra.mrb[0].mxu0 %v5103
  %v5105 = vpop.f32.mrb[0].mxu0
  %v5106 = vadd.f32 %v4785, %v5105
  %v5107 = vpop.f32.mrb[0].mxu0
  %5108 = vmatprep.mubr.f32.mxu0 0.0
  %v5109 = vand.u32 %v2257, 4294901760
  %v5110 = vsub.f32 %v2257, %v5109
  %v5111 = vand.u32 %v5110, 4294901760
  %5112 = vmatmul.mubr.f32.gmra.mrb[0].mxu0 %v5111
  %v5113 = vpop.f32.mrb[0].mxu0
  %v5114 = vadd.f32 %v4792, %v5113
  %v5115 = vpop.f32.mrb[0].mxu0
  %5116 = vmatprep.mubr.f32.mxu0 0.0
  %v5117 = vand.u32 %v2361, 4294901760
  %v5118 = vsub.f32 %v2361, %v5117
  %v5119 = vand.u32 %v5118, 4294901760
  %5120 = vmatmul.mubr.f32.gmra.mrb[0].mxu0 %v5119
  %v5121 = vpop.f32.mrb[0].mxu0
  %v5122 = vadd.f32 %v4799, %v5121
  %v5123 = vpop.f32.mrb[0].mxu0
  %5124 = vmatprep.mubr.f32.mxu0 0.0
  %v5125 = vand.u32 %v2465, 4294901760
  %v5126 = vsub.f32 %v2465, %v5125
  %v5127 = vand.u32 %v5126, 4294901760
  %5128 = vmatmul.mubr.f32.gmra.mrb[0].mxu0 %v5127
  %v5129 = vpop.f32.mrb[0].mxu0
  %v5130 = vadd.f32 %v4806, %v5129
  %v5131 = vpop.f32.mrb[0].mxu0
  %5132 = vmatprep.mubr.f32.mxu0 0.0
  %v5133 = vand.u32 %v2569, 4294901760
  %v5134 = vsub.f32 %v2569, %v5133
  %v5135 = vand.u32 %v5134, 4294901760
  %5136 = vmatmul.mubr.f32.gmra.mrb[0].mxu0 %v5135
  %v5137 = vpop.f32.mrb[0].mxu0
  %v5138 = vadd.f32 %v4813, %v5137
  %v5139 = vpop.f32.mrb[0].mxu0
  %5140 = vmatprep.mubr.f32.mxu0 0.0
  %v5141 = vand.u32 %v2673, 4294901760
  %v5142 = vsub.f32 %v2673, %v5141
  %v5143 = vand.u32 %v5142, 4294901760
  %5144 = vmatmul.mubr.f32.gmra.mrb[0].mxu0 %v5143
  %v5145 = vpop.f32.mrb[0].mxu0
  %v5146 = vadd.f32 %v4820, %v5145
  %v5147 = vpop.f32.mrb[0].mxu0
  %5148 = vmatprep.mubr.f32.mxu0 0.0
  %v5149 = vand.u32 %v2777, 4294901760
  %v5150 = vsub.f32 %v2777, %v5149
  %v5151 = vand.u32 %v5150, 4294901760
  %5152 = vmatmul.mubr.f32.gmra.mrb[0].mxu0 %v5151
  %v5153 = vpop.f32.mrb[0].mxu0
  %v5154 = vadd.f32 %v4827, %v5153
  %v5155 = vpop.f32.mrb[0].mxu0
  %5156 = vmatprep.mubr.f32.mxu0 0.0
  %v5157 = vand.u32 %v2881, 4294901760
  %v5158 = vsub.f32 %v2881, %v5157
  %v5159 = vand.u32 %v5158, 4294901760
  %5160 = vmatmul.mubr.f32.gmra.mrb[0].mxu0 %v5159
  %v5161 = vpop.f32.mrb[0].mxu0
  %v5162 = vadd.f32 %v4834, %v5161
  %v5163 = vpop.f32.mrb[0].mxu0
  %5164 = vmatprep.mubr.f32.mxu0 0.0
  %v5165 = vand.u32 %v2985, 4294901760
  %v5166 = vsub.f32 %v2985, %v5165
  %v5167 = vand.u32 %v5166, 4294901760
  %5168 = vmatmul.mubr.f32.gmra.mrb[0].mxu0 %v5167
  %v5169 = vpop.f32.mrb[0].mxu0
  %v5170 = vadd.f32 %v4841, %v5169
  %v5171 = vpop.f32.mrb[0].mxu0
  %5172 = vmatprep.mubr.f32.mxu0 0.0
  %v5173 = vand.u32 %v3089, 4294901760
  %v5174 = vsub.f32 %v3089, %v5173
  %v5175 = vand.u32 %v5174, 4294901760
  %5176 = vmatmul.mubr.f32.gmra.mrb[0].mxu0 %v5175
  %v5177 = vpop.f32.mrb[0].mxu0
  %v5178 = vadd.f32 %v4848, %v5177
  %v5179 = vpop.f32.mrb[0].mxu0
  %5180 = vmatprep.mubr.f32.mxu0 0.0
  %v5181 = vand.u32 %v3193, 4294901760
  %v5182 = vsub.f32 %v3193, %v5181
  %v5183 = vand.u32 %v5182, 4294901760
  %5184 = vmatmul.mubr.f32.gmra.mrb[0].mxu0 %v5183
  %v5185 = vpop.f32.mrb[0].mxu0
  %v5186 = vadd.f32 %v4855, %v5185
  %v5187 = vpop.f32.mrb[0].mxu0
  %5188 = vmatprep.mubr.f32.mxu0 0.0
  %v5189 = vand.u32 %v3297, 4294901760
  %v5190 = vsub.f32 %v3297, %v5189
  %v5191 = vand.u32 %v5190, 4294901760
  %5192 = vmatmul.mubr.f32.gmra.mrb[0].mxu0 %v5191
  %v5193 = vpop.f32.mrb[0].mxu0
  %v5194 = vadd.f32 %v4862, %v5193
  %v5195 = vpop.f32.mrb[0].mxu0
  %5196 = vmatprep.mubr.f32.mxu0 0.0
  %v5197 = vand.u32 %v3401, 4294901760
  %v5198 = vsub.f32 %v3401, %v5197
  %v5199 = vand.u32 %v5198, 4294901760
  %5200 = vmatmul.mubr.f32.gmra.mrb[0].mxu0 %v5199
  %v5201 = vpop.f32.mrb[0].mxu0
  %v5202 = vadd.f32 %v4869, %v5201
  %v5203 = vpop.f32.mrb[0].mxu0
  %5204 = vmatprep.mubr.f32.mxu0 0.0
  %v5205 = vand.u32 %v3505, 4294901760
  %v5206 = vsub.f32 %v3505, %v5205
  %v5207 = vand.u32 %v5206, 4294901760
  %5208 = vmatmul.mubr.f32.gmra.mrb[0].mxu0 %v5207
  %v5209 = vpop.f32.mrb[0].mxu0
  %v5210 = vadd.f32 %v4876, %v5209
  %v5211 = vpop.f32.mrb[0].mxu0
  %5212 = vmatprep.mubr.f32.mxu0 0.0
  %v5213 = vand.u32 %v3609, 4294901760
  %v5214 = vsub.f32 %v3609, %v5213
  %v5215 = vand.u32 %v5214, 4294901760
  %5216 = vmatmul.mubr.f32.gmra.mrb[0].mxu0 %v5215
  %v5217 = vpop.f32.mrb[0].mxu0
  %v5218 = vadd.f32 %v4883, %v5217
  %v5219 = vpop.f32.mrb[0].mxu0
  %5220 = vmatprep.mubr.f32.mxu0 0.0
  %v5221 = vand.u32 %v3713, 4294901760
  %v5222 = vsub.f32 %v3713, %v5221
  %v5223 = vand.u32 %v5222, 4294901760
  %5224 = vmatmul.mubr.f32.gmra.mrb[0].mxu0 %v5223
  %v5225 = vpop.f32.mrb[0].mxu0
  %v5226 = vadd.f32 %v4890, %v5225
  %v5227 = vpop.f32.mrb[0].mxu0
  %5228 = vmatprep.mubr.f32.mxu0 0.0
  %v5229 = vand.u32 %v3817, 4294901760
  %v5230 = vsub.f32 %v3817, %v5229
  %v5231 = vand.u32 %v5230, 4294901760
  %5232 = vmatmul.mubr.f32.gmra.mrb[0].mxu0 %v5231
  %v5233 = vpop.f32.mrb[0].mxu0
  %v5234 = vadd.f32 %v4897, %v5233
  %v5235 = vpop.f32.mrb[0].mxu0
  %5236 = vdwg.mxu0
  %5237 = vmatprep.subr.mxu0 0.0
  %v5238 = vand.u32 %v3818, 4294901760
  %v5239 = vsub.f32 %v3818, %v5238
  %v5240 = vand.u32 %v5239, 4294901760
  %5241 = vmatpush1.msra.mxu0 %v5240
  %5242 = vmatprep.subr.mxu0 0.0
  %v5243 = vand.u32 %v3819, 4294901760
  %v5244 = vsub.f32 %v3819, %v5243
  %v5245 = vand.u32 %v5244, 4294901760
  %5246 = vmatpush1.msra.mxu0 %v5245
  %5247 = vmatprep.subr.mxu0 0.0
  %v5248 = vand.u32 %v3820, 4294901760
  %v5249 = vsub.f32 %v3820, %v5248
  %v5250 = vand.u32 %v5249, 4294901760
  %5251 = vmatpush1.msra.mxu0 %v5250
  %5252 = vmatprep.subr.mxu0 0.0
  %v5253 = vand.u32 %v3821, 4294901760
  %v5254 = vsub.f32 %v3821, %v5253
  %v5255 = vand.u32 %v5254, 4294901760
  %5256 = vmatpush1.msra.mxu0 %v5255
  %5257 = vmatprep.subr.mxu0 0.0
  %v5258 = vand.u32 %v3822, 4294901760
  %v5259 = vsub.f32 %v3822, %v5258
  %v5260 = vand.u32 %v5259, 4294901760
  %5261 = vmatpush1.msra.mxu0 %v5260
  %5262 = vmatprep.subr.mxu0 0.0
  %v5263 = vand.u32 %v3823, 4294901760
  %v5264 = vsub.f32 %v3823, %v5263
  %v5265 = vand.u32 %v5264, 4294901760
  %5266 = vmatpush1.msra.mxu0 %v5265
  %5267 = vmatprep.subr.mxu0 0.0
  %v5268 = vand.u32 %v3824, 4294901760
  %v5269 = vsub.f32 %v3824, %v5268
  %v5270 = vand.u32 %v5269, 4294901760
  %5271 = vmatpush1.msra.mxu0 %v5270
  %5272 = vmatprep.subr.mxu0 0.0
  %v5273 = vand.u32 %v3825, 4294901760
  %v5274 = vsub.f32 %v3825, %v5273
  %v5275 = vand.u32 %v5274, 4294901760
  %5276 = vmatpush1.msra.mxu0 %v5275
  %5277 = vmatprep.subr.mxu0 0.0
  %v5278 = vand.u32 %v3826, 4294901760
  %v5279 = vsub.f32 %v3826, %v5278
  %v5280 = vand.u32 %v5279, 4294901760
  %5281 = vmatpush1.msra.mxu0 %v5280
  %5282 = vmatprep.subr.mxu0 0.0
  %v5283 = vand.u32 %v3827, 4294901760
  %v5284 = vsub.f32 %v3827, %v5283
  %v5285 = vand.u32 %v5284, 4294901760
  %5286 = vmatpush1.msra.mxu0 %v5285
  %5287 = vmatprep.subr.mxu0 0.0
  %v5288 = vand.u32 %v3828, 4294901760
  %v5289 = vsub.f32 %v3828, %v5288
  %v5290 = vand.u32 %v5289, 4294901760
  %5291 = vmatpush1.msra.mxu0 %v5290
  %5292 = vmatprep.subr.mxu0 0.0
  %v5293 = vand.u32 %v3829, 4294901760
  %v5294 = vsub.f32 %v3829, %v5293
  %v5295 = vand.u32 %v5294, 4294901760
  %5296 = vmatpush1.msra.mxu0 %v5295
  %5297 = vmatprep.subr.mxu0 0.0
  %v5298 = vand.u32 %v3830, 4294901760
  %v5299 = vsub.f32 %v3830, %v5298
  %v5300 = vand.u32 %v5299, 4294901760
  %5301 = vmatpush1.msra.mxu0 %v5300
  %5302 = vmatprep.subr.mxu0 0.0
  %v5303 = vand.u32 %v3831, 4294901760
  %v5304 = vsub.f32 %v3831, %v5303
  %v5305 = vand.u32 %v5304, 4294901760
  %5306 = vmatpush1.msra.mxu0 %v5305
  %5307 = vmatprep.subr.mxu0 0.0
  %v5308 = vand.u32 %v3832, 4294901760
  %v5309 = vsub.f32 %v3832, %v5308
  %v5310 = vand.u32 %v5309, 4294901760
  %5311 = vmatpush1.msra.mxu0 %v5310
  %5312 = vmatprep.subr.mxu0 0.0
  %v5313 = vand.u32 %v3833, 4294901760
  %v5314 = vsub.f32 %v3833, %v5313
  %v5315 = vand.u32 %v5314, 4294901760
  %5316 = vmatpush1.msra.mxu0 %v5315
  %5317 = vmatprep.subr.mxu0 0.0
  %5318 = vmatpush1.msra.mxu0 0.0
  %5319 = vmatprep.subr.mxu0 0.0
  %5320 = vmatpush1.msra.mxu0 0.0
  %5321 = vmatprep.subr.mxu0 0.0
  %5322 = vmatpush1.msra.mxu0 0.0
  %5323 = vmatprep.subr.mxu0 0.0
  %5324 = vmatpush1.msra.mxu0 0.0
  %5325 = vmatprep.subr.mxu0 0.0
  %5326 = vmatpush1.msra.mxu0 0.0
  %5327 = vmatprep.subr.mxu0 0.0
  %5328 = vmatpush1.msra.mxu0 0.0
  %5329 = vmatprep.subr.mxu0 0.0
  %5330 = vmatpush1.msra.mxu0 0.0
  %5331 = vmatprep.subr.mxu0 0.0
  %5332 = vmatpush1.msra.mxu0 0.0
  %5333 = vmatprep.subr.mxu0 0.0
  %5334 = vmatpush1.msra.mxu0 0.0
  %5335 = vmatprep.subr.mxu0 0.0
  %5336 = vmatpush1.msra.mxu0 0.0
  %5337 = vmatprep.subr.mxu0 0.0
  %5338 = vmatpush1.msra.mxu0 0.0
  %5339 = vmatprep.subr.mxu0 0.0
  %5340 = vmatpush1.msra.mxu0 0.0
  %5341 = vmatprep.subr.mxu0 0.0
  %5342 = vmatpush1.msra.mxu0 0.0
  %5343 = vmatprep.subr.mxu0 0.0
  %5344 = vmatpush1.msra.mxu0 0.0
  %5345 = vmatprep.subr.mxu0 0.0
  %5346 = vmatpush1.msra.mxu0 0.0
  %5347 = vmatprep.subr.mxu0 0.0
  %5348 = vmatpush1.msra.mxu0 0.0
  %5349 = vmatprep.mubr.f32.mxu0 0.0
  %v5350 = vand.u32 %v593, 4294901760
  %5351 = vmatmul.mubr.f32.gmra.mrb[0].mxu0 %v5350
  %v5352 = vpop.f32.mrb[0].mxu0
  %v5353 = vadd.f32 %v4986, %v5352
  %v5354 = vpop.f32.mrb[0].mxu0
  %5355 = vmatprep.mubr.f32.mxu0 0.0
  %v5356 = vand.u32 %v697, 4294901760
  %5357 = vmatmul.mubr.f32.gmra.mrb[0].mxu0 %v5356
  %v5358 = vpop.f32.mrb[0].mxu0
  %v5359 = vadd.f32 %v4994, %v5358
  %v5360 = vpop.f32.mrb[0].mxu0
  %5361 = vmatprep.mubr.f32.mxu0 0.0
  %v5362 = vand.u32 %v801, 4294901760
  %5363 = vmatmul.mubr.f32.gmra.mrb[0].mxu0 %v5362
  %v5364 = vpop.f32.mrb[0].mxu0
  %v5365 = vadd.f32 %v5002, %v5364
  %v5366 = vpop.f32.mrb[0].mxu0
  %5367 = vmatprep.mubr.f32.mxu0 0.0
  %v5368 = vand.u32 %v905, 4294901760
  %5369 = vmatmul.mubr.f32.gmra.mrb[0].mxu0 %v5368
  %v5370 = vpop.f32.mrb[0].mxu0
  %v5371 = vadd.f32 %v5010, %v5370
  %v5372 = vpop.f32.mrb[0].mxu0
  %5373 = vmatprep.mubr.f32.mxu0 0.0
  %v5374 = vand.u32 %v1009, 4294901760
  %5375 = vmatmul.mubr.f32.gmra.mrb[0].mxu0 %v5374
  %v5376 = vpop.f32.mrb[0].mxu0
  %v5377 = vadd.f32 %v5018, %v5376
  %v5378 = vpop.f32.mrb[0].mxu0
  %5379 = vmatprep.mubr.f32.mxu0 0.0
  %v5380 = vand.u32 %v1113, 4294901760
  %5381 = vmatmul.mubr.f32.gmra.mrb[0].mxu0 %v5380
  %v5382 = vpop.f32.mrb[0].mxu0
  %v5383 = vadd.f32 %v5026, %v5382
  %v5384 = vpop.f32.mrb[0].mxu0
  %5385 = vmatprep.mubr.f32.mxu0 0.0
  %v5386 = vand.u32 %v1217, 4294901760
  %5387 = vmatmul.mubr.f32.gmra.mrb[0].mxu0 %v5386
  %v5388 = vpop.f32.mrb[0].mxu0
  %v5389 = vadd.f32 %v5034, %v5388
  %v5390 = vpop.f32.mrb[0].mxu0
  %5391 = vmatprep.mubr.f32.mxu0 0.0
  %v5392 = vand.u32 %v1321, 4294901760
  %5393 = vmatmul.mubr.f32.gmra.mrb[0].mxu0 %v5392
  %v5394 = vpop.f32.mrb[0].mxu0
  %v5395 = vadd.f32 %v5042, %v5394
  %v5396 = vpop.f32.mrb[0].mxu0
  %5397 = vmatprep.mubr.f32.mxu0 0.0
  %v5398 = vand.u32 %v1425, 4294901760
  %5399 = vmatmul.mubr.f32.gmra.mrb[0].mxu0 %v5398
  %v5400 = vpop.f32.mrb[0].mxu0
  %v5401 = vadd.f32 %v5050, %v5400
  %v5402 = vpop.f32.mrb[0].mxu0
  %5403 = vmatprep.mubr.f32.mxu0 0.0
  %v5404 = vand.u32 %v1529, 4294901760
  %5405 = vmatmul.mubr.f32.gmra.mrb[0].mxu0 %v5404
  %v5406 = vpop.f32.mrb[0].mxu0
  %v5407 = vadd.f32 %v5058, %v5406
  %v5408 = vpop.f32.mrb[0].mxu0
  %5409 = vmatprep.mubr.f32.mxu0 0.0
  %v5410 = vand.u32 %v1633, 4294901760
  %5411 = vmatmul.mubr.f32.gmra.mrb[0].mxu0 %v5410
  %v5412 = vpop.f32.mrb[0].mxu0
  %v5413 = vadd.f32 %v5066, %v5412
  %v5414 = vpop.f32.mrb[0].mxu0
  %5415 = vmatprep.mubr.f32.mxu0 0.0
  %v5416 = vand.u32 %v1737, 4294901760
  %5417 = vmatmul.mubr.f32.gmra.mrb[0].mxu0 %v5416
  %v5418 = vpop.f32.mrb[0].mxu0
  %v5419 = vadd.f32 %v5074, %v5418
  %v5420 = vpop.f32.mrb[0].mxu0
  %5421 = vmatprep.mubr.f32.mxu0 0.0
  %v5422 = vand.u32 %v1841, 4294901760
  %5423 = vmatmul.mubr.f32.gmra.mrb[0].mxu0 %v5422
  %v5424 = vpop.f32.mrb[0].mxu0
  %v5425 = vadd.f32 %v5082, %v5424
  %v5426 = vpop.f32.mrb[0].mxu0
  %5427 = vmatprep.mubr.f32.mxu0 0.0
  %v5428 = vand.u32 %v1945, 4294901760
  %5429 = vmatmul.mubr.f32.gmra.mrb[0].mxu0 %v5428
  %v5430 = vpop.f32.mrb[0].mxu0
  %v5431 = vadd.f32 %v5090, %v5430
  %v5432 = vpop.f32.mrb[0].mxu0
  %5433 = vmatprep.mubr.f32.mxu0 0.0
  %v5434 = vand.u32 %v2049, 4294901760
  %5435 = vmatmul.mubr.f32.gmra.mrb[0].mxu0 %v5434
  %v5436 = vpop.f32.mrb[0].mxu0
  %v5437 = vadd.f32 %v5098, %v5436
  %v5438 = vpop.f32.mrb[0].mxu0
  %5439 = vmatprep.mubr.f32.mxu0 0.0
  %v5440 = vand.u32 %v2153, 4294901760
  %5441 = vmatmul.mubr.f32.gmra.mrb[0].mxu0 %v5440
  %v5442 = vpop.f32.mrb[0].mxu0
  %v5443 = vadd.f32 %v5106, %v5442
  %v5444 = vpop.f32.mrb[0].mxu0
  %5445 = vmatprep.mubr.f32.mxu0 0.0
  %v5446 = vand.u32 %v2257, 4294901760
  %5447 = vmatmul.mubr.f32.gmra.mrb[0].mxu0 %v5446
  %v5448 = vpop.f32.mrb[0].mxu0
  %v5449 = vadd.f32 %v5114, %v5448
  %v5450 = vpop.f32.mrb[0].mxu0
  %5451 = vmatprep.mubr.f32.mxu0 0.0
  %v5452 = vand.u32 %v2361, 4294901760
  %5453 = vmatmul.mubr.f32.gmra.mrb[0].mxu0 %v5452
  %v5454 = vpop.f32.mrb[0].mxu0
  %v5455 = vadd.f32 %v5122, %v5454
  %v5456 = vpop.f32.mrb[0].mxu0
  %5457 = vmatprep.mubr.f32.mxu0 0.0
  %v5458 = vand.u32 %v2465, 4294901760
  %5459 = vmatmul.mubr.f32.gmra.mrb[0].mxu0 %v5458
  %v5460 = vpop.f32.mrb[0].mxu0
  %v5461 = vadd.f32 %v5130, %v5460
  %v5462 = vpop.f32.mrb[0].mxu0
  %5463 = vmatprep.mubr.f32.mxu0 0.0
  %v5464 = vand.u32 %v2569, 4294901760
  %5465 = vmatmul.mubr.f32.gmra.mrb[0].mxu0 %v5464
  %v5466 = vpop.f32.mrb[0].mxu0
  %v5467 = vadd.f32 %v5138, %v5466
  %v5468 = vpop.f32.mrb[0].mxu0
  %5469 = vmatprep.mubr.f32.mxu0 0.0
  %v5470 = vand.u32 %v2673, 4294901760
  %5471 = vmatmul.mubr.f32.gmra.mrb[0].mxu0 %v5470
  %v5472 = vpop.f32.mrb[0].mxu0
  %v5473 = vadd.f32 %v5146, %v5472
  %v5474 = vpop.f32.mrb[0].mxu0
  %5475 = vmatprep.mubr.f32.mxu0 0.0
  %v5476 = vand.u32 %v2777, 4294901760
  %5477 = vmatmul.mubr.f32.gmra.mrb[0].mxu0 %v5476
  %v5478 = vpop.f32.mrb[0].mxu0
  %v5479 = vadd.f32 %v5154, %v5478
  %v5480 = vpop.f32.mrb[0].mxu0
  %5481 = vmatprep.mubr.f32.mxu0 0.0
  %v5482 = vand.u32 %v2881, 4294901760
  %5483 = vmatmul.mubr.f32.gmra.mrb[0].mxu0 %v5482
  %v5484 = vpop.f32.mrb[0].mxu0
  %v5485 = vadd.f32 %v5162, %v5484
  %v5486 = vpop.f32.mrb[0].mxu0
  %5487 = vmatprep.mubr.f32.mxu0 0.0
  %v5488 = vand.u32 %v2985, 4294901760
  %5489 = vmatmul.mubr.f32.gmra.mrb[0].mxu0 %v5488
  %v5490 = vpop.f32.mrb[0].mxu0
  %v5491 = vadd.f32 %v5170, %v5490
  %v5492 = vpop.f32.mrb[0].mxu0
  %5493 = vmatprep.mubr.f32.mxu0 0.0
  %v5494 = vand.u32 %v3089, 4294901760
  %5495 = vmatmul.mubr.f32.gmra.mrb[0].mxu0 %v5494
  %v5496 = vpop.f32.mrb[0].mxu0
  %v5497 = vadd.f32 %v5178, %v5496
  %v5498 = vpop.f32.mrb[0].mxu0
  %5499 = vmatprep.mubr.f32.mxu0 0.0
  %v5500 = vand.u32 %v3193, 4294901760
  %5501 = vmatmul.mubr.f32.gmra.mrb[0].mxu0 %v5500
  %v5502 = vpop.f32.mrb[0].mxu0
  %v5503 = vadd.f32 %v5186, %v5502
  %v5504 = vpop.f32.mrb[0].mxu0
  %5505 = vmatprep.mubr.f32.mxu0 0.0
  %v5506 = vand.u32 %v3297, 4294901760
  %5507 = vmatmul.mubr.f32.gmra.mrb[0].mxu0 %v5506
  %v5508 = vpop.f32.mrb[0].mxu0
  %v5509 = vadd.f32 %v5194, %v5508
  %v5510 = vpop.f32.mrb[0].mxu0
  %5511 = vmatprep.mubr.f32.mxu0 0.0
  %v5512 = vand.u32 %v3401, 4294901760
  %5513 = vmatmul.mubr.f32.gmra.mrb[0].mxu0 %v5512
  %v5514 = vpop.f32.mrb[0].mxu0
  %v5515 = vadd.f32 %v5202, %v5514
  %v5516 = vpop.f32.mrb[0].mxu0
  %5517 = vmatprep.mubr.f32.mxu0 0.0
  %v5518 = vand.u32 %v3505, 4294901760
  %5519 = vmatmul.mubr.f32.gmra.mrb[0].mxu0 %v5518
  %v5520 = vpop.f32.mrb[0].mxu0
  %v5521 = vadd.f32 %v5210, %v5520
  %v5522 = vpop.f32.mrb[0].mxu0
  %5523 = vmatprep.mubr.f32.mxu0 0.0
  %v5524 = vand.u32 %v3609, 4294901760
  %5525 = vmatmul.mubr.f32.gmra.mrb[0].mxu0 %v5524
  %v5526 = vpop.f32.mrb[0].mxu0
  %v5527 = vadd.f32 %v5218, %v5526
  %v5528 = vpop.f32.mrb[0].mxu0
  %5529 = vmatprep.mubr.f32.mxu0 0.0
  %v5530 = vand.u32 %v3713, 4294901760
  %5531 = vmatmul.mubr.f32.gmra.mrb[0].mxu0 %v5530
  %v5532 = vpop.f32.mrb[0].mxu0
  %v5533 = vadd.f32 %v5226, %v5532
  %v5534 = vpop.f32.mrb[0].mxu0
  %5535 = vmatprep.mubr.f32.mxu0 0.0
  %v5536 = vand.u32 %v3817, 4294901760
  %5537 = vmatmul.mubr.f32.gmra.mrb[0].mxu0 %v5536
  %v5538 = vpop.f32.mrb[0].mxu0
  %v5539 = vadd.f32 %v5234, %v5538
  %v5540 = vpop.f32.mrb[0].mxu0
  %5541 = vdwg.mxu0
  %5542 = vmatprep.subr.mxu0 0.0
  %v5543 = vand.u32 %v3818, 4294901760
  %5544 = vmatpush1.msra.mxu0 %v5543
  %5545 = vmatprep.subr.mxu0 0.0
  %v5546 = vand.u32 %v3819, 4294901760
  %5547 = vmatpush1.msra.mxu0 %v5546
  %5548 = vmatprep.subr.mxu0 0.0
  %v5549 = vand.u32 %v3820, 4294901760
  %5550 = vmatpush1.msra.mxu0 %v5549
  %5551 = vmatprep.subr.mxu0 0.0
  %v5552 = vand.u32 %v3821, 4294901760
  %5553 = vmatpush1.msra.mxu0 %v5552
  %5554 = vmatprep.subr.mxu0 0.0
  %v5555 = vand.u32 %v3822, 4294901760
  %5556 = vmatpush1.msra.mxu0 %v5555
  %5557 = vmatprep.subr.mxu0 0.0
  %v5558 = vand.u32 %v3823, 4294901760
  %5559 = vmatpush1.msra.mxu0 %v5558
  %5560 = vmatprep.subr.mxu0 0.0
  %v5561 = vand.u32 %v3824, 4294901760
  %5562 = vmatpush1.msra.mxu0 %v5561
  %5563 = vmatprep.subr.mxu0 0.0
  %v5564 = vand.u32 %v3825, 4294901760
  %5565 = vmatpush1.msra.mxu0 %v5564
  %5566 = vmatprep.subr.mxu0 0.0
  %v5567 = vand.u32 %v3826, 4294901760
  %5568 = vmatpush1.msra.mxu0 %v5567
  %5569 = vmatprep.subr.mxu0 0.0
  %v5570 = vand.u32 %v3827, 4294901760
  %5571 = vmatpush1.msra.mxu0 %v5570
  %5572 = vmatprep.subr.mxu0 0.0
  %v5573 = vand.u32 %v3828, 4294901760
  %5574 = vmatpush1.msra.mxu0 %v5573
  %5575 = vmatprep.subr.mxu0 0.0
  %v5576 = vand.u32 %v3829, 4294901760
  %5577 = vmatpush1.msra.mxu0 %v5576
  %5578 = vmatprep.subr.mxu0 0.0
  %v5579 = vand.u32 %v3830, 4294901760
  %5580 = vmatpush1.msra.mxu0 %v5579
  %5581 = vmatprep.subr.mxu0 0.0
  %v5582 = vand.u32 %v3831, 4294901760
  %5583 = vmatpush1.msra.mxu0 %v5582
  %5584 = vmatprep.subr.mxu0 0.0
  %v5585 = vand.u32 %v3832, 4294901760
  %5586 = vmatpush1.msra.mxu0 %v5585
  %5587 = vmatprep.subr.mxu0 0.0
  %v5588 = vand.u32 %v3833, 4294901760
  %5589 = vmatpush1.msra.mxu0 %v5588
  %5590 = vmatprep.subr.mxu0 0.0
  %5591 = vmatpush1.msra.mxu0 0.0
  %5592 = vmatprep.subr.mxu0 0.0
  %5593 = vmatpush1.msra.mxu0 0.0
  %5594 = vmatprep.subr.mxu0 0.0
  %5595 = vmatpush1.msra.mxu0 0.0
  %5596 = vmatprep.subr.mxu0 0.0
  %5597 = vmatpush1.msra.mxu0 0.0
  %5598 = vmatprep.subr.mxu0 0.0
  %5599 = vmatpush1.msra.mxu0 0.0
  %5600 = vmatprep.subr.mxu0 0.0
  %5601 = vmatpush1.msra.mxu0 0.0
  %5602 = vmatprep.subr.mxu0 0.0
  %5603 = vmatpush1.msra.mxu0 0.0
  %5604 = vmatprep.subr.mxu0 0.0
  %5605 = vmatpush1.msra.mxu0 0.0
  %5606 = vmatprep.subr.mxu0 0.0
  %5607 = vmatpush1.msra.mxu0 0.0
  %5608 = vmatprep.subr.mxu0 0.0
  %5609 = vmatpush1.msra.mxu0 0.0
  %5610 = vmatprep.subr.mxu0 0.0
  %5611 = vmatpush1.msra.mxu0 0.0
  %5612 = vmatprep.subr.mxu0 0.0
  %5613 = vmatpush1.msra.mxu0 0.0
  %5614 = vmatprep.subr.mxu0 0.0
  %5615 = vmatpush1.msra.mxu0 0.0
  %5616 = vmatprep.subr.mxu0 0.0
  %5617 = vmatpush1.msra.mxu0 0.0
  %5618 = vmatprep.subr.mxu0 0.0
  %5619 = vmatpush1.msra.mxu0 0.0
  %5620 = vmatprep.subr.mxu0 0.0
  %5621 = vmatpush1.msra.mxu0 0.0
  %5622 = vmatprep.mubr.f32.mxu0 0.0
  %v5623 = vand.u32 %v593, 4294901760
  %5624 = vmatmul.mubr.f32.gmra.mrb[0].mxu0 %v5623
  %v5625 = vpop.f32.mrb[0].mxu0
  %v5626 = vadd.f32 %v5353, %v5625
  %v5627 = vpop.f32.mrb[0].mxu0
  %5628 = vmatprep.mubr.f32.mxu0 0.0
  %v5629 = vand.u32 %v697, 4294901760
  %5630 = vmatmul.mubr.f32.gmra.mrb[0].mxu0 %v5629
  %v5631 = vpop.f32.mrb[0].mxu0
  %v5632 = vadd.f32 %v5359, %v5631
  %v5633 = vpop.f32.mrb[0].mxu0
  %5634 = vmatprep.mubr.f32.mxu0 0.0
  %v5635 = vand.u32 %v801, 4294901760
  %5636 = vmatmul.mubr.f32.gmra.mrb[0].mxu0 %v5635
  %v5637 = vpop.f32.mrb[0].mxu0
  %v5638 = vadd.f32 %v5365, %v5637
  %v5639 = vpop.f32.mrb[0].mxu0
  %5640 = vmatprep.mubr.f32.mxu0 0.0
  %v5641 = vand.u32 %v905, 4294901760
  %5642 = vmatmul.mubr.f32.gmra.mrb[0].mxu0 %v5641
  %v5643 = vpop.f32.mrb[0].mxu0
  %v5644 = vadd.f32 %v5371, %v5643
  %v5645 = vpop.f32.mrb[0].mxu0
  %5646 = vmatprep.mubr.f32.mxu0 0.0
  %v5647 = vand.u32 %v1009, 4294901760
  %5648 = vmatmul.mubr.f32.gmra.mrb[0].mxu0 %v5647
  %v5649 = vpop.f32.mrb[0].mxu0
  %v5650 = vadd.f32 %v5377, %v5649
  %v5651 = vpop.f32.mrb[0].mxu0
  %5652 = vmatprep.mubr.f32.mxu0 0.0
  %v5653 = vand.u32 %v1113, 4294901760
  %5654 = vmatmul.mubr.f32.gmra.mrb[0].mxu0 %v5653
  %v5655 = vpop.f32.mrb[0].mxu0
  %v5656 = vadd.f32 %v5383, %v5655
  %v5657 = vpop.f32.mrb[0].mxu0
  %5658 = vmatprep.mubr.f32.mxu0 0.0
  %v5659 = vand.u32 %v1217, 4294901760
  %5660 = vmatmul.mubr.f32.gmra.mrb[0].mxu0 %v5659
  %v5661 = vpop.f32.mrb[0].mxu0
  %v5662 = vadd.f32 %v5389, %v5661
  %v5663 = vpop.f32.mrb[0].mxu0
  %5664 = vmatprep.mubr.f32.mxu0 0.0
  %v5665 = vand.u32 %v1321, 4294901760
  %5666 = vmatmul.mubr.f32.gmra.mrb[0].mxu0 %v5665
  %v5667 = vpop.f32.mrb[0].mxu0
  %v5668 = vadd.f32 %v5395, %v5667
  %v5669 = vpop.f32.mrb[0].mxu0
  %5670 = vmatprep.mubr.f32.mxu0 0.0
  %v5671 = vand.u32 %v1425, 4294901760
  %5672 = vmatmul.mubr.f32.gmra.mrb[0].mxu0 %v5671
  %v5673 = vpop.f32.mrb[0].mxu0
  %v5674 = vadd.f32 %v5401, %v5673
  %v5675 = vpop.f32.mrb[0].mxu0
  %5676 = vmatprep.mubr.f32.mxu0 0.0
  %v5677 = vand.u32 %v1529, 4294901760
  %5678 = vmatmul.mubr.f32.gmra.mrb[0].mxu0 %v5677
  %v5679 = vpop.f32.mrb[0].mxu0
  %v5680 = vadd.f32 %v5407, %v5679
  %v5681 = vpop.f32.mrb[0].mxu0
  %5682 = vmatprep.mubr.f32.mxu0 0.0
  %v5683 = vand.u32 %v1633, 4294901760
  %5684 = vmatmul.mubr.f32.gmra.mrb[0].mxu0 %v5683
  %v5685 = vpop.f32.mrb[0].mxu0
  %v5686 = vadd.f32 %v5413, %v5685
  %v5687 = vpop.f32.mrb[0].mxu0
  %5688 = vmatprep.mubr.f32.mxu0 0.0
  %v5689 = vand.u32 %v1737, 4294901760
  %5690 = vmatmul.mubr.f32.gmra.mrb[0].mxu0 %v5689
  %v5691 = vpop.f32.mrb[0].mxu0
  %v5692 = vadd.f32 %v5419, %v5691
  %v5693 = vpop.f32.mrb[0].mxu0
  %5694 = vmatprep.mubr.f32.mxu0 0.0
  %v5695 = vand.u32 %v1841, 4294901760
  %5696 = vmatmul.mubr.f32.gmra.mrb[0].mxu0 %v5695
  %v5697 = vpop.f32.mrb[0].mxu0
  %v5698 = vadd.f32 %v5425, %v5697
  %v5699 = vpop.f32.mrb[0].mxu0
  %5700 = vmatprep.mubr.f32.mxu0 0.0
  %v5701 = vand.u32 %v1945, 4294901760
  %5702 = vmatmul.mubr.f32.gmra.mrb[0].mxu0 %v5701
  %v5703 = vpop.f32.mrb[0].mxu0
  %v5704 = vadd.f32 %v5431, %v5703
  %v5705 = vpop.f32.mrb[0].mxu0
  %5706 = vmatprep.mubr.f32.mxu0 0.0
  %v5707 = vand.u32 %v2049, 4294901760
  %5708 = vmatmul.mubr.f32.gmra.mrb[0].mxu0 %v5707
  %v5709 = vpop.f32.mrb[0].mxu0
  %v5710 = vadd.f32 %v5437, %v5709
  %v5711 = vpop.f32.mrb[0].mxu0
  %5712 = vmatprep.mubr.f32.mxu0 0.0
  %v5713 = vand.u32 %v2153, 4294901760
  %5714 = vmatmul.mubr.f32.gmra.mrb[0].mxu0 %v5713
  %v5715 = vpop.f32.mrb[0].mxu0
  %v5716 = vadd.f32 %v5443, %v5715
  %v5717 = vpop.f32.mrb[0].mxu0
  %5718 = vmatprep.mubr.f32.mxu0 0.0
  %v5719 = vand.u32 %v2257, 4294901760
  %5720 = vmatmul.mubr.f32.gmra.mrb[0].mxu0 %v5719
  %v5721 = vpop.f32.mrb[0].mxu0
  %v5722 = vadd.f32 %v5449, %v5721
  %v5723 = vpop.f32.mrb[0].mxu0
  %5724 = vmatprep.mubr.f32.mxu0 0.0
  %v5725 = vand.u32 %v2361, 4294901760
  %5726 = vmatmul.mubr.f32.gmra.mrb[0].mxu0 %v5725
  %v5727 = vpop.f32.mrb[0].mxu0
  %v5728 = vadd.f32 %v5455, %v5727
  %v5729 = vpop.f32.mrb[0].mxu0
  %5730 = vmatprep.mubr.f32.mxu0 0.0
  %v5731 = vand.u32 %v2465, 4294901760
  %5732 = vmatmul.mubr.f32.gmra.mrb[0].mxu0 %v5731
  %v5733 = vpop.f32.mrb[0].mxu0
  %v5734 = vadd.f32 %v5461, %v5733
  %v5735 = vpop.f32.mrb[0].mxu0
  %5736 = vmatprep.mubr.f32.mxu0 0.0
  %v5737 = vand.u32 %v2569, 4294901760
  %5738 = vmatmul.mubr.f32.gmra.mrb[0].mxu0 %v5737
  %v5739 = vpop.f32.mrb[0].mxu0
  %v5740 = vadd.f32 %v5467, %v5739
  %v5741 = vpop.f32.mrb[0].mxu0
  %5742 = vmatprep.mubr.f32.mxu0 0.0
  %v5743 = vand.u32 %v2673, 4294901760
  %5744 = vmatmul.mubr.f32.gmra.mrb[0].mxu0 %v5743
  %v5745 = vpop.f32.mrb[0].mxu0
  %v5746 = vadd.f32 %v5473, %v5745
  %v5747 = vpop.f32.mrb[0].mxu0
  %5748 = vmatprep.mubr.f32.mxu0 0.0
  %v5749 = vand.u32 %v2777, 4294901760
  %5750 = vmatmul.mubr.f32.gmra.mrb[0].mxu0 %v5749
  %v5751 = vpop.f32.mrb[0].mxu0
  %v5752 = vadd.f32 %v5479, %v5751
  %v5753 = vpop.f32.mrb[0].mxu0
  %5754 = vmatprep.mubr.f32.mxu0 0.0
  %v5755 = vand.u32 %v2881, 4294901760
  %5756 = vmatmul.mubr.f32.gmra.mrb[0].mxu0 %v5755
  %v5757 = vpop.f32.mrb[0].mxu0
  %v5758 = vadd.f32 %v5485, %v5757
  %v5759 = vpop.f32.mrb[0].mxu0
  %5760 = vmatprep.mubr.f32.mxu0 0.0
  %v5761 = vand.u32 %v2985, 4294901760
  %5762 = vmatmul.mubr.f32.gmra.mrb[0].mxu0 %v5761
  %v5763 = vpop.f32.mrb[0].mxu0
  %v5764 = vadd.f32 %v5491, %v5763
  %v5765 = vpop.f32.mrb[0].mxu0
  %5766 = vmatprep.mubr.f32.mxu0 0.0
  %v5767 = vand.u32 %v3089, 4294901760
  %5768 = vmatmul.mubr.f32.gmra.mrb[0].mxu0 %v5767
  %v5769 = vpop.f32.mrb[0].mxu0
  %v5770 = vadd.f32 %v5497, %v5769
  %v5771 = vpop.f32.mrb[0].mxu0
  %5772 = vmatprep.mubr.f32.mxu0 0.0
  %v5773 = vand.u32 %v3193, 4294901760
  %5774 = vmatmul.mubr.f32.gmra.mrb[0].mxu0 %v5773
  %v5775 = vpop.f32.mrb[0].mxu0
  %v5776 = vadd.f32 %v5503, %v5775
  %v5777 = vpop.f32.mrb[0].mxu0
  %5778 = vmatprep.mubr.f32.mxu0 0.0
  %v5779 = vand.u32 %v3297, 4294901760
  %5780 = vmatmul.mubr.f32.gmra.mrb[0].mxu0 %v5779
  %v5781 = vpop.f32.mrb[0].mxu0
  %v5782 = vadd.f32 %v5509, %v5781
  %v5783 = vpop.f32.mrb[0].mxu0
  %5784 = vmatprep.mubr.f32.mxu0 0.0
  %v5785 = vand.u32 %v3401, 4294901760
  %5786 = vmatmul.mubr.f32.gmra.mrb[0].mxu0 %v5785
  %v5787 = vpop.f32.mrb[0].mxu0
  %v5788 = vadd.f32 %v5515, %v5787
  %v5789 = vpop.f32.mrb[0].mxu0
  %5790 = vmatprep.mubr.f32.mxu0 0.0
  %v5791 = vand.u32 %v3505, 4294901760
  %5792 = vmatmul.mubr.f32.gmra.mrb[0].mxu0 %v5791
  %v5793 = vpop.f32.mrb[0].mxu0
  %v5794 = vadd.f32 %v5521, %v5793
  %v5795 = vpop.f32.mrb[0].mxu0
  %5796 = vmatprep.mubr.f32.mxu0 0.0
  %v5797 = vand.u32 %v3609, 4294901760
  %5798 = vmatmul.mubr.f32.gmra.mrb[0].mxu0 %v5797
  %v5799 = vpop.f32.mrb[0].mxu0
  %v5800 = vadd.f32 %v5527, %v5799
  %v5801 = vpop.f32.mrb[0].mxu0
  %5802 = vmatprep.mubr.f32.mxu0 0.0
  %v5803 = vand.u32 %v3713, 4294901760
  %5804 = vmatmul.mubr.f32.gmra.mrb[0].mxu0 %v5803
  %v5805 = vpop.f32.mrb[0].mxu0
  %v5806 = vadd.f32 %v5533, %v5805
  %v5807 = vpop.f32.mrb[0].mxu0
  %5808 = vmatprep.mubr.f32.mxu0 0.0
  %v5809 = vand.u32 %v3817, 4294901760
  %5810 = vmatmul.mubr.f32.gmra.mrb[0].mxu0 %v5809
  %v5811 = vpop.f32.mrb[0].mxu0
  %v5812 = vadd.f32 %v5539, %v5811
  %v5813 = vpop.f32.mrb[0].mxu0
  %5814 = vdwg.mxu0
  %v5815 = vand.u32 2147483647, %v5626
  %vm5816 = vcmp.le.f32.partialorder %v5815, 0.7853982
  %vm5817 = vcmp.lt.s32.totalorder %v5626, 0
  %v5818 = vand.u32 %v5626, 2139095040
  %v5819 = vshrl.u32 %v5818, 23
  %v5820 = vsub.s32 %v5819, 127
  %v5821 = vand.u32 2147483647, %v5626
  %v5822 = vand.u32 %v5821, 8388607
  %v5823 = vor.u32 %v5822, 8388608
  %v5824 = vsub.s32 0, %v5823
  %v5825 = vadd.s32 %v5820, 1
  %vm5826 = vcmp.gt.s32.totalorder %v5825, 0
  %v5827 = vsel %vm5826, %v5825, 0
  %v5828 = vshrl.u32 %v5827, 5
  %v5829 = vand.u32 %v5827, 31
  %v5830 = vsub.s32 32, %v5829
  %v5831 = vshrl.u32 683565275, %v5830
  %v5832 = vshll.u32 683565275, %v5829
  %v5833 = vshrl.u32 2475754826, %v5830
  %v5834 = vor.u32 %v5832, %v5833
  %v5835 = vshll.u32 2475754826, %v5829
  %v5836 = vshrl.u32 2131351028, %v5830
  %v5837 = vor.u32 %v5835, %v5836
  %v5838 = vshll.u32 2131351028, %v5829
  %v5839 = vshrl.u32 2102212464, %v5830
  %v5840 = vor.u32 %v5838, %v5839
  %v5841 = vshll.u32 2102212464, %v5829
  %v5842 = vshrl.u32 920167782, %v5830
  %v5843 = vor.u32 %v5841, %v5842
  %v5844 = vshll.u32 920167782, %v5829
  %v5845 = vshrl.u32 1326507024, %v5830
  %v5846 = vor.u32 %v5844, %v5845
  %vm5847 = vcmp.lt.s32.totalorder %v5828, 1
  %vm5848 = vcmp.lt.s32.totalorder %v5828, 2
  %vm5849 = vcmp.lt.s32.totalorder %v5828, 3
  %vm5850 = vcmp.lt.s32.totalorder %v5828, 4
  %v5851 = vsel %vm5847, %v5831, %v5834
  %v5852 = vsel %vm5850, %v5840, 2102212464
  %v5853 = vsel %vm5849, %v5837, %v5852
  %v5854 = vsel %vm5848, %v5851, %v5853
  %v5855 = vsel %vm5847, %v5834, %v5837
  %v5856 = vsel %vm5850, %v5843, 920167782
  %v5857 = vsel %vm5849, %v5840, %v5856
  %v5858 = vsel %vm5848, %v5855, %v5857
  %v5859 = vsel %vm5847, %v5837, %v5840
  %v5860 = vsel %vm5850, %v5846, 1326507024
  %v5861 = vsel %vm5849, %v5843, %v5860
  %v5862 = vsel %vm5848, %v5859, %v5861
  %v5863 = vshll.u32 %v5823, 8
  %v5864 = vmul.u32.u64.compose %v5863, %v5862
  %v5865 = vextract.low.u32 %v5864
  %v5866 = vextract.high.u32 %v5864
  %v5867 = vmul.u32.u64.compose %v5863, %v5858
  %v5868 = vextract.low.u32 %v5867
  %v5869 = vextract.high.u32 %v5867
  %v5870 = vmul.u32 %v5863, %v5854
  %v5871 = vadd.s32 %v5866, %v5868
  %vm5872 = vc.u32 %v5866, %v5868
  %v5873 = vadd.s32 %v5869, 1
  %v5874 = vsel %vm5872, %v5873, %v5869
  %v5875 = vadd.s32 %v5870, %v5874
  %v5876 = vadd.s32 %v5875, 536870912
  %v5877 = vshrl.u32 %v5876, 30
  %v5878 = vshll.u32 %v5877, 30
  %v5879 = vsub.s32 %v5875, %v5878
  %vm5880 = vcmp.lt.s32.totalorder %v5879, 0
  %v5881 = vsub.s32 0, %v5879
  %v5882 = vsel %vm5880, %v5881, %v5879
  %v5883 = vclz %v5882
  %v5884 = vsub.s32 %v5883, 2
  %vm5885 = vcmp.gt.s32.totalorder 0, %v5884
  %v5886 = vsel %vm5885, 0, %v5884
  %v5887 = vsub.s32 32, %v5886
  %v5888 = vshll.u32 %v5879, %v5886
  %v5889 = vshrl.u32 %v5871, %v5887
  %v5890 = vor.u32 %v5888, %v5889
  %v5891 = vsub.s32 4294967266, %v5886
  %v5892 = vadd.s32 %v5891, 127
  %v5893 = vshll.u32 %v5892, 23
  %v5894 = vor.u32 4788187, %v5893
  %v5895 = vand.u32 2147483647, %v5894
  %v5897 = vcvt.s32.f32 %v5890
  %v5898 = vmul.f32 %v5897, %v5895
  %v5899 = vxor.u32 %v5898, 2147483648
  %v5900 = vsel %vm5817, %v5899, %v5898
  %v5901 = vsub.s32 4, %v5877
  %v5902 = vsel %vm5817, %v5901, %v5877
  %v5903 = vsel %vm5816, %v5626, %v5900
  %v5904 = vsel %vm5816, 0, %v5902
  %v5905 = vcosq.f32.pop %v5903
  %v5906 = vsinq.f32.pop %v5903
  %vm5907 = vweird.f32 %v5626
  %v5908 = vadd.s32 %v5904, 3
  %v5909 = vand.u32 %v5908, 3
  %vm5910 = vcmp.lt.s32.totalorder %v5909, 2
  %vm5911 = vcmp.eq.s32.totalorder %v5909, 0
  %v5912 = vxor.u32 %v5906, 2147483648
  %v5913 = vsel %vm5911, %v5905, %v5912
  %vm5914 = vcmp.eq.s32.totalorder %v5909, 2
  %v5915 = vxor.u32 %v5905, 2147483648
  %v5916 = vsel %vm5914, %v5915, %v5906
  %v5917 = vsel %vm5910, %v5913, %v5916
  %v5918 = vsel %vm5907, nan, %v5917
  %v5919 = vand.u32 2147483647, %v5632
  %vm5920 = vcmp.le.f32.partialorder %v5919, 0.7853982
  %vm5921 = vcmp.lt.s32.totalorder %v5632, 0
  %v5922 = vand.u32 %v5632, 2139095040
  %v5923 = vshrl.u32 %v5922, 23
  %v5924 = vsub.s32 %v5923, 127
  %v5925 = vand.u32 2147483647, %v5632
  %v5926 = vand.u32 %v5925, 8388607
  %v5927 = vor.u32 %v5926, 8388608
  %v5928 = vsub.s32 0, %v5927
  %v5929 = vadd.s32 %v5924, 1
  %vm5930 = vcmp.gt.s32.totalorder %v5929, 0
  %v5931 = vsel %vm5930, %v5929, 0
  %v5932 = vshrl.u32 %v5931, 5
  %v5933 = vand.u32 %v5931, 31
  %v5934 = vsub.s32 32, %v5933
  %v5935 = vshrl.u32 683565275, %v5934
  %v5936 = vshll.u32 683565275, %v5933
  %v5937 = vshrl.u32 2475754826, %v5934
  %v5938 = vor.u32 %v5936, %v5937
  %v5939 = vshll.u32 2475754826, %v5933
  %v5940 = vshrl.u32 2131351028, %v5934
  %v5941 = vor.u32 %v5939, %v5940
  %v5942 = vshll.u32 2131351028, %v5933
  %v5943 = vshrl.u32 2102212464, %v5934
  %v5944 = vor.u32 %v5942, %v5943
  %v5945 = vshll.u32 2102212464, %v5933
  %v5946 = vshrl.u32 920167782, %v5934
  %v5947 = vor.u32 %v5945, %v5946
  %v5948 = vshll.u32 920167782, %v5933
  %v5949 = vshrl.u32 1326507024, %v5934
  %v5950 = vor.u32 %v5948, %v5949
  %vm5951 = vcmp.lt.s32.totalorder %v5932, 1
  %vm5952 = vcmp.lt.s32.totalorder %v5932, 2
  %vm5953 = vcmp.lt.s32.totalorder %v5932, 3
  %vm5954 = vcmp.lt.s32.totalorder %v5932, 4
  %v5955 = vsel %vm5951, %v5935, %v5938
  %v5956 = vsel %vm5954, %v5944, 2102212464
  %v5957 = vsel %vm5953, %v5941, %v5956
  %v5958 = vsel %vm5952, %v5955, %v5957
  %v5959 = vsel %vm5951, %v5938, %v5941
  %v5960 = vsel %vm5954, %v5947, 920167782
  %v5961 = vsel %vm5953, %v5944, %v5960
  %v5962 = vsel %vm5952, %v5959, %v5961
  %v5963 = vsel %vm5951, %v5941, %v5944
  %v5964 = vsel %vm5954, %v5950, 1326507024
  %v5965 = vsel %vm5953, %v5947, %v5964
  %v5966 = vsel %vm5952, %v5963, %v5965
  %v5967 = vshll.u32 %v5927, 8
  %v5968 = vmul.u32.u64.compose %v5967, %v5966
  %v5969 = vextract.low.u32 %v5968
  %v5970 = vextract.high.u32 %v5968
  %v5971 = vmul.u32.u64.compose %v5967, %v5962
  %v5972 = vextract.low.u32 %v5971
  %v5973 = vextract.high.u32 %v5971
  %v5974 = vmul.u32 %v5967, %v5958
  %v5975 = vadd.s32 %v5970, %v5972
  %vm5976 = vc.u32 %v5970, %v5972
  %v5977 = vadd.s32 %v5973, 1
  %v5978 = vsel %vm5976, %v5977, %v5973
  %v5979 = vadd.s32 %v5974, %v5978
  %v5980 = vadd.s32 %v5979, 536870912
  %v5981 = vshrl.u32 %v5980, 30
  %v5982 = vshll.u32 %v5981, 30
  %v5983 = vsub.s32 %v5979, %v5982
  %vm5984 = vcmp.lt.s32.totalorder %v5983, 0
  %v5985 = vsub.s32 0, %v5983
  %v5986 = vsel %vm5984, %v5985, %v5983
  %v5987 = vclz %v5986
  %v5988 = vsub.s32 %v5987, 2
  %vm5989 = vcmp.gt.s32.totalorder 0, %v5988
  %v5990 = vsel %vm5989, 0, %v5988
  %v5991 = vsub.s32 32, %v5990
  %v5992 = vshll.u32 %v5983, %v5990
  %v5993 = vshrl.u32 %v5975, %v5991
  %v5994 = vor.u32 %v5992, %v5993
  %v5995 = vsub.s32 4294967266, %v5990
  %v5996 = vadd.s32 %v5995, 127
  %v5997 = vshll.u32 %v5996, 23
  %v5998 = vor.u32 4788187, %v5997
  %v5999 = vand.u32 2147483647, %v5998
  %v6001 = vcvt.s32.f32 %v5994
  %v6002 = vmul.f32 %v6001, %v5999
  %v6003 = vxor.u32 %v6002, 2147483648
  %v6004 = vsel %vm5921, %v6003, %v6002
  %v6005 = vsub.s32 4, %v5981
  %v6006 = vsel %vm5921, %v6005, %v5981
  %v6007 = vsel %vm5920, %v5632, %v6004
  %v6008 = vsel %vm5920, 0, %v6006
  %v6009 = vcosq.f32.pop %v6007
  %v6010 = vsinq.f32.pop %v6007
  %vm6011 = vweird.f32 %v5632
  %v6012 = vadd.s32 %v6008, 3
  %v6013 = vand.u32 %v6012, 3
  %vm6014 = vcmp.lt.s32.totalorder %v6013, 2
  %vm6015 = vcmp.eq.s32.totalorder %v6013, 0
  %v6016 = vxor.u32 %v6010, 2147483648
  %v6017 = vsel %vm6015, %v6009, %v6016
  %vm6018 = vcmp.eq.s32.totalorder %v6013, 2
  %v6019 = vxor.u32 %v6009, 2147483648
  %v6020 = vsel %vm6018, %v6019, %v6010
  %v6021 = vsel %vm6014, %v6017, %v6020
  %v6022 = vsel %vm6011, nan, %v6021
  %v6023 = vand.u32 2147483647, %v5638
  %vm6024 = vcmp.le.f32.partialorder %v6023, 0.7853982
  %vm6025 = vcmp.lt.s32.totalorder %v5638, 0
  %v6026 = vand.u32 %v5638, 2139095040
  %v6027 = vshrl.u32 %v6026, 23
  %v6028 = vsub.s32 %v6027, 127
  %v6029 = vand.u32 2147483647, %v5638
  %v6030 = vand.u32 %v6029, 8388607
  %v6031 = vor.u32 %v6030, 8388608
  %v6032 = vsub.s32 0, %v6031
  %v6033 = vadd.s32 %v6028, 1
  %vm6034 = vcmp.gt.s32.totalorder %v6033, 0
  %v6035 = vsel %vm6034, %v6033, 0
  %v6036 = vshrl.u32 %v6035, 5
  %v6037 = vand.u32 %v6035, 31
  %v6038 = vsub.s32 32, %v6037
  %v6039 = vshrl.u32 683565275, %v6038
  %v6040 = vshll.u32 683565275, %v6037
  %v6041 = vshrl.u32 2475754826, %v6038
  %v6042 = vor.u32 %v6040, %v6041
  %v6043 = vshll.u32 2475754826, %v6037
  %v6044 = vshrl.u32 2131351028, %v6038
  %v6045 = vor.u32 %v6043, %v6044
  %v6046 = vshll.u32 2131351028, %v6037
  %v6047 = vshrl.u32 2102212464, %v6038
  %v6048 = vor.u32 %v6046, %v6047
  %v6049 = vshll.u32 2102212464, %v6037
  %v6050 = vshrl.u32 920167782, %v6038
  %v6051 = vor.u32 %v6049, %v6050
  %v6052 = vshll.u32 920167782, %v6037
  %v6053 = vshrl.u32 1326507024, %v6038
  %v6054 = vor.u32 %v6052, %v6053
  %vm6055 = vcmp.lt.s32.totalorder %v6036, 1
  %vm6056 = vcmp.lt.s32.totalorder %v6036, 2
  %vm6057 = vcmp.lt.s32.totalorder %v6036, 3
  %vm6058 = vcmp.lt.s32.totalorder %v6036, 4
  %v6059 = vsel %vm6055, %v6039, %v6042
  %v6060 = vsel %vm6058, %v6048, 2102212464
  %v6061 = vsel %vm6057, %v6045, %v6060
  %v6062 = vsel %vm6056, %v6059, %v6061
  %v6063 = vsel %vm6055, %v6042, %v6045
  %v6064 = vsel %vm6058, %v6051, 920167782
  %v6065 = vsel %vm6057, %v6048, %v6064
  %v6066 = vsel %vm6056, %v6063, %v6065
  %v6067 = vsel %vm6055, %v6045, %v6048
  %v6068 = vsel %vm6058, %v6054, 1326507024
  %v6069 = vsel %vm6057, %v6051, %v6068
  %v6070 = vsel %vm6056, %v6067, %v6069
  %v6071 = vshll.u32 %v6031, 8
  %v6072 = vmul.u32.u64.compose %v6071, %v6070
  %v6073 = vextract.low.u32 %v6072
  %v6074 = vextract.high.u32 %v6072
  %v6075 = vmul.u32.u64.compose %v6071, %v6066
  %v6076 = vextract.low.u32 %v6075
  %v6077 = vextract.high.u32 %v6075
  %v6078 = vmul.u32 %v6071, %v6062
  %v6079 = vadd.s32 %v6074, %v6076
  %vm6080 = vc.u32 %v6074, %v6076
  %v6081 = vadd.s32 %v6077, 1
  %v6082 = vsel %vm6080, %v6081, %v6077
  %v6083 = vadd.s32 %v6078, %v6082
  %v6084 = vadd.s32 %v6083, 536870912
  %v6085 = vshrl.u32 %v6084, 30
  %v6086 = vshll.u32 %v6085, 30
  %v6087 = vsub.s32 %v6083, %v6086
  %vm6088 = vcmp.lt.s32.totalorder %v6087, 0
  %v6089 = vsub.s32 0, %v6087
  %v6090 = vsel %vm6088, %v6089, %v6087
  %v6091 = vclz %v6090
  %v6092 = vsub.s32 %v6091, 2
  %vm6093 = vcmp.gt.s32.totalorder 0, %v6092
  %v6094 = vsel %vm6093, 0, %v6092
  %v6095 = vsub.s32 32, %v6094
  %v6096 = vshll.u32 %v6087, %v6094
  %v6097 = vshrl.u32 %v6079, %v6095
  %v6098 = vor.u32 %v6096, %v6097
  %v6099 = vsub.s32 4294967266, %v6094
  %v6100 = vadd.s32 %v6099, 127
  %v6101 = vshll.u32 %v6100, 23
  %v6102 = vor.u32 4788187, %v6101
  %v6103 = vand.u32 2147483647, %v6102
  %v6105 = vcvt.s32.f32 %v6098
  %v6106 = vmul.f32 %v6105, %v6103
  %v6107 = vxor.u32 %v6106, 2147483648
  %v6108 = vsel %vm6025, %v6107, %v6106
  %v6109 = vsub.s32 4, %v6085
  %v6110 = vsel %vm6025, %v6109, %v6085
  %v6111 = vsel %vm6024, %v5638, %v6108
  %v6112 = vsel %vm6024, 0, %v6110
  %v6113 = vcosq.f32.pop %v6111
  %v6114 = vsinq.f32.pop %v6111
  %vm6115 = vweird.f32 %v5638
  %v6116 = vadd.s32 %v6112, 3
  %v6117 = vand.u32 %v6116, 3
  %vm6118 = vcmp.lt.s32.totalorder %v6117, 2
  %vm6119 = vcmp.eq.s32.totalorder %v6117, 0
  %v6120 = vxor.u32 %v6114, 2147483648
  %v6121 = vsel %vm6119, %v6113, %v6120
  %vm6122 = vcmp.eq.s32.totalorder %v6117, 2
  %v6123 = vxor.u32 %v6113, 2147483648
  %v6124 = vsel %vm6122, %v6123, %v6114
  %v6125 = vsel %vm6118, %v6121, %v6124
  %v6126 = vsel %vm6115, nan, %v6125
  %v6127 = vand.u32 2147483647, %v5644
  %vm6128 = vcmp.le.f32.partialorder %v6127, 0.7853982
  %vm6129 = vcmp.lt.s32.totalorder %v5644, 0
  %v6130 = vand.u32 %v5644, 2139095040
  %v6131 = vshrl.u32 %v6130, 23
  %v6132 = vsub.s32 %v6131, 127
  %v6133 = vand.u32 2147483647, %v5644
  %v6134 = vand.u32 %v6133, 8388607
  %v6135 = vor.u32 %v6134, 8388608
  %v6136 = vsub.s32 0, %v6135
  %v6137 = vadd.s32 %v6132, 1
  %vm6138 = vcmp.gt.s32.totalorder %v6137, 0
  %v6139 = vsel %vm6138, %v6137, 0
  %v6140 = vshrl.u32 %v6139, 5
  %v6141 = vand.u32 %v6139, 31
  %v6142 = vsub.s32 32, %v6141
  %v6143 = vshrl.u32 683565275, %v6142
  %v6144 = vshll.u32 683565275, %v6141
  %v6145 = vshrl.u32 2475754826, %v6142
  %v6146 = vor.u32 %v6144, %v6145
  %v6147 = vshll.u32 2475754826, %v6141
  %v6148 = vshrl.u32 2131351028, %v6142
  %v6149 = vor.u32 %v6147, %v6148
  %v6150 = vshll.u32 2131351028, %v6141
  %v6151 = vshrl.u32 2102212464, %v6142
  %v6152 = vor.u32 %v6150, %v6151
  %v6153 = vshll.u32 2102212464, %v6141
  %v6154 = vshrl.u32 920167782, %v6142
  %v6155 = vor.u32 %v6153, %v6154
  %v6156 = vshll.u32 920167782, %v6141
  %v6157 = vshrl.u32 1326507024, %v6142
  %v6158 = vor.u32 %v6156, %v6157
  %vm6159 = vcmp.lt.s32.totalorder %v6140, 1
  %vm6160 = vcmp.lt.s32.totalorder %v6140, 2
  %vm6161 = vcmp.lt.s32.totalorder %v6140, 3
  %vm6162 = vcmp.lt.s32.totalorder %v6140, 4
  %v6163 = vsel %vm6159, %v6143, %v6146
  %v6164 = vsel %vm6162, %v6152, 2102212464
  %v6165 = vsel %vm6161, %v6149, %v6164
  %v6166 = vsel %vm6160, %v6163, %v6165
  %v6167 = vsel %vm6159, %v6146, %v6149
  %v6168 = vsel %vm6162, %v6155, 920167782
  %v6169 = vsel %vm6161, %v6152, %v6168
  %v6170 = vsel %vm6160, %v6167, %v6169
  %v6171 = vsel %vm6159, %v6149, %v6152
  %v6172 = vsel %vm6162, %v6158, 1326507024
  %v6173 = vsel %vm6161, %v6155, %v6172
  %v6174 = vsel %vm6160, %v6171, %v6173
  %v6175 = vshll.u32 %v6135, 8
  %v6176 = vmul.u32.u64.compose %v6175, %v6174
  %v6177 = vextract.low.u32 %v6176
  %v6178 = vextract.high.u32 %v6176
  %v6179 = vmul.u32.u64.compose %v6175, %v6170
  %v6180 = vextract.low.u32 %v6179
  %v6181 = vextract.high.u32 %v6179
  %v6182 = vmul.u32 %v6175, %v6166
  %v6183 = vadd.s32 %v6178, %v6180
  %vm6184 = vc.u32 %v6178, %v6180
  %v6185 = vadd.s32 %v6181, 1
  %v6186 = vsel %vm6184, %v6185, %v6181
  %v6187 = vadd.s32 %v6182, %v6186
  %v6188 = vadd.s32 %v6187, 536870912
  %v6189 = vshrl.u32 %v6188, 30
  %v6190 = vshll.u32 %v6189, 30
  %v6191 = vsub.s32 %v6187, %v6190
  %vm6192 = vcmp.lt.s32.totalorder %v6191, 0
  %v6193 = vsub.s32 0, %v6191
  %v6194 = vsel %vm6192, %v6193, %v6191
  %v6195 = vclz %v6194
  %v6196 = vsub.s32 %v6195, 2
  %vm6197 = vcmp.gt.s32.totalorder 0, %v6196
  %v6198 = vsel %vm6197, 0, %v6196
  %v6199 = vsub.s32 32, %v6198
  %v6200 = vshll.u32 %v6191, %v6198
  %v6201 = vshrl.u32 %v6183, %v6199
  %v6202 = vor.u32 %v6200, %v6201
  %v6203 = vsub.s32 4294967266, %v6198
  %v6204 = vadd.s32 %v6203, 127
  %v6205 = vshll.u32 %v6204, 23
  %v6206 = vor.u32 4788187, %v6205
  %v6207 = vand.u32 2147483647, %v6206
  %v6209 = vcvt.s32.f32 %v6202
  %v6210 = vmul.f32 %v6209, %v6207
  %v6211 = vxor.u32 %v6210, 2147483648
  %v6212 = vsel %vm6129, %v6211, %v6210
  %v6213 = vsub.s32 4, %v6189
  %v6214 = vsel %vm6129, %v6213, %v6189
  %v6215 = vsel %vm6128, %v5644, %v6212
  %v6216 = vsel %vm6128, 0, %v6214
  %v6217 = vcosq.f32.pop %v6215
  %v6218 = vsinq.f32.pop %v6215
  %vm6219 = vweird.f32 %v5644
  %v6220 = vadd.s32 %v6216, 3
  %v6221 = vand.u32 %v6220, 3
  %vm6222 = vcmp.lt.s32.totalorder %v6221, 2
  %vm6223 = vcmp.eq.s32.totalorder %v6221, 0
  %v6224 = vxor.u32 %v6218, 2147483648
  %v6225 = vsel %vm6223, %v6217, %v6224
  %vm6226 = vcmp.eq.s32.totalorder %v6221, 2
  %v6227 = vxor.u32 %v6217, 2147483648
  %v6228 = vsel %vm6226, %v6227, %v6218
  %v6229 = vsel %vm6222, %v6225, %v6228
  %v6230 = vsel %vm6219, nan, %v6229
  %v6231 = vand.u32 2147483647, %v5650
  %vm6232 = vcmp.le.f32.partialorder %v6231, 0.7853982
  %vm6233 = vcmp.lt.s32.totalorder %v5650, 0
  %v6234 = vand.u32 %v5650, 2139095040
  %v6235 = vshrl.u32 %v6234, 23
  %v6236 = vsub.s32 %v6235, 127
  %v6237 = vand.u32 2147483647, %v5650
  %v6238 = vand.u32 %v6237, 8388607
  %v6239 = vor.u32 %v6238, 8388608
  %v6240 = vsub.s32 0, %v6239
  %v6241 = vadd.s32 %v6236, 1
  %vm6242 = vcmp.gt.s32.totalorder %v6241, 0
  %v6243 = vsel %vm6242, %v6241, 0
  %v6244 = vshrl.u32 %v6243, 5
  %v6245 = vand.u32 %v6243, 31
  %v6246 = vsub.s32 32, %v6245
  %v6247 = vshrl.u32 683565275, %v6246
  %v6248 = vshll.u32 683565275, %v6245
  %v6249 = vshrl.u32 2475754826, %v6246
  %v6250 = vor.u32 %v6248, %v6249
  %v6251 = vshll.u32 2475754826, %v6245
  %v6252 = vshrl.u32 2131351028, %v6246
  %v6253 = vor.u32 %v6251, %v6252
  %v6254 = vshll.u32 2131351028, %v6245
  %v6255 = vshrl.u32 2102212464, %v6246
  %v6256 = vor.u32 %v6254, %v6255
  %v6257 = vshll.u32 2102212464, %v6245
  %v6258 = vshrl.u32 920167782, %v6246
  %v6259 = vor.u32 %v6257, %v6258
  %v6260 = vshll.u32 920167782, %v6245
  %v6261 = vshrl.u32 1326507024, %v6246
  %v6262 = vor.u32 %v6260, %v6261
  %vm6263 = vcmp.lt.s32.totalorder %v6244, 1
  %vm6264 = vcmp.lt.s32.totalorder %v6244, 2
  %vm6265 = vcmp.lt.s32.totalorder %v6244, 3
  %vm6266 = vcmp.lt.s32.totalorder %v6244, 4
  %v6267 = vsel %vm6263, %v6247, %v6250
  %v6268 = vsel %vm6266, %v6256, 2102212464
  %v6269 = vsel %vm6265, %v6253, %v6268
  %v6270 = vsel %vm6264, %v6267, %v6269
  %v6271 = vsel %vm6263, %v6250, %v6253
  %v6272 = vsel %vm6266, %v6259, 920167782
  %v6273 = vsel %vm6265, %v6256, %v6272
  %v6274 = vsel %vm6264, %v6271, %v6273
  %v6275 = vsel %vm6263, %v6253, %v6256
  %v6276 = vsel %vm6266, %v6262, 1326507024
  %v6277 = vsel %vm6265, %v6259, %v6276
  %v6278 = vsel %vm6264, %v6275, %v6277
  %v6279 = vshll.u32 %v6239, 8
  %v6280 = vmul.u32.u64.compose %v6279, %v6278
  %v6281 = vextract.low.u32 %v6280
  %v6282 = vextract.high.u32 %v6280
  %v6283 = vmul.u32.u64.compose %v6279, %v6274
  %v6284 = vextract.low.u32 %v6283
  %v6285 = vextract.high.u32 %v6283
  %v6286 = vmul.u32 %v6279, %v6270
  %v6287 = vadd.s32 %v6282, %v6284
  %vm6288 = vc.u32 %v6282, %v6284
  %v6289 = vadd.s32 %v6285, 1
  %v6290 = vsel %vm6288, %v6289, %v6285
  %v6291 = vadd.s32 %v6286, %v6290
  %v6292 = vadd.s32 %v6291, 536870912
  %v6293 = vshrl.u32 %v6292, 30
  %v6294 = vshll.u32 %v6293, 30
  %v6295 = vsub.s32 %v6291, %v6294
  %vm6296 = vcmp.lt.s32.totalorder %v6295, 0
  %v6297 = vsub.s32 0, %v6295
  %v6298 = vsel %vm6296, %v6297, %v6295
  %v6299 = vclz %v6298
  %v6300 = vsub.s32 %v6299, 2
  %vm6301 = vcmp.gt.s32.totalorder 0, %v6300
  %v6302 = vsel %vm6301, 0, %v6300
  %v6303 = vsub.s32 32, %v6302
  %v6304 = vshll.u32 %v6295, %v6302
  %v6305 = vshrl.u32 %v6287, %v6303
  %v6306 = vor.u32 %v6304, %v6305
  %v6307 = vsub.s32 4294967266, %v6302
  %v6308 = vadd.s32 %v6307, 127
  %v6309 = vshll.u32 %v6308, 23
  %v6310 = vor.u32 4788187, %v6309
  %v6311 = vand.u32 2147483647, %v6310
  %v6313 = vcvt.s32.f32 %v6306
  %v6314 = vmul.f32 %v6313, %v6311
  %v6315 = vxor.u32 %v6314, 2147483648
  %v6316 = vsel %vm6233, %v6315, %v6314
  %v6317 = vsub.s32 4, %v6293
  %v6318 = vsel %vm6233, %v6317, %v6293
  %v6319 = vsel %vm6232, %v5650, %v6316
  %v6320 = vsel %vm6232, 0, %v6318
  %v6321 = vcosq.f32.pop %v6319
  %v6322 = vsinq.f32.pop %v6319
  %vm6323 = vweird.f32 %v5650
  %v6324 = vadd.s32 %v6320, 3
  %v6325 = vand.u32 %v6324, 3
  %vm6326 = vcmp.lt.s32.totalorder %v6325, 2
  %vm6327 = vcmp.eq.s32.totalorder %v6325, 0
  %v6328 = vxor.u32 %v6322, 2147483648
  %v6329 = vsel %vm6327, %v6321, %v6328
  %vm6330 = vcmp.eq.s32.totalorder %v6325, 2
  %v6331 = vxor.u32 %v6321, 2147483648
  %v6332 = vsel %vm6330, %v6331, %v6322
  %v6333 = vsel %vm6326, %v6329, %v6332
  %v6334 = vsel %vm6323, nan, %v6333
  %v6335 = vand.u32 2147483647, %v5656
  %vm6336 = vcmp.le.f32.partialorder %v6335, 0.7853982
  %vm6337 = vcmp.lt.s32.totalorder %v5656, 0
  %v6338 = vand.u32 %v5656, 2139095040
  %v6339 = vshrl.u32 %v6338, 23
  %v6340 = vsub.s32 %v6339, 127
  %v6341 = vand.u32 2147483647, %v5656
  %v6342 = vand.u32 %v6341, 8388607
  %v6343 = vor.u32 %v6342, 8388608
  %v6344 = vsub.s32 0, %v6343
  %v6345 = vadd.s32 %v6340, 1
  %vm6346 = vcmp.gt.s32.totalorder %v6345, 0
  %v6347 = vsel %vm6346, %v6345, 0
  %v6348 = vshrl.u32 %v6347, 5
  %v6349 = vand.u32 %v6347, 31
  %v6350 = vsub.s32 32, %v6349
  %v6351 = vshrl.u32 683565275, %v6350
  %v6352 = vshll.u32 683565275, %v6349
  %v6353 = vshrl.u32 2475754826, %v6350
  %v6354 = vor.u32 %v6352, %v6353
  %v6355 = vshll.u32 2475754826, %v6349
  %v6356 = vshrl.u32 2131351028, %v6350
  %v6357 = vor.u32 %v6355, %v6356
  %v6358 = vshll.u32 2131351028, %v6349
  %v6359 = vshrl.u32 2102212464, %v6350
  %v6360 = vor.u32 %v6358, %v6359
  %v6361 = vshll.u32 2102212464, %v6349
  %v6362 = vshrl.u32 920167782, %v6350
  %v6363 = vor.u32 %v6361, %v6362
  %v6364 = vshll.u32 920167782, %v6349
  %v6365 = vshrl.u32 1326507024, %v6350
  %v6366 = vor.u32 %v6364, %v6365
  %vm6367 = vcmp.lt.s32.totalorder %v6348, 1
  %vm6368 = vcmp.lt.s32.totalorder %v6348, 2
  %vm6369 = vcmp.lt.s32.totalorder %v6348, 3
  %vm6370 = vcmp.lt.s32.totalorder %v6348, 4
  %v6371 = vsel %vm6367, %v6351, %v6354
  %v6372 = vsel %vm6370, %v6360, 2102212464
  %v6373 = vsel %vm6369, %v6357, %v6372
  %v6374 = vsel %vm6368, %v6371, %v6373
  %v6375 = vsel %vm6367, %v6354, %v6357
  %v6376 = vsel %vm6370, %v6363, 920167782
  %v6377 = vsel %vm6369, %v6360, %v6376
  %v6378 = vsel %vm6368, %v6375, %v6377
  %v6379 = vsel %vm6367, %v6357, %v6360
  %v6380 = vsel %vm6370, %v6366, 1326507024
  %v6381 = vsel %vm6369, %v6363, %v6380
  %v6382 = vsel %vm6368, %v6379, %v6381
  %v6383 = vshll.u32 %v6343, 8
  %v6384 = vmul.u32.u64.compose %v6383, %v6382
  %v6385 = vextract.low.u32 %v6384
  %v6386 = vextract.high.u32 %v6384
  %v6387 = vmul.u32.u64.compose %v6383, %v6378
  %v6388 = vextract.low.u32 %v6387
  %v6389 = vextract.high.u32 %v6387
  %v6390 = vmul.u32 %v6383, %v6374
  %v6391 = vadd.s32 %v6386, %v6388
  %vm6392 = vc.u32 %v6386, %v6388
  %v6393 = vadd.s32 %v6389, 1
  %v6394 = vsel %vm6392, %v6393, %v6389
  %v6395 = vadd.s32 %v6390, %v6394
  %v6396 = vadd.s32 %v6395, 536870912
  %v6397 = vshrl.u32 %v6396, 30
  %v6398 = vshll.u32 %v6397, 30
  %v6399 = vsub.s32 %v6395, %v6398
  %vm6400 = vcmp.lt.s32.totalorder %v6399, 0
  %v6401 = vsub.s32 0, %v6399
  %v6402 = vsel %vm6400, %v6401, %v6399
  %v6403 = vclz %v6402
  %v6404 = vsub.s32 %v6403, 2
  %vm6405 = vcmp.gt.s32.totalorder 0, %v6404
  %v6406 = vsel %vm6405, 0, %v6404
  %v6407 = vsub.s32 32, %v6406
  %v6408 = vshll.u32 %v6399, %v6406
  %v6409 = vshrl.u32 %v6391, %v6407
  %v6410 = vor.u32 %v6408, %v6409
  %v6411 = vsub.s32 4294967266, %v6406
  %v6412 = vadd.s32 %v6411, 127
  %v6413 = vshll.u32 %v6412, 23
  %v6414 = vor.u32 4788187, %v6413
  %v6415 = vand.u32 2147483647, %v6414
  %v6417 = vcvt.s32.f32 %v6410
  %v6418 = vmul.f32 %v6417, %v6415
  %v6419 = vxor.u32 %v6418, 2147483648
  %v6420 = vsel %vm6337, %v6419, %v6418
  %v6421 = vsub.s32 4, %v6397
  %v6422 = vsel %vm6337, %v6421, %v6397
  %v6423 = vsel %vm6336, %v5656, %v6420
  %v6424 = vsel %vm6336, 0, %v6422
  %v6425 = vcosq.f32.pop %v6423
  %v6426 = vsinq.f32.pop %v6423
  %vm6427 = vweird.f32 %v5656
  %v6428 = vadd.s32 %v6424, 3
  %v6429 = vand.u32 %v6428, 3
  %vm6430 = vcmp.lt.s32.totalorder %v6429, 2
  %vm6431 = vcmp.eq.s32.totalorder %v6429, 0
  %v6432 = vxor.u32 %v6426, 2147483648
  %v6433 = vsel %vm6431, %v6425, %v6432
  %vm6434 = vcmp.eq.s32.totalorder %v6429, 2
  %v6435 = vxor.u32 %v6425, 2147483648
  %v6436 = vsel %vm6434, %v6435, %v6426
  %v6437 = vsel %vm6430, %v6433, %v6436
  %v6438 = vsel %vm6427, nan, %v6437
  %v6439 = vand.u32 2147483647, %v5662
  %vm6440 = vcmp.le.f32.partialorder %v6439, 0.7853982
  %vm6441 = vcmp.lt.s32.totalorder %v5662, 0
  %v6442 = vand.u32 %v5662, 2139095040
  %v6443 = vshrl.u32 %v6442, 23
  %v6444 = vsub.s32 %v6443, 127
  %v6445 = vand.u32 2147483647, %v5662
  %v6446 = vand.u32 %v6445, 8388607
  %v6447 = vor.u32 %v6446, 8388608
  %v6448 = vsub.s32 0, %v6447
  %v6449 = vadd.s32 %v6444, 1
  %vm6450 = vcmp.gt.s32.totalorder %v6449, 0
  %v6451 = vsel %vm6450, %v6449, 0
  %v6452 = vshrl.u32 %v6451, 5
  %v6453 = vand.u32 %v6451, 31
  %v6454 = vsub.s32 32, %v6453
  %v6455 = vshrl.u32 683565275, %v6454
  %v6456 = vshll.u32 683565275, %v6453
  %v6457 = vshrl.u32 2475754826, %v6454
  %v6458 = vor.u32 %v6456, %v6457
  %v6459 = vshll.u32 2475754826, %v6453
  %v6460 = vshrl.u32 2131351028, %v6454
  %v6461 = vor.u32 %v6459, %v6460
  %v6462 = vshll.u32 2131351028, %v6453
  %v6463 = vshrl.u32 2102212464, %v6454
  %v6464 = vor.u32 %v6462, %v6463
  %v6465 = vshll.u32 2102212464, %v6453
  %v6466 = vshrl.u32 920167782, %v6454
  %v6467 = vor.u32 %v6465, %v6466
  %v6468 = vshll.u32 920167782, %v6453
  %v6469 = vshrl.u32 1326507024, %v6454
  %v6470 = vor.u32 %v6468, %v6469
  %vm6471 = vcmp.lt.s32.totalorder %v6452, 1
  %vm6472 = vcmp.lt.s32.totalorder %v6452, 2
  %vm6473 = vcmp.lt.s32.totalorder %v6452, 3
  %vm6474 = vcmp.lt.s32.totalorder %v6452, 4
  %v6475 = vsel %vm6471, %v6455, %v6458
  %v6476 = vsel %vm6474, %v6464, 2102212464
  %v6477 = vsel %vm6473, %v6461, %v6476
  %v6478 = vsel %vm6472, %v6475, %v6477
  %v6479 = vsel %vm6471, %v6458, %v6461
  %v6480 = vsel %vm6474, %v6467, 920167782
  %v6481 = vsel %vm6473, %v6464, %v6480
  %v6482 = vsel %vm6472, %v6479, %v6481
  %v6483 = vsel %vm6471, %v6461, %v6464
  %v6484 = vsel %vm6474, %v6470, 1326507024
  %v6485 = vsel %vm6473, %v6467, %v6484
  %v6486 = vsel %vm6472, %v6483, %v6485
  %v6487 = vshll.u32 %v6447, 8
  %v6488 = vmul.u32.u64.compose %v6487, %v6486
  %v6489 = vextract.low.u32 %v6488
  %v6490 = vextract.high.u32 %v6488
  %v6491 = vmul.u32.u64.compose %v6487, %v6482
  %v6492 = vextract.low.u32 %v6491
  %v6493 = vextract.high.u32 %v6491
  %v6494 = vmul.u32 %v6487, %v6478
  %v6495 = vadd.s32 %v6490, %v6492
  %vm6496 = vc.u32 %v6490, %v6492
  %v6497 = vadd.s32 %v6493, 1
  %v6498 = vsel %vm6496, %v6497, %v6493
  %v6499 = vadd.s32 %v6494, %v6498
  %v6500 = vadd.s32 %v6499, 536870912
  %v6501 = vshrl.u32 %v6500, 30
  %v6502 = vshll.u32 %v6501, 30
  %v6503 = vsub.s32 %v6499, %v6502
  %vm6504 = vcmp.lt.s32.totalorder %v6503, 0
  %v6505 = vsub.s32 0, %v6503
  %v6506 = vsel %vm6504, %v6505, %v6503
  %v6507 = vclz %v6506
  %v6508 = vsub.s32 %v6507, 2
  %vm6509 = vcmp.gt.s32.totalorder 0, %v6508
  %v6510 = vsel %vm6509, 0, %v6508
  %v6511 = vsub.s32 32, %v6510
  %v6512 = vshll.u32 %v6503, %v6510
  %v6513 = vshrl.u32 %v6495, %v6511
  %v6514 = vor.u32 %v6512, %v6513
  %v6515 = vsub.s32 4294967266, %v6510
  %v6516 = vadd.s32 %v6515, 127
  %v6517 = vshll.u32 %v6516, 23
  %v6518 = vor.u32 4788187, %v6517
  %v6519 = vand.u32 2147483647, %v6518
  %v6521 = vcvt.s32.f32 %v6514
  %v6522 = vmul.f32 %v6521, %v6519
  %v6523 = vxor.u32 %v6522, 2147483648
  %v6524 = vsel %vm6441, %v6523, %v6522
  %v6525 = vsub.s32 4, %v6501
  %v6526 = vsel %vm6441, %v6525, %v6501
  %v6527 = vsel %vm6440, %v5662, %v6524
  %v6528 = vsel %vm6440, 0, %v6526
  %v6529 = vcosq.f32.pop %v6527
  %v6530 = vsinq.f32.pop %v6527
  %vm6531 = vweird.f32 %v5662
  %v6532 = vadd.s32 %v6528, 3
  %v6533 = vand.u32 %v6532, 3
  %vm6534 = vcmp.lt.s32.totalorder %v6533, 2
  %vm6535 = vcmp.eq.s32.totalorder %v6533, 0
  %v6536 = vxor.u32 %v6530, 2147483648
  %v6537 = vsel %vm6535, %v6529, %v6536
  %vm6538 = vcmp.eq.s32.totalorder %v6533, 2
  %v6539 = vxor.u32 %v6529, 2147483648
  %v6540 = vsel %vm6538, %v6539, %v6530
  %v6541 = vsel %vm6534, %v6537, %v6540
  %v6542 = vsel %vm6531, nan, %v6541
  %v6543 = vand.u32 2147483647, %v5668
  %vm6544 = vcmp.le.f32.partialorder %v6543, 0.7853982
  %vm6545 = vcmp.lt.s32.totalorder %v5668, 0
  %v6546 = vand.u32 %v5668, 2139095040
  %v6547 = vshrl.u32 %v6546, 23
  %v6548 = vsub.s32 %v6547, 127
  %v6549 = vand.u32 2147483647, %v5668
  %v6550 = vand.u32 %v6549, 8388607
  %v6551 = vor.u32 %v6550, 8388608
  %v6552 = vsub.s32 0, %v6551
  %v6553 = vadd.s32 %v6548, 1
  %vm6554 = vcmp.gt.s32.totalorder %v6553, 0
  %v6555 = vsel %vm6554, %v6553, 0
  %v6556 = vshrl.u32 %v6555, 5
  %v6557 = vand.u32 %v6555, 31
  %v6558 = vsub.s32 32, %v6557
  %v6559 = vshrl.u32 683565275, %v6558
  %v6560 = vshll.u32 683565275, %v6557
  %v6561 = vshrl.u32 2475754826, %v6558
  %v6562 = vor.u32 %v6560, %v6561
  %v6563 = vshll.u32 2475754826, %v6557
  %v6564 = vshrl.u32 2131351028, %v6558
  %v6565 = vor.u32 %v6563, %v6564
  %v6566 = vshll.u32 2131351028, %v6557
  %v6567 = vshrl.u32 2102212464, %v6558
  %v6568 = vor.u32 %v6566, %v6567
  %v6569 = vshll.u32 2102212464, %v6557
  %v6570 = vshrl.u32 920167782, %v6558
  %v6571 = vor.u32 %v6569, %v6570
  %v6572 = vshll.u32 920167782, %v6557
  %v6573 = vshrl.u32 1326507024, %v6558
  %v6574 = vor.u32 %v6572, %v6573
  %vm6575 = vcmp.lt.s32.totalorder %v6556, 1
  %vm6576 = vcmp.lt.s32.totalorder %v6556, 2
  %vm6577 = vcmp.lt.s32.totalorder %v6556, 3
  %vm6578 = vcmp.lt.s32.totalorder %v6556, 4
  %v6579 = vsel %vm6575, %v6559, %v6562
  %v6580 = vsel %vm6578, %v6568, 2102212464
  %v6581 = vsel %vm6577, %v6565, %v6580
  %v6582 = vsel %vm6576, %v6579, %v6581
  %v6583 = vsel %vm6575, %v6562, %v6565
  %v6584 = vsel %vm6578, %v6571, 920167782
  %v6585 = vsel %vm6577, %v6568, %v6584
  %v6586 = vsel %vm6576, %v6583, %v6585
  %v6587 = vsel %vm6575, %v6565, %v6568
  %v6588 = vsel %vm6578, %v6574, 1326507024
  %v6589 = vsel %vm6577, %v6571, %v6588
  %v6590 = vsel %vm6576, %v6587, %v6589
  %v6591 = vshll.u32 %v6551, 8
  %v6592 = vmul.u32.u64.compose %v6591, %v6590
  %v6593 = vextract.low.u32 %v6592
  %v6594 = vextract.high.u32 %v6592
  %v6595 = vmul.u32.u64.compose %v6591, %v6586
  %v6596 = vextract.low.u32 %v6595
  %v6597 = vextract.high.u32 %v6595
  %v6598 = vmul.u32 %v6591, %v6582
  %v6599 = vadd.s32 %v6594, %v6596
  %vm6600 = vc.u32 %v6594, %v6596
  %v6601 = vadd.s32 %v6597, 1
  %v6602 = vsel %vm6600, %v6601, %v6597
  %v6603 = vadd.s32 %v6598, %v6602
  %v6604 = vadd.s32 %v6603, 536870912
  %v6605 = vshrl.u32 %v6604, 30
  %v6606 = vshll.u32 %v6605, 30
  %v6607 = vsub.s32 %v6603, %v6606
  %vm6608 = vcmp.lt.s32.totalorder %v6607, 0
  %v6609 = vsub.s32 0, %v6607
  %v6610 = vsel %vm6608, %v6609, %v6607
  %v6611 = vclz %v6610
  %v6612 = vsub.s32 %v6611, 2
  %vm6613 = vcmp.gt.s32.totalorder 0, %v6612
  %v6614 = vsel %vm6613, 0, %v6612
  %v6615 = vsub.s32 32, %v6614
  %v6616 = vshll.u32 %v6607, %v6614
  %v6617 = vshrl.u32 %v6599, %v6615
  %v6618 = vor.u32 %v6616, %v6617
  %v6619 = vsub.s32 4294967266, %v6614
  %v6620 = vadd.s32 %v6619, 127
  %v6621 = vshll.u32 %v6620, 23
  %v6622 = vor.u32 4788187, %v6621
  %v6623 = vand.u32 2147483647, %v6622
  %v6625 = vcvt.s32.f32 %v6618
  %v6626 = vmul.f32 %v6625, %v6623
  %v6627 = vxor.u32 %v6626, 2147483648
  %v6628 = vsel %vm6545, %v6627, %v6626
  %v6629 = vsub.s32 4, %v6605
  %v6630 = vsel %vm6545, %v6629, %v6605
  %v6631 = vsel %vm6544, %v5668, %v6628
  %v6632 = vsel %vm6544, 0, %v6630
  %v6633 = vcosq.f32.pop %v6631
  %v6634 = vsinq.f32.pop %v6631
  %vm6635 = vweird.f32 %v5668
  %v6636 = vadd.s32 %v6632, 3
  %v6637 = vand.u32 %v6636, 3
  %vm6638 = vcmp.lt.s32.totalorder %v6637, 2
  %vm6639 = vcmp.eq.s32.totalorder %v6637, 0
  %v6640 = vxor.u32 %v6634, 2147483648
  %v6641 = vsel %vm6639, %v6633, %v6640
  %vm6642 = vcmp.eq.s32.totalorder %v6637, 2
  %v6643 = vxor.u32 %v6633, 2147483648
  %v6644 = vsel %vm6642, %v6643, %v6634
  %v6645 = vsel %vm6638, %v6641, %v6644
  %v6646 = vsel %vm6635, nan, %v6645
  %v6647 = vand.u32 2147483647, %v5674
  %vm6648 = vcmp.le.f32.partialorder %v6647, 0.7853982
  %vm6649 = vcmp.lt.s32.totalorder %v5674, 0
  %v6650 = vand.u32 %v5674, 2139095040
  %v6651 = vshrl.u32 %v6650, 23
  %v6652 = vsub.s32 %v6651, 127
  %v6653 = vand.u32 2147483647, %v5674
  %v6654 = vand.u32 %v6653, 8388607
  %v6655 = vor.u32 %v6654, 8388608
  %v6656 = vsub.s32 0, %v6655
  %v6657 = vadd.s32 %v6652, 1
  %vm6658 = vcmp.gt.s32.totalorder %v6657, 0
  %v6659 = vsel %vm6658, %v6657, 0
  %v6660 = vshrl.u32 %v6659, 5
  %v6661 = vand.u32 %v6659, 31
  %v6662 = vsub.s32 32, %v6661
  %v6663 = vshrl.u32 683565275, %v6662
  %v6664 = vshll.u32 683565275, %v6661
  %v6665 = vshrl.u32 2475754826, %v6662
  %v6666 = vor.u32 %v6664, %v6665
  %v6667 = vshll.u32 2475754826, %v6661
  %v6668 = vshrl.u32 2131351028, %v6662
  %v6669 = vor.u32 %v6667, %v6668
  %v6670 = vshll.u32 2131351028, %v6661
  %v6671 = vshrl.u32 2102212464, %v6662
  %v6672 = vor.u32 %v6670, %v6671
  %v6673 = vshll.u32 2102212464, %v6661
  %v6674 = vshrl.u32 920167782, %v6662
  %v6675 = vor.u32 %v6673, %v6674
  %v6676 = vshll.u32 920167782, %v6661
  %v6677 = vshrl.u32 1326507024, %v6662
  %v6678 = vor.u32 %v6676, %v6677
  %vm6679 = vcmp.lt.s32.totalorder %v6660, 1
  %vm6680 = vcmp.lt.s32.totalorder %v6660, 2
  %vm6681 = vcmp.lt.s32.totalorder %v6660, 3
  %vm6682 = vcmp.lt.s32.totalorder %v6660, 4
  %v6683 = vsel %vm6679, %v6663, %v6666
  %v6684 = vsel %vm6682, %v6672, 2102212464
  %v6685 = vsel %vm6681, %v6669, %v6684
  %v6686 = vsel %vm6680, %v6683, %v6685
  %v6687 = vsel %vm6679, %v6666, %v6669
  %v6688 = vsel %vm6682, %v6675, 920167782
  %v6689 = vsel %vm6681, %v6672, %v6688
  %v6690 = vsel %vm6680, %v6687, %v6689
  %v6691 = vsel %vm6679, %v6669, %v6672
  %v6692 = vsel %vm6682, %v6678, 1326507024
  %v6693 = vsel %vm6681, %v6675, %v6692
  %v6694 = vsel %vm6680, %v6691, %v6693
  %v6695 = vshll.u32 %v6655, 8
  %v6696 = vmul.u32.u64.compose %v6695, %v6694
  %v6697 = vextract.low.u32 %v6696
  %v6698 = vextract.high.u32 %v6696
  %v6699 = vmul.u32.u64.compose %v6695, %v6690
  %v6700 = vextract.low.u32 %v6699
  %v6701 = vextract.high.u32 %v6699
  %v6702 = vmul.u32 %v6695, %v6686
  %v6703 = vadd.s32 %v6698, %v6700
  %vm6704 = vc.u32 %v6698, %v6700
  %v6705 = vadd.s32 %v6701, 1
  %v6706 = vsel %vm6704, %v6705, %v6701
  %v6707 = vadd.s32 %v6702, %v6706
  %v6708 = vadd.s32 %v6707, 536870912
  %v6709 = vshrl.u32 %v6708, 30
  %v6710 = vshll.u32 %v6709, 30
  %v6711 = vsub.s32 %v6707, %v6710
  %vm6712 = vcmp.lt.s32.totalorder %v6711, 0
  %v6713 = vsub.s32 0, %v6711
  %v6714 = vsel %vm6712, %v6713, %v6711
  %v6715 = vclz %v6714
  %v6716 = vsub.s32 %v6715, 2
  %vm6717 = vcmp.gt.s32.totalorder 0, %v6716
  %v6718 = vsel %vm6717, 0, %v6716
  %v6719 = vsub.s32 32, %v6718
  %v6720 = vshll.u32 %v6711, %v6718
  %v6721 = vshrl.u32 %v6703, %v6719
  %v6722 = vor.u32 %v6720, %v6721
  %v6723 = vsub.s32 4294967266, %v6718
  %v6724 = vadd.s32 %v6723, 127
  %v6725 = vshll.u32 %v6724, 23
  %v6726 = vor.u32 4788187, %v6725
  %v6727 = vand.u32 2147483647, %v6726
  %v6729 = vcvt.s32.f32 %v6722
  %v6730 = vmul.f32 %v6729, %v6727
  %v6731 = vxor.u32 %v6730, 2147483648
  %v6732 = vsel %vm6649, %v6731, %v6730
  %v6733 = vsub.s32 4, %v6709
  %v6734 = vsel %vm6649, %v6733, %v6709
  %v6735 = vsel %vm6648, %v5674, %v6732
  %v6736 = vsel %vm6648, 0, %v6734
  %v6737 = vcosq.f32.pop %v6735
  %v6738 = vsinq.f32.pop %v6735
  %vm6739 = vweird.f32 %v5674
  %v6740 = vadd.s32 %v6736, 3
  %v6741 = vand.u32 %v6740, 3
  %vm6742 = vcmp.lt.s32.totalorder %v6741, 2
  %vm6743 = vcmp.eq.s32.totalorder %v6741, 0
  %v6744 = vxor.u32 %v6738, 2147483648
  %v6745 = vsel %vm6743, %v6737, %v6744
  %vm6746 = vcmp.eq.s32.totalorder %v6741, 2
  %v6747 = vxor.u32 %v6737, 2147483648
  %v6748 = vsel %vm6746, %v6747, %v6738
  %v6749 = vsel %vm6742, %v6745, %v6748
  %v6750 = vsel %vm6739, nan, %v6749
  %v6751 = vand.u32 2147483647, %v5680
  %vm6752 = vcmp.le.f32.partialorder %v6751, 0.7853982
  %vm6753 = vcmp.lt.s32.totalorder %v5680, 0
  %v6754 = vand.u32 %v5680, 2139095040
  %v6755 = vshrl.u32 %v6754, 23
  %v6756 = vsub.s32 %v6755, 127
  %v6757 = vand.u32 2147483647, %v5680
  %v6758 = vand.u32 %v6757, 8388607
  %v6759 = vor.u32 %v6758, 8388608
  %v6760 = vsub.s32 0, %v6759
  %v6761 = vadd.s32 %v6756, 1
  %vm6762 = vcmp.gt.s32.totalorder %v6761, 0
  %v6763 = vsel %vm6762, %v6761, 0
  %v6764 = vshrl.u32 %v6763, 5
  %v6765 = vand.u32 %v6763, 31
  %v6766 = vsub.s32 32, %v6765
  %v6767 = vshrl.u32 683565275, %v6766
  %v6768 = vshll.u32 683565275, %v6765
  %v6769 = vshrl.u32 2475754826, %v6766
  %v6770 = vor.u32 %v6768, %v6769
  %v6771 = vshll.u32 2475754826, %v6765
  %v6772 = vshrl.u32 2131351028, %v6766
  %v6773 = vor.u32 %v6771, %v6772
  %v6774 = vshll.u32 2131351028, %v6765
  %v6775 = vshrl.u32 2102212464, %v6766
  %v6776 = vor.u32 %v6774, %v6775
  %v6777 = vshll.u32 2102212464, %v6765
  %v6778 = vshrl.u32 920167782, %v6766
  %v6779 = vor.u32 %v6777, %v6778
  %v6780 = vshll.u32 920167782, %v6765
  %v6781 = vshrl.u32 1326507024, %v6766
  %v6782 = vor.u32 %v6780, %v6781
  %vm6783 = vcmp.lt.s32.totalorder %v6764, 1
  %vm6784 = vcmp.lt.s32.totalorder %v6764, 2
  %vm6785 = vcmp.lt.s32.totalorder %v6764, 3
  %vm6786 = vcmp.lt.s32.totalorder %v6764, 4
  %v6787 = vsel %vm6783, %v6767, %v6770
  %v6788 = vsel %vm6786, %v6776, 2102212464
  %v6789 = vsel %vm6785, %v6773, %v6788
  %v6790 = vsel %vm6784, %v6787, %v6789
  %v6791 = vsel %vm6783, %v6770, %v6773
  %v6792 = vsel %vm6786, %v6779, 920167782
  %v6793 = vsel %vm6785, %v6776, %v6792
  %v6794 = vsel %vm6784, %v6791, %v6793
  %v6795 = vsel %vm6783, %v6773, %v6776
  %v6796 = vsel %vm6786, %v6782, 1326507024
  %v6797 = vsel %vm6785, %v6779, %v6796
  %v6798 = vsel %vm6784, %v6795, %v6797
  %v6799 = vshll.u32 %v6759, 8
  %v6800 = vmul.u32.u64.compose %v6799, %v6798
  %v6801 = vextract.low.u32 %v6800
  %v6802 = vextract.high.u32 %v6800
  %v6803 = vmul.u32.u64.compose %v6799, %v6794
  %v6804 = vextract.low.u32 %v6803
  %v6805 = vextract.high.u32 %v6803
  %v6806 = vmul.u32 %v6799, %v6790
  %v6807 = vadd.s32 %v6802, %v6804
  %vm6808 = vc.u32 %v6802, %v6804
  %v6809 = vadd.s32 %v6805, 1
  %v6810 = vsel %vm6808, %v6809, %v6805
  %v6811 = vadd.s32 %v6806, %v6810
  %v6812 = vadd.s32 %v6811, 536870912
  %v6813 = vshrl.u32 %v6812, 30
  %v6814 = vshll.u32 %v6813, 30
  %v6815 = vsub.s32 %v6811, %v6814
  %vm6816 = vcmp.lt.s32.totalorder %v6815, 0
  %v6817 = vsub.s32 0, %v6815
  %v6818 = vsel %vm6816, %v6817, %v6815
  %v6819 = vclz %v6818
  %v6820 = vsub.s32 %v6819, 2
  %vm6821 = vcmp.gt.s32.totalorder 0, %v6820
  %v6822 = vsel %vm6821, 0, %v6820
  %v6823 = vsub.s32 32, %v6822
  %v6824 = vshll.u32 %v6815, %v6822
  %v6825 = vshrl.u32 %v6807, %v6823
  %v6826 = vor.u32 %v6824, %v6825
  %v6827 = vsub.s32 4294967266, %v6822
  %v6828 = vadd.s32 %v6827, 127
  %v6829 = vshll.u32 %v6828, 23
  %v6830 = vor.u32 4788187, %v6829
  %v6831 = vand.u32 2147483647, %v6830
  %v6833 = vcvt.s32.f32 %v6826
  %v6834 = vmul.f32 %v6833, %v6831
  %v6835 = vxor.u32 %v6834, 2147483648
  %v6836 = vsel %vm6753, %v6835, %v6834
  %v6837 = vsub.s32 4, %v6813
  %v6838 = vsel %vm6753, %v6837, %v6813
  %v6839 = vsel %vm6752, %v5680, %v6836
  %v6840 = vsel %vm6752, 0, %v6838
  %v6841 = vcosq.f32.pop %v6839
  %v6842 = vsinq.f32.pop %v6839
  %vm6843 = vweird.f32 %v5680
  %v6844 = vadd.s32 %v6840, 3
  %v6845 = vand.u32 %v6844, 3
  %vm6846 = vcmp.lt.s32.totalorder %v6845, 2
  %vm6847 = vcmp.eq.s32.totalorder %v6845, 0
  %v6848 = vxor.u32 %v6842, 2147483648
  %v6849 = vsel %vm6847, %v6841, %v6848
  %vm6850 = vcmp.eq.s32.totalorder %v6845, 2
  %v6851 = vxor.u32 %v6841, 2147483648
  %v6852 = vsel %vm6850, %v6851, %v6842
  %v6853 = vsel %vm6846, %v6849, %v6852
  %v6854 = vsel %vm6843, nan, %v6853
  %v6855 = vand.u32 2147483647, %v5686
  %vm6856 = vcmp.le.f32.partialorder %v6855, 0.7853982
  %vm6857 = vcmp.lt.s32.totalorder %v5686, 0
  %v6858 = vand.u32 %v5686, 2139095040
  %v6859 = vshrl.u32 %v6858, 23
  %v6860 = vsub.s32 %v6859, 127
  %v6861 = vand.u32 2147483647, %v5686
  %v6862 = vand.u32 %v6861, 8388607
  %v6863 = vor.u32 %v6862, 8388608
  %v6864 = vsub.s32 0, %v6863
  %v6865 = vadd.s32 %v6860, 1
  %vm6866 = vcmp.gt.s32.totalorder %v6865, 0
  %v6867 = vsel %vm6866, %v6865, 0
  %v6868 = vshrl.u32 %v6867, 5
  %v6869 = vand.u32 %v6867, 31
  %v6870 = vsub.s32 32, %v6869
  %v6871 = vshrl.u32 683565275, %v6870
  %v6872 = vshll.u32 683565275, %v6869
  %v6873 = vshrl.u32 2475754826, %v6870
  %v6874 = vor.u32 %v6872, %v6873
  %v6875 = vshll.u32 2475754826, %v6869
  %v6876 = vshrl.u32 2131351028, %v6870
  %v6877 = vor.u32 %v6875, %v6876
  %v6878 = vshll.u32 2131351028, %v6869
  %v6879 = vshrl.u32 2102212464, %v6870
  %v6880 = vor.u32 %v6878, %v6879
  %v6881 = vshll.u32 2102212464, %v6869
  %v6882 = vshrl.u32 920167782, %v6870
  %v6883 = vor.u32 %v6881, %v6882
  %v6884 = vshll.u32 920167782, %v6869
  %v6885 = vshrl.u32 1326507024, %v6870
  %v6886 = vor.u32 %v6884, %v6885
  %vm6887 = vcmp.lt.s32.totalorder %v6868, 1
  %vm6888 = vcmp.lt.s32.totalorder %v6868, 2
  %vm6889 = vcmp.lt.s32.totalorder %v6868, 3
  %vm6890 = vcmp.lt.s32.totalorder %v6868, 4
  %v6891 = vsel %vm6887, %v6871, %v6874
  %v6892 = vsel %vm6890, %v6880, 2102212464
  %v6893 = vsel %vm6889, %v6877, %v6892
  %v6894 = vsel %vm6888, %v6891, %v6893
  %v6895 = vsel %vm6887, %v6874, %v6877
  %v6896 = vsel %vm6890, %v6883, 920167782
  %v6897 = vsel %vm6889, %v6880, %v6896
  %v6898 = vsel %vm6888, %v6895, %v6897
  %v6899 = vsel %vm6887, %v6877, %v6880
  %v6900 = vsel %vm6890, %v6886, 1326507024
  %v6901 = vsel %vm6889, %v6883, %v6900
  %v6902 = vsel %vm6888, %v6899, %v6901
  %v6903 = vshll.u32 %v6863, 8
  %v6904 = vmul.u32.u64.compose %v6903, %v6902
  %v6905 = vextract.low.u32 %v6904
  %v6906 = vextract.high.u32 %v6904
  %v6907 = vmul.u32.u64.compose %v6903, %v6898
  %v6908 = vextract.low.u32 %v6907
  %v6909 = vextract.high.u32 %v6907
  %v6910 = vmul.u32 %v6903, %v6894
  %v6911 = vadd.s32 %v6906, %v6908
  %vm6912 = vc.u32 %v6906, %v6908
  %v6913 = vadd.s32 %v6909, 1
  %v6914 = vsel %vm6912, %v6913, %v6909
  %v6915 = vadd.s32 %v6910, %v6914
  %v6916 = vadd.s32 %v6915, 536870912
  %v6917 = vshrl.u32 %v6916, 30
  %v6918 = vshll.u32 %v6917, 30
  %v6919 = vsub.s32 %v6915, %v6918
  %vm6920 = vcmp.lt.s32.totalorder %v6919, 0
  %v6921 = vsub.s32 0, %v6919
  %v6922 = vsel %vm6920, %v6921, %v6919
  %v6923 = vclz %v6922
  %v6924 = vsub.s32 %v6923, 2
  %vm6925 = vcmp.gt.s32.totalorder 0, %v6924
  %v6926 = vsel %vm6925, 0, %v6924
  %v6927 = vsub.s32 32, %v6926
  %v6928 = vshll.u32 %v6919, %v6926
  %v6929 = vshrl.u32 %v6911, %v6927
  %v6930 = vor.u32 %v6928, %v6929
  %v6931 = vsub.s32 4294967266, %v6926
  %v6932 = vadd.s32 %v6931, 127
  %v6933 = vshll.u32 %v6932, 23
  %v6934 = vor.u32 4788187, %v6933
  %v6935 = vand.u32 2147483647, %v6934
  %v6937 = vcvt.s32.f32 %v6930
  %v6938 = vmul.f32 %v6937, %v6935
  %v6939 = vxor.u32 %v6938, 2147483648
  %v6940 = vsel %vm6857, %v6939, %v6938
  %v6941 = vsub.s32 4, %v6917
  %v6942 = vsel %vm6857, %v6941, %v6917
  %v6943 = vsel %vm6856, %v5686, %v6940
  %v6944 = vsel %vm6856, 0, %v6942
  %v6945 = vcosq.f32.pop %v6943
  %v6946 = vsinq.f32.pop %v6943
  %vm6947 = vweird.f32 %v5686
  %v6948 = vadd.s32 %v6944, 3
  %v6949 = vand.u32 %v6948, 3
  %vm6950 = vcmp.lt.s32.totalorder %v6949, 2
  %vm6951 = vcmp.eq.s32.totalorder %v6949, 0
  %v6952 = vxor.u32 %v6946, 2147483648
  %v6953 = vsel %vm6951, %v6945, %v6952
  %vm6954 = vcmp.eq.s32.totalorder %v6949, 2
  %v6955 = vxor.u32 %v6945, 2147483648
  %v6956 = vsel %vm6954, %v6955, %v6946
  %v6957 = vsel %vm6950, %v6953, %v6956
  %v6958 = vsel %vm6947, nan, %v6957
  %v6959 = vand.u32 2147483647, %v5692
  %vm6960 = vcmp.le.f32.partialorder %v6959, 0.7853982
  %vm6961 = vcmp.lt.s32.totalorder %v5692, 0
  %v6962 = vand.u32 %v5692, 2139095040
  %v6963 = vshrl.u32 %v6962, 23
  %v6964 = vsub.s32 %v6963, 127
  %v6965 = vand.u32 2147483647, %v5692
  %v6966 = vand.u32 %v6965, 8388607
  %v6967 = vor.u32 %v6966, 8388608
  %v6968 = vsub.s32 0, %v6967
  %v6969 = vadd.s32 %v6964, 1
  %vm6970 = vcmp.gt.s32.totalorder %v6969, 0
  %v6971 = vsel %vm6970, %v6969, 0
  %v6972 = vshrl.u32 %v6971, 5
  %v6973 = vand.u32 %v6971, 31
  %v6974 = vsub.s32 32, %v6973
  %v6975 = vshrl.u32 683565275, %v6974
  %v6976 = vshll.u32 683565275, %v6973
  %v6977 = vshrl.u32 2475754826, %v6974
  %v6978 = vor.u32 %v6976, %v6977
  %v6979 = vshll.u32 2475754826, %v6973
  %v6980 = vshrl.u32 2131351028, %v6974
  %v6981 = vor.u32 %v6979, %v6980
  %v6982 = vshll.u32 2131351028, %v6973
  %v6983 = vshrl.u32 2102212464, %v6974
  %v6984 = vor.u32 %v6982, %v6983
  %v6985 = vshll.u32 2102212464, %v6973
  %v6986 = vshrl.u32 920167782, %v6974
  %v6987 = vor.u32 %v6985, %v6986
  %v6988 = vshll.u32 920167782, %v6973
  %v6989 = vshrl.u32 1326507024, %v6974
  %v6990 = vor.u32 %v6988, %v6989
  %vm6991 = vcmp.lt.s32.totalorder %v6972, 1
  %vm6992 = vcmp.lt.s32.totalorder %v6972, 2
  %vm6993 = vcmp.lt.s32.totalorder %v6972, 3
  %vm6994 = vcmp.lt.s32.totalorder %v6972, 4
  %v6995 = vsel %vm6991, %v6975, %v6978
  %v6996 = vsel %vm6994, %v6984, 2102212464
  %v6997 = vsel %vm6993, %v6981, %v6996
  %v6998 = vsel %vm6992, %v6995, %v6997
  %v6999 = vsel %vm6991, %v6978, %v6981
  %v7000 = vsel %vm6994, %v6987, 920167782
  %v7001 = vsel %vm6993, %v6984, %v7000
  %v7002 = vsel %vm6992, %v6999, %v7001
  %v7003 = vsel %vm6991, %v6981, %v6984
  %v7004 = vsel %vm6994, %v6990, 1326507024
  %v7005 = vsel %vm6993, %v6987, %v7004
  %v7006 = vsel %vm6992, %v7003, %v7005
  %v7007 = vshll.u32 %v6967, 8
  %v7008 = vmul.u32.u64.compose %v7007, %v7006
  %v7009 = vextract.low.u32 %v7008
  %v7010 = vextract.high.u32 %v7008
  %v7011 = vmul.u32.u64.compose %v7007, %v7002
  %v7012 = vextract.low.u32 %v7011
  %v7013 = vextract.high.u32 %v7011
  %v7014 = vmul.u32 %v7007, %v6998
  %v7015 = vadd.s32 %v7010, %v7012
  %vm7016 = vc.u32 %v7010, %v7012
  %v7017 = vadd.s32 %v7013, 1
  %v7018 = vsel %vm7016, %v7017, %v7013
  %v7019 = vadd.s32 %v7014, %v7018
  %v7020 = vadd.s32 %v7019, 536870912
  %v7021 = vshrl.u32 %v7020, 30
  %v7022 = vshll.u32 %v7021, 30
  %v7023 = vsub.s32 %v7019, %v7022
  %vm7024 = vcmp.lt.s32.totalorder %v7023, 0
  %v7025 = vsub.s32 0, %v7023
  %v7026 = vsel %vm7024, %v7025, %v7023
  %v7027 = vclz %v7026
  %v7028 = vsub.s32 %v7027, 2
  %vm7029 = vcmp.gt.s32.totalorder 0, %v7028
  %v7030 = vsel %vm7029, 0, %v7028
  %v7031 = vsub.s32 32, %v7030
  %v7032 = vshll.u32 %v7023, %v7030
  %v7033 = vshrl.u32 %v7015, %v7031
  %v7034 = vor.u32 %v7032, %v7033
  %v7035 = vsub.s32 4294967266, %v7030
  %v7036 = vadd.s32 %v7035, 127
  %v7037 = vshll.u32 %v7036, 23
  %v7038 = vor.u32 4788187, %v7037
  %v7039 = vand.u32 2147483647, %v7038
  %v7041 = vcvt.s32.f32 %v7034
  %v7042 = vmul.f32 %v7041, %v7039
  %v7043 = vxor.u32 %v7042, 2147483648
  %v7044 = vsel %vm6961, %v7043, %v7042
  %v7045 = vsub.s32 4, %v7021
  %v7046 = vsel %vm6961, %v7045, %v7021
  %v7047 = vsel %vm6960, %v5692, %v7044
  %v7048 = vsel %vm6960, 0, %v7046
  %v7049 = vcosq.f32.pop %v7047
  %v7050 = vsinq.f32.pop %v7047
  %vm7051 = vweird.f32 %v5692
  %v7052 = vadd.s32 %v7048, 3
  %v7053 = vand.u32 %v7052, 3
  %vm7054 = vcmp.lt.s32.totalorder %v7053, 2
  %vm7055 = vcmp.eq.s32.totalorder %v7053, 0
  %v7056 = vxor.u32 %v7050, 2147483648
  %v7057 = vsel %vm7055, %v7049, %v7056
  %vm7058 = vcmp.eq.s32.totalorder %v7053, 2
  %v7059 = vxor.u32 %v7049, 2147483648
  %v7060 = vsel %vm7058, %v7059, %v7050
  %v7061 = vsel %vm7054, %v7057, %v7060
  %v7062 = vsel %vm7051, nan, %v7061
  %v7063 = vand.u32 2147483647, %v5698
  %vm7064 = vcmp.le.f32.partialorder %v7063, 0.7853982
  %vm7065 = vcmp.lt.s32.totalorder %v5698, 0
  %v7066 = vand.u32 %v5698, 2139095040
  %v7067 = vshrl.u32 %v7066, 23
  %v7068 = vsub.s32 %v7067, 127
  %v7069 = vand.u32 2147483647, %v5698
  %v7070 = vand.u32 %v7069, 8388607
  %v7071 = vor.u32 %v7070, 8388608
  %v7072 = vsub.s32 0, %v7071
  %v7073 = vadd.s32 %v7068, 1
  %vm7074 = vcmp.gt.s32.totalorder %v7073, 0
  %v7075 = vsel %vm7074, %v7073, 0
  %v7076 = vshrl.u32 %v7075, 5
  %v7077 = vand.u32 %v7075, 31
  %v7078 = vsub.s32 32, %v7077
  %v7079 = vshrl.u32 683565275, %v7078
  %v7080 = vshll.u32 683565275, %v7077
  %v7081 = vshrl.u32 2475754826, %v7078
  %v7082 = vor.u32 %v7080, %v7081
  %v7083 = vshll.u32 2475754826, %v7077
  %v7084 = vshrl.u32 2131351028, %v7078
  %v7085 = vor.u32 %v7083, %v7084
  %v7086 = vshll.u32 2131351028, %v7077
  %v7087 = vshrl.u32 2102212464, %v7078
  %v7088 = vor.u32 %v7086, %v7087
  %v7089 = vshll.u32 2102212464, %v7077
  %v7090 = vshrl.u32 920167782, %v7078
  %v7091 = vor.u32 %v7089, %v7090
  %v7092 = vshll.u32 920167782, %v7077
  %v7093 = vshrl.u32 1326507024, %v7078
  %v7094 = vor.u32 %v7092, %v7093
  %vm7095 = vcmp.lt.s32.totalorder %v7076, 1
  %vm7096 = vcmp.lt.s32.totalorder %v7076, 2
  %vm7097 = vcmp.lt.s32.totalorder %v7076, 3
  %vm7098 = vcmp.lt.s32.totalorder %v7076, 4
  %v7099 = vsel %vm7095, %v7079, %v7082
  %v7100 = vsel %vm7098, %v7088, 2102212464
  %v7101 = vsel %vm7097, %v7085, %v7100
  %v7102 = vsel %vm7096, %v7099, %v7101
  %v7103 = vsel %vm7095, %v7082, %v7085
  %v7104 = vsel %vm7098, %v7091, 920167782
  %v7105 = vsel %vm7097, %v7088, %v7104
  %v7106 = vsel %vm7096, %v7103, %v7105
  %v7107 = vsel %vm7095, %v7085, %v7088
  %v7108 = vsel %vm7098, %v7094, 1326507024
  %v7109 = vsel %vm7097, %v7091, %v7108
  %v7110 = vsel %vm7096, %v7107, %v7109
  %v7111 = vshll.u32 %v7071, 8
  %v7112 = vmul.u32.u64.compose %v7111, %v7110
  %v7113 = vextract.low.u32 %v7112
  %v7114 = vextract.high.u32 %v7112
  %v7115 = vmul.u32.u64.compose %v7111, %v7106
  %v7116 = vextract.low.u32 %v7115
  %v7117 = vextract.high.u32 %v7115
  %v7118 = vmul.u32 %v7111, %v7102
  %v7119 = vadd.s32 %v7114, %v7116
  %vm7120 = vc.u32 %v7114, %v7116
  %v7121 = vadd.s32 %v7117, 1
  %v7122 = vsel %vm7120, %v7121, %v7117
  %v7123 = vadd.s32 %v7118, %v7122
  %v7124 = vadd.s32 %v7123, 536870912
  %v7125 = vshrl.u32 %v7124, 30
  %v7126 = vshll.u32 %v7125, 30
  %v7127 = vsub.s32 %v7123, %v7126
  %vm7128 = vcmp.lt.s32.totalorder %v7127, 0
  %v7129 = vsub.s32 0, %v7127
  %v7130 = vsel %vm7128, %v7129, %v7127
  %v7131 = vclz %v7130
  %v7132 = vsub.s32 %v7131, 2
  %vm7133 = vcmp.gt.s32.totalorder 0, %v7132
  %v7134 = vsel %vm7133, 0, %v7132
  %v7135 = vsub.s32 32, %v7134
  %v7136 = vshll.u32 %v7127, %v7134
  %v7137 = vshrl.u32 %v7119, %v7135
  %v7138 = vor.u32 %v7136, %v7137
  %v7139 = vsub.s32 4294967266, %v7134
  %v7140 = vadd.s32 %v7139, 127
  %v7141 = vshll.u32 %v7140, 23
  %v7142 = vor.u32 4788187, %v7141
  %v7143 = vand.u32 2147483647, %v7142
  %v7145 = vcvt.s32.f32 %v7138
  %v7146 = vmul.f32 %v7145, %v7143
  %v7147 = vxor.u32 %v7146, 2147483648
  %v7148 = vsel %vm7065, %v7147, %v7146
  %v7149 = vsub.s32 4, %v7125
  %v7150 = vsel %vm7065, %v7149, %v7125
  %v7151 = vsel %vm7064, %v5698, %v7148
  %v7152 = vsel %vm7064, 0, %v7150
  %v7153 = vcosq.f32.pop %v7151
  %v7154 = vsinq.f32.pop %v7151
  %vm7155 = vweird.f32 %v5698
  %v7156 = vadd.s32 %v7152, 3
  %v7157 = vand.u32 %v7156, 3
  %vm7158 = vcmp.lt.s32.totalorder %v7157, 2
  %vm7159 = vcmp.eq.s32.totalorder %v7157, 0
  %v7160 = vxor.u32 %v7154, 2147483648
  %v7161 = vsel %vm7159, %v7153, %v7160
  %vm7162 = vcmp.eq.s32.totalorder %v7157, 2
  %v7163 = vxor.u32 %v7153, 2147483648
  %v7164 = vsel %vm7162, %v7163, %v7154
  %v7165 = vsel %vm7158, %v7161, %v7164
  %v7166 = vsel %vm7155, nan, %v7165
  %v7167 = vand.u32 2147483647, %v5704
  %vm7168 = vcmp.le.f32.partialorder %v7167, 0.7853982
  %vm7169 = vcmp.lt.s32.totalorder %v5704, 0
  %v7170 = vand.u32 %v5704, 2139095040
  %v7171 = vshrl.u32 %v7170, 23
  %v7172 = vsub.s32 %v7171, 127
  %v7173 = vand.u32 2147483647, %v5704
  %v7174 = vand.u32 %v7173, 8388607
  %v7175 = vor.u32 %v7174, 8388608
  %v7176 = vsub.s32 0, %v7175
  %v7177 = vadd.s32 %v7172, 1
  %vm7178 = vcmp.gt.s32.totalorder %v7177, 0
  %v7179 = vsel %vm7178, %v7177, 0
  %v7180 = vshrl.u32 %v7179, 5
  %v7181 = vand.u32 %v7179, 31
  %v7182 = vsub.s32 32, %v7181
  %v7183 = vshrl.u32 683565275, %v7182
  %v7184 = vshll.u32 683565275, %v7181
  %v7185 = vshrl.u32 2475754826, %v7182
  %v7186 = vor.u32 %v7184, %v7185
  %v7187 = vshll.u32 2475754826, %v7181
  %v7188 = vshrl.u32 2131351028, %v7182
  %v7189 = vor.u32 %v7187, %v7188
  %v7190 = vshll.u32 2131351028, %v7181
  %v7191 = vshrl.u32 2102212464, %v7182
  %v7192 = vor.u32 %v7190, %v7191
  %v7193 = vshll.u32 2102212464, %v7181
  %v7194 = vshrl.u32 920167782, %v7182
  %v7195 = vor.u32 %v7193, %v7194
  %v7196 = vshll.u32 920167782, %v7181
  %v7197 = vshrl.u32 1326507024, %v7182
  %v7198 = vor.u32 %v7196, %v7197
  %vm7199 = vcmp.lt.s32.totalorder %v7180, 1
  %vm7200 = vcmp.lt.s32.totalorder %v7180, 2
  %vm7201 = vcmp.lt.s32.totalorder %v7180, 3
  %vm7202 = vcmp.lt.s32.totalorder %v7180, 4
  %v7203 = vsel %vm7199, %v7183, %v7186
  %v7204 = vsel %vm7202, %v7192, 2102212464
  %v7205 = vsel %vm7201, %v7189, %v7204
  %v7206 = vsel %vm7200, %v7203, %v7205
  %v7207 = vsel %vm7199, %v7186, %v7189
  %v7208 = vsel %vm7202, %v7195, 920167782
  %v7209 = vsel %vm7201, %v7192, %v7208
  %v7210 = vsel %vm7200, %v7207, %v7209
  %v7211 = vsel %vm7199, %v7189, %v7192
  %v7212 = vsel %vm7202, %v7198, 1326507024
  %v7213 = vsel %vm7201, %v7195, %v7212
  %v7214 = vsel %vm7200, %v7211, %v7213
  %v7215 = vshll.u32 %v7175, 8
  %v7216 = vmul.u32.u64.compose %v7215, %v7214
  %v7217 = vextract.low.u32 %v7216
  %v7218 = vextract.high.u32 %v7216
  %v7219 = vmul.u32.u64.compose %v7215, %v7210
  %v7220 = vextract.low.u32 %v7219
  %v7221 = vextract.high.u32 %v7219
  %v7222 = vmul.u32 %v7215, %v7206
  %v7223 = vadd.s32 %v7218, %v7220
  %vm7224 = vc.u32 %v7218, %v7220
  %v7225 = vadd.s32 %v7221, 1
  %v7226 = vsel %vm7224, %v7225, %v7221
  %v7227 = vadd.s32 %v7222, %v7226
  %v7228 = vadd.s32 %v7227, 536870912
  %v7229 = vshrl.u32 %v7228, 30
  %v7230 = vshll.u32 %v7229, 30
  %v7231 = vsub.s32 %v7227, %v7230
  %vm7232 = vcmp.lt.s32.totalorder %v7231, 0
  %v7233 = vsub.s32 0, %v7231
  %v7234 = vsel %vm7232, %v7233, %v7231
  %v7235 = vclz %v7234
  %v7236 = vsub.s32 %v7235, 2
  %vm7237 = vcmp.gt.s32.totalorder 0, %v7236
  %v7238 = vsel %vm7237, 0, %v7236
  %v7239 = vsub.s32 32, %v7238
  %v7240 = vshll.u32 %v7231, %v7238
  %v7241 = vshrl.u32 %v7223, %v7239
  %v7242 = vor.u32 %v7240, %v7241
  %v7243 = vsub.s32 4294967266, %v7238
  %v7244 = vadd.s32 %v7243, 127
  %v7245 = vshll.u32 %v7244, 23
  %v7246 = vor.u32 4788187, %v7245
  %v7247 = vand.u32 2147483647, %v7246
  %v7249 = vcvt.s32.f32 %v7242
  %v7250 = vmul.f32 %v7249, %v7247
  %v7251 = vxor.u32 %v7250, 2147483648
  %v7252 = vsel %vm7169, %v7251, %v7250
  %v7253 = vsub.s32 4, %v7229
  %v7254 = vsel %vm7169, %v7253, %v7229
  %v7255 = vsel %vm7168, %v5704, %v7252
  %v7256 = vsel %vm7168, 0, %v7254
  %v7257 = vcosq.f32.pop %v7255
  %v7258 = vsinq.f32.pop %v7255
  %vm7259 = vweird.f32 %v5704
  %v7260 = vadd.s32 %v7256, 3
  %v7261 = vand.u32 %v7260, 3
  %vm7262 = vcmp.lt.s32.totalorder %v7261, 2
  %vm7263 = vcmp.eq.s32.totalorder %v7261, 0
  %v7264 = vxor.u32 %v7258, 2147483648
  %v7265 = vsel %vm7263, %v7257, %v7264
  %vm7266 = vcmp.eq.s32.totalorder %v7261, 2
  %v7267 = vxor.u32 %v7257, 2147483648
  %v7268 = vsel %vm7266, %v7267, %v7258
  %v7269 = vsel %vm7262, %v7265, %v7268
  %v7270 = vsel %vm7259, nan, %v7269
  %v7271 = vand.u32 2147483647, %v5710
  %vm7272 = vcmp.le.f32.partialorder %v7271, 0.7853982
  %vm7273 = vcmp.lt.s32.totalorder %v5710, 0
  %v7274 = vand.u32 %v5710, 2139095040
  %v7275 = vshrl.u32 %v7274, 23
  %v7276 = vsub.s32 %v7275, 127
  %v7277 = vand.u32 2147483647, %v5710
  %v7278 = vand.u32 %v7277, 8388607
  %v7279 = vor.u32 %v7278, 8388608
  %v7280 = vsub.s32 0, %v7279
  %v7281 = vadd.s32 %v7276, 1
  %vm7282 = vcmp.gt.s32.totalorder %v7281, 0
  %v7283 = vsel %vm7282, %v7281, 0
  %v7284 = vshrl.u32 %v7283, 5
  %v7285 = vand.u32 %v7283, 31
  %v7286 = vsub.s32 32, %v7285
  %v7287 = vshrl.u32 683565275, %v7286
  %v7288 = vshll.u32 683565275, %v7285
  %v7289 = vshrl.u32 2475754826, %v7286
  %v7290 = vor.u32 %v7288, %v7289
  %v7291 = vshll.u32 2475754826, %v7285
  %v7292 = vshrl.u32 2131351028, %v7286
  %v7293 = vor.u32 %v7291, %v7292
  %v7294 = vshll.u32 2131351028, %v7285
  %v7295 = vshrl.u32 2102212464, %v7286
  %v7296 = vor.u32 %v7294, %v7295
  %v7297 = vshll.u32 2102212464, %v7285
  %v7298 = vshrl.u32 920167782, %v7286
  %v7299 = vor.u32 %v7297, %v7298
  %v7300 = vshll.u32 920167782, %v7285
  %v7301 = vshrl.u32 1326507024, %v7286
  %v7302 = vor.u32 %v7300, %v7301
  %vm7303 = vcmp.lt.s32.totalorder %v7284, 1
  %vm7304 = vcmp.lt.s32.totalorder %v7284, 2
  %vm7305 = vcmp.lt.s32.totalorder %v7284, 3
  %vm7306 = vcmp.lt.s32.totalorder %v7284, 4
  %v7307 = vsel %vm7303, %v7287, %v7290
  %v7308 = vsel %vm7306, %v7296, 2102212464
  %v7309 = vsel %vm7305, %v7293, %v7308
  %v7310 = vsel %vm7304, %v7307, %v7309
  %v7311 = vsel %vm7303, %v7290, %v7293
  %v7312 = vsel %vm7306, %v7299, 920167782
  %v7313 = vsel %vm7305, %v7296, %v7312
  %v7314 = vsel %vm7304, %v7311, %v7313
  %v7315 = vsel %vm7303, %v7293, %v7296
  %v7316 = vsel %vm7306, %v7302, 1326507024
  %v7317 = vsel %vm7305, %v7299, %v7316
  %v7318 = vsel %vm7304, %v7315, %v7317
  %v7319 = vshll.u32 %v7279, 8
  %v7320 = vmul.u32.u64.compose %v7319, %v7318
  %v7321 = vextract.low.u32 %v7320
  %v7322 = vextract.high.u32 %v7320
  %v7323 = vmul.u32.u64.compose %v7319, %v7314
  %v7324 = vextract.low.u32 %v7323
  %v7325 = vextract.high.u32 %v7323
  %v7326 = vmul.u32 %v7319, %v7310
  %v7327 = vadd.s32 %v7322, %v7324
  %vm7328 = vc.u32 %v7322, %v7324
  %v7329 = vadd.s32 %v7325, 1
  %v7330 = vsel %vm7328, %v7329, %v7325
  %v7331 = vadd.s32 %v7326, %v7330
  %v7332 = vadd.s32 %v7331, 536870912
  %v7333 = vshrl.u32 %v7332, 30
  %v7334 = vshll.u32 %v7333, 30
  %v7335 = vsub.s32 %v7331, %v7334
  %vm7336 = vcmp.lt.s32.totalorder %v7335, 0
  %v7337 = vsub.s32 0, %v7335
  %v7338 = vsel %vm7336, %v7337, %v7335
  %v7339 = vclz %v7338
  %v7340 = vsub.s32 %v7339, 2
  %vm7341 = vcmp.gt.s32.totalorder 0, %v7340
  %v7342 = vsel %vm7341, 0, %v7340
  %v7343 = vsub.s32 32, %v7342
  %v7344 = vshll.u32 %v7335, %v7342
  %v7345 = vshrl.u32 %v7327, %v7343
  %v7346 = vor.u32 %v7344, %v7345
  %v7347 = vsub.s32 4294967266, %v7342
  %v7348 = vadd.s32 %v7347, 127
  %v7349 = vshll.u32 %v7348, 23
  %v7350 = vor.u32 4788187, %v7349
  %v7351 = vand.u32 2147483647, %v7350
  %v7353 = vcvt.s32.f32 %v7346
  %v7354 = vmul.f32 %v7353, %v7351
  %v7355 = vxor.u32 %v7354, 2147483648
  %v7356 = vsel %vm7273, %v7355, %v7354
  %v7357 = vsub.s32 4, %v7333
  %v7358 = vsel %vm7273, %v7357, %v7333
  %v7359 = vsel %vm7272, %v5710, %v7356
  %v7360 = vsel %vm7272, 0, %v7358
  %v7361 = vcosq.f32.pop %v7359
  %v7362 = vsinq.f32.pop %v7359
  %vm7363 = vweird.f32 %v5710
  %v7364 = vadd.s32 %v7360, 3
  %v7365 = vand.u32 %v7364, 3
  %vm7366 = vcmp.lt.s32.totalorder %v7365, 2
  %vm7367 = vcmp.eq.s32.totalorder %v7365, 0
  %v7368 = vxor.u32 %v7362, 2147483648
  %v7369 = vsel %vm7367, %v7361, %v7368
  %vm7370 = vcmp.eq.s32.totalorder %v7365, 2
  %v7371 = vxor.u32 %v7361, 2147483648
  %v7372 = vsel %vm7370, %v7371, %v7362
  %v7373 = vsel %vm7366, %v7369, %v7372
  %v7374 = vsel %vm7363, nan, %v7373
  %v7375 = vand.u32 2147483647, %v5716
  %vm7376 = vcmp.le.f32.partialorder %v7375, 0.7853982
  %vm7377 = vcmp.lt.s32.totalorder %v5716, 0
  %v7378 = vand.u32 %v5716, 2139095040
  %v7379 = vshrl.u32 %v7378, 23
  %v7380 = vsub.s32 %v7379, 127
  %v7381 = vand.u32 2147483647, %v5716
  %v7382 = vand.u32 %v7381, 8388607
  %v7383 = vor.u32 %v7382, 8388608
  %v7384 = vsub.s32 0, %v7383
  %v7385 = vadd.s32 %v7380, 1
  %vm7386 = vcmp.gt.s32.totalorder %v7385, 0
  %v7387 = vsel %vm7386, %v7385, 0
  %v7388 = vshrl.u32 %v7387, 5
  %v7389 = vand.u32 %v7387, 31
  %v7390 = vsub.s32 32, %v7389
  %v7391 = vshrl.u32 683565275, %v7390
  %v7392 = vshll.u32 683565275, %v7389
  %v7393 = vshrl.u32 2475754826, %v7390
  %v7394 = vor.u32 %v7392, %v7393
  %v7395 = vshll.u32 2475754826, %v7389
  %v7396 = vshrl.u32 2131351028, %v7390
  %v7397 = vor.u32 %v7395, %v7396
  %v7398 = vshll.u32 2131351028, %v7389
  %v7399 = vshrl.u32 2102212464, %v7390
  %v7400 = vor.u32 %v7398, %v7399
  %v7401 = vshll.u32 2102212464, %v7389
  %v7402 = vshrl.u32 920167782, %v7390
  %v7403 = vor.u32 %v7401, %v7402
  %v7404 = vshll.u32 920167782, %v7389
  %v7405 = vshrl.u32 1326507024, %v7390
  %v7406 = vor.u32 %v7404, %v7405
  %vm7407 = vcmp.lt.s32.totalorder %v7388, 1
  %vm7408 = vcmp.lt.s32.totalorder %v7388, 2
  %vm7409 = vcmp.lt.s32.totalorder %v7388, 3
  %vm7410 = vcmp.lt.s32.totalorder %v7388, 4
  %v7411 = vsel %vm7407, %v7391, %v7394
  %v7412 = vsel %vm7410, %v7400, 2102212464
  %v7413 = vsel %vm7409, %v7397, %v7412
  %v7414 = vsel %vm7408, %v7411, %v7413
  %v7415 = vsel %vm7407, %v7394, %v7397
  %v7416 = vsel %vm7410, %v7403, 920167782
  %v7417 = vsel %vm7409, %v7400, %v7416
  %v7418 = vsel %vm7408, %v7415, %v7417
  %v7419 = vsel %vm7407, %v7397, %v7400
  %v7420 = vsel %vm7410, %v7406, 1326507024
  %v7421 = vsel %vm7409, %v7403, %v7420
  %v7422 = vsel %vm7408, %v7419, %v7421
  %v7423 = vshll.u32 %v7383, 8
  %v7424 = vmul.u32.u64.compose %v7423, %v7422
  %v7425 = vextract.low.u32 %v7424
  %v7426 = vextract.high.u32 %v7424
  %v7427 = vmul.u32.u64.compose %v7423, %v7418
  %v7428 = vextract.low.u32 %v7427
  %v7429 = vextract.high.u32 %v7427
  %v7430 = vmul.u32 %v7423, %v7414
  %v7431 = vadd.s32 %v7426, %v7428
  %vm7432 = vc.u32 %v7426, %v7428
  %v7433 = vadd.s32 %v7429, 1
  %v7434 = vsel %vm7432, %v7433, %v7429
  %v7435 = vadd.s32 %v7430, %v7434
  %v7436 = vadd.s32 %v7435, 536870912
  %v7437 = vshrl.u32 %v7436, 30
  %v7438 = vshll.u32 %v7437, 30
  %v7439 = vsub.s32 %v7435, %v7438
  %vm7440 = vcmp.lt.s32.totalorder %v7439, 0
  %v7441 = vsub.s32 0, %v7439
  %v7442 = vsel %vm7440, %v7441, %v7439
  %v7443 = vclz %v7442
  %v7444 = vsub.s32 %v7443, 2
  %vm7445 = vcmp.gt.s32.totalorder 0, %v7444
  %v7446 = vsel %vm7445, 0, %v7444
  %v7447 = vsub.s32 32, %v7446
  %v7448 = vshll.u32 %v7439, %v7446
  %v7449 = vshrl.u32 %v7431, %v7447
  %v7450 = vor.u32 %v7448, %v7449
  %v7451 = vsub.s32 4294967266, %v7446
  %v7452 = vadd.s32 %v7451, 127
  %v7453 = vshll.u32 %v7452, 23
  %v7454 = vor.u32 4788187, %v7453
  %v7455 = vand.u32 2147483647, %v7454
  %v7457 = vcvt.s32.f32 %v7450
  %v7458 = vmul.f32 %v7457, %v7455
  %v7459 = vxor.u32 %v7458, 2147483648
  %v7460 = vsel %vm7377, %v7459, %v7458
  %v7461 = vsub.s32 4, %v7437
  %v7462 = vsel %vm7377, %v7461, %v7437
  %v7463 = vsel %vm7376, %v5716, %v7460
  %v7464 = vsel %vm7376, 0, %v7462
  %v7465 = vcosq.f32.pop %v7463
  %v7466 = vsinq.f32.pop %v7463
  %vm7467 = vweird.f32 %v5716
  %v7468 = vadd.s32 %v7464, 3
  %v7469 = vand.u32 %v7468, 3
  %vm7470 = vcmp.lt.s32.totalorder %v7469, 2
  %vm7471 = vcmp.eq.s32.totalorder %v7469, 0
  %v7472 = vxor.u32 %v7466, 2147483648
  %v7473 = vsel %vm7471, %v7465, %v7472
  %vm7474 = vcmp.eq.s32.totalorder %v7469, 2
  %v7475 = vxor.u32 %v7465, 2147483648
  %v7476 = vsel %vm7474, %v7475, %v7466
  %v7477 = vsel %vm7470, %v7473, %v7476
  %v7478 = vsel %vm7467, nan, %v7477
  %v7479 = vand.u32 2147483647, %v5722
  %vm7480 = vcmp.le.f32.partialorder %v7479, 0.7853982
  %vm7481 = vcmp.lt.s32.totalorder %v5722, 0
  %v7482 = vand.u32 %v5722, 2139095040
  %v7483 = vshrl.u32 %v7482, 23
  %v7484 = vsub.s32 %v7483, 127
  %v7485 = vand.u32 2147483647, %v5722
  %v7486 = vand.u32 %v7485, 8388607
  %v7487 = vor.u32 %v7486, 8388608
  %v7488 = vsub.s32 0, %v7487
  %v7489 = vadd.s32 %v7484, 1
  %vm7490 = vcmp.gt.s32.totalorder %v7489, 0
  %v7491 = vsel %vm7490, %v7489, 0
  %v7492 = vshrl.u32 %v7491, 5
  %v7493 = vand.u32 %v7491, 31
  %v7494 = vsub.s32 32, %v7493
  %v7495 = vshrl.u32 683565275, %v7494
  %v7496 = vshll.u32 683565275, %v7493
  %v7497 = vshrl.u32 2475754826, %v7494
  %v7498 = vor.u32 %v7496, %v7497
  %v7499 = vshll.u32 2475754826, %v7493
  %v7500 = vshrl.u32 2131351028, %v7494
  %v7501 = vor.u32 %v7499, %v7500
  %v7502 = vshll.u32 2131351028, %v7493
  %v7503 = vshrl.u32 2102212464, %v7494
  %v7504 = vor.u32 %v7502, %v7503
  %v7505 = vshll.u32 2102212464, %v7493
  %v7506 = vshrl.u32 920167782, %v7494
  %v7507 = vor.u32 %v7505, %v7506
  %v7508 = vshll.u32 920167782, %v7493
  %v7509 = vshrl.u32 1326507024, %v7494
  %v7510 = vor.u32 %v7508, %v7509
  %vm7511 = vcmp.lt.s32.totalorder %v7492, 1
  %vm7512 = vcmp.lt.s32.totalorder %v7492, 2
  %vm7513 = vcmp.lt.s32.totalorder %v7492, 3
  %vm7514 = vcmp.lt.s32.totalorder %v7492, 4
  %v7515 = vsel %vm7511, %v7495, %v7498
  %v7516 = vsel %vm7514, %v7504, 2102212464
  %v7517 = vsel %vm7513, %v7501, %v7516
  %v7518 = vsel %vm7512, %v7515, %v7517
  %v7519 = vsel %vm7511, %v7498, %v7501
  %v7520 = vsel %vm7514, %v7507, 920167782
  %v7521 = vsel %vm7513, %v7504, %v7520
  %v7522 = vsel %vm7512, %v7519, %v7521
  %v7523 = vsel %vm7511, %v7501, %v7504
  %v7524 = vsel %vm7514, %v7510, 1326507024
  %v7525 = vsel %vm7513, %v7507, %v7524
  %v7526 = vsel %vm7512, %v7523, %v7525
  %v7527 = vshll.u32 %v7487, 8
  %v7528 = vmul.u32.u64.compose %v7527, %v7526
  %v7529 = vextract.low.u32 %v7528
  %v7530 = vextract.high.u32 %v7528
  %v7531 = vmul.u32.u64.compose %v7527, %v7522
  %v7532 = vextract.low.u32 %v7531
  %v7533 = vextract.high.u32 %v7531
  %v7534 = vmul.u32 %v7527, %v7518
  %v7535 = vadd.s32 %v7530, %v7532
  %vm7536 = vc.u32 %v7530, %v7532
  %v7537 = vadd.s32 %v7533, 1
  %v7538 = vsel %vm7536, %v7537, %v7533
  %v7539 = vadd.s32 %v7534, %v7538
  %v7540 = vadd.s32 %v7539, 536870912
  %v7541 = vshrl.u32 %v7540, 30
  %v7542 = vshll.u32 %v7541, 30
  %v7543 = vsub.s32 %v7539, %v7542
  %vm7544 = vcmp.lt.s32.totalorder %v7543, 0
  %v7545 = vsub.s32 0, %v7543
  %v7546 = vsel %vm7544, %v7545, %v7543
  %v7547 = vclz %v7546
  %v7548 = vsub.s32 %v7547, 2
  %vm7549 = vcmp.gt.s32.totalorder 0, %v7548
  %v7550 = vsel %vm7549, 0, %v7548
  %v7551 = vsub.s32 32, %v7550
  %v7552 = vshll.u32 %v7543, %v7550
  %v7553 = vshrl.u32 %v7535, %v7551
  %v7554 = vor.u32 %v7552, %v7553
  %v7555 = vsub.s32 4294967266, %v7550
  %v7556 = vadd.s32 %v7555, 127
  %v7557 = vshll.u32 %v7556, 23
  %v7558 = vor.u32 4788187, %v7557
  %v7559 = vand.u32 2147483647, %v7558
  %v7561 = vcvt.s32.f32 %v7554
  %v7562 = vmul.f32 %v7561, %v7559
  %v7563 = vxor.u32 %v7562, 2147483648
  %v7564 = vsel %vm7481, %v7563, %v7562
  %v7565 = vsub.s32 4, %v7541
  %v7566 = vsel %vm7481, %v7565, %v7541
  %v7567 = vsel %vm7480, %v5722, %v7564
  %v7568 = vsel %vm7480, 0, %v7566
  %v7569 = vcosq.f32.pop %v7567
  %v7570 = vsinq.f32.pop %v7567
  %vm7571 = vweird.f32 %v5722
  %v7572 = vadd.s32 %v7568, 3
  %v7573 = vand.u32 %v7572, 3
  %vm7574 = vcmp.lt.s32.totalorder %v7573, 2
  %vm7575 = vcmp.eq.s32.totalorder %v7573, 0
  %v7576 = vxor.u32 %v7570, 2147483648
  %v7577 = vsel %vm7575, %v7569, %v7576
  %vm7578 = vcmp.eq.s32.totalorder %v7573, 2
  %v7579 = vxor.u32 %v7569, 2147483648
  %v7580 = vsel %vm7578, %v7579, %v7570
  %v7581 = vsel %vm7574, %v7577, %v7580
  %v7582 = vsel %vm7571, nan, %v7581
  %v7583 = vand.u32 2147483647, %v5728
  %vm7584 = vcmp.le.f32.partialorder %v7583, 0.7853982
  %vm7585 = vcmp.lt.s32.totalorder %v5728, 0
  %v7586 = vand.u32 %v5728, 2139095040
  %v7587 = vshrl.u32 %v7586, 23
  %v7588 = vsub.s32 %v7587, 127
  %v7589 = vand.u32 2147483647, %v5728
  %v7590 = vand.u32 %v7589, 8388607
  %v7591 = vor.u32 %v7590, 8388608
  %v7592 = vsub.s32 0, %v7591
  %v7593 = vadd.s32 %v7588, 1
  %vm7594 = vcmp.gt.s32.totalorder %v7593, 0
  %v7595 = vsel %vm7594, %v7593, 0
  %v7596 = vshrl.u32 %v7595, 5
  %v7597 = vand.u32 %v7595, 31
  %v7598 = vsub.s32 32, %v7597
  %v7599 = vshrl.u32 683565275, %v7598
  %v7600 = vshll.u32 683565275, %v7597
  %v7601 = vshrl.u32 2475754826, %v7598
  %v7602 = vor.u32 %v7600, %v7601
  %v7603 = vshll.u32 2475754826, %v7597
  %v7604 = vshrl.u32 2131351028, %v7598
  %v7605 = vor.u32 %v7603, %v7604
  %v7606 = vshll.u32 2131351028, %v7597
  %v7607 = vshrl.u32 2102212464, %v7598
  %v7608 = vor.u32 %v7606, %v7607
  %v7609 = vshll.u32 2102212464, %v7597
  %v7610 = vshrl.u32 920167782, %v7598
  %v7611 = vor.u32 %v7609, %v7610
  %v7612 = vshll.u32 920167782, %v7597
  %v7613 = vshrl.u32 1326507024, %v7598
  %v7614 = vor.u32 %v7612, %v7613
  %vm7615 = vcmp.lt.s32.totalorder %v7596, 1
  %vm7616 = vcmp.lt.s32.totalorder %v7596, 2
  %vm7617 = vcmp.lt.s32.totalorder %v7596, 3
  %vm7618 = vcmp.lt.s32.totalorder %v7596, 4
  %v7619 = vsel %vm7615, %v7599, %v7602
  %v7620 = vsel %vm7618, %v7608, 2102212464
  %v7621 = vsel %vm7617, %v7605, %v7620
  %v7622 = vsel %vm7616, %v7619, %v7621
  %v7623 = vsel %vm7615, %v7602, %v7605
  %v7624 = vsel %vm7618, %v7611, 920167782
  %v7625 = vsel %vm7617, %v7608, %v7624
  %v7626 = vsel %vm7616, %v7623, %v7625
  %v7627 = vsel %vm7615, %v7605, %v7608
  %v7628 = vsel %vm7618, %v7614, 1326507024
  %v7629 = vsel %vm7617, %v7611, %v7628
  %v7630 = vsel %vm7616, %v7627, %v7629
  %v7631 = vshll.u32 %v7591, 8
  %v7632 = vmul.u32.u64.compose %v7631, %v7630
  %v7633 = vextract.low.u32 %v7632
  %v7634 = vextract.high.u32 %v7632
  %v7635 = vmul.u32.u64.compose %v7631, %v7626
  %v7636 = vextract.low.u32 %v7635
  %v7637 = vextract.high.u32 %v7635
  %v7638 = vmul.u32 %v7631, %v7622
  %v7639 = vadd.s32 %v7634, %v7636
  %vm7640 = vc.u32 %v7634, %v7636
  %v7641 = vadd.s32 %v7637, 1
  %v7642 = vsel %vm7640, %v7641, %v7637
  %v7643 = vadd.s32 %v7638, %v7642
  %v7644 = vadd.s32 %v7643, 536870912
  %v7645 = vshrl.u32 %v7644, 30
  %v7646 = vshll.u32 %v7645, 30
  %v7647 = vsub.s32 %v7643, %v7646
  %vm7648 = vcmp.lt.s32.totalorder %v7647, 0
  %v7649 = vsub.s32 0, %v7647
  %v7650 = vsel %vm7648, %v7649, %v7647
  %v7651 = vclz %v7650
  %v7652 = vsub.s32 %v7651, 2
  %vm7653 = vcmp.gt.s32.totalorder 0, %v7652
  %v7654 = vsel %vm7653, 0, %v7652
  %v7655 = vsub.s32 32, %v7654
  %v7656 = vshll.u32 %v7647, %v7654
  %v7657 = vshrl.u32 %v7639, %v7655
  %v7658 = vor.u32 %v7656, %v7657
  %v7659 = vsub.s32 4294967266, %v7654
  %v7660 = vadd.s32 %v7659, 127
  %v7661 = vshll.u32 %v7660, 23
  %v7662 = vor.u32 4788187, %v7661
  %v7663 = vand.u32 2147483647, %v7662
  %v7665 = vcvt.s32.f32 %v7658
  %v7666 = vmul.f32 %v7665, %v7663
  %v7667 = vxor.u32 %v7666, 2147483648
  %v7668 = vsel %vm7585, %v7667, %v7666
  %v7669 = vsub.s32 4, %v7645
  %v7670 = vsel %vm7585, %v7669, %v7645
  %v7671 = vsel %vm7584, %v5728, %v7668
  %v7672 = vsel %vm7584, 0, %v7670
  %v7673 = vcosq.f32.pop %v7671
  %v7674 = vsinq.f32.pop %v7671
  %vm7675 = vweird.f32 %v5728
  %v7676 = vadd.s32 %v7672, 3
  %v7677 = vand.u32 %v7676, 3
  %vm7678 = vcmp.lt.s32.totalorder %v7677, 2
  %vm7679 = vcmp.eq.s32.totalorder %v7677, 0
  %v7680 = vxor.u32 %v7674, 2147483648
  %v7681 = vsel %vm7679, %v7673, %v7680
  %vm7682 = vcmp.eq.s32.totalorder %v7677, 2
  %v7683 = vxor.u32 %v7673, 2147483648
  %v7684 = vsel %vm7682, %v7683, %v7674
  %v7685 = vsel %vm7678, %v7681, %v7684
  %v7686 = vsel %vm7675, nan, %v7685
  %v7687 = vand.u32 2147483647, %v5734
  %vm7688 = vcmp.le.f32.partialorder %v7687, 0.7853982
  %vm7689 = vcmp.lt.s32.totalorder %v5734, 0
  %v7690 = vand.u32 %v5734, 2139095040
  %v7691 = vshrl.u32 %v7690, 23
  %v7692 = vsub.s32 %v7691, 127
  %v7693 = vand.u32 2147483647, %v5734
  %v7694 = vand.u32 %v7693, 8388607
  %v7695 = vor.u32 %v7694, 8388608
  %v7696 = vsub.s32 0, %v7695
  %v7697 = vadd.s32 %v7692, 1
  %vm7698 = vcmp.gt.s32.totalorder %v7697, 0
  %v7699 = vsel %vm7698, %v7697, 0
  %v7700 = vshrl.u32 %v7699, 5
  %v7701 = vand.u32 %v7699, 31
  %v7702 = vsub.s32 32, %v7701
  %v7703 = vshrl.u32 683565275, %v7702
  %v7704 = vshll.u32 683565275, %v7701
  %v7705 = vshrl.u32 2475754826, %v7702
  %v7706 = vor.u32 %v7704, %v7705
  %v7707 = vshll.u32 2475754826, %v7701
  %v7708 = vshrl.u32 2131351028, %v7702
  %v7709 = vor.u32 %v7707, %v7708
  %v7710 = vshll.u32 2131351028, %v7701
  %v7711 = vshrl.u32 2102212464, %v7702
  %v7712 = vor.u32 %v7710, %v7711
  %v7713 = vshll.u32 2102212464, %v7701
  %v7714 = vshrl.u32 920167782, %v7702
  %v7715 = vor.u32 %v7713, %v7714
  %v7716 = vshll.u32 920167782, %v7701
  %v7717 = vshrl.u32 1326507024, %v7702
  %v7718 = vor.u32 %v7716, %v7717
  %vm7719 = vcmp.lt.s32.totalorder %v7700, 1
  %vm7720 = vcmp.lt.s32.totalorder %v7700, 2
  %vm7721 = vcmp.lt.s32.totalorder %v7700, 3
  %vm7722 = vcmp.lt.s32.totalorder %v7700, 4
  %v7723 = vsel %vm7719, %v7703, %v7706
  %v7724 = vsel %vm7722, %v7712, 2102212464
  %v7725 = vsel %vm7721, %v7709, %v7724
  %v7726 = vsel %vm7720, %v7723, %v7725
  %v7727 = vsel %vm7719, %v7706, %v7709
  %v7728 = vsel %vm7722, %v7715, 920167782
  %v7729 = vsel %vm7721, %v7712, %v7728
  %v7730 = vsel %vm7720, %v7727, %v7729
  %v7731 = vsel %vm7719, %v7709, %v7712
  %v7732 = vsel %vm7722, %v7718, 1326507024
  %v7733 = vsel %vm7721, %v7715, %v7732
  %v7734 = vsel %vm7720, %v7731, %v7733
  %v7735 = vshll.u32 %v7695, 8
  %v7736 = vmul.u32.u64.compose %v7735, %v7734
  %v7737 = vextract.low.u32 %v7736
  %v7738 = vextract.high.u32 %v7736
  %v7739 = vmul.u32.u64.compose %v7735, %v7730
  %v7740 = vextract.low.u32 %v7739
  %v7741 = vextract.high.u32 %v7739
  %v7742 = vmul.u32 %v7735, %v7726
  %v7743 = vadd.s32 %v7738, %v7740
  %vm7744 = vc.u32 %v7738, %v7740
  %v7745 = vadd.s32 %v7741, 1
  %v7746 = vsel %vm7744, %v7745, %v7741
  %v7747 = vadd.s32 %v7742, %v7746
  %v7748 = vadd.s32 %v7747, 536870912
  %v7749 = vshrl.u32 %v7748, 30
  %v7750 = vshll.u32 %v7749, 30
  %v7751 = vsub.s32 %v7747, %v7750
  %vm7752 = vcmp.lt.s32.totalorder %v7751, 0
  %v7753 = vsub.s32 0, %v7751
  %v7754 = vsel %vm7752, %v7753, %v7751
  %v7755 = vclz %v7754
  %v7756 = vsub.s32 %v7755, 2
  %vm7757 = vcmp.gt.s32.totalorder 0, %v7756
  %v7758 = vsel %vm7757, 0, %v7756
  %v7759 = vsub.s32 32, %v7758
  %v7760 = vshll.u32 %v7751, %v7758
  %v7761 = vshrl.u32 %v7743, %v7759
  %v7762 = vor.u32 %v7760, %v7761
  %v7763 = vsub.s32 4294967266, %v7758
  %v7764 = vadd.s32 %v7763, 127
  %v7765 = vshll.u32 %v7764, 23
  %v7766 = vor.u32 4788187, %v7765
  %v7767 = vand.u32 2147483647, %v7766
  %v7769 = vcvt.s32.f32 %v7762
  %v7770 = vmul.f32 %v7769, %v7767
  %v7771 = vxor.u32 %v7770, 2147483648
  %v7772 = vsel %vm7689, %v7771, %v7770
  %v7773 = vsub.s32 4, %v7749
  %v7774 = vsel %vm7689, %v7773, %v7749
  %v7775 = vsel %vm7688, %v5734, %v7772
  %v7776 = vsel %vm7688, 0, %v7774
  %v7777 = vcosq.f32.pop %v7775
  %v7778 = vsinq.f32.pop %v7775
  %vm7779 = vweird.f32 %v5734
  %v7780 = vadd.s32 %v7776, 3
  %v7781 = vand.u32 %v7780, 3
  %vm7782 = vcmp.lt.s32.totalorder %v7781, 2
  %vm7783 = vcmp.eq.s32.totalorder %v7781, 0
  %v7784 = vxor.u32 %v7778, 2147483648
  %v7785 = vsel %vm7783, %v7777, %v7784
  %vm7786 = vcmp.eq.s32.totalorder %v7781, 2
  %v7787 = vxor.u32 %v7777, 2147483648
  %v7788 = vsel %vm7786, %v7787, %v7778
  %v7789 = vsel %vm7782, %v7785, %v7788
  %v7790 = vsel %vm7779, nan, %v7789
  %v7791 = vand.u32 2147483647, %v5740
  %vm7792 = vcmp.le.f32.partialorder %v7791, 0.7853982
  %vm7793 = vcmp.lt.s32.totalorder %v5740, 0
  %v7794 = vand.u32 %v5740, 2139095040
  %v7795 = vshrl.u32 %v7794, 23
  %v7796 = vsub.s32 %v7795, 127
  %v7797 = vand.u32 2147483647, %v5740
  %v7798 = vand.u32 %v7797, 8388607
  %v7799 = vor.u32 %v7798, 8388608
  %v7800 = vsub.s32 0, %v7799
  %v7801 = vadd.s32 %v7796, 1
  %vm7802 = vcmp.gt.s32.totalorder %v7801, 0
  %v7803 = vsel %vm7802, %v7801, 0
  %v7804 = vshrl.u32 %v7803, 5
  %v7805 = vand.u32 %v7803, 31
  %v7806 = vsub.s32 32, %v7805
  %v7807 = vshrl.u32 683565275, %v7806
  %v7808 = vshll.u32 683565275, %v7805
  %v7809 = vshrl.u32 2475754826, %v7806
  %v7810 = vor.u32 %v7808, %v7809
  %v7811 = vshll.u32 2475754826, %v7805
  %v7812 = vshrl.u32 2131351028, %v7806
  %v7813 = vor.u32 %v7811, %v7812
  %v7814 = vshll.u32 2131351028, %v7805
  %v7815 = vshrl.u32 2102212464, %v7806
  %v7816 = vor.u32 %v7814, %v7815
  %v7817 = vshll.u32 2102212464, %v7805
  %v7818 = vshrl.u32 920167782, %v7806
  %v7819 = vor.u32 %v7817, %v7818
  %v7820 = vshll.u32 920167782, %v7805
  %v7821 = vshrl.u32 1326507024, %v7806
  %v7822 = vor.u32 %v7820, %v7821
  %vm7823 = vcmp.lt.s32.totalorder %v7804, 1
  %vm7824 = vcmp.lt.s32.totalorder %v7804, 2
  %vm7825 = vcmp.lt.s32.totalorder %v7804, 3
  %vm7826 = vcmp.lt.s32.totalorder %v7804, 4
  %v7827 = vsel %vm7823, %v7807, %v7810
  %v7828 = vsel %vm7826, %v7816, 2102212464
  %v7829 = vsel %vm7825, %v7813, %v7828
  %v7830 = vsel %vm7824, %v7827, %v7829
  %v7831 = vsel %vm7823, %v7810, %v7813
  %v7832 = vsel %vm7826, %v7819, 920167782
  %v7833 = vsel %vm7825, %v7816, %v7832
  %v7834 = vsel %vm7824, %v7831, %v7833
  %v7835 = vsel %vm7823, %v7813, %v7816
  %v7836 = vsel %vm7826, %v7822, 1326507024
  %v7837 = vsel %vm7825, %v7819, %v7836
  %v7838 = vsel %vm7824, %v7835, %v7837
  %v7839 = vshll.u32 %v7799, 8
  %v7840 = vmul.u32.u64.compose %v7839, %v7838
  %v7841 = vextract.low.u32 %v7840
  %v7842 = vextract.high.u32 %v7840
  %v7843 = vmul.u32.u64.compose %v7839, %v7834
  %v7844 = vextract.low.u32 %v7843
  %v7845 = vextract.high.u32 %v7843
  %v7846 = vmul.u32 %v7839, %v7830
  %v7847 = vadd.s32 %v7842, %v7844
  %vm7848 = vc.u32 %v7842, %v7844
  %v7849 = vadd.s32 %v7845, 1
  %v7850 = vsel %vm7848, %v7849, %v7845
  %v7851 = vadd.s32 %v7846, %v7850
  %v7852 = vadd.s32 %v7851, 536870912
  %v7853 = vshrl.u32 %v7852, 30
  %v7854 = vshll.u32 %v7853, 30
  %v7855 = vsub.s32 %v7851, %v7854
  %vm7856 = vcmp.lt.s32.totalorder %v7855, 0
  %v7857 = vsub.s32 0, %v7855
  %v7858 = vsel %vm7856, %v7857, %v7855
  %v7859 = vclz %v7858
  %v7860 = vsub.s32 %v7859, 2
  %vm7861 = vcmp.gt.s32.totalorder 0, %v7860
  %v7862 = vsel %vm7861, 0, %v7860
  %v7863 = vsub.s32 32, %v7862
  %v7864 = vshll.u32 %v7855, %v7862
  %v7865 = vshrl.u32 %v7847, %v7863
  %v7866 = vor.u32 %v7864, %v7865
  %v7867 = vsub.s32 4294967266, %v7862
  %v7868 = vadd.s32 %v7867, 127
  %v7869 = vshll.u32 %v7868, 23
  %v7870 = vor.u32 4788187, %v7869
  %v7871 = vand.u32 2147483647, %v7870
  %v7873 = vcvt.s32.f32 %v7866
  %v7874 = vmul.f32 %v7873, %v7871
  %v7875 = vxor.u32 %v7874, 2147483648
  %v7876 = vsel %vm7793, %v7875, %v7874
  %v7877 = vsub.s32 4, %v7853
  %v7878 = vsel %vm7793, %v7877, %v7853
  %v7879 = vsel %vm7792, %v5740, %v7876
  %v7880 = vsel %vm7792, 0, %v7878
  %v7881 = vcosq.f32.pop %v7879
  %v7882 = vsinq.f32.pop %v7879
  %vm7883 = vweird.f32 %v5740
  %v7884 = vadd.s32 %v7880, 3
  %v7885 = vand.u32 %v7884, 3
  %vm7886 = vcmp.lt.s32.totalorder %v7885, 2
  %vm7887 = vcmp.eq.s32.totalorder %v7885, 0
  %v7888 = vxor.u32 %v7882, 2147483648
  %v7889 = vsel %vm7887, %v7881, %v7888
  %vm7890 = vcmp.eq.s32.totalorder %v7885, 2
  %v7891 = vxor.u32 %v7881, 2147483648
  %v7892 = vsel %vm7890, %v7891, %v7882
  %v7893 = vsel %vm7886, %v7889, %v7892
  %v7894 = vsel %vm7883, nan, %v7893
  %v7895 = vand.u32 2147483647, %v5746
  %vm7896 = vcmp.le.f32.partialorder %v7895, 0.7853982
  %vm7897 = vcmp.lt.s32.totalorder %v5746, 0
  %v7898 = vand.u32 %v5746, 2139095040
  %v7899 = vshrl.u32 %v7898, 23
  %v7900 = vsub.s32 %v7899, 127
  %v7901 = vand.u32 2147483647, %v5746
  %v7902 = vand.u32 %v7901, 8388607
  %v7903 = vor.u32 %v7902, 8388608
  %v7904 = vsub.s32 0, %v7903
  %v7905 = vadd.s32 %v7900, 1
  %vm7906 = vcmp.gt.s32.totalorder %v7905, 0
  %v7907 = vsel %vm7906, %v7905, 0
  %v7908 = vshrl.u32 %v7907, 5
  %v7909 = vand.u32 %v7907, 31
  %v7910 = vsub.s32 32, %v7909
  %v7911 = vshrl.u32 683565275, %v7910
  %v7912 = vshll.u32 683565275, %v7909
  %v7913 = vshrl.u32 2475754826, %v7910
  %v7914 = vor.u32 %v7912, %v7913
  %v7915 = vshll.u32 2475754826, %v7909
  %v7916 = vshrl.u32 2131351028, %v7910
  %v7917 = vor.u32 %v7915, %v7916
  %v7918 = vshll.u32 2131351028, %v7909
  %v7919 = vshrl.u32 2102212464, %v7910
  %v7920 = vor.u32 %v7918, %v7919
  %v7921 = vshll.u32 2102212464, %v7909
  %v7922 = vshrl.u32 920167782, %v7910
  %v7923 = vor.u32 %v7921, %v7922
  %v7924 = vshll.u32 920167782, %v7909
  %v7925 = vshrl.u32 1326507024, %v7910
  %v7926 = vor.u32 %v7924, %v7925
  %vm7927 = vcmp.lt.s32.totalorder %v7908, 1
  %vm7928 = vcmp.lt.s32.totalorder %v7908, 2
  %vm7929 = vcmp.lt.s32.totalorder %v7908, 3
  %vm7930 = vcmp.lt.s32.totalorder %v7908, 4
  %v7931 = vsel %vm7927, %v7911, %v7914
  %v7932 = vsel %vm7930, %v7920, 2102212464
  %v7933 = vsel %vm7929, %v7917, %v7932
  %v7934 = vsel %vm7928, %v7931, %v7933
  %v7935 = vsel %vm7927, %v7914, %v7917
  %v7936 = vsel %vm7930, %v7923, 920167782
  %v7937 = vsel %vm7929, %v7920, %v7936
  %v7938 = vsel %vm7928, %v7935, %v7937
  %v7939 = vsel %vm7927, %v7917, %v7920
  %v7940 = vsel %vm7930, %v7926, 1326507024
  %v7941 = vsel %vm7929, %v7923, %v7940
  %v7942 = vsel %vm7928, %v7939, %v7941
  %v7943 = vshll.u32 %v7903, 8
  %v7944 = vmul.u32.u64.compose %v7943, %v7942
  %v7945 = vextract.low.u32 %v7944
  %v7946 = vextract.high.u32 %v7944
  %v7947 = vmul.u32.u64.compose %v7943, %v7938
  %v7948 = vextract.low.u32 %v7947
  %v7949 = vextract.high.u32 %v7947
  %v7950 = vmul.u32 %v7943, %v7934
  %v7951 = vadd.s32 %v7946, %v7948
  %vm7952 = vc.u32 %v7946, %v7948
  %v7953 = vadd.s32 %v7949, 1
  %v7954 = vsel %vm7952, %v7953, %v7949
  %v7955 = vadd.s32 %v7950, %v7954
  %v7956 = vadd.s32 %v7955, 536870912
  %v7957 = vshrl.u32 %v7956, 30
  %v7958 = vshll.u32 %v7957, 30
  %v7959 = vsub.s32 %v7955, %v7958
  %vm7960 = vcmp.lt.s32.totalorder %v7959, 0
  %v7961 = vsub.s32 0, %v7959
  %v7962 = vsel %vm7960, %v7961, %v7959
  %v7963 = vclz %v7962
  %v7964 = vsub.s32 %v7963, 2
  %vm7965 = vcmp.gt.s32.totalorder 0, %v7964
  %v7966 = vsel %vm7965, 0, %v7964
  %v7967 = vsub.s32 32, %v7966
  %v7968 = vshll.u32 %v7959, %v7966
  %v7969 = vshrl.u32 %v7951, %v7967
  %v7970 = vor.u32 %v7968, %v7969
  %v7971 = vsub.s32 4294967266, %v7966
  %v7972 = vadd.s32 %v7971, 127
  %v7973 = vshll.u32 %v7972, 23
  %v7974 = vor.u32 4788187, %v7973
  %v7975 = vand.u32 2147483647, %v7974
  %v7977 = vcvt.s32.f32 %v7970
  %v7978 = vmul.f32 %v7977, %v7975
  %v7979 = vxor.u32 %v7978, 2147483648
  %v7980 = vsel %vm7897, %v7979, %v7978
  %v7981 = vsub.s32 4, %v7957
  %v7982 = vsel %vm7897, %v7981, %v7957
  %v7983 = vsel %vm7896, %v5746, %v7980
  %v7984 = vsel %vm7896, 0, %v7982
  %v7985 = vcosq.f32.pop %v7983
  %v7986 = vsinq.f32.pop %v7983
  %vm7987 = vweird.f32 %v5746
  %v7988 = vadd.s32 %v7984, 3
  %v7989 = vand.u32 %v7988, 3
  %vm7990 = vcmp.lt.s32.totalorder %v7989, 2
  %vm7991 = vcmp.eq.s32.totalorder %v7989, 0
  %v7992 = vxor.u32 %v7986, 2147483648
  %v7993 = vsel %vm7991, %v7985, %v7992
  %vm7994 = vcmp.eq.s32.totalorder %v7989, 2
  %v7995 = vxor.u32 %v7985, 2147483648
  %v7996 = vsel %vm7994, %v7995, %v7986
  %v7997 = vsel %vm7990, %v7993, %v7996
  %v7998 = vsel %vm7987, nan, %v7997
  %v7999 = vand.u32 2147483647, %v5752
  %vm8000 = vcmp.le.f32.partialorder %v7999, 0.7853982
  %vm8001 = vcmp.lt.s32.totalorder %v5752, 0
  %v8002 = vand.u32 %v5752, 2139095040
  %v8003 = vshrl.u32 %v8002, 23
  %v8004 = vsub.s32 %v8003, 127
  %v8005 = vand.u32 2147483647, %v5752
  %v8006 = vand.u32 %v8005, 8388607
  %v8007 = vor.u32 %v8006, 8388608
  %v8008 = vsub.s32 0, %v8007
  %v8009 = vadd.s32 %v8004, 1
  %vm8010 = vcmp.gt.s32.totalorder %v8009, 0
  %v8011 = vsel %vm8010, %v8009, 0
  %v8012 = vshrl.u32 %v8011, 5
  %v8013 = vand.u32 %v8011, 31
  %v8014 = vsub.s32 32, %v8013
  %v8015 = vshrl.u32 683565275, %v8014
  %v8016 = vshll.u32 683565275, %v8013
  %v8017 = vshrl.u32 2475754826, %v8014
  %v8018 = vor.u32 %v8016, %v8017
  %v8019 = vshll.u32 2475754826, %v8013
  %v8020 = vshrl.u32 2131351028, %v8014
  %v8021 = vor.u32 %v8019, %v8020
  %v8022 = vshll.u32 2131351028, %v8013
  %v8023 = vshrl.u32 2102212464, %v8014
  %v8024 = vor.u32 %v8022, %v8023
  %v8025 = vshll.u32 2102212464, %v8013
  %v8026 = vshrl.u32 920167782, %v8014
  %v8027 = vor.u32 %v8025, %v8026
  %v8028 = vshll.u32 920167782, %v8013
  %v8029 = vshrl.u32 1326507024, %v8014
  %v8030 = vor.u32 %v8028, %v8029
  %vm8031 = vcmp.lt.s32.totalorder %v8012, 1
  %vm8032 = vcmp.lt.s32.totalorder %v8012, 2
  %vm8033 = vcmp.lt.s32.totalorder %v8012, 3
  %vm8034 = vcmp.lt.s32.totalorder %v8012, 4
  %v8035 = vsel %vm8031, %v8015, %v8018
  %v8036 = vsel %vm8034, %v8024, 2102212464
  %v8037 = vsel %vm8033, %v8021, %v8036
  %v8038 = vsel %vm8032, %v8035, %v8037
  %v8039 = vsel %vm8031, %v8018, %v8021
  %v8040 = vsel %vm8034, %v8027, 920167782
  %v8041 = vsel %vm8033, %v8024, %v8040
  %v8042 = vsel %vm8032, %v8039, %v8041
  %v8043 = vsel %vm8031, %v8021, %v8024
  %v8044 = vsel %vm8034, %v8030, 1326507024
  %v8045 = vsel %vm8033, %v8027, %v8044
  %v8046 = vsel %vm8032, %v8043, %v8045
  %v8047 = vshll.u32 %v8007, 8
  %v8048 = vmul.u32.u64.compose %v8047, %v8046
  %v8049 = vextract.low.u32 %v8048
  %v8050 = vextract.high.u32 %v8048
  %v8051 = vmul.u32.u64.compose %v8047, %v8042
  %v8052 = vextract.low.u32 %v8051
  %v8053 = vextract.high.u32 %v8051
  %v8054 = vmul.u32 %v8047, %v8038
  %v8055 = vadd.s32 %v8050, %v8052
  %vm8056 = vc.u32 %v8050, %v8052
  %v8057 = vadd.s32 %v8053, 1
  %v8058 = vsel %vm8056, %v8057, %v8053
  %v8059 = vadd.s32 %v8054, %v8058
  %v8060 = vadd.s32 %v8059, 536870912
  %v8061 = vshrl.u32 %v8060, 30
  %v8062 = vshll.u32 %v8061, 30
  %v8063 = vsub.s32 %v8059, %v8062
  %vm8064 = vcmp.lt.s32.totalorder %v8063, 0
  %v8065 = vsub.s32 0, %v8063
  %v8066 = vsel %vm8064, %v8065, %v8063
  %v8067 = vclz %v8066
  %v8068 = vsub.s32 %v8067, 2
  %vm8069 = vcmp.gt.s32.totalorder 0, %v8068
  %v8070 = vsel %vm8069, 0, %v8068
  %v8071 = vsub.s32 32, %v8070
  %v8072 = vshll.u32 %v8063, %v8070
  %v8073 = vshrl.u32 %v8055, %v8071
  %v8074 = vor.u32 %v8072, %v8073
  %v8075 = vsub.s32 4294967266, %v8070
  %v8076 = vadd.s32 %v8075, 127
  %v8077 = vshll.u32 %v8076, 23
  %v8078 = vor.u32 4788187, %v8077
  %v8079 = vand.u32 2147483647, %v8078
  %v8081 = vcvt.s32.f32 %v8074
  %v8082 = vmul.f32 %v8081, %v8079
  %v8083 = vxor.u32 %v8082, 2147483648
  %v8084 = vsel %vm8001, %v8083, %v8082
  %v8085 = vsub.s32 4, %v8061
  %v8086 = vsel %vm8001, %v8085, %v8061
  %v8087 = vsel %vm8000, %v5752, %v8084
  %v8088 = vsel %vm8000, 0, %v8086
  %v8089 = vcosq.f32.pop %v8087
  %v8090 = vsinq.f32.pop %v8087
  %vm8091 = vweird.f32 %v5752
  %v8092 = vadd.s32 %v8088, 3
  %v8093 = vand.u32 %v8092, 3
  %vm8094 = vcmp.lt.s32.totalorder %v8093, 2
  %vm8095 = vcmp.eq.s32.totalorder %v8093, 0
  %v8096 = vxor.u32 %v8090, 2147483648
  %v8097 = vsel %vm8095, %v8089, %v8096
  %vm8098 = vcmp.eq.s32.totalorder %v8093, 2
  %v8099 = vxor.u32 %v8089, 2147483648
  %v8100 = vsel %vm8098, %v8099, %v8090
  %v8101 = vsel %vm8094, %v8097, %v8100
  %v8102 = vsel %vm8091, nan, %v8101
  %v8103 = vand.u32 2147483647, %v5758
  %vm8104 = vcmp.le.f32.partialorder %v8103, 0.7853982
  %vm8105 = vcmp.lt.s32.totalorder %v5758, 0
  %v8106 = vand.u32 %v5758, 2139095040
  %v8107 = vshrl.u32 %v8106, 23
  %v8108 = vsub.s32 %v8107, 127
  %v8109 = vand.u32 2147483647, %v5758
  %v8110 = vand.u32 %v8109, 8388607
  %v8111 = vor.u32 %v8110, 8388608
  %v8112 = vsub.s32 0, %v8111
  %v8113 = vadd.s32 %v8108, 1
  %vm8114 = vcmp.gt.s32.totalorder %v8113, 0
  %v8115 = vsel %vm8114, %v8113, 0
  %v8116 = vshrl.u32 %v8115, 5
  %v8117 = vand.u32 %v8115, 31
  %v8118 = vsub.s32 32, %v8117
  %v8119 = vshrl.u32 683565275, %v8118
  %v8120 = vshll.u32 683565275, %v8117
  %v8121 = vshrl.u32 2475754826, %v8118
  %v8122 = vor.u32 %v8120, %v8121
  %v8123 = vshll.u32 2475754826, %v8117
  %v8124 = vshrl.u32 2131351028, %v8118
  %v8125 = vor.u32 %v8123, %v8124
  %v8126 = vshll.u32 2131351028, %v8117
  %v8127 = vshrl.u32 2102212464, %v8118
  %v8128 = vor.u32 %v8126, %v8127
  %v8129 = vshll.u32 2102212464, %v8117
  %v8130 = vshrl.u32 920167782, %v8118
  %v8131 = vor.u32 %v8129, %v8130
  %v8132 = vshll.u32 920167782, %v8117
  %v8133 = vshrl.u32 1326507024, %v8118
  %v8134 = vor.u32 %v8132, %v8133
  %vm8135 = vcmp.lt.s32.totalorder %v8116, 1
  %vm8136 = vcmp.lt.s32.totalorder %v8116, 2
  %vm8137 = vcmp.lt.s32.totalorder %v8116, 3
  %vm8138 = vcmp.lt.s32.totalorder %v8116, 4
  %v8139 = vsel %vm8135, %v8119, %v8122
  %v8140 = vsel %vm8138, %v8128, 2102212464
  %v8141 = vsel %vm8137, %v8125, %v8140
  %v8142 = vsel %vm8136, %v8139, %v8141
  %v8143 = vsel %vm8135, %v8122, %v8125
  %v8144 = vsel %vm8138, %v8131, 920167782
  %v8145 = vsel %vm8137, %v8128, %v8144
  %v8146 = vsel %vm8136, %v8143, %v8145
  %v8147 = vsel %vm8135, %v8125, %v8128
  %v8148 = vsel %vm8138, %v8134, 1326507024
  %v8149 = vsel %vm8137, %v8131, %v8148
  %v8150 = vsel %vm8136, %v8147, %v8149
  %v8151 = vshll.u32 %v8111, 8
  %v8152 = vmul.u32.u64.compose %v8151, %v8150
  %v8153 = vextract.low.u32 %v8152
  %v8154 = vextract.high.u32 %v8152
  %v8155 = vmul.u32.u64.compose %v8151, %v8146
  %v8156 = vextract.low.u32 %v8155
  %v8157 = vextract.high.u32 %v8155
  %v8158 = vmul.u32 %v8151, %v8142
  %v8159 = vadd.s32 %v8154, %v8156
  %vm8160 = vc.u32 %v8154, %v8156
  %v8161 = vadd.s32 %v8157, 1
  %v8162 = vsel %vm8160, %v8161, %v8157
  %v8163 = vadd.s32 %v8158, %v8162
  %v8164 = vadd.s32 %v8163, 536870912
  %v8165 = vshrl.u32 %v8164, 30
  %v8166 = vshll.u32 %v8165, 30
  %v8167 = vsub.s32 %v8163, %v8166
  %vm8168 = vcmp.lt.s32.totalorder %v8167, 0
  %v8169 = vsub.s32 0, %v8167
  %v8170 = vsel %vm8168, %v8169, %v8167
  %v8171 = vclz %v8170
  %v8172 = vsub.s32 %v8171, 2
  %vm8173 = vcmp.gt.s32.totalorder 0, %v8172
  %v8174 = vsel %vm8173, 0, %v8172
  %v8175 = vsub.s32 32, %v8174
  %v8176 = vshll.u32 %v8167, %v8174
  %v8177 = vshrl.u32 %v8159, %v8175
  %v8178 = vor.u32 %v8176, %v8177
  %v8179 = vsub.s32 4294967266, %v8174
  %v8180 = vadd.s32 %v8179, 127
  %v8181 = vshll.u32 %v8180, 23
  %v8182 = vor.u32 4788187, %v8181
  %v8183 = vand.u32 2147483647, %v8182
  %v8185 = vcvt.s32.f32 %v8178
  %v8186 = vmul.f32 %v8185, %v8183
  %v8187 = vxor.u32 %v8186, 2147483648
  %v8188 = vsel %vm8105, %v8187, %v8186
  %v8189 = vsub.s32 4, %v8165
  %v8190 = vsel %vm8105, %v8189, %v8165
  %v8191 = vsel %vm8104, %v5758, %v8188
  %v8192 = vsel %vm8104, 0, %v8190
  %v8193 = vcosq.f32.pop %v8191
  %v8194 = vsinq.f32.pop %v8191
  %vm8195 = vweird.f32 %v5758
  %v8196 = vadd.s32 %v8192, 3
  %v8197 = vand.u32 %v8196, 3
  %vm8198 = vcmp.lt.s32.totalorder %v8197, 2
  %vm8199 = vcmp.eq.s32.totalorder %v8197, 0
  %v8200 = vxor.u32 %v8194, 2147483648
  %v8201 = vsel %vm8199, %v8193, %v8200
  %vm8202 = vcmp.eq.s32.totalorder %v8197, 2
  %v8203 = vxor.u32 %v8193, 2147483648
  %v8204 = vsel %vm8202, %v8203, %v8194
  %v8205 = vsel %vm8198, %v8201, %v8204
  %v8206 = vsel %vm8195, nan, %v8205
  %v8207 = vand.u32 2147483647, %v5764
  %vm8208 = vcmp.le.f32.partialorder %v8207, 0.7853982
  %vm8209 = vcmp.lt.s32.totalorder %v5764, 0
  %v8210 = vand.u32 %v5764, 2139095040
  %v8211 = vshrl.u32 %v8210, 23
  %v8212 = vsub.s32 %v8211, 127
  %v8213 = vand.u32 2147483647, %v5764
  %v8214 = vand.u32 %v8213, 8388607
  %v8215 = vor.u32 %v8214, 8388608
  %v8216 = vsub.s32 0, %v8215
  %v8217 = vadd.s32 %v8212, 1
  %vm8218 = vcmp.gt.s32.totalorder %v8217, 0
  %v8219 = vsel %vm8218, %v8217, 0
  %v8220 = vshrl.u32 %v8219, 5
  %v8221 = vand.u32 %v8219, 31
  %v8222 = vsub.s32 32, %v8221
  %v8223 = vshrl.u32 683565275, %v8222
  %v8224 = vshll.u32 683565275, %v8221
  %v8225 = vshrl.u32 2475754826, %v8222
  %v8226 = vor.u32 %v8224, %v8225
  %v8227 = vshll.u32 2475754826, %v8221
  %v8228 = vshrl.u32 2131351028, %v8222
  %v8229 = vor.u32 %v8227, %v8228
  %v8230 = vshll.u32 2131351028, %v8221
  %v8231 = vshrl.u32 2102212464, %v8222
  %v8232 = vor.u32 %v8230, %v8231
  %v8233 = vshll.u32 2102212464, %v8221
  %v8234 = vshrl.u32 920167782, %v8222
  %v8235 = vor.u32 %v8233, %v8234
  %v8236 = vshll.u32 920167782, %v8221
  %v8237 = vshrl.u32 1326507024, %v8222
  %v8238 = vor.u32 %v8236, %v8237
  %vm8239 = vcmp.lt.s32.totalorder %v8220, 1
  %vm8240 = vcmp.lt.s32.totalorder %v8220, 2
  %vm8241 = vcmp.lt.s32.totalorder %v8220, 3
  %vm8242 = vcmp.lt.s32.totalorder %v8220, 4
  %v8243 = vsel %vm8239, %v8223, %v8226
  %v8244 = vsel %vm8242, %v8232, 2102212464
  %v8245 = vsel %vm8241, %v8229, %v8244
  %v8246 = vsel %vm8240, %v8243, %v8245
  %v8247 = vsel %vm8239, %v8226, %v8229
  %v8248 = vsel %vm8242, %v8235, 920167782
  %v8249 = vsel %vm8241, %v8232, %v8248
  %v8250 = vsel %vm8240, %v8247, %v8249
  %v8251 = vsel %vm8239, %v8229, %v8232
  %v8252 = vsel %vm8242, %v8238, 1326507024
  %v8253 = vsel %vm8241, %v8235, %v8252
  %v8254 = vsel %vm8240, %v8251, %v8253
  %v8255 = vshll.u32 %v8215, 8
  %v8256 = vmul.u32.u64.compose %v8255, %v8254
  %v8257 = vextract.low.u32 %v8256
  %v8258 = vextract.high.u32 %v8256
  %v8259 = vmul.u32.u64.compose %v8255, %v8250
  %v8260 = vextract.low.u32 %v8259
  %v8261 = vextract.high.u32 %v8259
  %v8262 = vmul.u32 %v8255, %v8246
  %v8263 = vadd.s32 %v8258, %v8260
  %vm8264 = vc.u32 %v8258, %v8260
  %v8265 = vadd.s32 %v8261, 1
  %v8266 = vsel %vm8264, %v8265, %v8261
  %v8267 = vadd.s32 %v8262, %v8266
  %v8268 = vadd.s32 %v8267, 536870912
  %v8269 = vshrl.u32 %v8268, 30
  %v8270 = vshll.u32 %v8269, 30
  %v8271 = vsub.s32 %v8267, %v8270
  %vm8272 = vcmp.lt.s32.totalorder %v8271, 0
  %v8273 = vsub.s32 0, %v8271
  %v8274 = vsel %vm8272, %v8273, %v8271
  %v8275 = vclz %v8274
  %v8276 = vsub.s32 %v8275, 2
  %vm8277 = vcmp.gt.s32.totalorder 0, %v8276
  %v8278 = vsel %vm8277, 0, %v8276
  %v8279 = vsub.s32 32, %v8278
  %v8280 = vshll.u32 %v8271, %v8278
  %v8281 = vshrl.u32 %v8263, %v8279
  %v8282 = vor.u32 %v8280, %v8281
  %v8283 = vsub.s32 4294967266, %v8278
  %v8284 = vadd.s32 %v8283, 127
  %v8285 = vshll.u32 %v8284, 23
  %v8286 = vor.u32 4788187, %v8285
  %v8287 = vand.u32 2147483647, %v8286
  %v8289 = vcvt.s32.f32 %v8282
  %v8290 = vmul.f32 %v8289, %v8287
  %v8291 = vxor.u32 %v8290, 2147483648
  %v8292 = vsel %vm8209, %v8291, %v8290
  %v8293 = vsub.s32 4, %v8269
  %v8294 = vsel %vm8209, %v8293, %v8269
  %v8295 = vsel %vm8208, %v5764, %v8292
  %v8296 = vsel %vm8208, 0, %v8294
  %v8297 = vcosq.f32.pop %v8295
  %v8298 = vsinq.f32.pop %v8295
  %vm8299 = vweird.f32 %v5764
  %v8300 = vadd.s32 %v8296, 3
  %v8301 = vand.u32 %v8300, 3
  %vm8302 = vcmp.lt.s32.totalorder %v8301, 2
  %vm8303 = vcmp.eq.s32.totalorder %v8301, 0
  %v8304 = vxor.u32 %v8298, 2147483648
  %v8305 = vsel %vm8303, %v8297, %v8304
  %vm8306 = vcmp.eq.s32.totalorder %v8301, 2
  %v8307 = vxor.u32 %v8297, 2147483648
  %v8308 = vsel %vm8306, %v8307, %v8298
  %v8309 = vsel %vm8302, %v8305, %v8308
  %v8310 = vsel %vm8299, nan, %v8309
  %v8311 = vand.u32 2147483647, %v5770
  %vm8312 = vcmp.le.f32.partialorder %v8311, 0.7853982
  %vm8313 = vcmp.lt.s32.totalorder %v5770, 0
  %v8314 = vand.u32 %v5770, 2139095040
  %v8315 = vshrl.u32 %v8314, 23
  %v8316 = vsub.s32 %v8315, 127
  %v8317 = vand.u32 2147483647, %v5770
  %v8318 = vand.u32 %v8317, 8388607
  %v8319 = vor.u32 %v8318, 8388608
  %v8320 = vsub.s32 0, %v8319
  %v8321 = vadd.s32 %v8316, 1
  %vm8322 = vcmp.gt.s32.totalorder %v8321, 0
  %v8323 = vsel %vm8322, %v8321, 0
  %v8324 = vshrl.u32 %v8323, 5
  %v8325 = vand.u32 %v8323, 31
  %v8326 = vsub.s32 32, %v8325
  %v8327 = vshrl.u32 683565275, %v8326
  %v8328 = vshll.u32 683565275, %v8325
  %v8329 = vshrl.u32 2475754826, %v8326
  %v8330 = vor.u32 %v8328, %v8329
  %v8331 = vshll.u32 2475754826, %v8325
  %v8332 = vshrl.u32 2131351028, %v8326
  %v8333 = vor.u32 %v8331, %v8332
  %v8334 = vshll.u32 2131351028, %v8325
  %v8335 = vshrl.u32 2102212464, %v8326
  %v8336 = vor.u32 %v8334, %v8335
  %v8337 = vshll.u32 2102212464, %v8325
  %v8338 = vshrl.u32 920167782, %v8326
  %v8339 = vor.u32 %v8337, %v8338
  %v8340 = vshll.u32 920167782, %v8325
  %v8341 = vshrl.u32 1326507024, %v8326
  %v8342 = vor.u32 %v8340, %v8341
  %vm8343 = vcmp.lt.s32.totalorder %v8324, 1
  %vm8344 = vcmp.lt.s32.totalorder %v8324, 2
  %vm8345 = vcmp.lt.s32.totalorder %v8324, 3
  %vm8346 = vcmp.lt.s32.totalorder %v8324, 4
  %v8347 = vsel %vm8343, %v8327, %v8330
  %v8348 = vsel %vm8346, %v8336, 2102212464
  %v8349 = vsel %vm8345, %v8333, %v8348
  %v8350 = vsel %vm8344, %v8347, %v8349
  %v8351 = vsel %vm8343, %v8330, %v8333
  %v8352 = vsel %vm8346, %v8339, 920167782
  %v8353 = vsel %vm8345, %v8336, %v8352
  %v8354 = vsel %vm8344, %v8351, %v8353
  %v8355 = vsel %vm8343, %v8333, %v8336
  %v8356 = vsel %vm8346, %v8342, 1326507024
  %v8357 = vsel %vm8345, %v8339, %v8356
  %v8358 = vsel %vm8344, %v8355, %v8357
  %v8359 = vshll.u32 %v8319, 8
  %v8360 = vmul.u32.u64.compose %v8359, %v8358
  %v8361 = vextract.low.u32 %v8360
  %v8362 = vextract.high.u32 %v8360
  %v8363 = vmul.u32.u64.compose %v8359, %v8354
  %v8364 = vextract.low.u32 %v8363
  %v8365 = vextract.high.u32 %v8363
  %v8366 = vmul.u32 %v8359, %v8350
  %v8367 = vadd.s32 %v8362, %v8364
  %vm8368 = vc.u32 %v8362, %v8364
  %v8369 = vadd.s32 %v8365, 1
  %v8370 = vsel %vm8368, %v8369, %v8365
  %v8371 = vadd.s32 %v8366, %v8370
  %v8372 = vadd.s32 %v8371, 536870912
  %v8373 = vshrl.u32 %v8372, 30
  %v8374 = vshll.u32 %v8373, 30
  %v8375 = vsub.s32 %v8371, %v8374
  %vm8376 = vcmp.lt.s32.totalorder %v8375, 0
  %v8377 = vsub.s32 0, %v8375
  %v8378 = vsel %vm8376, %v8377, %v8375
  %v8379 = vclz %v8378
  %v8380 = vsub.s32 %v8379, 2
  %vm8381 = vcmp.gt.s32.totalorder 0, %v8380
  %v8382 = vsel %vm8381, 0, %v8380
  %v8383 = vsub.s32 32, %v8382
  %v8384 = vshll.u32 %v8375, %v8382
  %v8385 = vshrl.u32 %v8367, %v8383
  %v8386 = vor.u32 %v8384, %v8385
  %v8387 = vsub.s32 4294967266, %v8382
  %v8388 = vadd.s32 %v8387, 127
  %v8389 = vshll.u32 %v8388, 23
  %v8390 = vor.u32 4788187, %v8389
  %v8391 = vand.u32 2147483647, %v8390
  %v8393 = vcvt.s32.f32 %v8386
  %v8394 = vmul.f32 %v8393, %v8391
  %v8395 = vxor.u32 %v8394, 2147483648
  %v8396 = vsel %vm8313, %v8395, %v8394
  %v8397 = vsub.s32 4, %v8373
  %v8398 = vsel %vm8313, %v8397, %v8373
  %v8399 = vsel %vm8312, %v5770, %v8396
  %v8400 = vsel %vm8312, 0, %v8398
  %v8401 = vcosq.f32.pop %v8399
  %v8402 = vsinq.f32.pop %v8399
  %vm8403 = vweird.f32 %v5770
  %v8404 = vadd.s32 %v8400, 3
  %v8405 = vand.u32 %v8404, 3
  %vm8406 = vcmp.lt.s32.totalorder %v8405, 2
  %vm8407 = vcmp.eq.s32.totalorder %v8405, 0
  %v8408 = vxor.u32 %v8402, 2147483648
  %v8409 = vsel %vm8407, %v8401, %v8408
  %vm8410 = vcmp.eq.s32.totalorder %v8405, 2
  %v8411 = vxor.u32 %v8401, 2147483648
  %v8412 = vsel %vm8410, %v8411, %v8402
  %v8413 = vsel %vm8406, %v8409, %v8412
  %v8414 = vsel %vm8403, nan, %v8413
  %v8415 = vand.u32 2147483647, %v5776
  %vm8416 = vcmp.le.f32.partialorder %v8415, 0.7853982
  %vm8417 = vcmp.lt.s32.totalorder %v5776, 0
  %v8418 = vand.u32 %v5776, 2139095040
  %v8419 = vshrl.u32 %v8418, 23
  %v8420 = vsub.s32 %v8419, 127
  %v8421 = vand.u32 2147483647, %v5776
  %v8422 = vand.u32 %v8421, 8388607
  %v8423 = vor.u32 %v8422, 8388608
  %v8424 = vsub.s32 0, %v8423
  %v8425 = vadd.s32 %v8420, 1
  %vm8426 = vcmp.gt.s32.totalorder %v8425, 0
  %v8427 = vsel %vm8426, %v8425, 0
  %v8428 = vshrl.u32 %v8427, 5
  %v8429 = vand.u32 %v8427, 31
  %v8430 = vsub.s32 32, %v8429
  %v8431 = vshrl.u32 683565275, %v8430
  %v8432 = vshll.u32 683565275, %v8429
  %v8433 = vshrl.u32 2475754826, %v8430
  %v8434 = vor.u32 %v8432, %v8433
  %v8435 = vshll.u32 2475754826, %v8429
  %v8436 = vshrl.u32 2131351028, %v8430
  %v8437 = vor.u32 %v8435, %v8436
  %v8438 = vshll.u32 2131351028, %v8429
  %v8439 = vshrl.u32 2102212464, %v8430
  %v8440 = vor.u32 %v8438, %v8439
  %v8441 = vshll.u32 2102212464, %v8429
  %v8442 = vshrl.u32 920167782, %v8430
  %v8443 = vor.u32 %v8441, %v8442
  %v8444 = vshll.u32 920167782, %v8429
  %v8445 = vshrl.u32 1326507024, %v8430
  %v8446 = vor.u32 %v8444, %v8445
  %vm8447 = vcmp.lt.s32.totalorder %v8428, 1
  %vm8448 = vcmp.lt.s32.totalorder %v8428, 2
  %vm8449 = vcmp.lt.s32.totalorder %v8428, 3
  %vm8450 = vcmp.lt.s32.totalorder %v8428, 4
  %v8451 = vsel %vm8447, %v8431, %v8434
  %v8452 = vsel %vm8450, %v8440, 2102212464
  %v8453 = vsel %vm8449, %v8437, %v8452
  %v8454 = vsel %vm8448, %v8451, %v8453
  %v8455 = vsel %vm8447, %v8434, %v8437
  %v8456 = vsel %vm8450, %v8443, 920167782
  %v8457 = vsel %vm8449, %v8440, %v8456
  %v8458 = vsel %vm8448, %v8455, %v8457
  %v8459 = vsel %vm8447, %v8437, %v8440
  %v8460 = vsel %vm8450, %v8446, 1326507024
  %v8461 = vsel %vm8449, %v8443, %v8460
  %v8462 = vsel %vm8448, %v8459, %v8461
  %v8463 = vshll.u32 %v8423, 8
  %v8464 = vmul.u32.u64.compose %v8463, %v8462
  %v8465 = vextract.low.u32 %v8464
  %v8466 = vextract.high.u32 %v8464
  %v8467 = vmul.u32.u64.compose %v8463, %v8458
  %v8468 = vextract.low.u32 %v8467
  %v8469 = vextract.high.u32 %v8467
  %v8470 = vmul.u32 %v8463, %v8454
  %v8471 = vadd.s32 %v8466, %v8468
  %vm8472 = vc.u32 %v8466, %v8468
  %v8473 = vadd.s32 %v8469, 1
  %v8474 = vsel %vm8472, %v8473, %v8469
  %v8475 = vadd.s32 %v8470, %v8474
  %v8476 = vadd.s32 %v8475, 536870912
  %v8477 = vshrl.u32 %v8476, 30
  %v8478 = vshll.u32 %v8477, 30
  %v8479 = vsub.s32 %v8475, %v8478
  %vm8480 = vcmp.lt.s32.totalorder %v8479, 0
  %v8481 = vsub.s32 0, %v8479
  %v8482 = vsel %vm8480, %v8481, %v8479
  %v8483 = vclz %v8482
  %v8484 = vsub.s32 %v8483, 2
  %vm8485 = vcmp.gt.s32.totalorder 0, %v8484
  %v8486 = vsel %vm8485, 0, %v8484
  %v8487 = vsub.s32 32, %v8486
  %v8488 = vshll.u32 %v8479, %v8486
  %v8489 = vshrl.u32 %v8471, %v8487
  %v8490 = vor.u32 %v8488, %v8489
  %v8491 = vsub.s32 4294967266, %v8486
  %v8492 = vadd.s32 %v8491, 127
  %v8493 = vshll.u32 %v8492, 23
  %v8494 = vor.u32 4788187, %v8493
  %v8495 = vand.u32 2147483647, %v8494
  %v8497 = vcvt.s32.f32 %v8490
  %v8498 = vmul.f32 %v8497, %v8495
  %v8499 = vxor.u32 %v8498, 2147483648
  %v8500 = vsel %vm8417, %v8499, %v8498
  %v8501 = vsub.s32 4, %v8477
  %v8502 = vsel %vm8417, %v8501, %v8477
  %v8503 = vsel %vm8416, %v5776, %v8500
  %v8504 = vsel %vm8416, 0, %v8502
  %v8505 = vcosq.f32.pop %v8503
  %v8506 = vsinq.f32.pop %v8503
  %vm8507 = vweird.f32 %v5776
  %v8508 = vadd.s32 %v8504, 3
  %v8509 = vand.u32 %v8508, 3
  %vm8510 = vcmp.lt.s32.totalorder %v8509, 2
  %vm8511 = vcmp.eq.s32.totalorder %v8509, 0
  %v8512 = vxor.u32 %v8506, 2147483648
  %v8513 = vsel %vm8511, %v8505, %v8512
  %vm8514 = vcmp.eq.s32.totalorder %v8509, 2
  %v8515 = vxor.u32 %v8505, 2147483648
  %v8516 = vsel %vm8514, %v8515, %v8506
  %v8517 = vsel %vm8510, %v8513, %v8516
  %v8518 = vsel %vm8507, nan, %v8517
  %v8519 = vand.u32 2147483647, %v5782
  %vm8520 = vcmp.le.f32.partialorder %v8519, 0.7853982
  %vm8521 = vcmp.lt.s32.totalorder %v5782, 0
  %v8522 = vand.u32 %v5782, 2139095040
  %v8523 = vshrl.u32 %v8522, 23
  %v8524 = vsub.s32 %v8523, 127
  %v8525 = vand.u32 2147483647, %v5782
  %v8526 = vand.u32 %v8525, 8388607
  %v8527 = vor.u32 %v8526, 8388608
  %v8528 = vsub.s32 0, %v8527
  %v8529 = vadd.s32 %v8524, 1
  %vm8530 = vcmp.gt.s32.totalorder %v8529, 0
  %v8531 = vsel %vm8530, %v8529, 0
  %v8532 = vshrl.u32 %v8531, 5
  %v8533 = vand.u32 %v8531, 31
  %v8534 = vsub.s32 32, %v8533
  %v8535 = vshrl.u32 683565275, %v8534
  %v8536 = vshll.u32 683565275, %v8533
  %v8537 = vshrl.u32 2475754826, %v8534
  %v8538 = vor.u32 %v8536, %v8537
  %v8539 = vshll.u32 2475754826, %v8533
  %v8540 = vshrl.u32 2131351028, %v8534
  %v8541 = vor.u32 %v8539, %v8540
  %v8542 = vshll.u32 2131351028, %v8533
  %v8543 = vshrl.u32 2102212464, %v8534
  %v8544 = vor.u32 %v8542, %v8543
  %v8545 = vshll.u32 2102212464, %v8533
  %v8546 = vshrl.u32 920167782, %v8534
  %v8547 = vor.u32 %v8545, %v8546
  %v8548 = vshll.u32 920167782, %v8533
  %v8549 = vshrl.u32 1326507024, %v8534
  %v8550 = vor.u32 %v8548, %v8549
  %vm8551 = vcmp.lt.s32.totalorder %v8532, 1
  %vm8552 = vcmp.lt.s32.totalorder %v8532, 2
  %vm8553 = vcmp.lt.s32.totalorder %v8532, 3
  %vm8554 = vcmp.lt.s32.totalorder %v8532, 4
  %v8555 = vsel %vm8551, %v8535, %v8538
  %v8556 = vsel %vm8554, %v8544, 2102212464
  %v8557 = vsel %vm8553, %v8541, %v8556
  %v8558 = vsel %vm8552, %v8555, %v8557
  %v8559 = vsel %vm8551, %v8538, %v8541
  %v8560 = vsel %vm8554, %v8547, 920167782
  %v8561 = vsel %vm8553, %v8544, %v8560
  %v8562 = vsel %vm8552, %v8559, %v8561
  %v8563 = vsel %vm8551, %v8541, %v8544
  %v8564 = vsel %vm8554, %v8550, 1326507024
  %v8565 = vsel %vm8553, %v8547, %v8564
  %v8566 = vsel %vm8552, %v8563, %v8565
  %v8567 = vshll.u32 %v8527, 8
  %v8568 = vmul.u32.u64.compose %v8567, %v8566
  %v8569 = vextract.low.u32 %v8568
  %v8570 = vextract.high.u32 %v8568
  %v8571 = vmul.u32.u64.compose %v8567, %v8562
  %v8572 = vextract.low.u32 %v8571
  %v8573 = vextract.high.u32 %v8571
  %v8574 = vmul.u32 %v8567, %v8558
  %v8575 = vadd.s32 %v8570, %v8572
  %vm8576 = vc.u32 %v8570, %v8572
  %v8577 = vadd.s32 %v8573, 1
  %v8578 = vsel %vm8576, %v8577, %v8573
  %v8579 = vadd.s32 %v8574, %v8578
  %v8580 = vadd.s32 %v8579, 536870912
  %v8581 = vshrl.u32 %v8580, 30
  %v8582 = vshll.u32 %v8581, 30
  %v8583 = vsub.s32 %v8579, %v8582
  %vm8584 = vcmp.lt.s32.totalorder %v8583, 0
  %v8585 = vsub.s32 0, %v8583
  %v8586 = vsel %vm8584, %v8585, %v8583
  %v8587 = vclz %v8586
  %v8588 = vsub.s32 %v8587, 2
  %vm8589 = vcmp.gt.s32.totalorder 0, %v8588
  %v8590 = vsel %vm8589, 0, %v8588
  %v8591 = vsub.s32 32, %v8590
  %v8592 = vshll.u32 %v8583, %v8590
  %v8593 = vshrl.u32 %v8575, %v8591
  %v8594 = vor.u32 %v8592, %v8593
  %v8595 = vsub.s32 4294967266, %v8590
  %v8596 = vadd.s32 %v8595, 127
  %v8597 = vshll.u32 %v8596, 23
  %v8598 = vor.u32 4788187, %v8597
  %v8599 = vand.u32 2147483647, %v8598
  %v8601 = vcvt.s32.f32 %v8594
  %v8602 = vmul.f32 %v8601, %v8599
  %v8603 = vxor.u32 %v8602, 2147483648
  %v8604 = vsel %vm8521, %v8603, %v8602
  %v8605 = vsub.s32 4, %v8581
  %v8606 = vsel %vm8521, %v8605, %v8581
  %v8607 = vsel %vm8520, %v5782, %v8604
  %v8608 = vsel %vm8520, 0, %v8606
  %v8609 = vcosq.f32.pop %v8607
  %v8610 = vsinq.f32.pop %v8607
  %vm8611 = vweird.f32 %v5782
  %v8612 = vadd.s32 %v8608, 3
  %v8613 = vand.u32 %v8612, 3
  %vm8614 = vcmp.lt.s32.totalorder %v8613, 2
  %vm8615 = vcmp.eq.s32.totalorder %v8613, 0
  %v8616 = vxor.u32 %v8610, 2147483648
  %v8617 = vsel %vm8615, %v8609, %v8616
  %vm8618 = vcmp.eq.s32.totalorder %v8613, 2
  %v8619 = vxor.u32 %v8609, 2147483648
  %v8620 = vsel %vm8618, %v8619, %v8610
  %v8621 = vsel %vm8614, %v8617, %v8620
  %v8622 = vsel %vm8611, nan, %v8621
  %v8623 = vand.u32 2147483647, %v5788
  %vm8624 = vcmp.le.f32.partialorder %v8623, 0.7853982
  %vm8625 = vcmp.lt.s32.totalorder %v5788, 0
  %v8626 = vand.u32 %v5788, 2139095040
  %v8627 = vshrl.u32 %v8626, 23
  %v8628 = vsub.s32 %v8627, 127
  %v8629 = vand.u32 2147483647, %v5788
  %v8630 = vand.u32 %v8629, 8388607
  %v8631 = vor.u32 %v8630, 8388608
  %v8632 = vsub.s32 0, %v8631
  %v8633 = vadd.s32 %v8628, 1
  %vm8634 = vcmp.gt.s32.totalorder %v8633, 0
  %v8635 = vsel %vm8634, %v8633, 0
  %v8636 = vshrl.u32 %v8635, 5
  %v8637 = vand.u32 %v8635, 31
  %v8638 = vsub.s32 32, %v8637
  %v8639 = vshrl.u32 683565275, %v8638
  %v8640 = vshll.u32 683565275, %v8637
  %v8641 = vshrl.u32 2475754826, %v8638
  %v8642 = vor.u32 %v8640, %v8641
  %v8643 = vshll.u32 2475754826, %v8637
  %v8644 = vshrl.u32 2131351028, %v8638
  %v8645 = vor.u32 %v8643, %v8644
  %v8646 = vshll.u32 2131351028, %v8637
  %v8647 = vshrl.u32 2102212464, %v8638
  %v8648 = vor.u32 %v8646, %v8647
  %v8649 = vshll.u32 2102212464, %v8637
  %v8650 = vshrl.u32 920167782, %v8638
  %v8651 = vor.u32 %v8649, %v8650
  %v8652 = vshll.u32 920167782, %v8637
  %v8653 = vshrl.u32 1326507024, %v8638
  %v8654 = vor.u32 %v8652, %v8653
  %vm8655 = vcmp.lt.s32.totalorder %v8636, 1
  %vm8656 = vcmp.lt.s32.totalorder %v8636, 2
  %vm8657 = vcmp.lt.s32.totalorder %v8636, 3
  %vm8658 = vcmp.lt.s32.totalorder %v8636, 4
  %v8659 = vsel %vm8655, %v8639, %v8642
  %v8660 = vsel %vm8658, %v8648, 2102212464
  %v8661 = vsel %vm8657, %v8645, %v8660
  %v8662 = vsel %vm8656, %v8659, %v8661
  %v8663 = vsel %vm8655, %v8642, %v8645
  %v8664 = vsel %vm8658, %v8651, 920167782
  %v8665 = vsel %vm8657, %v8648, %v8664
  %v8666 = vsel %vm8656, %v8663, %v8665
  %v8667 = vsel %vm8655, %v8645, %v8648
  %v8668 = vsel %vm8658, %v8654, 1326507024
  %v8669 = vsel %vm8657, %v8651, %v8668
  %v8670 = vsel %vm8656, %v8667, %v8669
  %v8671 = vshll.u32 %v8631, 8
  %v8672 = vmul.u32.u64.compose %v8671, %v8670
  %v8673 = vextract.low.u32 %v8672
  %v8674 = vextract.high.u32 %v8672
  %v8675 = vmul.u32.u64.compose %v8671, %v8666
  %v8676 = vextract.low.u32 %v8675
  %v8677 = vextract.high.u32 %v8675
  %v8678 = vmul.u32 %v8671, %v8662
  %v8679 = vadd.s32 %v8674, %v8676
  %vm8680 = vc.u32 %v8674, %v8676
  %v8681 = vadd.s32 %v8677, 1
  %v8682 = vsel %vm8680, %v8681, %v8677
  %v8683 = vadd.s32 %v8678, %v8682
  %v8684 = vadd.s32 %v8683, 536870912
  %v8685 = vshrl.u32 %v8684, 30
  %v8686 = vshll.u32 %v8685, 30
  %v8687 = vsub.s32 %v8683, %v8686
  %vm8688 = vcmp.lt.s32.totalorder %v8687, 0
  %v8689 = vsub.s32 0, %v8687
  %v8690 = vsel %vm8688, %v8689, %v8687
  %v8691 = vclz %v8690
  %v8692 = vsub.s32 %v8691, 2
  %vm8693 = vcmp.gt.s32.totalorder 0, %v8692
  %v8694 = vsel %vm8693, 0, %v8692
  %v8695 = vsub.s32 32, %v8694
  %v8696 = vshll.u32 %v8687, %v8694
  %v8697 = vshrl.u32 %v8679, %v8695
  %v8698 = vor.u32 %v8696, %v8697
  %v8699 = vsub.s32 4294967266, %v8694
  %v8700 = vadd.s32 %v8699, 127
  %v8701 = vshll.u32 %v8700, 23
  %v8702 = vor.u32 4788187, %v8701
  %v8703 = vand.u32 2147483647, %v8702
  %v8705 = vcvt.s32.f32 %v8698
  %v8706 = vmul.f32 %v8705, %v8703
  %v8707 = vxor.u32 %v8706, 2147483648
  %v8708 = vsel %vm8625, %v8707, %v8706
  %v8709 = vsub.s32 4, %v8685
  %v8710 = vsel %vm8625, %v8709, %v8685
  %v8711 = vsel %vm8624, %v5788, %v8708
  %v8712 = vsel %vm8624, 0, %v8710
  %v8713 = vcosq.f32.pop %v8711
  %v8714 = vsinq.f32.pop %v8711
  %vm8715 = vweird.f32 %v5788
  %v8716 = vadd.s32 %v8712, 3
  %v8717 = vand.u32 %v8716, 3
  %vm8718 = vcmp.lt.s32.totalorder %v8717, 2
  %vm8719 = vcmp.eq.s32.totalorder %v8717, 0
  %v8720 = vxor.u32 %v8714, 2147483648
  %v8721 = vsel %vm8719, %v8713, %v8720
  %vm8722 = vcmp.eq.s32.totalorder %v8717, 2
  %v8723 = vxor.u32 %v8713, 2147483648
  %v8724 = vsel %vm8722, %v8723, %v8714
  %v8725 = vsel %vm8718, %v8721, %v8724
  %v8726 = vsel %vm8715, nan, %v8725
  %v8727 = vand.u32 2147483647, %v5794
  %vm8728 = vcmp.le.f32.partialorder %v8727, 0.7853982
  %vm8729 = vcmp.lt.s32.totalorder %v5794, 0
  %v8730 = vand.u32 %v5794, 2139095040
  %v8731 = vshrl.u32 %v8730, 23
  %v8732 = vsub.s32 %v8731, 127
  %v8733 = vand.u32 2147483647, %v5794
  %v8734 = vand.u32 %v8733, 8388607
  %v8735 = vor.u32 %v8734, 8388608
  %v8736 = vsub.s32 0, %v8735
  %v8737 = vadd.s32 %v8732, 1
  %vm8738 = vcmp.gt.s32.totalorder %v8737, 0
  %v8739 = vsel %vm8738, %v8737, 0
  %v8740 = vshrl.u32 %v8739, 5
  %v8741 = vand.u32 %v8739, 31
  %v8742 = vsub.s32 32, %v8741
  %v8743 = vshrl.u32 683565275, %v8742
  %v8744 = vshll.u32 683565275, %v8741
  %v8745 = vshrl.u32 2475754826, %v8742
  %v8746 = vor.u32 %v8744, %v8745
  %v8747 = vshll.u32 2475754826, %v8741
  %v8748 = vshrl.u32 2131351028, %v8742
  %v8749 = vor.u32 %v8747, %v8748
  %v8750 = vshll.u32 2131351028, %v8741
  %v8751 = vshrl.u32 2102212464, %v8742
  %v8752 = vor.u32 %v8750, %v8751
  %v8753 = vshll.u32 2102212464, %v8741
  %v8754 = vshrl.u32 920167782, %v8742
  %v8755 = vor.u32 %v8753, %v8754
  %v8756 = vshll.u32 920167782, %v8741
  %v8757 = vshrl.u32 1326507024, %v8742
  %v8758 = vor.u32 %v8756, %v8757
  %vm8759 = vcmp.lt.s32.totalorder %v8740, 1
  %vm8760 = vcmp.lt.s32.totalorder %v8740, 2
  %vm8761 = vcmp.lt.s32.totalorder %v8740, 3
  %vm8762 = vcmp.lt.s32.totalorder %v8740, 4
  %v8763 = vsel %vm8759, %v8743, %v8746
  %v8764 = vsel %vm8762, %v8752, 2102212464
  %v8765 = vsel %vm8761, %v8749, %v8764
  %v8766 = vsel %vm8760, %v8763, %v8765
  %v8767 = vsel %vm8759, %v8746, %v8749
  %v8768 = vsel %vm8762, %v8755, 920167782
  %v8769 = vsel %vm8761, %v8752, %v8768
  %v8770 = vsel %vm8760, %v8767, %v8769
  %v8771 = vsel %vm8759, %v8749, %v8752
  %v8772 = vsel %vm8762, %v8758, 1326507024
  %v8773 = vsel %vm8761, %v8755, %v8772
  %v8774 = vsel %vm8760, %v8771, %v8773
  %v8775 = vshll.u32 %v8735, 8
  %v8776 = vmul.u32.u64.compose %v8775, %v8774
  %v8777 = vextract.low.u32 %v8776
  %v8778 = vextract.high.u32 %v8776
  %v8779 = vmul.u32.u64.compose %v8775, %v8770
  %v8780 = vextract.low.u32 %v8779
  %v8781 = vextract.high.u32 %v8779
  %v8782 = vmul.u32 %v8775, %v8766
  %v8783 = vadd.s32 %v8778, %v8780
  %vm8784 = vc.u32 %v8778, %v8780
  %v8785 = vadd.s32 %v8781, 1
  %v8786 = vsel %vm8784, %v8785, %v8781
  %v8787 = vadd.s32 %v8782, %v8786
  %v8788 = vadd.s32 %v8787, 536870912
  %v8789 = vshrl.u32 %v8788, 30
  %v8790 = vshll.u32 %v8789, 30
  %v8791 = vsub.s32 %v8787, %v8790
  %vm8792 = vcmp.lt.s32.totalorder %v8791, 0
  %v8793 = vsub.s32 0, %v8791
  %v8794 = vsel %vm8792, %v8793, %v8791
  %v8795 = vclz %v8794
  %v8796 = vsub.s32 %v8795, 2
  %vm8797 = vcmp.gt.s32.totalorder 0, %v8796
  %v8798 = vsel %vm8797, 0, %v8796
  %v8799 = vsub.s32 32, %v8798
  %v8800 = vshll.u32 %v8791, %v8798
  %v8801 = vshrl.u32 %v8783, %v8799
  %v8802 = vor.u32 %v8800, %v8801
  %v8803 = vsub.s32 4294967266, %v8798
  %v8804 = vadd.s32 %v8803, 127
  %v8805 = vshll.u32 %v8804, 23
  %v8806 = vor.u32 4788187, %v8805
  %v8807 = vand.u32 2147483647, %v8806
  %v8809 = vcvt.s32.f32 %v8802
  %v8810 = vmul.f32 %v8809, %v8807
  %v8811 = vxor.u32 %v8810, 2147483648
  %v8812 = vsel %vm8729, %v8811, %v8810
  %v8813 = vsub.s32 4, %v8789
  %v8814 = vsel %vm8729, %v8813, %v8789
  %v8815 = vsel %vm8728, %v5794, %v8812
  %v8816 = vsel %vm8728, 0, %v8814
  %v8817 = vcosq.f32.pop %v8815
  %v8818 = vsinq.f32.pop %v8815
  %vm8819 = vweird.f32 %v5794
  %v8820 = vadd.s32 %v8816, 3
  %v8821 = vand.u32 %v8820, 3
  %vm8822 = vcmp.lt.s32.totalorder %v8821, 2
  %vm8823 = vcmp.eq.s32.totalorder %v8821, 0
  %v8824 = vxor.u32 %v8818, 2147483648
  %v8825 = vsel %vm8823, %v8817, %v8824
  %vm8826 = vcmp.eq.s32.totalorder %v8821, 2
  %v8827 = vxor.u32 %v8817, 2147483648
  %v8828 = vsel %vm8826, %v8827, %v8818
  %v8829 = vsel %vm8822, %v8825, %v8828
  %v8830 = vsel %vm8819, nan, %v8829
  %v8831 = vand.u32 2147483647, %v5800
  %vm8832 = vcmp.le.f32.partialorder %v8831, 0.7853982
  %vm8833 = vcmp.lt.s32.totalorder %v5800, 0
  %v8834 = vand.u32 %v5800, 2139095040
  %v8835 = vshrl.u32 %v8834, 23
  %v8836 = vsub.s32 %v8835, 127
  %v8837 = vand.u32 2147483647, %v5800
  %v8838 = vand.u32 %v8837, 8388607
  %v8839 = vor.u32 %v8838, 8388608
  %v8840 = vsub.s32 0, %v8839
  %v8841 = vadd.s32 %v8836, 1
  %vm8842 = vcmp.gt.s32.totalorder %v8841, 0
  %v8843 = vsel %vm8842, %v8841, 0
  %v8844 = vshrl.u32 %v8843, 5
  %v8845 = vand.u32 %v8843, 31
  %v8846 = vsub.s32 32, %v8845
  %v8847 = vshrl.u32 683565275, %v8846
  %v8848 = vshll.u32 683565275, %v8845
  %v8849 = vshrl.u32 2475754826, %v8846
  %v8850 = vor.u32 %v8848, %v8849
  %v8851 = vshll.u32 2475754826, %v8845
  %v8852 = vshrl.u32 2131351028, %v8846
  %v8853 = vor.u32 %v8851, %v8852
  %v8854 = vshll.u32 2131351028, %v8845
  %v8855 = vshrl.u32 2102212464, %v8846
  %v8856 = vor.u32 %v8854, %v8855
  %v8857 = vshll.u32 2102212464, %v8845
  %v8858 = vshrl.u32 920167782, %v8846
  %v8859 = vor.u32 %v8857, %v8858
  %v8860 = vshll.u32 920167782, %v8845
  %v8861 = vshrl.u32 1326507024, %v8846
  %v8862 = vor.u32 %v8860, %v8861
  %vm8863 = vcmp.lt.s32.totalorder %v8844, 1
  %vm8864 = vcmp.lt.s32.totalorder %v8844, 2
  %vm8865 = vcmp.lt.s32.totalorder %v8844, 3
  %vm8866 = vcmp.lt.s32.totalorder %v8844, 4
  %v8867 = vsel %vm8863, %v8847, %v8850
  %v8868 = vsel %vm8866, %v8856, 2102212464
  %v8869 = vsel %vm8865, %v8853, %v8868
  %v8870 = vsel %vm8864, %v8867, %v8869
  %v8871 = vsel %vm8863, %v8850, %v8853
  %v8872 = vsel %vm8866, %v8859, 920167782
  %v8873 = vsel %vm8865, %v8856, %v8872
  %v8874 = vsel %vm8864, %v8871, %v8873
  %v8875 = vsel %vm8863, %v8853, %v8856
  %v8876 = vsel %vm8866, %v8862, 1326507024
  %v8877 = vsel %vm8865, %v8859, %v8876
  %v8878 = vsel %vm8864, %v8875, %v8877
  %v8879 = vshll.u32 %v8839, 8
  %v8880 = vmul.u32.u64.compose %v8879, %v8878
  %v8881 = vextract.low.u32 %v8880
  %v8882 = vextract.high.u32 %v8880
  %v8883 = vmul.u32.u64.compose %v8879, %v8874
  %v8884 = vextract.low.u32 %v8883
  %v8885 = vextract.high.u32 %v8883
  %v8886 = vmul.u32 %v8879, %v8870
  %v8887 = vadd.s32 %v8882, %v8884
  %vm8888 = vc.u32 %v8882, %v8884
  %v8889 = vadd.s32 %v8885, 1
  %v8890 = vsel %vm8888, %v8889, %v8885
  %v8891 = vadd.s32 %v8886, %v8890
  %v8892 = vadd.s32 %v8891, 536870912
  %v8893 = vshrl.u32 %v8892, 30
  %v8894 = vshll.u32 %v8893, 30
  %v8895 = vsub.s32 %v8891, %v8894
  %vm8896 = vcmp.lt.s32.totalorder %v8895, 0
  %v8897 = vsub.s32 0, %v8895
  %v8898 = vsel %vm8896, %v8897, %v8895
  %v8899 = vclz %v8898
  %v8900 = vsub.s32 %v8899, 2
  %vm8901 = vcmp.gt.s32.totalorder 0, %v8900
  %v8902 = vsel %vm8901, 0, %v8900
  %v8903 = vsub.s32 32, %v8902
  %v8904 = vshll.u32 %v8895, %v8902
  %v8905 = vshrl.u32 %v8887, %v8903
  %v8906 = vor.u32 %v8904, %v8905
  %v8907 = vsub.s32 4294967266, %v8902
  %v8908 = vadd.s32 %v8907, 127
  %v8909 = vshll.u32 %v8908, 23
  %v8910 = vor.u32 4788187, %v8909
  %v8911 = vand.u32 2147483647, %v8910
  %v8913 = vcvt.s32.f32 %v8906
  %v8914 = vmul.f32 %v8913, %v8911
  %v8915 = vxor.u32 %v8914, 2147483648
  %v8916 = vsel %vm8833, %v8915, %v8914
  %v8917 = vsub.s32 4, %v8893
  %v8918 = vsel %vm8833, %v8917, %v8893
  %v8919 = vsel %vm8832, %v5800, %v8916
  %v8920 = vsel %vm8832, 0, %v8918
  %v8921 = vcosq.f32.pop %v8919
  %v8922 = vsinq.f32.pop %v8919
  %vm8923 = vweird.f32 %v5800
  %v8924 = vadd.s32 %v8920, 3
  %v8925 = vand.u32 %v8924, 3
  %vm8926 = vcmp.lt.s32.totalorder %v8925, 2
  %vm8927 = vcmp.eq.s32.totalorder %v8925, 0
  %v8928 = vxor.u32 %v8922, 2147483648
  %v8929 = vsel %vm8927, %v8921, %v8928
  %vm8930 = vcmp.eq.s32.totalorder %v8925, 2
  %v8931 = vxor.u32 %v8921, 2147483648
  %v8932 = vsel %vm8930, %v8931, %v8922
  %v8933 = vsel %vm8926, %v8929, %v8932
  %v8934 = vsel %vm8923, nan, %v8933
  %v8935 = vand.u32 2147483647, %v5806
  %vm8936 = vcmp.le.f32.partialorder %v8935, 0.7853982
  %vm8937 = vcmp.lt.s32.totalorder %v5806, 0
  %v8938 = vand.u32 %v5806, 2139095040
  %v8939 = vshrl.u32 %v8938, 23
  %v8940 = vsub.s32 %v8939, 127
  %v8941 = vand.u32 2147483647, %v5806
  %v8942 = vand.u32 %v8941, 8388607
  %v8943 = vor.u32 %v8942, 8388608
  %v8944 = vsub.s32 0, %v8943
  %v8945 = vadd.s32 %v8940, 1
  %vm8946 = vcmp.gt.s32.totalorder %v8945, 0
  %v8947 = vsel %vm8946, %v8945, 0
  %v8948 = vshrl.u32 %v8947, 5
  %v8949 = vand.u32 %v8947, 31
  %v8950 = vsub.s32 32, %v8949
  %v8951 = vshrl.u32 683565275, %v8950
  %v8952 = vshll.u32 683565275, %v8949
  %v8953 = vshrl.u32 2475754826, %v8950
  %v8954 = vor.u32 %v8952, %v8953
  %v8955 = vshll.u32 2475754826, %v8949
  %v8956 = vshrl.u32 2131351028, %v8950
  %v8957 = vor.u32 %v8955, %v8956
  %v8958 = vshll.u32 2131351028, %v8949
  %v8959 = vshrl.u32 2102212464, %v8950
  %v8960 = vor.u32 %v8958, %v8959
  %v8961 = vshll.u32 2102212464, %v8949
  %v8962 = vshrl.u32 920167782, %v8950
  %v8963 = vor.u32 %v8961, %v8962
  %v8964 = vshll.u32 920167782, %v8949
  %v8965 = vshrl.u32 1326507024, %v8950
  %v8966 = vor.u32 %v8964, %v8965
  %vm8967 = vcmp.lt.s32.totalorder %v8948, 1
  %vm8968 = vcmp.lt.s32.totalorder %v8948, 2
  %vm8969 = vcmp.lt.s32.totalorder %v8948, 3
  %vm8970 = vcmp.lt.s32.totalorder %v8948, 4
  %v8971 = vsel %vm8967, %v8951, %v8954
  %v8972 = vsel %vm8970, %v8960, 2102212464
  %v8973 = vsel %vm8969, %v8957, %v8972
  %v8974 = vsel %vm8968, %v8971, %v8973
  %v8975 = vsel %vm8967, %v8954, %v8957
  %v8976 = vsel %vm8970, %v8963, 920167782
  %v8977 = vsel %vm8969, %v8960, %v8976
  %v8978 = vsel %vm8968, %v8975, %v8977
  %v8979 = vsel %vm8967, %v8957, %v8960
  %v8980 = vsel %vm8970, %v8966, 1326507024
  %v8981 = vsel %vm8969, %v8963, %v8980
  %v8982 = vsel %vm8968, %v8979, %v8981
  %v8983 = vshll.u32 %v8943, 8
  %v8984 = vmul.u32.u64.compose %v8983, %v8982
  %v8985 = vextract.low.u32 %v8984
  %v8986 = vextract.high.u32 %v8984
  %v8987 = vmul.u32.u64.compose %v8983, %v8978
  %v8988 = vextract.low.u32 %v8987
  %v8989 = vextract.high.u32 %v8987
  %v8990 = vmul.u32 %v8983, %v8974
  %v8991 = vadd.s32 %v8986, %v8988
  %vm8992 = vc.u32 %v8986, %v8988
  %v8993 = vadd.s32 %v8989, 1
  %v8994 = vsel %vm8992, %v8993, %v8989
  %v8995 = vadd.s32 %v8990, %v8994
  %v8996 = vadd.s32 %v8995, 536870912
  %v8997 = vshrl.u32 %v8996, 30
  %v8998 = vshll.u32 %v8997, 30
  %v8999 = vsub.s32 %v8995, %v8998
  %vm9000 = vcmp.lt.s32.totalorder %v8999, 0
  %v9001 = vsub.s32 0, %v8999
  %v9002 = vsel %vm9000, %v9001, %v8999
  %v9003 = vclz %v9002
  %v9004 = vsub.s32 %v9003, 2
  %vm9005 = vcmp.gt.s32.totalorder 0, %v9004
  %v9006 = vsel %vm9005, 0, %v9004
  %v9007 = vsub.s32 32, %v9006
  %v9008 = vshll.u32 %v8999, %v9006
  %v9009 = vshrl.u32 %v8991, %v9007
  %v9010 = vor.u32 %v9008, %v9009
  %v9011 = vsub.s32 4294967266, %v9006
  %v9012 = vadd.s32 %v9011, 127
  %v9013 = vshll.u32 %v9012, 23
  %v9014 = vor.u32 4788187, %v9013
  %v9015 = vand.u32 2147483647, %v9014
  %v9017 = vcvt.s32.f32 %v9010
  %v9018 = vmul.f32 %v9017, %v9015
  %v9019 = vxor.u32 %v9018, 2147483648
  %v9020 = vsel %vm8937, %v9019, %v9018
  %v9021 = vsub.s32 4, %v8997
  %v9022 = vsel %vm8937, %v9021, %v8997
  %v9023 = vsel %vm8936, %v5806, %v9020
  %v9024 = vsel %vm8936, 0, %v9022
  %v9025 = vcosq.f32.pop %v9023
  %v9026 = vsinq.f32.pop %v9023
  %vm9027 = vweird.f32 %v5806
  %v9028 = vadd.s32 %v9024, 3
  %v9029 = vand.u32 %v9028, 3
  %vm9030 = vcmp.lt.s32.totalorder %v9029, 2
  %vm9031 = vcmp.eq.s32.totalorder %v9029, 0
  %v9032 = vxor.u32 %v9026, 2147483648
  %v9033 = vsel %vm9031, %v9025, %v9032
  %vm9034 = vcmp.eq.s32.totalorder %v9029, 2
  %v9035 = vxor.u32 %v9025, 2147483648
  %v9036 = vsel %vm9034, %v9035, %v9026
  %v9037 = vsel %vm9030, %v9033, %v9036
  %v9038 = vsel %vm9027, nan, %v9037
  %v9039 = vand.u32 2147483647, %v5812
  %vm9040 = vcmp.le.f32.partialorder %v9039, 0.7853982
  %vm9041 = vcmp.lt.s32.totalorder %v5812, 0
  %v9042 = vand.u32 %v5812, 2139095040
  %v9043 = vshrl.u32 %v9042, 23
  %v9044 = vsub.s32 %v9043, 127
  %v9045 = vand.u32 2147483647, %v5812
  %v9046 = vand.u32 %v9045, 8388607
  %v9047 = vor.u32 %v9046, 8388608
  %v9048 = vsub.s32 0, %v9047
  %v9049 = vadd.s32 %v9044, 1
  %vm9050 = vcmp.gt.s32.totalorder %v9049, 0
  %v9051 = vsel %vm9050, %v9049, 0
  %v9052 = vshrl.u32 %v9051, 5
  %v9053 = vand.u32 %v9051, 31
  %v9054 = vsub.s32 32, %v9053
  %v9055 = vshrl.u32 683565275, %v9054
  %v9056 = vshll.u32 683565275, %v9053
  %v9057 = vshrl.u32 2475754826, %v9054
  %v9058 = vor.u32 %v9056, %v9057
  %v9059 = vshll.u32 2475754826, %v9053
  %v9060 = vshrl.u32 2131351028, %v9054
  %v9061 = vor.u32 %v9059, %v9060
  %v9062 = vshll.u32 2131351028, %v9053
  %v9063 = vshrl.u32 2102212464, %v9054
  %v9064 = vor.u32 %v9062, %v9063
  %v9065 = vshll.u32 2102212464, %v9053
  %v9066 = vshrl.u32 920167782, %v9054
  %v9067 = vor.u32 %v9065, %v9066
  %v9068 = vshll.u32 920167782, %v9053
  %v9069 = vshrl.u32 1326507024, %v9054
  %v9070 = vor.u32 %v9068, %v9069
  %vm9071 = vcmp.lt.s32.totalorder %v9052, 1
  %vm9072 = vcmp.lt.s32.totalorder %v9052, 2
  %vm9073 = vcmp.lt.s32.totalorder %v9052, 3
  %vm9074 = vcmp.lt.s32.totalorder %v9052, 4
  %v9075 = vsel %vm9071, %v9055, %v9058
  %v9076 = vsel %vm9074, %v9064, 2102212464
  %v9077 = vsel %vm9073, %v9061, %v9076
  %v9078 = vsel %vm9072, %v9075, %v9077
  %v9079 = vsel %vm9071, %v9058, %v9061
  %v9080 = vsel %vm9074, %v9067, 920167782
  %v9081 = vsel %vm9073, %v9064, %v9080
  %v9082 = vsel %vm9072, %v9079, %v9081
  %v9083 = vsel %vm9071, %v9061, %v9064
  %v9084 = vsel %vm9074, %v9070, 1326507024
  %v9085 = vsel %vm9073, %v9067, %v9084
  %v9086 = vsel %vm9072, %v9083, %v9085
  %v9087 = vshll.u32 %v9047, 8
  %v9088 = vmul.u32.u64.compose %v9087, %v9086
  %v9089 = vextract.low.u32 %v9088
  %v9090 = vextract.high.u32 %v9088
  %v9091 = vmul.u32.u64.compose %v9087, %v9082
  %v9092 = vextract.low.u32 %v9091
  %v9093 = vextract.high.u32 %v9091
  %v9094 = vmul.u32 %v9087, %v9078
  %v9095 = vadd.s32 %v9090, %v9092
  %vm9096 = vc.u32 %v9090, %v9092
  %v9097 = vadd.s32 %v9093, 1
  %v9098 = vsel %vm9096, %v9097, %v9093
  %v9099 = vadd.s32 %v9094, %v9098
  %v9100 = vadd.s32 %v9099, 536870912
  %v9101 = vshrl.u32 %v9100, 30
  %v9102 = vshll.u32 %v9101, 30
  %v9103 = vsub.s32 %v9099, %v9102
  %vm9104 = vcmp.lt.s32.totalorder %v9103, 0
  %v9105 = vsub.s32 0, %v9103
  %v9106 = vsel %vm9104, %v9105, %v9103
  %v9107 = vclz %v9106
  %v9108 = vsub.s32 %v9107, 2
  %vm9109 = vcmp.gt.s32.totalorder 0, %v9108
  %v9110 = vsel %vm9109, 0, %v9108
  %v9111 = vsub.s32 32, %v9110
  %v9112 = vshll.u32 %v9103, %v9110
  %v9113 = vshrl.u32 %v9095, %v9111
  %v9114 = vor.u32 %v9112, %v9113
  %v9115 = vsub.s32 4294967266, %v9110
  %v9116 = vadd.s32 %v9115, 127
  %v9117 = vshll.u32 %v9116, 23
  %v9118 = vor.u32 4788187, %v9117
  %v9119 = vand.u32 2147483647, %v9118
  %v9121 = vcvt.s32.f32 %v9114
  %v9122 = vmul.f32 %v9121, %v9119
  %v9123 = vxor.u32 %v9122, 2147483648
  %v9124 = vsel %vm9041, %v9123, %v9122
  %v9125 = vsub.s32 4, %v9101
  %v9126 = vsel %vm9041, %v9125, %v9101
  %v9127 = vsel %vm9040, %v5812, %v9124
  %v9128 = vsel %vm9040, 0, %v9126
  %v9129 = vcosq.f32.pop %v9127
  %v9130 = vsinq.f32.pop %v9127
  %vm9131 = vweird.f32 %v5812
  %v9132 = vadd.s32 %v9128, 3
  %v9133 = vand.u32 %v9132, 3
  %vm9134 = vcmp.lt.s32.totalorder %v9133, 2
  %vm9135 = vcmp.eq.s32.totalorder %v9133, 0
  %v9136 = vxor.u32 %v9130, 2147483648
  %v9137 = vsel %vm9135, %v9129, %v9136
  %vm9138 = vcmp.eq.s32.totalorder %v9133, 2
  %v9139 = vxor.u32 %v9129, 2147483648
  %v9140 = vsel %vm9138, %v9139, %v9130
  %v9141 = vsel %vm9134, %v9137, %v9140
  %v9142 = vsel %vm9131, nan, %v9141
  %v9143 = vld [vmem:[%s5] sm:$0xff]
  %v9144 = vld [vmem:[%s5 + $0x8] sm:$0xff]
  %v9145 = vld [vmem:[%s5 + $0x10] sm:$0xff]
  %v9146 = vld [vmem:[%s5 + $0x18] sm:$0xff]
  %v9147 = vld [vmem:[%s5 + $0x20] sm:$0xff]
  %v9148 = vld [vmem:[%s5 + $0x28] sm:$0xff]
  %v9149 = vld [vmem:[%s5 + $0x30] sm:$0xff]
  %v9150 = vld [vmem:[%s5 + $0x38] sm:$0xff]
  %v9151 = vld [vmem:[%s5 + $0x40] sm:$0xff]
  %v9152 = vld [vmem:[%s5 + $0x48] sm:$0xff]
  %v9153 = vld [vmem:[%s5 + $0x50] sm:$0xff]
  %v9154 = vld [vmem:[%s5 + $0x58] sm:$0xff]
  %v9155 = vld [vmem:[%s5 + $0x60] sm:$0xff]
  %v9156 = vld [vmem:[%s5 + $0x68] sm:$0xff]
  %v9157 = vld [vmem:[%s5 + $0x70] sm:$0xff]
  %v9158 = vld [vmem:[%s5 + $0x78] sm:$0xff]
  %v9159 = vld [vmem:[%s6] sm:$0x1]
  %v9161 = vlaneseq
  %v9162 = vshrl.u32 %v9161, 7
  %v9163 = vsub.s32 0, %v9162
  %v9164 = vrot.slane %v9159, %v9163
  %9166 = vmatprep.subr.mxu0 0.0
  %v9167 = vand.u32 %v9143, 4294901760
  %9168 = vmatpush1.msra.mxu0 %v9167
  %9169 = vmatprep.subr.mxu0 0.0
  %v9170 = vand.u32 %v9144, 4294901760
  %9171 = vmatpush1.msra.mxu0 %v9170
  %9172 = vmatprep.subr.mxu0 0.0
  %v9173 = vand.u32 %v9145, 4294901760
  %9174 = vmatpush1.msra.mxu0 %v9173
  %9175 = vmatprep.subr.mxu0 0.0
  %v9176 = vand.u32 %v9146, 4294901760
  %9177 = vmatpush1.msra.mxu0 %v9176
  %9178 = vmatprep.subr.mxu0 0.0
  %v9179 = vand.u32 %v9147, 4294901760
  %9180 = vmatpush1.msra.mxu0 %v9179
  %9181 = vmatprep.subr.mxu0 0.0
  %v9182 = vand.u32 %v9148, 4294901760
  %9183 = vmatpush1.msra.mxu0 %v9182
  %9184 = vmatprep.subr.mxu0 0.0
  %v9185 = vand.u32 %v9149, 4294901760
  %9186 = vmatpush1.msra.mxu0 %v9185
  %9187 = vmatprep.subr.mxu0 0.0
  %v9188 = vand.u32 %v9150, 4294901760
  %9189 = vmatpush1.msra.mxu0 %v9188
  %9190 = vmatprep.subr.mxu0 0.0
  %v9191 = vand.u32 %v9151, 4294901760
  %9192 = vmatpush1.msra.mxu0 %v9191
  %9193 = vmatprep.subr.mxu0 0.0
  %v9194 = vand.u32 %v9152, 4294901760
  %9195 = vmatpush1.msra.mxu0 %v9194
  %9196 = vmatprep.subr.mxu0 0.0
  %v9197 = vand.u32 %v9153, 4294901760
  %9198 = vmatpush1.msra.mxu0 %v9197
  %9199 = vmatprep.subr.mxu0 0.0
  %v9200 = vand.u32 %v9154, 4294901760
  %9201 = vmatpush1.msra.mxu0 %v9200
  %9202 = vmatprep.subr.mxu0 0.0
  %v9203 = vand.u32 %v9155, 4294901760
  %9204 = vmatpush1.msra.mxu0 %v9203
  %9205 = vmatprep.subr.mxu0 0.0
  %v9206 = vand.u32 %v9156, 4294901760
  %9207 = vmatpush1.msra.mxu0 %v9206
  %9208 = vmatprep.subr.mxu0 0.0
  %v9209 = vand.u32 %v9157, 4294901760
  %9210 = vmatpush1.msra.mxu0 %v9209
  %9211 = vmatprep.subr.mxu0 0.0
  %v9212 = vand.u32 %v9158, 4294901760
  %9213 = vmatpush1.msra.mxu0 %v9212
  %9214 = vmatprep.subr.mxu0 0.0
  %9215 = vmatpush1.msra.mxu0 0.0
  %9216 = vmatprep.subr.mxu0 0.0
  %9217 = vmatpush1.msra.mxu0 0.0
  %9218 = vmatprep.subr.mxu0 0.0
  %9219 = vmatpush1.msra.mxu0 0.0
  %9220 = vmatprep.subr.mxu0 0.0
  %9221 = vmatpush1.msra.mxu0 0.0
  %9222 = vmatprep.subr.mxu0 0.0
  %9223 = vmatpush1.msra.mxu0 0.0
  %9224 = vmatprep.subr.mxu0 0.0
  %9225 = vmatpush1.msra.mxu0 0.0
  %9226 = vmatprep.subr.mxu0 0.0
  %9227 = vmatpush1.msra.mxu0 0.0
  %9228 = vmatprep.subr.mxu0 0.0
  %9229 = vmatpush1.msra.mxu0 0.0
  %9230 = vmatprep.subr.mxu0 0.0
  %9231 = vmatpush1.msra.mxu0 0.0
  %9232 = vmatprep.subr.mxu0 0.0
  %9233 = vmatpush1.msra.mxu0 0.0
  %9234 = vmatprep.subr.mxu0 0.0
  %9235 = vmatpush1.msra.mxu0 0.0
  %9236 = vmatprep.subr.mxu0 0.0
  %9237 = vmatpush1.msra.mxu0 0.0
  %9238 = vmatprep.subr.mxu0 0.0
  %9239 = vmatpush1.msra.mxu0 0.0
  %9240 = vmatprep.subr.mxu0 0.0
  %9241 = vmatpush1.msra.mxu0 0.0
  %9242 = vmatprep.subr.mxu0 0.0
  %9243 = vmatpush1.msra.mxu0 0.0
  %9244 = vmatprep.subr.mxu0 0.0
  %9245 = vmatpush1.msra.mxu0 0.0
  %9246 = vmatprep.mubr.f32.mxu0 0.0
  %v9247 = vand.u32 %v5918, 4294901760
  %v9248 = vsub.f32 %v5918, %v9247
  %v9249 = vand.u32 %v9248, 4294901760
  %v9250 = vsub.f32 %v9248, %v9249
  %v9251 = vand.u32 %v9250, 4294901760
  %9252 = vmatmul.mubr.f32.gmra.mrb[0].mxu0 %v9251
  %v9253 = vpop.f32.mrb[0].mxu0
  %v9254 = vadd.f32 %v9164, %v9253
  %v9255 = vpop.f32.mrb[0].mxu0
  %9256 = vmatprep.mubr.f32.mxu0 0.0
  %v9257 = vand.u32 %v6022, 4294901760
  %v9258 = vsub.f32 %v6022, %v9257
  %v9259 = vand.u32 %v9258, 4294901760
  %v9260 = vsub.f32 %v9258, %v9259
  %v9261 = vand.u32 %v9260, 4294901760
  %9262 = vmatmul.mubr.f32.gmra.mrb[0].mxu0 %v9261
  %v9263 = vpop.f32.mrb[0].mxu0
  %v9264 = vadd.f32 %v9164, %v9263
  %v9265 = vpop.f32.mrb[0].mxu0
  %9266 = vmatprep.mubr.f32.mxu0 0.0
  %v9267 = vand.u32 %v6126, 4294901760
  %v9268 = vsub.f32 %v6126, %v9267
  %v9269 = vand.u32 %v9268, 4294901760
  %v9270 = vsub.f32 %v9268, %v9269
  %v9271 = vand.u32 %v9270, 4294901760
  %9272 = vmatmul.mubr.f32.gmra.mrb[0].mxu0 %v9271
  %v9273 = vpop.f32.mrb[0].mxu0
  %v9274 = vadd.f32 %v9164, %v9273
  %v9275 = vpop.f32.mrb[0].mxu0
  %9276 = vmatprep.mubr.f32.mxu0 0.0
  %v9277 = vand.u32 %v6230, 4294901760
  %v9278 = vsub.f32 %v6230, %v9277
  %v9279 = vand.u32 %v9278, 4294901760
  %v9280 = vsub.f32 %v9278, %v9279
  %v9281 = vand.u32 %v9280, 4294901760
  %9282 = vmatmul.mubr.f32.gmra.mrb[0].mxu0 %v9281
  %v9283 = vpop.f32.mrb[0].mxu0
  %v9284 = vadd.f32 %v9164, %v9283
  %v9285 = vpop.f32.mrb[0].mxu0
  %9286 = vmatprep.mubr.f32.mxu0 0.0
  %v9287 = vand.u32 %v6334, 4294901760
  %v9288 = vsub.f32 %v6334, %v9287
  %v9289 = vand.u32 %v9288, 4294901760
  %v9290 = vsub.f32 %v9288, %v9289
  %v9291 = vand.u32 %v9290, 4294901760
  %9292 = vmatmul.mubr.f32.gmra.mrb[0].mxu0 %v9291
  %v9293 = vpop.f32.mrb[0].mxu0
  %v9294 = vadd.f32 %v9164, %v9293
  %v9295 = vpop.f32.mrb[0].mxu0
  %9296 = vmatprep.mubr.f32.mxu0 0.0
  %v9297 = vand.u32 %v6438, 4294901760
  %v9298 = vsub.f32 %v6438, %v9297
  %v9299 = vand.u32 %v9298, 4294901760
  %v9300 = vsub.f32 %v9298, %v9299
  %v9301 = vand.u32 %v9300, 4294901760
  %9302 = vmatmul.mubr.f32.gmra.mrb[0].mxu0 %v9301
  %v9303 = vpop.f32.mrb[0].mxu0
  %v9304 = vadd.f32 %v9164, %v9303
  %v9305 = vpop.f32.mrb[0].mxu0
  %9306 = vmatprep.mubr.f32.mxu0 0.0
  %v9307 = vand.u32 %v6542, 4294901760
  %v9308 = vsub.f32 %v6542, %v9307
  %v9309 = vand.u32 %v9308, 4294901760
  %v9310 = vsub.f32 %v9308, %v9309
  %v9311 = vand.u32 %v9310, 4294901760
  %9312 = vmatmul.mubr.f32.gmra.mrb[0].mxu0 %v9311
  %v9313 = vpop.f32.mrb[0].mxu0
  %v9314 = vadd.f32 %v9164, %v9313
  %v9315 = vpop.f32.mrb[0].mxu0
  %9316 = vmatprep.mubr.f32.mxu0 0.0
  %v9317 = vand.u32 %v6646, 4294901760
  %v9318 = vsub.f32 %v6646, %v9317
  %v9319 = vand.u32 %v9318, 4294901760
  %v9320 = vsub.f32 %v9318, %v9319
  %v9321 = vand.u32 %v9320, 4294901760
  %9322 = vmatmul.mubr.f32.gmra.mrb[0].mxu0 %v9321
  %v9323 = vpop.f32.mrb[0].mxu0
  %v9324 = vadd.f32 %v9164, %v9323
  %v9325 = vpop.f32.mrb[0].mxu0
  %9326 = vmatprep.mubr.f32.mxu0 0.0
  %v9327 = vand.u32 %v6750, 4294901760
  %v9328 = vsub.f32 %v6750, %v9327
  %v9329 = vand.u32 %v9328, 4294901760
  %v9330 = vsub.f32 %v9328, %v9329
  %v9331 = vand.u32 %v9330, 4294901760
  %9332 = vmatmul.mubr.f32.gmra.mrb[0].mxu0 %v9331
  %v9333 = vpop.f32.mrb[0].mxu0
  %v9334 = vadd.f32 %v9164, %v9333
  %v9335 = vpop.f32.mrb[0].mxu0
  %9336 = vmatprep.mubr.f32.mxu0 0.0
  %v9337 = vand.u32 %v6854, 4294901760
  %v9338 = vsub.f32 %v6854, %v9337
  %v9339 = vand.u32 %v9338, 4294901760
  %v9340 = vsub.f32 %v9338, %v9339
  %v9341 = vand.u32 %v9340, 4294901760
  %9342 = vmatmul.mubr.f32.gmra.mrb[0].mxu0 %v9341
  %v9343 = vpop.f32.mrb[0].mxu0
  %v9344 = vadd.f32 %v9164, %v9343
  %v9345 = vpop.f32.mrb[0].mxu0
  %9346 = vmatprep.mubr.f32.mxu0 0.0
  %v9347 = vand.u32 %v6958, 4294901760
  %v9348 = vsub.f32 %v6958, %v9347
  %v9349 = vand.u32 %v9348, 4294901760
  %v9350 = vsub.f32 %v9348, %v9349
  %v9351 = vand.u32 %v9350, 4294901760
  %9352 = vmatmul.mubr.f32.gmra.mrb[0].mxu0 %v9351
  %v9353 = vpop.f32.mrb[0].mxu0
  %v9354 = vadd.f32 %v9164, %v9353
  %v9355 = vpop.f32.mrb[0].mxu0
  %9356 = vmatprep.mubr.f32.mxu0 0.0
  %v9357 = vand.u32 %v7062, 4294901760
  %v9358 = vsub.f32 %v7062, %v9357
  %v9359 = vand.u32 %v9358, 4294901760
  %v9360 = vsub.f32 %v9358, %v9359
  %v9361 = vand.u32 %v9360, 4294901760
  %9362 = vmatmul.mubr.f32.gmra.mrb[0].mxu0 %v9361
  %v9363 = vpop.f32.mrb[0].mxu0
  %v9364 = vadd.f32 %v9164, %v9363
  %v9365 = vpop.f32.mrb[0].mxu0
  %9366 = vmatprep.mubr.f32.mxu0 0.0
  %v9367 = vand.u32 %v7166, 4294901760
  %v9368 = vsub.f32 %v7166, %v9367
  %v9369 = vand.u32 %v9368, 4294901760
  %v9370 = vsub.f32 %v9368, %v9369
  %v9371 = vand.u32 %v9370, 4294901760
  %9372 = vmatmul.mubr.f32.gmra.mrb[0].mxu0 %v9371
  %v9373 = vpop.f32.mrb[0].mxu0
  %v9374 = vadd.f32 %v9164, %v9373
  %v9375 = vpop.f32.mrb[0].mxu0
  %9376 = vmatprep.mubr.f32.mxu0 0.0
  %v9377 = vand.u32 %v7270, 4294901760
  %v9378 = vsub.f32 %v7270, %v9377
  %v9379 = vand.u32 %v9378, 4294901760
  %v9380 = vsub.f32 %v9378, %v9379
  %v9381 = vand.u32 %v9380, 4294901760
  %9382 = vmatmul.mubr.f32.gmra.mrb[0].mxu0 %v9381
  %v9383 = vpop.f32.mrb[0].mxu0
  %v9384 = vadd.f32 %v9164, %v9383
  %v9385 = vpop.f32.mrb[0].mxu0
  %9386 = vmatprep.mubr.f32.mxu0 0.0
  %v9387 = vand.u32 %v7374, 4294901760
  %v9388 = vsub.f32 %v7374, %v9387
  %v9389 = vand.u32 %v9388, 4294901760
  %v9390 = vsub.f32 %v9388, %v9389
  %v9391 = vand.u32 %v9390, 4294901760
  %9392 = vmatmul.mubr.f32.gmra.mrb[0].mxu0 %v9391
  %v9393 = vpop.f32.mrb[0].mxu0
  %v9394 = vadd.f32 %v9164, %v9393
  %v9395 = vpop.f32.mrb[0].mxu0
  %9396 = vmatprep.mubr.f32.mxu0 0.0
  %v9397 = vand.u32 %v7478, 4294901760
  %v9398 = vsub.f32 %v7478, %v9397
  %v9399 = vand.u32 %v9398, 4294901760
  %v9400 = vsub.f32 %v9398, %v9399
  %v9401 = vand.u32 %v9400, 4294901760
  %9402 = vmatmul.mubr.f32.gmra.mrb[0].mxu0 %v9401
  %v9403 = vpop.f32.mrb[0].mxu0
  %v9404 = vadd.f32 %v9164, %v9403
  %v9405 = vpop.f32.mrb[0].mxu0
  %9406 = vmatprep.mubr.f32.mxu0 0.0
  %v9407 = vand.u32 %v7582, 4294901760
  %v9408 = vsub.f32 %v7582, %v9407
  %v9409 = vand.u32 %v9408, 4294901760
  %v9410 = vsub.f32 %v9408, %v9409
  %v9411 = vand.u32 %v9410, 4294901760
  %9412 = vmatmul.mubr.f32.gmra.mrb[0].mxu0 %v9411
  %v9413 = vpop.f32.mrb[0].mxu0
  %v9414 = vadd.f32 %v9164, %v9413
  %v9415 = vpop.f32.mrb[0].mxu0
  %9416 = vmatprep.mubr.f32.mxu0 0.0
  %v9417 = vand.u32 %v7686, 4294901760
  %v9418 = vsub.f32 %v7686, %v9417
  %v9419 = vand.u32 %v9418, 4294901760
  %v9420 = vsub.f32 %v9418, %v9419
  %v9421 = vand.u32 %v9420, 4294901760
  %9422 = vmatmul.mubr.f32.gmra.mrb[0].mxu0 %v9421
  %v9423 = vpop.f32.mrb[0].mxu0
  %v9424 = vadd.f32 %v9164, %v9423
  %v9425 = vpop.f32.mrb[0].mxu0
  %9426 = vmatprep.mubr.f32.mxu0 0.0
  %v9427 = vand.u32 %v7790, 4294901760
  %v9428 = vsub.f32 %v7790, %v9427
  %v9429 = vand.u32 %v9428, 4294901760
  %v9430 = vsub.f32 %v9428, %v9429
  %v9431 = vand.u32 %v9430, 4294901760
  %9432 = vmatmul.mubr.f32.gmra.mrb[0].mxu0 %v9431
  %v9433 = vpop.f32.mrb[0].mxu0
  %v9434 = vadd.f32 %v9164, %v9433
  %v9435 = vpop.f32.mrb[0].mxu0
  %9436 = vmatprep.mubr.f32.mxu0 0.0
  %v9437 = vand.u32 %v7894, 4294901760
  %v9438 = vsub.f32 %v7894, %v9437
  %v9439 = vand.u32 %v9438, 4294901760
  %v9440 = vsub.f32 %v9438, %v9439
  %v9441 = vand.u32 %v9440, 4294901760
  %9442 = vmatmul.mubr.f32.gmra.mrb[0].mxu0 %v9441
  %v9443 = vpop.f32.mrb[0].mxu0
  %v9444 = vadd.f32 %v9164, %v9443
  %v9445 = vpop.f32.mrb[0].mxu0
  %9446 = vmatprep.mubr.f32.mxu0 0.0
  %v9447 = vand.u32 %v7998, 4294901760
  %v9448 = vsub.f32 %v7998, %v9447
  %v9449 = vand.u32 %v9448, 4294901760
  %v9450 = vsub.f32 %v9448, %v9449
  %v9451 = vand.u32 %v9450, 4294901760
  %9452 = vmatmul.mubr.f32.gmra.mrb[0].mxu0 %v9451
  %v9453 = vpop.f32.mrb[0].mxu0
  %v9454 = vadd.f32 %v9164, %v9453
  %v9455 = vpop.f32.mrb[0].mxu0
  %9456 = vmatprep.mubr.f32.mxu0 0.0
  %v9457 = vand.u32 %v8102, 4294901760
  %v9458 = vsub.f32 %v8102, %v9457
  %v9459 = vand.u32 %v9458, 4294901760
  %v9460 = vsub.f32 %v9458, %v9459
  %v9461 = vand.u32 %v9460, 4294901760
  %9462 = vmatmul.mubr.f32.gmra.mrb[0].mxu0 %v9461
  %v9463 = vpop.f32.mrb[0].mxu0
  %v9464 = vadd.f32 %v9164, %v9463
  %v9465 = vpop.f32.mrb[0].mxu0
  %9466 = vmatprep.mubr.f32.mxu0 0.0
  %v9467 = vand.u32 %v8206, 4294901760
  %v9468 = vsub.f32 %v8206, %v9467
  %v9469 = vand.u32 %v9468, 4294901760
  %v9470 = vsub.f32 %v9468, %v9469
  %v9471 = vand.u32 %v9470, 4294901760
  %9472 = vmatmul.mubr.f32.gmra.mrb[0].mxu0 %v9471
  %v9473 = vpop.f32.mrb[0].mxu0
  %v9474 = vadd.f32 %v9164, %v9473
  %v9475 = vpop.f32.mrb[0].mxu0
  %9476 = vmatprep.mubr.f32.mxu0 0.0
  %v9477 = vand.u32 %v8310, 4294901760
  %v9478 = vsub.f32 %v8310, %v9477
  %v9479 = vand.u32 %v9478, 4294901760
  %v9480 = vsub.f32 %v9478, %v9479
  %v9481 = vand.u32 %v9480, 4294901760
  %9482 = vmatmul.mubr.f32.gmra.mrb[0].mxu0 %v9481
  %v9483 = vpop.f32.mrb[0].mxu0
  %v9484 = vadd.f32 %v9164, %v9483
  %v9485 = vpop.f32.mrb[0].mxu0
  %9486 = vmatprep.mubr.f32.mxu0 0.0
  %v9487 = vand.u32 %v8414, 4294901760
  %v9488 = vsub.f32 %v8414, %v9487
  %v9489 = vand.u32 %v9488, 4294901760
  %v9490 = vsub.f32 %v9488, %v9489
  %v9491 = vand.u32 %v9490, 4294901760
  %9492 = vmatmul.mubr.f32.gmra.mrb[0].mxu0 %v9491
  %v9493 = vpop.f32.mrb[0].mxu0
  %v9494 = vadd.f32 %v9164, %v9493
  %v9495 = vpop.f32.mrb[0].mxu0
  %9496 = vmatprep.mubr.f32.mxu0 0.0
  %v9497 = vand.u32 %v8518, 4294901760
  %v9498 = vsub.f32 %v8518, %v9497
  %v9499 = vand.u32 %v9498, 4294901760
  %v9500 = vsub.f32 %v9498, %v9499
  %v9501 = vand.u32 %v9500, 4294901760
  %9502 = vmatmul.mubr.f32.gmra.mrb[0].mxu0 %v9501
  %v9503 = vpop.f32.mrb[0].mxu0
  %v9504 = vadd.f32 %v9164, %v9503
  %v9505 = vpop.f32.mrb[0].mxu0
  %9506 = vmatprep.mubr.f32.mxu0 0.0
  %v9507 = vand.u32 %v8622, 4294901760
  %v9508 = vsub.f32 %v8622, %v9507
  %v9509 = vand.u32 %v9508, 4294901760
  %v9510 = vsub.f32 %v9508, %v9509
  %v9511 = vand.u32 %v9510, 4294901760
  %9512 = vmatmul.mubr.f32.gmra.mrb[0].mxu0 %v9511
  %v9513 = vpop.f32.mrb[0].mxu0
  %v9514 = vadd.f32 %v9164, %v9513
  %v9515 = vpop.f32.mrb[0].mxu0
  %9516 = vmatprep.mubr.f32.mxu0 0.0
  %v9517 = vand.u32 %v8726, 4294901760
  %v9518 = vsub.f32 %v8726, %v9517
  %v9519 = vand.u32 %v9518, 4294901760
  %v9520 = vsub.f32 %v9518, %v9519
  %v9521 = vand.u32 %v9520, 4294901760
  %9522 = vmatmul.mubr.f32.gmra.mrb[0].mxu0 %v9521
  %v9523 = vpop.f32.mrb[0].mxu0
  %v9524 = vadd.f32 %v9164, %v9523
  %v9525 = vpop.f32.mrb[0].mxu0
  %9526 = vmatprep.mubr.f32.mxu0 0.0
  %v9527 = vand.u32 %v8830, 4294901760
  %v9528 = vsub.f32 %v8830, %v9527
  %v9529 = vand.u32 %v9528, 4294901760
  %v9530 = vsub.f32 %v9528, %v9529
  %v9531 = vand.u32 %v9530, 4294901760
  %9532 = vmatmul.mubr.f32.gmra.mrb[0].mxu0 %v9531
  %v9533 = vpop.f32.mrb[0].mxu0
  %v9534 = vadd.f32 %v9164, %v9533
  %v9535 = vpop.f32.mrb[0].mxu0
  %9536 = vmatprep.mubr.f32.mxu0 0.0
  %v9537 = vand.u32 %v8934, 4294901760
  %v9538 = vsub.f32 %v8934, %v9537
  %v9539 = vand.u32 %v9538, 4294901760
  %v9540 = vsub.f32 %v9538, %v9539
  %v9541 = vand.u32 %v9540, 4294901760
  %9542 = vmatmul.mubr.f32.gmra.mrb[0].mxu0 %v9541
  %v9543 = vpop.f32.mrb[0].mxu0
  %v9544 = vadd.f32 %v9164, %v9543
  %v9545 = vpop.f32.mrb[0].mxu0
  %9546 = vmatprep.mubr.f32.mxu0 0.0
  %v9547 = vand.u32 %v9038, 4294901760
  %v9548 = vsub.f32 %v9038, %v9547
  %v9549 = vand.u32 %v9548, 4294901760
  %v9550 = vsub.f32 %v9548, %v9549
  %v9551 = vand.u32 %v9550, 4294901760
  %9552 = vmatmul.mubr.f32.gmra.mrb[0].mxu0 %v9551
  %v9553 = vpop.f32.mrb[0].mxu0
  %v9554 = vadd.f32 %v9164, %v9553
  %v9555 = vpop.f32.mrb[0].mxu0
  %9556 = vmatprep.mubr.f32.mxu0 0.0
  %v9557 = vand.u32 %v9142, 4294901760
  %v9558 = vsub.f32 %v9142, %v9557
  %v9559 = vand.u32 %v9558, 4294901760
  %v9560 = vsub.f32 %v9558, %v9559
  %v9561 = vand.u32 %v9560, 4294901760
  %9562 = vmatmul.mubr.f32.gmra.mrb[0].mxu0 %v9561
  %v9563 = vpop.f32.mrb[0].mxu0
  %v9564 = vadd.f32 %v9164, %v9563
  %v9565 = vpop.f32.mrb[0].mxu0
  %9566 = vdwg.mxu0
  %9567 = vmatprep.subr.mxu0 0.0
  %v9568 = vand.u32 %v9143, 4294901760
  %v9569 = vsub.f32 %v9143, %v9568
  %v9570 = vand.u32 %v9569, 4294901760
  %v9571 = vsub.f32 %v9569, %v9570
  %v9572 = vand.u32 %v9571, 4294901760
  %9573 = vmatpush1.msra.mxu0 %v9572
  %9574 = vmatprep.subr.mxu0 0.0
  %v9575 = vand.u32 %v9144, 4294901760
  %v9576 = vsub.f32 %v9144, %v9575
  %v9577 = vand.u32 %v9576, 4294901760
  %v9578 = vsub.f32 %v9576, %v9577
  %v9579 = vand.u32 %v9578, 4294901760
  %9580 = vmatpush1.msra.mxu0 %v9579
  %9581 = vmatprep.subr.mxu0 0.0
  %v9582 = vand.u32 %v9145, 4294901760
  %v9583 = vsub.f32 %v9145, %v9582
  %v9584 = vand.u32 %v9583, 4294901760
  %v9585 = vsub.f32 %v9583, %v9584
  %v9586 = vand.u32 %v9585, 4294901760
  %9587 = vmatpush1.msra.mxu0 %v9586
  %9588 = vmatprep.subr.mxu0 0.0
  %v9589 = vand.u32 %v9146, 4294901760
  %v9590 = vsub.f32 %v9146, %v9589
  %v9591 = vand.u32 %v9590, 4294901760
  %v9592 = vsub.f32 %v9590, %v9591
  %v9593 = vand.u32 %v9592, 4294901760
  %9594 = vmatpush1.msra.mxu0 %v9593
  %9595 = vmatprep.subr.mxu0 0.0
  %v9596 = vand.u32 %v9147, 4294901760
  %v9597 = vsub.f32 %v9147, %v9596
  %v9598 = vand.u32 %v9597, 4294901760
  %v9599 = vsub.f32 %v9597, %v9598
  %v9600 = vand.u32 %v9599, 4294901760
  %9601 = vmatpush1.msra.mxu0 %v9600
  %9602 = vmatprep.subr.mxu0 0.0
  %v9603 = vand.u32 %v9148, 4294901760
  %v9604 = vsub.f32 %v9148, %v9603
  %v9605 = vand.u32 %v9604, 4294901760
  %v9606 = vsub.f32 %v9604, %v9605
  %v9607 = vand.u32 %v9606, 4294901760
  %9608 = vmatpush1.msra.mxu0 %v9607
  %9609 = vmatprep.subr.mxu0 0.0
  %v9610 = vand.u32 %v9149, 4294901760
  %v9611 = vsub.f32 %v9149, %v9610
  %v9612 = vand.u32 %v9611, 4294901760
  %v9613 = vsub.f32 %v9611, %v9612
  %v9614 = vand.u32 %v9613, 4294901760
  %9615 = vmatpush1.msra.mxu0 %v9614
  %9616 = vmatprep.subr.mxu0 0.0
  %v9617 = vand.u32 %v9150, 4294901760
  %v9618 = vsub.f32 %v9150, %v9617
  %v9619 = vand.u32 %v9618, 4294901760
  %v9620 = vsub.f32 %v9618, %v9619
  %v9621 = vand.u32 %v9620, 4294901760
  %9622 = vmatpush1.msra.mxu0 %v9621
  %9623 = vmatprep.subr.mxu0 0.0
  %v9624 = vand.u32 %v9151, 4294901760
  %v9625 = vsub.f32 %v9151, %v9624
  %v9626 = vand.u32 %v9625, 4294901760
  %v9627 = vsub.f32 %v9625, %v9626
  %v9628 = vand.u32 %v9627, 4294901760
  %9629 = vmatpush1.msra.mxu0 %v9628
  %9630 = vmatprep.subr.mxu0 0.0
  %v9631 = vand.u32 %v9152, 4294901760
  %v9632 = vsub.f32 %v9152, %v9631
  %v9633 = vand.u32 %v9632, 4294901760
  %v9634 = vsub.f32 %v9632, %v9633
  %v9635 = vand.u32 %v9634, 4294901760
  %9636 = vmatpush1.msra.mxu0 %v9635
  %9637 = vmatprep.subr.mxu0 0.0
  %v9638 = vand.u32 %v9153, 4294901760
  %v9639 = vsub.f32 %v9153, %v9638
  %v9640 = vand.u32 %v9639, 4294901760
  %v9641 = vsub.f32 %v9639, %v9640
  %v9642 = vand.u32 %v9641, 4294901760
  %9643 = vmatpush1.msra.mxu0 %v9642
  %9644 = vmatprep.subr.mxu0 0.0
  %v9645 = vand.u32 %v9154, 4294901760
  %v9646 = vsub.f32 %v9154, %v9645
  %v9647 = vand.u32 %v9646, 4294901760
  %v9648 = vsub.f32 %v9646, %v9647
  %v9649 = vand.u32 %v9648, 4294901760
  %9650 = vmatpush1.msra.mxu0 %v9649
  %9651 = vmatprep.subr.mxu0 0.0
  %v9652 = vand.u32 %v9155, 4294901760
  %v9653 = vsub.f32 %v9155, %v9652
  %v9654 = vand.u32 %v9653, 4294901760
  %v9655 = vsub.f32 %v9653, %v9654
  %v9656 = vand.u32 %v9655, 4294901760
  %9657 = vmatpush1.msra.mxu0 %v9656
  %9658 = vmatprep.subr.mxu0 0.0
  %v9659 = vand.u32 %v9156, 4294901760
  %v9660 = vsub.f32 %v9156, %v9659
  %v9661 = vand.u32 %v9660, 4294901760
  %v9662 = vsub.f32 %v9660, %v9661
  %v9663 = vand.u32 %v9662, 4294901760
  %9664 = vmatpush1.msra.mxu0 %v9663
  %9665 = vmatprep.subr.mxu0 0.0
  %v9666 = vand.u32 %v9157, 4294901760
  %v9667 = vsub.f32 %v9157, %v9666
  %v9668 = vand.u32 %v9667, 4294901760
  %v9669 = vsub.f32 %v9667, %v9668
  %v9670 = vand.u32 %v9669, 4294901760
  %9671 = vmatpush1.msra.mxu0 %v9670
  %9672 = vmatprep.subr.mxu0 0.0
  %v9673 = vand.u32 %v9158, 4294901760
  %v9674 = vsub.f32 %v9158, %v9673
  %v9675 = vand.u32 %v9674, 4294901760
  %v9676 = vsub.f32 %v9674, %v9675
  %v9677 = vand.u32 %v9676, 4294901760
  %9678 = vmatpush1.msra.mxu0 %v9677
  %9679 = vmatprep.subr.mxu0 0.0
  %9680 = vmatpush1.msra.mxu0 0.0
  %9681 = vmatprep.subr.mxu0 0.0
  %9682 = vmatpush1.msra.mxu0 0.0
  %9683 = vmatprep.subr.mxu0 0.0
  %9684 = vmatpush1.msra.mxu0 0.0
  %9685 = vmatprep.subr.mxu0 0.0
  %9686 = vmatpush1.msra.mxu0 0.0
  %9687 = vmatprep.subr.mxu0 0.0
  %9688 = vmatpush1.msra.mxu0 0.0
  %9689 = vmatprep.subr.mxu0 0.0
  %9690 = vmatpush1.msra.mxu0 0.0
  %9691 = vmatprep.subr.mxu0 0.0
  %9692 = vmatpush1.msra.mxu0 0.0
  %9693 = vmatprep.subr.mxu0 0.0
  %9694 = vmatpush1.msra.mxu0 0.0
  %9695 = vmatprep.subr.mxu0 0.0
  %9696 = vmatpush1.msra.mxu0 0.0
  %9697 = vmatprep.subr.mxu0 0.0
  %9698 = vmatpush1.msra.mxu0 0.0
  %9699 = vmatprep.subr.mxu0 0.0
  %9700 = vmatpush1.msra.mxu0 0.0
  %9701 = vmatprep.subr.mxu0 0.0
  %9702 = vmatpush1.msra.mxu0 0.0
  %9703 = vmatprep.subr.mxu0 0.0
  %9704 = vmatpush1.msra.mxu0 0.0
  %9705 = vmatprep.subr.mxu0 0.0
  %9706 = vmatpush1.msra.mxu0 0.0
  %9707 = vmatprep.subr.mxu0 0.0
  %9708 = vmatpush1.msra.mxu0 0.0
  %9709 = vmatprep.subr.mxu0 0.0
  %9710 = vmatpush1.msra.mxu0 0.0
  %9711 = vmatprep.mubr.f32.mxu0 0.0
  %v9712 = vand.u32 %v5918, 4294901760
  %9713 = vmatmul.mubr.f32.gmra.mrb[0].mxu0 %v9712
  %v9714 = vpop.f32.mrb[0].mxu0
  %v9715 = vadd.f32 %v9254, %v9714
  %v9716 = vpop.f32.mrb[0].mxu0
  %9717 = vmatprep.mubr.f32.mxu0 0.0
  %v9718 = vand.u32 %v6022, 4294901760
  %9719 = vmatmul.mubr.f32.gmra.mrb[0].mxu0 %v9718
  %v9720 = vpop.f32.mrb[0].mxu0
  %v9721 = vadd.f32 %v9264, %v9720
  %v9722 = vpop.f32.mrb[0].mxu0
  %9723 = vmatprep.mubr.f32.mxu0 0.0
  %v9724 = vand.u32 %v6126, 4294901760
  %9725 = vmatmul.mubr.f32.gmra.mrb[0].mxu0 %v9724
  %v9726 = vpop.f32.mrb[0].mxu0
  %v9727 = vadd.f32 %v9274, %v9726
  %v9728 = vpop.f32.mrb[0].mxu0
  %9729 = vmatprep.mubr.f32.mxu0 0.0
  %v9730 = vand.u32 %v6230, 4294901760
  %9731 = vmatmul.mubr.f32.gmra.mrb[0].mxu0 %v9730
  %v9732 = vpop.f32.mrb[0].mxu0
  %v9733 = vadd.f32 %v9284, %v9732
  %v9734 = vpop.f32.mrb[0].mxu0
  %9735 = vmatprep.mubr.f32.mxu0 0.0
  %v9736 = vand.u32 %v6334, 4294901760
  %9737 = vmatmul.mubr.f32.gmra.mrb[0].mxu0 %v9736
  %v9738 = vpop.f32.mrb[0].mxu0
  %v9739 = vadd.f32 %v9294, %v9738
  %v9740 = vpop.f32.mrb[0].mxu0
  %9741 = vmatprep.mubr.f32.mxu0 0.0
  %v9742 = vand.u32 %v6438, 4294901760
  %9743 = vmatmul.mubr.f32.gmra.mrb[0].mxu0 %v9742
  %v9744 = vpop.f32.mrb[0].mxu0
  %v9745 = vadd.f32 %v9304, %v9744
  %v9746 = vpop.f32.mrb[0].mxu0
  %9747 = vmatprep.mubr.f32.mxu0 0.0
  %v9748 = vand.u32 %v6542, 4294901760
  %9749 = vmatmul.mubr.f32.gmra.mrb[0].mxu0 %v9748
  %v9750 = vpop.f32.mrb[0].mxu0
  %v9751 = vadd.f32 %v9314, %v9750
  %v9752 = vpop.f32.mrb[0].mxu0
  %9753 = vmatprep.mubr.f32.mxu0 0.0
  %v9754 = vand.u32 %v6646, 4294901760
  %9755 = vmatmul.mubr.f32.gmra.mrb[0].mxu0 %v9754
  %v9756 = vpop.f32.mrb[0].mxu0
  %v9757 = vadd.f32 %v9324, %v9756
  %v9758 = vpop.f32.mrb[0].mxu0
  %9759 = vmatprep.mubr.f32.mxu0 0.0
  %v9760 = vand.u32 %v6750, 4294901760
  %9761 = vmatmul.mubr.f32.gmra.mrb[0].mxu0 %v9760
  %v9762 = vpop.f32.mrb[0].mxu0
  %v9763 = vadd.f32 %v9334, %v9762
  %v9764 = vpop.f32.mrb[0].mxu0
  %9765 = vmatprep.mubr.f32.mxu0 0.0
  %v9766 = vand.u32 %v6854, 4294901760
  %9767 = vmatmul.mubr.f32.gmra.mrb[0].mxu0 %v9766
  %v9768 = vpop.f32.mrb[0].mxu0
  %v9769 = vadd.f32 %v9344, %v9768
  %v9770 = vpop.f32.mrb[0].mxu0
  %9771 = vmatprep.mubr.f32.mxu0 0.0
  %v9772 = vand.u32 %v6958, 4294901760
  %9773 = vmatmul.mubr.f32.gmra.mrb[0].mxu0 %v9772
  %v9774 = vpop.f32.mrb[0].mxu0
  %v9775 = vadd.f32 %v9354, %v9774
  %v9776 = vpop.f32.mrb[0].mxu0
  %9777 = vmatprep.mubr.f32.mxu0 0.0
  %v9778 = vand.u32 %v7062, 4294901760
  %9779 = vmatmul.mubr.f32.gmra.mrb[0].mxu0 %v9778
  %v9780 = vpop.f32.mrb[0].mxu0
  %v9781 = vadd.f32 %v9364, %v9780
  %v9782 = vpop.f32.mrb[0].mxu0
  %9783 = vmatprep.mubr.f32.mxu0 0.0
  %v9784 = vand.u32 %v7166, 4294901760
  %9785 = vmatmul.mubr.f32.gmra.mrb[0].mxu0 %v9784
  %v9786 = vpop.f32.mrb[0].mxu0
  %v9787 = vadd.f32 %v9374, %v9786
  %v9788 = vpop.f32.mrb[0].mxu0
  %9789 = vmatprep.mubr.f32.mxu0 0.0
  %v9790 = vand.u32 %v7270, 4294901760
  %9791 = vmatmul.mubr.f32.gmra.mrb[0].mxu0 %v9790
  %v9792 = vpop.f32.mrb[0].mxu0
  %v9793 = vadd.f32 %v9384, %v9792
  %v9794 = vpop.f32.mrb[0].mxu0
  %9795 = vmatprep.mubr.f32.mxu0 0.0
  %v9796 = vand.u32 %v7374, 4294901760
  %9797 = vmatmul.mubr.f32.gmra.mrb[0].mxu0 %v9796
  %v9798 = vpop.f32.mrb[0].mxu0
  %v9799 = vadd.f32 %v9394, %v9798
  %v9800 = vpop.f32.mrb[0].mxu0
  %9801 = vmatprep.mubr.f32.mxu0 0.0
  %v9802 = vand.u32 %v7478, 4294901760
  %9803 = vmatmul.mubr.f32.gmra.mrb[0].mxu0 %v9802
  %v9804 = vpop.f32.mrb[0].mxu0
  %v9805 = vadd.f32 %v9404, %v9804
  %v9806 = vpop.f32.mrb[0].mxu0
  %9807 = vmatprep.mubr.f32.mxu0 0.0
  %v9808 = vand.u32 %v7582, 4294901760
  %9809 = vmatmul.mubr.f32.gmra.mrb[0].mxu0 %v9808
  %v9810 = vpop.f32.mrb[0].mxu0
  %v9811 = vadd.f32 %v9414, %v9810
  %v9812 = vpop.f32.mrb[0].mxu0
  %9813 = vmatprep.mubr.f32.mxu0 0.0
  %v9814 = vand.u32 %v7686, 4294901760
  %9815 = vmatmul.mubr.f32.gmra.mrb[0].mxu0 %v9814
  %v9816 = vpop.f32.mrb[0].mxu0
  %v9817 = vadd.f32 %v9424, %v9816
  %v9818 = vpop.f32.mrb[0].mxu0
  %9819 = vmatprep.mubr.f32.mxu0 0.0
  %v9820 = vand.u32 %v7790, 4294901760
  %9821 = vmatmul.mubr.f32.gmra.mrb[0].mxu0 %v9820
  %v9822 = vpop.f32.mrb[0].mxu0
  %v9823 = vadd.f32 %v9434, %v9822
  %v9824 = vpop.f32.mrb[0].mxu0
  %9825 = vmatprep.mubr.f32.mxu0 0.0
  %v9826 = vand.u32 %v7894, 4294901760
  %9827 = vmatmul.mubr.f32.gmra.mrb[0].mxu0 %v9826
  %v9828 = vpop.f32.mrb[0].mxu0
  %v9829 = vadd.f32 %v9444, %v9828
  %v9830 = vpop.f32.mrb[0].mxu0
  %9831 = vmatprep.mubr.f32.mxu0 0.0
  %v9832 = vand.u32 %v7998, 4294901760
  %9833 = vmatmul.mubr.f32.gmra.mrb[0].mxu0 %v9832
  %v9834 = vpop.f32.mrb[0].mxu0
  %v9835 = vadd.f32 %v9454, %v9834
  %v9836 = vpop.f32.mrb[0].mxu0
  %9837 = vmatprep.mubr.f32.mxu0 0.0
  %v9838 = vand.u32 %v8102, 4294901760
  %9839 = vmatmul.mubr.f32.gmra.mrb[0].mxu0 %v9838
  %v9840 = vpop.f32.mrb[0].mxu0
  %v9841 = vadd.f32 %v9464, %v9840
  %v9842 = vpop.f32.mrb[0].mxu0
  %9843 = vmatprep.mubr.f32.mxu0 0.0
  %v9844 = vand.u32 %v8206, 4294901760
  %9845 = vmatmul.mubr.f32.gmra.mrb[0].mxu0 %v9844
  %v9846 = vpop.f32.mrb[0].mxu0
  %v9847 = vadd.f32 %v9474, %v9846
  %v9848 = vpop.f32.mrb[0].mxu0
  %9849 = vmatprep.mubr.f32.mxu0 0.0
  %v9850 = vand.u32 %v8310, 4294901760
  %9851 = vmatmul.mubr.f32.gmra.mrb[0].mxu0 %v9850
  %v9852 = vpop.f32.mrb[0].mxu0
  %v9853 = vadd.f32 %v9484, %v9852
  %v9854 = vpop.f32.mrb[0].mxu0
  %9855 = vmatprep.mubr.f32.mxu0 0.0
  %v9856 = vand.u32 %v8414, 4294901760
  %9857 = vmatmul.mubr.f32.gmra.mrb[0].mxu0 %v9856
  %v9858 = vpop.f32.mrb[0].mxu0
  %v9859 = vadd.f32 %v9494, %v9858
  %v9860 = vpop.f32.mrb[0].mxu0
  %9861 = vmatprep.mubr.f32.mxu0 0.0
  %v9862 = vand.u32 %v8518, 4294901760
  %9863 = vmatmul.mubr.f32.gmra.mrb[0].mxu0 %v9862
  %v9864 = vpop.f32.mrb[0].mxu0
  %v9865 = vadd.f32 %v9504, %v9864
  %v9866 = vpop.f32.mrb[0].mxu0
  %9867 = vmatprep.mubr.f32.mxu0 0.0
  %v9868 = vand.u32 %v8622, 4294901760
  %9869 = vmatmul.mubr.f32.gmra.mrb[0].mxu0 %v9868
  %v9870 = vpop.f32.mrb[0].mxu0
  %v9871 = vadd.f32 %v9514, %v9870
  %v9872 = vpop.f32.mrb[0].mxu0
  %9873 = vmatprep.mubr.f32.mxu0 0.0
  %v9874 = vand.u32 %v8726, 4294901760
  %9875 = vmatmul.mubr.f32.gmra.mrb[0].mxu0 %v9874
  %v9876 = vpop.f32.mrb[0].mxu0
  %v9877 = vadd.f32 %v9524, %v9876
  %v9878 = vpop.f32.mrb[0].mxu0
  %9879 = vmatprep.mubr.f32.mxu0 0.0
  %v9880 = vand.u32 %v8830, 4294901760
  %9881 = vmatmul.mubr.f32.gmra.mrb[0].mxu0 %v9880
  %v9882 = vpop.f32.mrb[0].mxu0
  %v9883 = vadd.f32 %v9534, %v9882
  %v9884 = vpop.f32.mrb[0].mxu0
  %9885 = vmatprep.mubr.f32.mxu0 0.0
  %v9886 = vand.u32 %v8934, 4294901760
  %9887 = vmatmul.mubr.f32.gmra.mrb[0].mxu0 %v9886
  %v9888 = vpop.f32.mrb[0].mxu0
  %v9889 = vadd.f32 %v9544, %v9888
  %v9890 = vpop.f32.mrb[0].mxu0
  %9891 = vmatprep.mubr.f32.mxu0 0.0
  %v9892 = vand.u32 %v9038, 4294901760
  %9893 = vmatmul.mubr.f32.gmra.mrb[0].mxu0 %v9892
  %v9894 = vpop.f32.mrb[0].mxu0
  %v9895 = vadd.f32 %v9554, %v9894
  %v9896 = vpop.f32.mrb[0].mxu0
  %9897 = vmatprep.mubr.f32.mxu0 0.0
  %v9898 = vand.u32 %v9142, 4294901760
  %9899 = vmatmul.mubr.f32.gmra.mrb[0].mxu0 %v9898
  %v9900 = vpop.f32.mrb[0].mxu0
  %v9901 = vadd.f32 %v9564, %v9900
  %v9902 = vpop.f32.mrb[0].mxu0
  %9903 = vdwg.mxu0
  %9904 = vmatprep.subr.mxu0 0.0
  %v9905 = vand.u32 %v9143, 4294901760
  %v9906 = vsub.f32 %v9143, %v9905
  %9907 = vmatpush1.msra.mxu0 %v9906
  %9908 = vmatprep.subr.mxu0 0.0
  %v9909 = vand.u32 %v9144, 4294901760
  %v9910 = vsub.f32 %v9144, %v9909
  %9911 = vmatpush1.msra.mxu0 %v9910
  %9912 = vmatprep.subr.mxu0 0.0
  %v9913 = vand.u32 %v9145, 4294901760
  %v9914 = vsub.f32 %v9145, %v9913
  %9915 = vmatpush1.msra.mxu0 %v9914
  %9916 = vmatprep.subr.mxu0 0.0
  %v9917 = vand.u32 %v9146, 4294901760
  %v9918 = vsub.f32 %v9146, %v9917
  %9919 = vmatpush1.msra.mxu0 %v9918
  %9920 = vmatprep.subr.mxu0 0.0
  %v9921 = vand.u32 %v9147, 4294901760
  %v9922 = vsub.f32 %v9147, %v9921
  %9923 = vmatpush1.msra.mxu0 %v9922
  %9924 = vmatprep.subr.mxu0 0.0
  %v9925 = vand.u32 %v9148, 4294901760
  %v9926 = vsub.f32 %v9148, %v9925
  %9927 = vmatpush1.msra.mxu0 %v9926
  %9928 = vmatprep.subr.mxu0 0.0
  %v9929 = vand.u32 %v9149, 4294901760
  %v9930 = vsub.f32 %v9149, %v9929
  %9931 = vmatpush1.msra.mxu0 %v9930
  %9932 = vmatprep.subr.mxu0 0.0
  %v9933 = vand.u32 %v9150, 4294901760
  %v9934 = vsub.f32 %v9150, %v9933
  %9935 = vmatpush1.msra.mxu0 %v9934
  %9936 = vmatprep.subr.mxu0 0.0
  %v9937 = vand.u32 %v9151, 4294901760
  %v9938 = vsub.f32 %v9151, %v9937
  %9939 = vmatpush1.msra.mxu0 %v9938
  %9940 = vmatprep.subr.mxu0 0.0
  %v9941 = vand.u32 %v9152, 4294901760
  %v9942 = vsub.f32 %v9152, %v9941
  %9943 = vmatpush1.msra.mxu0 %v9942
  %9944 = vmatprep.subr.mxu0 0.0
  %v9945 = vand.u32 %v9153, 4294901760
  %v9946 = vsub.f32 %v9153, %v9945
  %9947 = vmatpush1.msra.mxu0 %v9946
  %9948 = vmatprep.subr.mxu0 0.0
  %v9949 = vand.u32 %v9154, 4294901760
  %v9950 = vsub.f32 %v9154, %v9949
  %9951 = vmatpush1.msra.mxu0 %v9950
  %9952 = vmatprep.subr.mxu0 0.0
  %v9953 = vand.u32 %v9155, 4294901760
  %v9954 = vsub.f32 %v9155, %v9953
  %9955 = vmatpush1.msra.mxu0 %v9954
  %9956 = vmatprep.subr.mxu0 0.0
  %v9957 = vand.u32 %v9156, 4294901760
  %v9958 = vsub.f32 %v9156, %v9957
  %9959 = vmatpush1.msra.mxu0 %v9958
  %9960 = vmatprep.subr.mxu0 0.0
  %v9961 = vand.u32 %v9157, 4294901760
  %v9962 = vsub.f32 %v9157, %v9961
  %9963 = vmatpush1.msra.mxu0 %v9962
  %9964 = vmatprep.subr.mxu0 0.0
  %v9965 = vand.u32 %v9158, 4294901760
  %v9966 = vsub.f32 %v9158, %v9965
  %9967 = vmatpush1.msra.mxu0 %v9966
  %9968 = vmatprep.subr.mxu0 0.0
  %9969 = vmatpush1.msra.mxu0 0.0
  %9970 = vmatprep.subr.mxu0 0.0
  %9971 = vmatpush1.msra.mxu0 0.0
  %9972 = vmatprep.subr.mxu0 0.0
  %9973 = vmatpush1.msra.mxu0 0.0
  %9974 = vmatprep.subr.mxu0 0.0
  %9975 = vmatpush1.msra.mxu0 0.0
  %9976 = vmatprep.subr.mxu0 0.0
  %9977 = vmatpush1.msra.mxu0 0.0
  %9978 = vmatprep.subr.mxu0 0.0
  %9979 = vmatpush1.msra.mxu0 0.0
  %9980 = vmatprep.subr.mxu0 0.0
  %9981 = vmatpush1.msra.mxu0 0.0
  %9982 = vmatprep.subr.mxu0 0.0
  %9983 = vmatpush1.msra.mxu0 0.0
  %9984 = vmatprep.subr.mxu0 0.0
  %9985 = vmatpush1.msra.mxu0 0.0
  %9986 = vmatprep.subr.mxu0 0.0
  %9987 = vmatpush1.msra.mxu0 0.0
  %9988 = vmatprep.subr.mxu0 0.0
  %9989 = vmatpush1.msra.mxu0 0.0
  %9990 = vmatprep.subr.mxu0 0.0
  %9991 = vmatpush1.msra.mxu0 0.0
  %9992 = vmatprep.subr.mxu0 0.0
  %9993 = vmatpush1.msra.mxu0 0.0
  %9994 = vmatprep.subr.mxu0 0.0
  %9995 = vmatpush1.msra.mxu0 0.0
  %9996 = vmatprep.subr.mxu0 0.0
  %9997 = vmatpush1.msra.mxu0 0.0
  %9998 = vmatprep.subr.mxu0 0.0
  %9999 = vmatpush1.msra.mxu0 0.0
  %10000 = vmatprep.mubr.f32.mxu0 0.0
  %v10001 = vand.u32 %v5918, 4294901760
  %v10002 = vsub.f32 %v5918, %v10001
  %10003 = vmatmul.mubr.f32.gmra.mrb[0].mxu0 %v10002
  %v10004 = vpop.f32.mrb[0].mxu0
  %v10005 = vadd.f32 %v9715, %v10004
  %v10006 = vpop.f32.mrb[0].mxu0
  %10007 = vmatprep.mubr.f32.mxu0 0.0
  %v10008 = vand.u32 %v6022, 4294901760
  %v10009 = vsub.f32 %v6022, %v10008
  %10010 = vmatmul.mubr.f32.gmra.mrb[0].mxu0 %v10009
  %v10011 = vpop.f32.mrb[0].mxu0
  %v10012 = vadd.f32 %v9721, %v10011
  %v10013 = vpop.f32.mrb[0].mxu0
  %10014 = vmatprep.mubr.f32.mxu0 0.0
  %v10015 = vand.u32 %v6126, 4294901760
  %v10016 = vsub.f32 %v6126, %v10015
  %10017 = vmatmul.mubr.f32.gmra.mrb[0].mxu0 %v10016
  %v10018 = vpop.f32.mrb[0].mxu0
  %v10019 = vadd.f32 %v9727, %v10018
  %v10020 = vpop.f32.mrb[0].mxu0
  %10021 = vmatprep.mubr.f32.mxu0 0.0
  %v10022 = vand.u32 %v6230, 4294901760
  %v10023 = vsub.f32 %v6230, %v10022
  %10024 = vmatmul.mubr.f32.gmra.mrb[0].mxu0 %v10023
  %v10025 = vpop.f32.mrb[0].mxu0
  %v10026 = vadd.f32 %v9733, %v10025
  %v10027 = vpop.f32.mrb[0].mxu0
  %10028 = vmatprep.mubr.f32.mxu0 0.0
  %v10029 = vand.u32 %v6334, 4294901760
  %v10030 = vsub.f32 %v6334, %v10029
  %10031 = vmatmul.mubr.f32.gmra.mrb[0].mxu0 %v10030
  %v10032 = vpop.f32.mrb[0].mxu0
  %v10033 = vadd.f32 %v9739, %v10032
  %v10034 = vpop.f32.mrb[0].mxu0
  %10035 = vmatprep.mubr.f32.mxu0 0.0
  %v10036 = vand.u32 %v6438, 4294901760
  %v10037 = vsub.f32 %v6438, %v10036
  %10038 = vmatmul.mubr.f32.gmra.mrb[0].mxu0 %v10037
  %v10039 = vpop.f32.mrb[0].mxu0
  %v10040 = vadd.f32 %v9745, %v10039
  %v10041 = vpop.f32.mrb[0].mxu0
  %10042 = vmatprep.mubr.f32.mxu0 0.0
  %v10043 = vand.u32 %v6542, 4294901760
  %v10044 = vsub.f32 %v6542, %v10043
  %10045 = vmatmul.mubr.f32.gmra.mrb[0].mxu0 %v10044
  %v10046 = vpop.f32.mrb[0].mxu0
  %v10047 = vadd.f32 %v9751, %v10046
  %v10048 = vpop.f32.mrb[0].mxu0
  %10049 = vmatprep.mubr.f32.mxu0 0.0
  %v10050 = vand.u32 %v6646, 4294901760
  %v10051 = vsub.f32 %v6646, %v10050
  %10052 = vmatmul.mubr.f32.gmra.mrb[0].mxu0 %v10051
  %v10053 = vpop.f32.mrb[0].mxu0
  %v10054 = vadd.f32 %v9757, %v10053
  %v10055 = vpop.f32.mrb[0].mxu0
  %10056 = vmatprep.mubr.f32.mxu0 0.0
  %v10057 = vand.u32 %v6750, 4294901760
  %v10058 = vsub.f32 %v6750, %v10057
  %10059 = vmatmul.mubr.f32.gmra.mrb[0].mxu0 %v10058
  %v10060 = vpop.f32.mrb[0].mxu0
  %v10061 = vadd.f32 %v9763, %v10060
  %v10062 = vpop.f32.mrb[0].mxu0
  %10063 = vmatprep.mubr.f32.mxu0 0.0
  %v10064 = vand.u32 %v6854, 4294901760
  %v10065 = vsub.f32 %v6854, %v10064
  %10066 = vmatmul.mubr.f32.gmra.mrb[0].mxu0 %v10065
  %v10067 = vpop.f32.mrb[0].mxu0
  %v10068 = vadd.f32 %v9769, %v10067
  %v10069 = vpop.f32.mrb[0].mxu0
  %10070 = vmatprep.mubr.f32.mxu0 0.0
  %v10071 = vand.u32 %v6958, 4294901760
  %v10072 = vsub.f32 %v6958, %v10071
  %10073 = vmatmul.mubr.f32.gmra.mrb[0].mxu0 %v10072
  %v10074 = vpop.f32.mrb[0].mxu0
  %v10075 = vadd.f32 %v9775, %v10074
  %v10076 = vpop.f32.mrb[0].mxu0
  %10077 = vmatprep.mubr.f32.mxu0 0.0
  %v10078 = vand.u32 %v7062, 4294901760
  %v10079 = vsub.f32 %v7062, %v10078
  %10080 = vmatmul.mubr.f32.gmra.mrb[0].mxu0 %v10079
  %v10081 = vpop.f32.mrb[0].mxu0
  %v10082 = vadd.f32 %v9781, %v10081
  %v10083 = vpop.f32.mrb[0].mxu0
  %10084 = vmatprep.mubr.f32.mxu0 0.0
  %v10085 = vand.u32 %v7166, 4294901760
  %v10086 = vsub.f32 %v7166, %v10085
  %10087 = vmatmul.mubr.f32.gmra.mrb[0].mxu0 %v10086
  %v10088 = vpop.f32.mrb[0].mxu0
  %v10089 = vadd.f32 %v9787, %v10088
  %v10090 = vpop.f32.mrb[0].mxu0
  %10091 = vmatprep.mubr.f32.mxu0 0.0
  %v10092 = vand.u32 %v7270, 4294901760
  %v10093 = vsub.f32 %v7270, %v10092
  %10094 = vmatmul.mubr.f32.gmra.mrb[0].mxu0 %v10093
  %v10095 = vpop.f32.mrb[0].mxu0
  %v10096 = vadd.f32 %v9793, %v10095
  %v10097 = vpop.f32.mrb[0].mxu0
  %10098 = vmatprep.mubr.f32.mxu0 0.0
  %v10099 = vand.u32 %v7374, 4294901760
  %v10100 = vsub.f32 %v7374, %v10099
  %10101 = vmatmul.mubr.f32.gmra.mrb[0].mxu0 %v10100
  %v10102 = vpop.f32.mrb[0].mxu0
  %v10103 = vadd.f32 %v9799, %v10102
  %v10104 = vpop.f32.mrb[0].mxu0
  %10105 = vmatprep.mubr.f32.mxu0 0.0
  %v10106 = vand.u32 %v7478, 4294901760
  %v10107 = vsub.f32 %v7478, %v10106
  %10108 = vmatmul.mubr.f32.gmra.mrb[0].mxu0 %v10107
  %v10109 = vpop.f32.mrb[0].mxu0
  %v10110 = vadd.f32 %v9805, %v10109
  %v10111 = vpop.f32.mrb[0].mxu0
  %10112 = vmatprep.mubr.f32.mxu0 0.0
  %v10113 = vand.u32 %v7582, 4294901760
  %v10114 = vsub.f32 %v7582, %v10113
  %10115 = vmatmul.mubr.f32.gmra.mrb[0].mxu0 %v10114
  %v10116 = vpop.f32.mrb[0].mxu0
  %v10117 = vadd.f32 %v9811, %v10116
  %v10118 = vpop.f32.mrb[0].mxu0
  %10119 = vmatprep.mubr.f32.mxu0 0.0
  %v10120 = vand.u32 %v7686, 4294901760
  %v10121 = vsub.f32 %v7686, %v10120
  %10122 = vmatmul.mubr.f32.gmra.mrb[0].mxu0 %v10121
  %v10123 = vpop.f32.mrb[0].mxu0
  %v10124 = vadd.f32 %v9817, %v10123
  %v10125 = vpop.f32.mrb[0].mxu0
  %10126 = vmatprep.mubr.f32.mxu0 0.0
  %v10127 = vand.u32 %v7790, 4294901760
  %v10128 = vsub.f32 %v7790, %v10127
  %10129 = vmatmul.mubr.f32.gmra.mrb[0].mxu0 %v10128
  %v10130 = vpop.f32.mrb[0].mxu0
  %v10131 = vadd.f32 %v9823, %v10130
  %v10132 = vpop.f32.mrb[0].mxu0
  %10133 = vmatprep.mubr.f32.mxu0 0.0
  %v10134 = vand.u32 %v7894, 4294901760
  %v10135 = vsub.f32 %v7894, %v10134
  %10136 = vmatmul.mubr.f32.gmra.mrb[0].mxu0 %v10135
  %v10137 = vpop.f32.mrb[0].mxu0
  %v10138 = vadd.f32 %v9829, %v10137
  %v10139 = vpop.f32.mrb[0].mxu0
  %10140 = vmatprep.mubr.f32.mxu0 0.0
  %v10141 = vand.u32 %v7998, 4294901760
  %v10142 = vsub.f32 %v7998, %v10141
  %10143 = vmatmul.mubr.f32.gmra.mrb[0].mxu0 %v10142
  %v10144 = vpop.f32.mrb[0].mxu0
  %v10145 = vadd.f32 %v9835, %v10144
  %v10146 = vpop.f32.mrb[0].mxu0
  %10147 = vmatprep.mubr.f32.mxu0 0.0
  %v10148 = vand.u32 %v8102, 4294901760
  %v10149 = vsub.f32 %v8102, %v10148
  %10150 = vmatmul.mubr.f32.gmra.mrb[0].mxu0 %v10149
  %v10151 = vpop.f32.mrb[0].mxu0
  %v10152 = vadd.f32 %v9841, %v10151
  %v10153 = vpop.f32.mrb[0].mxu0
  %10154 = vmatprep.mubr.f32.mxu0 0.0
  %v10155 = vand.u32 %v8206, 4294901760
  %v10156 = vsub.f32 %v8206, %v10155
  %10157 = vmatmul.mubr.f32.gmra.mrb[0].mxu0 %v10156
  %v10158 = vpop.f32.mrb[0].mxu0
  %v10159 = vadd.f32 %v9847, %v10158
  %v10160 = vpop.f32.mrb[0].mxu0
  %10161 = vmatprep.mubr.f32.mxu0 0.0
  %v10162 = vand.u32 %v8310, 4294901760
  %v10163 = vsub.f32 %v8310, %v10162
  %10164 = vmatmul.mubr.f32.gmra.mrb[0].mxu0 %v10163
  %v10165 = vpop.f32.mrb[0].mxu0
  %v10166 = vadd.f32 %v9853, %v10165
  %v10167 = vpop.f32.mrb[0].mxu0
  %10168 = vmatprep.mubr.f32.mxu0 0.0
  %v10169 = vand.u32 %v8414, 4294901760
  %v10170 = vsub.f32 %v8414, %v10169
  %10171 = vmatmul.mubr.f32.gmra.mrb[0].mxu0 %v10170
  %v10172 = vpop.f32.mrb[0].mxu0
  %v10173 = vadd.f32 %v9859, %v10172
  %v10174 = vpop.f32.mrb[0].mxu0
  %10175 = vmatprep.mubr.f32.mxu0 0.0
  %v10176 = vand.u32 %v8518, 4294901760
  %v10177 = vsub.f32 %v8518, %v10176
  %10178 = vmatmul.mubr.f32.gmra.mrb[0].mxu0 %v10177
  %v10179 = vpop.f32.mrb[0].mxu0
  %v10180 = vadd.f32 %v9865, %v10179
  %v10181 = vpop.f32.mrb[0].mxu0
  %10182 = vmatprep.mubr.f32.mxu0 0.0
  %v10183 = vand.u32 %v8622, 4294901760
  %v10184 = vsub.f32 %v8622, %v10183
  %10185 = vmatmul.mubr.f32.gmra.mrb[0].mxu0 %v10184
  %v10186 = vpop.f32.mrb[0].mxu0
  %v10187 = vadd.f32 %v9871, %v10186
  %v10188 = vpop.f32.mrb[0].mxu0
  %10189 = vmatprep.mubr.f32.mxu0 0.0
  %v10190 = vand.u32 %v8726, 4294901760
  %v10191 = vsub.f32 %v8726, %v10190
  %10192 = vmatmul.mubr.f32.gmra.mrb[0].mxu0 %v10191
  %v10193 = vpop.f32.mrb[0].mxu0
  %v10194 = vadd.f32 %v9877, %v10193
  %v10195 = vpop.f32.mrb[0].mxu0
  %10196 = vmatprep.mubr.f32.mxu0 0.0
  %v10197 = vand.u32 %v8830, 4294901760
  %v10198 = vsub.f32 %v8830, %v10197
  %10199 = vmatmul.mubr.f32.gmra.mrb[0].mxu0 %v10198
  %v10200 = vpop.f32.mrb[0].mxu0
  %v10201 = vadd.f32 %v9883, %v10200
  %v10202 = vpop.f32.mrb[0].mxu0
  %10203 = vmatprep.mubr.f32.mxu0 0.0
  %v10204 = vand.u32 %v8934, 4294901760
  %v10205 = vsub.f32 %v8934, %v10204
  %10206 = vmatmul.mubr.f32.gmra.mrb[0].mxu0 %v10205
  %v10207 = vpop.f32.mrb[0].mxu0
  %v10208 = vadd.f32 %v9889, %v10207
  %v10209 = vpop.f32.mrb[0].mxu0
  %10210 = vmatprep.mubr.f32.mxu0 0.0
  %v10211 = vand.u32 %v9038, 4294901760
  %v10212 = vsub.f32 %v9038, %v10211
  %10213 = vmatmul.mubr.f32.gmra.mrb[0].mxu0 %v10212
  %v10214 = vpop.f32.mrb[0].mxu0
  %v10215 = vadd.f32 %v9895, %v10214
  %v10216 = vpop.f32.mrb[0].mxu0
  %10217 = vmatprep.mubr.f32.mxu0 0.0
  %v10218 = vand.u32 %v9142, 4294901760
  %v10219 = vsub.f32 %v9142, %v10218
  %10220 = vmatmul.mubr.f32.gmra.mrb[0].mxu0 %v10219
  %v10221 = vpop.f32.mrb[0].mxu0
  %v10222 = vadd.f32 %v9901, %v10221
  %v10223 = vpop.f32.mrb[0].mxu0
  %10224 = vdwg.mxu0
  %10225 = vmatprep.subr.mxu0 0.0
  %v10226 = vand.u32 %v9143, 4294901760
  %10227 = vmatpush1.msra.mxu0 %v10226
  %10228 = vmatprep.subr.mxu0 0.0
  %v10229 = vand.u32 %v9144, 4294901760
  %10230 = vmatpush1.msra.mxu0 %v10229
  %10231 = vmatprep.subr.mxu0 0.0
  %v10232 = vand.u32 %v9145, 4294901760
  %10233 = vmatpush1.msra.mxu0 %v10232
  %10234 = vmatprep.subr.mxu0 0.0
  %v10235 = vand.u32 %v9146, 4294901760
  %10236 = vmatpush1.msra.mxu0 %v10235
  %10237 = vmatprep.subr.mxu0 0.0
  %v10238 = vand.u32 %v9147, 4294901760
  %10239 = vmatpush1.msra.mxu0 %v10238
  %10240 = vmatprep.subr.mxu0 0.0
  %v10241 = vand.u32 %v9148, 4294901760
  %10242 = vmatpush1.msra.mxu0 %v10241
  %10243 = vmatprep.subr.mxu0 0.0
  %v10244 = vand.u32 %v9149, 4294901760
  %10245 = vmatpush1.msra.mxu0 %v10244
  %10246 = vmatprep.subr.mxu0 0.0
  %v10247 = vand.u32 %v9150, 4294901760
  %10248 = vmatpush1.msra.mxu0 %v10247
  %10249 = vmatprep.subr.mxu0 0.0
  %v10250 = vand.u32 %v9151, 4294901760
  %10251 = vmatpush1.msra.mxu0 %v10250
  %10252 = vmatprep.subr.mxu0 0.0
  %v10253 = vand.u32 %v9152, 4294901760
  %10254 = vmatpush1.msra.mxu0 %v10253
  %10255 = vmatprep.subr.mxu0 0.0
  %v10256 = vand.u32 %v9153, 4294901760
  %10257 = vmatpush1.msra.mxu0 %v10256
  %10258 = vmatprep.subr.mxu0 0.0
  %v10259 = vand.u32 %v9154, 4294901760
  %10260 = vmatpush1.msra.mxu0 %v10259
  %10261 = vmatprep.subr.mxu0 0.0
  %v10262 = vand.u32 %v9155, 4294901760
  %10263 = vmatpush1.msra.mxu0 %v10262
  %10264 = vmatprep.subr.mxu0 0.0
  %v10265 = vand.u32 %v9156, 4294901760
  %10266 = vmatpush1.msra.mxu0 %v10265
  %10267 = vmatprep.subr.mxu0 0.0
  %v10268 = vand.u32 %v9157, 4294901760
  %10269 = vmatpush1.msra.mxu0 %v10268
  %10270 = vmatprep.subr.mxu0 0.0
  %v10271 = vand.u32 %v9158, 4294901760
  %10272 = vmatpush1.msra.mxu0 %v10271
  %10273 = vmatprep.subr.mxu0 0.0
  %10274 = vmatpush1.msra.mxu0 0.0
  %10275 = vmatprep.subr.mxu0 0.0
  %10276 = vmatpush1.msra.mxu0 0.0
  %10277 = vmatprep.subr.mxu0 0.0
  %10278 = vmatpush1.msra.mxu0 0.0
  %10279 = vmatprep.subr.mxu0 0.0
  %10280 = vmatpush1.msra.mxu0 0.0
  %10281 = vmatprep.subr.mxu0 0.0
  %10282 = vmatpush1.msra.mxu0 0.0
  %10283 = vmatprep.subr.mxu0 0.0
  %10284 = vmatpush1.msra.mxu0 0.0
  %10285 = vmatprep.subr.mxu0 0.0
  %10286 = vmatpush1.msra.mxu0 0.0
  %10287 = vmatprep.subr.mxu0 0.0
  %10288 = vmatpush1.msra.mxu0 0.0
  %10289 = vmatprep.subr.mxu0 0.0
  %10290 = vmatpush1.msra.mxu0 0.0
  %10291 = vmatprep.subr.mxu0 0.0
  %10292 = vmatpush1.msra.mxu0 0.0
  %10293 = vmatprep.subr.mxu0 0.0
  %10294 = vmatpush1.msra.mxu0 0.0
  %10295 = vmatprep.subr.mxu0 0.0
  %10296 = vmatpush1.msra.mxu0 0.0
  %10297 = vmatprep.subr.mxu0 0.0
  %10298 = vmatpush1.msra.mxu0 0.0
  %10299 = vmatprep.subr.mxu0 0.0
  %10300 = vmatpush1.msra.mxu0 0.0
  %10301 = vmatprep.subr.mxu0 0.0
  %10302 = vmatpush1.msra.mxu0 0.0
  %10303 = vmatprep.subr.mxu0 0.0
  %10304 = vmatpush1.msra.mxu0 0.0
  %10305 = vmatprep.mubr.f32.mxu0 0.0
  %v10306 = vand.u32 %v5918, 4294901760
  %v10307 = vsub.f32 %v5918, %v10306
  %v10308 = vand.u32 %v10307, 4294901760
  %10309 = vmatmul.mubr.f32.gmra.mrb[0].mxu0 %v10308
  %v10310 = vpop.f32.mrb[0].mxu0
  %v10311 = vadd.f32 %v10005, %v10310
  %v10312 = vpop.f32.mrb[0].mxu0
  %10313 = vmatprep.mubr.f32.mxu0 0.0
  %v10314 = vand.u32 %v6022, 4294901760
  %v10315 = vsub.f32 %v6022, %v10314
  %v10316 = vand.u32 %v10315, 4294901760
  %10317 = vmatmul.mubr.f32.gmra.mrb[0].mxu0 %v10316
  %v10318 = vpop.f32.mrb[0].mxu0
  %v10319 = vadd.f32 %v10012, %v10318
  %v10320 = vpop.f32.mrb[0].mxu0
  %10321 = vmatprep.mubr.f32.mxu0 0.0
  %v10322 = vand.u32 %v6126, 4294901760
  %v10323 = vsub.f32 %v6126, %v10322
  %v10324 = vand.u32 %v10323, 4294901760
  %10325 = vmatmul.mubr.f32.gmra.mrb[0].mxu0 %v10324
  %v10326 = vpop.f32.mrb[0].mxu0
  %v10327 = vadd.f32 %v10019, %v10326
  %v10328 = vpop.f32.mrb[0].mxu0
  %10329 = vmatprep.mubr.f32.mxu0 0.0
  %v10330 = vand.u32 %v6230, 4294901760
  %v10331 = vsub.f32 %v6230, %v10330
  %v10332 = vand.u32 %v10331, 4294901760
  %10333 = vmatmul.mubr.f32.gmra.mrb[0].mxu0 %v10332
  %v10334 = vpop.f32.mrb[0].mxu0
  %v10335 = vadd.f32 %v10026, %v10334
  %v10336 = vpop.f32.mrb[0].mxu0
  %10337 = vmatprep.mubr.f32.mxu0 0.0
  %v10338 = vand.u32 %v6334, 4294901760
  %v10339 = vsub.f32 %v6334, %v10338
  %v10340 = vand.u32 %v10339, 4294901760
  %10341 = vmatmul.mubr.f32.gmra.mrb[0].mxu0 %v10340
  %v10342 = vpop.f32.mrb[0].mxu0
  %v10343 = vadd.f32 %v10033, %v10342
  %v10344 = vpop.f32.mrb[0].mxu0
  %10345 = vmatprep.mubr.f32.mxu0 0.0
  %v10346 = vand.u32 %v6438, 4294901760
  %v10347 = vsub.f32 %v6438, %v10346
  %v10348 = vand.u32 %v10347, 4294901760
  %10349 = vmatmul.mubr.f32.gmra.mrb[0].mxu0 %v10348
  %v10350 = vpop.f32.mrb[0].mxu0
  %v10351 = vadd.f32 %v10040, %v10350
  %v10352 = vpop.f32.mrb[0].mxu0
  %10353 = vmatprep.mubr.f32.mxu0 0.0
  %v10354 = vand.u32 %v6542, 4294901760
  %v10355 = vsub.f32 %v6542, %v10354
  %v10356 = vand.u32 %v10355, 4294901760
  %10357 = vmatmul.mubr.f32.gmra.mrb[0].mxu0 %v10356
  %v10358 = vpop.f32.mrb[0].mxu0
  %v10359 = vadd.f32 %v10047, %v10358
  %v10360 = vpop.f32.mrb[0].mxu0
  %10361 = vmatprep.mubr.f32.mxu0 0.0
  %v10362 = vand.u32 %v6646, 4294901760
  %v10363 = vsub.f32 %v6646, %v10362
  %v10364 = vand.u32 %v10363, 4294901760
  %10365 = vmatmul.mubr.f32.gmra.mrb[0].mxu0 %v10364
  %v10366 = vpop.f32.mrb[0].mxu0
  %v10367 = vadd.f32 %v10054, %v10366
  %v10368 = vpop.f32.mrb[0].mxu0
  %10369 = vmatprep.mubr.f32.mxu0 0.0
  %v10370 = vand.u32 %v6750, 4294901760
  %v10371 = vsub.f32 %v6750, %v10370
  %v10372 = vand.u32 %v10371, 4294901760
  %10373 = vmatmul.mubr.f32.gmra.mrb[0].mxu0 %v10372
  %v10374 = vpop.f32.mrb[0].mxu0
  %v10375 = vadd.f32 %v10061, %v10374
  %v10376 = vpop.f32.mrb[0].mxu0
  %10377 = vmatprep.mubr.f32.mxu0 0.0
  %v10378 = vand.u32 %v6854, 4294901760
  %v10379 = vsub.f32 %v6854, %v10378
  %v10380 = vand.u32 %v10379, 4294901760
  %10381 = vmatmul.mubr.f32.gmra.mrb[0].mxu0 %v10380
  %v10382 = vpop.f32.mrb[0].mxu0
  %v10383 = vadd.f32 %v10068, %v10382
  %v10384 = vpop.f32.mrb[0].mxu0
  %10385 = vmatprep.mubr.f32.mxu0 0.0
  %v10386 = vand.u32 %v6958, 4294901760
  %v10387 = vsub.f32 %v6958, %v10386
  %v10388 = vand.u32 %v10387, 4294901760
  %10389 = vmatmul.mubr.f32.gmra.mrb[0].mxu0 %v10388
  %v10390 = vpop.f32.mrb[0].mxu0
  %v10391 = vadd.f32 %v10075, %v10390
  %v10392 = vpop.f32.mrb[0].mxu0
  %10393 = vmatprep.mubr.f32.mxu0 0.0
  %v10394 = vand.u32 %v7062, 4294901760
  %v10395 = vsub.f32 %v7062, %v10394
  %v10396 = vand.u32 %v10395, 4294901760
  %10397 = vmatmul.mubr.f32.gmra.mrb[0].mxu0 %v10396
  %v10398 = vpop.f32.mrb[0].mxu0
  %v10399 = vadd.f32 %v10082, %v10398
  %v10400 = vpop.f32.mrb[0].mxu0
  %10401 = vmatprep.mubr.f32.mxu0 0.0
  %v10402 = vand.u32 %v7166, 4294901760
  %v10403 = vsub.f32 %v7166, %v10402
  %v10404 = vand.u32 %v10403, 4294901760
  %10405 = vmatmul.mubr.f32.gmra.mrb[0].mxu0 %v10404
  %v10406 = vpop.f32.mrb[0].mxu0
  %v10407 = vadd.f32 %v10089, %v10406
  %v10408 = vpop.f32.mrb[0].mxu0
  %10409 = vmatprep.mubr.f32.mxu0 0.0
  %v10410 = vand.u32 %v7270, 4294901760
  %v10411 = vsub.f32 %v7270, %v10410
  %v10412 = vand.u32 %v10411, 4294901760
  %10413 = vmatmul.mubr.f32.gmra.mrb[0].mxu0 %v10412
  %v10414 = vpop.f32.mrb[0].mxu0
  %v10415 = vadd.f32 %v10096, %v10414
  %v10416 = vpop.f32.mrb[0].mxu0
  %10417 = vmatprep.mubr.f32.mxu0 0.0
  %v10418 = vand.u32 %v7374, 4294901760
  %v10419 = vsub.f32 %v7374, %v10418
  %v10420 = vand.u32 %v10419, 4294901760
  %10421 = vmatmul.mubr.f32.gmra.mrb[0].mxu0 %v10420
  %v10422 = vpop.f32.mrb[0].mxu0
  %v10423 = vadd.f32 %v10103, %v10422
  %v10424 = vpop.f32.mrb[0].mxu0
  %10425 = vmatprep.mubr.f32.mxu0 0.0
  %v10426 = vand.u32 %v7478, 4294901760
  %v10427 = vsub.f32 %v7478, %v10426
  %v10428 = vand.u32 %v10427, 4294901760
  %10429 = vmatmul.mubr.f32.gmra.mrb[0].mxu0 %v10428
  %v10430 = vpop.f32.mrb[0].mxu0
  %v10431 = vadd.f32 %v10110, %v10430
  %v10432 = vpop.f32.mrb[0].mxu0
  %10433 = vmatprep.mubr.f32.mxu0 0.0
  %v10434 = vand.u32 %v7582, 4294901760
  %v10435 = vsub.f32 %v7582, %v10434
  %v10436 = vand.u32 %v10435, 4294901760
  %10437 = vmatmul.mubr.f32.gmra.mrb[0].mxu0 %v10436
  %v10438 = vpop.f32.mrb[0].mxu0
  %v10439 = vadd.f32 %v10117, %v10438
  %v10440 = vpop.f32.mrb[0].mxu0
  %10441 = vmatprep.mubr.f32.mxu0 0.0
  %v10442 = vand.u32 %v7686, 4294901760
  %v10443 = vsub.f32 %v7686, %v10442
  %v10444 = vand.u32 %v10443, 4294901760
  %10445 = vmatmul.mubr.f32.gmra.mrb[0].mxu0 %v10444
  %v10446 = vpop.f32.mrb[0].mxu0
  %v10447 = vadd.f32 %v10124, %v10446
  %v10448 = vpop.f32.mrb[0].mxu0
  %10449 = vmatprep.mubr.f32.mxu0 0.0
  %v10450 = vand.u32 %v7790, 4294901760
  %v10451 = vsub.f32 %v7790, %v10450
  %v10452 = vand.u32 %v10451, 4294901760
  %10453 = vmatmul.mubr.f32.gmra.mrb[0].mxu0 %v10452
  %v10454 = vpop.f32.mrb[0].mxu0
  %v10455 = vadd.f32 %v10131, %v10454
  %v10456 = vpop.f32.mrb[0].mxu0
  %10457 = vmatprep.mubr.f32.mxu0 0.0
  %v10458 = vand.u32 %v7894, 4294901760
  %v10459 = vsub.f32 %v7894, %v10458
  %v10460 = vand.u32 %v10459, 4294901760
  %10461 = vmatmul.mubr.f32.gmra.mrb[0].mxu0 %v10460
  %v10462 = vpop.f32.mrb[0].mxu0
  %v10463 = vadd.f32 %v10138, %v10462
  %v10464 = vpop.f32.mrb[0].mxu0
  %10465 = vmatprep.mubr.f32.mxu0 0.0
  %v10466 = vand.u32 %v7998, 4294901760
  %v10467 = vsub.f32 %v7998, %v10466
  %v10468 = vand.u32 %v10467, 4294901760
  %10469 = vmatmul.mubr.f32.gmra.mrb[0].mxu0 %v10468
  %v10470 = vpop.f32.mrb[0].mxu0
  %v10471 = vadd.f32 %v10145, %v10470
  %v10472 = vpop.f32.mrb[0].mxu0
  %10473 = vmatprep.mubr.f32.mxu0 0.0
  %v10474 = vand.u32 %v8102, 4294901760
  %v10475 = vsub.f32 %v8102, %v10474
  %v10476 = vand.u32 %v10475, 4294901760
  %10477 = vmatmul.mubr.f32.gmra.mrb[0].mxu0 %v10476
  %v10478 = vpop.f32.mrb[0].mxu0
  %v10479 = vadd.f32 %v10152, %v10478
  %v10480 = vpop.f32.mrb[0].mxu0
  %10481 = vmatprep.mubr.f32.mxu0 0.0
  %v10482 = vand.u32 %v8206, 4294901760
  %v10483 = vsub.f32 %v8206, %v10482
  %v10484 = vand.u32 %v10483, 4294901760
  %10485 = vmatmul.mubr.f32.gmra.mrb[0].mxu0 %v10484
  %v10486 = vpop.f32.mrb[0].mxu0
  %v10487 = vadd.f32 %v10159, %v10486
  %v10488 = vpop.f32.mrb[0].mxu0
  %10489 = vmatprep.mubr.f32.mxu0 0.0
  %v10490 = vand.u32 %v8310, 4294901760
  %v10491 = vsub.f32 %v8310, %v10490
  %v10492 = vand.u32 %v10491, 4294901760
  %10493 = vmatmul.mubr.f32.gmra.mrb[0].mxu0 %v10492
  %v10494 = vpop.f32.mrb[0].mxu0
  %v10495 = vadd.f32 %v10166, %v10494
  %v10496 = vpop.f32.mrb[0].mxu0
  %10497 = vmatprep.mubr.f32.mxu0 0.0
  %v10498 = vand.u32 %v8414, 4294901760
  %v10499 = vsub.f32 %v8414, %v10498
  %v10500 = vand.u32 %v10499, 4294901760
  %10501 = vmatmul.mubr.f32.gmra.mrb[0].mxu0 %v10500
  %v10502 = vpop.f32.mrb[0].mxu0
  %v10503 = vadd.f32 %v10173, %v10502
  %v10504 = vpop.f32.mrb[0].mxu0
  %10505 = vmatprep.mubr.f32.mxu0 0.0
  %v10506 = vand.u32 %v8518, 4294901760
  %v10507 = vsub.f32 %v8518, %v10506
  %v10508 = vand.u32 %v10507, 4294901760
  %10509 = vmatmul.mubr.f32.gmra.mrb[0].mxu0 %v10508
  %v10510 = vpop.f32.mrb[0].mxu0
  %v10511 = vadd.f32 %v10180, %v10510
  %v10512 = vpop.f32.mrb[0].mxu0
  %10513 = vmatprep.mubr.f32.mxu0 0.0
  %v10514 = vand.u32 %v8622, 4294901760
  %v10515 = vsub.f32 %v8622, %v10514
  %v10516 = vand.u32 %v10515, 4294901760
  %10517 = vmatmul.mubr.f32.gmra.mrb[0].mxu0 %v10516
  %v10518 = vpop.f32.mrb[0].mxu0
  %v10519 = vadd.f32 %v10187, %v10518
  %v10520 = vpop.f32.mrb[0].mxu0
  %10521 = vmatprep.mubr.f32.mxu0 0.0
  %v10522 = vand.u32 %v8726, 4294901760
  %v10523 = vsub.f32 %v8726, %v10522
  %v10524 = vand.u32 %v10523, 4294901760
  %10525 = vmatmul.mubr.f32.gmra.mrb[0].mxu0 %v10524
  %v10526 = vpop.f32.mrb[0].mxu0
  %v10527 = vadd.f32 %v10194, %v10526
  %v10528 = vpop.f32.mrb[0].mxu0
  %10529 = vmatprep.mubr.f32.mxu0 0.0
  %v10530 = vand.u32 %v8830, 4294901760
  %v10531 = vsub.f32 %v8830, %v10530
  %v10532 = vand.u32 %v10531, 4294901760
  %10533 = vmatmul.mubr.f32.gmra.mrb[0].mxu0 %v10532
  %v10534 = vpop.f32.mrb[0].mxu0
  %v10535 = vadd.f32 %v10201, %v10534
  %v10536 = vpop.f32.mrb[0].mxu0
  %10537 = vmatprep.mubr.f32.mxu0 0.0
  %v10538 = vand.u32 %v8934, 4294901760
  %v10539 = vsub.f32 %v8934, %v10538
  %v10540 = vand.u32 %v10539, 4294901760
  %10541 = vmatmul.mubr.f32.gmra.mrb[0].mxu0 %v10540
  %v10542 = vpop.f32.mrb[0].mxu0
  %v10543 = vadd.f32 %v10208, %v10542
  %v10544 = vpop.f32.mrb[0].mxu0
  %10545 = vmatprep.mubr.f32.mxu0 0.0
  %v10546 = vand.u32 %v9038, 4294901760
  %v10547 = vsub.f32 %v9038, %v10546
  %v10548 = vand.u32 %v10547, 4294901760
  %10549 = vmatmul.mubr.f32.gmra.mrb[0].mxu0 %v10548
  %v10550 = vpop.f32.mrb[0].mxu0
  %v10551 = vadd.f32 %v10215, %v10550
  %v10552 = vpop.f32.mrb[0].mxu0
  %10553 = vmatprep.mubr.f32.mxu0 0.0
  %v10554 = vand.u32 %v9142, 4294901760
  %v10555 = vsub.f32 %v9142, %v10554
  %v10556 = vand.u32 %v10555, 4294901760
  %10557 = vmatmul.mubr.f32.gmra.mrb[0].mxu0 %v10556
  %v10558 = vpop.f32.mrb[0].mxu0
  %v10559 = vadd.f32 %v10222, %v10558
  %v10560 = vpop.f32.mrb[0].mxu0
  %10561 = vdwg.mxu0
  %10562 = vmatprep.subr.mxu0 0.0
  %v10563 = vand.u32 %v9143, 4294901760
  %v10564 = vsub.f32 %v9143, %v10563
  %v10565 = vand.u32 %v10564, 4294901760
  %10566 = vmatpush1.msra.mxu0 %v10565
  %10567 = vmatprep.subr.mxu0 0.0
  %v10568 = vand.u32 %v9144, 4294901760
  %v10569 = vsub.f32 %v9144, %v10568
  %v10570 = vand.u32 %v10569, 4294901760
  %10571 = vmatpush1.msra.mxu0 %v10570
  %10572 = vmatprep.subr.mxu0 0.0
  %v10573 = vand.u32 %v9145, 4294901760
  %v10574 = vsub.f32 %v9145, %v10573
  %v10575 = vand.u32 %v10574, 4294901760
  %10576 = vmatpush1.msra.mxu0 %v10575
  %10577 = vmatprep.subr.mxu0 0.0
  %v10578 = vand.u32 %v9146, 4294901760
  %v10579 = vsub.f32 %v9146, %v10578
  %v10580 = vand.u32 %v10579, 4294901760
  %10581 = vmatpush1.msra.mxu0 %v10580
  %10582 = vmatprep.subr.mxu0 0.0
  %v10583 = vand.u32 %v9147, 4294901760
  %v10584 = vsub.f32 %v9147, %v10583
  %v10585 = vand.u32 %v10584, 4294901760
  %10586 = vmatpush1.msra.mxu0 %v10585
  %10587 = vmatprep.subr.mxu0 0.0
  %v10588 = vand.u32 %v9148, 4294901760
  %v10589 = vsub.f32 %v9148, %v10588
  %v10590 = vand.u32 %v10589, 4294901760
  %10591 = vmatpush1.msra.mxu0 %v10590
  %10592 = vmatprep.subr.mxu0 0.0
  %v10593 = vand.u32 %v9149, 4294901760
  %v10594 = vsub.f32 %v9149, %v10593
  %v10595 = vand.u32 %v10594, 4294901760
  %10596 = vmatpush1.msra.mxu0 %v10595
  %10597 = vmatprep.subr.mxu0 0.0
  %v10598 = vand.u32 %v9150, 4294901760
  %v10599 = vsub.f32 %v9150, %v10598
  %v10600 = vand.u32 %v10599, 4294901760
  %10601 = vmatpush1.msra.mxu0 %v10600
  %10602 = vmatprep.subr.mxu0 0.0
  %v10603 = vand.u32 %v9151, 4294901760
  %v10604 = vsub.f32 %v9151, %v10603
  %v10605 = vand.u32 %v10604, 4294901760
  %10606 = vmatpush1.msra.mxu0 %v10605
  %10607 = vmatprep.subr.mxu0 0.0
  %v10608 = vand.u32 %v9152, 4294901760
  %v10609 = vsub.f32 %v9152, %v10608
  %v10610 = vand.u32 %v10609, 4294901760
  %10611 = vmatpush1.msra.mxu0 %v10610
  %10612 = vmatprep.subr.mxu0 0.0
  %v10613 = vand.u32 %v9153, 4294901760
  %v10614 = vsub.f32 %v9153, %v10613
  %v10615 = vand.u32 %v10614, 4294901760
  %10616 = vmatpush1.msra.mxu0 %v10615
  %10617 = vmatprep.subr.mxu0 0.0
  %v10618 = vand.u32 %v9154, 4294901760
  %v10619 = vsub.f32 %v9154, %v10618
  %v10620 = vand.u32 %v10619, 4294901760
  %10621 = vmatpush1.msra.mxu0 %v10620
  %10622 = vmatprep.subr.mxu0 0.0
  %v10623 = vand.u32 %v9155, 4294901760
  %v10624 = vsub.f32 %v9155, %v10623
  %v10625 = vand.u32 %v10624, 4294901760
  %10626 = vmatpush1.msra.mxu0 %v10625
  %10627 = vmatprep.subr.mxu0 0.0
  %v10628 = vand.u32 %v9156, 4294901760
  %v10629 = vsub.f32 %v9156, %v10628
  %v10630 = vand.u32 %v10629, 4294901760
  %10631 = vmatpush1.msra.mxu0 %v10630
  %10632 = vmatprep.subr.mxu0 0.0
  %v10633 = vand.u32 %v9157, 4294901760
  %v10634 = vsub.f32 %v9157, %v10633
  %v10635 = vand.u32 %v10634, 4294901760
  %10636 = vmatpush1.msra.mxu0 %v10635
  %10637 = vmatprep.subr.mxu0 0.0
  %v10638 = vand.u32 %v9158, 4294901760
  %v10639 = vsub.f32 %v9158, %v10638
  %v10640 = vand.u32 %v10639, 4294901760
  %10641 = vmatpush1.msra.mxu0 %v10640
  %10642 = vmatprep.subr.mxu0 0.0
  %10643 = vmatpush1.msra.mxu0 0.0
  %10644 = vmatprep.subr.mxu0 0.0
  %10645 = vmatpush1.msra.mxu0 0.0
  %10646 = vmatprep.subr.mxu0 0.0
  %10647 = vmatpush1.msra.mxu0 0.0
  %10648 = vmatprep.subr.mxu0 0.0
  %10649 = vmatpush1.msra.mxu0 0.0
  %10650 = vmatprep.subr.mxu0 0.0
  %10651 = vmatpush1.msra.mxu0 0.0
  %10652 = vmatprep.subr.mxu0 0.0
  %10653 = vmatpush1.msra.mxu0 0.0
  %10654 = vmatprep.subr.mxu0 0.0
  %10655 = vmatpush1.msra.mxu0 0.0
  %10656 = vmatprep.subr.mxu0 0.0
  %10657 = vmatpush1.msra.mxu0 0.0
  %10658 = vmatprep.subr.mxu0 0.0
  %10659 = vmatpush1.msra.mxu0 0.0
  %10660 = vmatprep.subr.mxu0 0.0
  %10661 = vmatpush1.msra.mxu0 0.0
  %10662 = vmatprep.subr.mxu0 0.0
  %10663 = vmatpush1.msra.mxu0 0.0
  %10664 = vmatprep.subr.mxu0 0.0
  %10665 = vmatpush1.msra.mxu0 0.0
  %10666 = vmatprep.subr.mxu0 0.0
  %10667 = vmatpush1.msra.mxu0 0.0
  %10668 = vmatprep.subr.mxu0 0.0
  %10669 = vmatpush1.msra.mxu0 0.0
  %10670 = vmatprep.subr.mxu0 0.0
  %10671 = vmatpush1.msra.mxu0 0.0
  %10672 = vmatprep.subr.mxu0 0.0
  %10673 = vmatpush1.msra.mxu0 0.0
  %10674 = vmatprep.mubr.f32.mxu0 0.0
  %v10675 = vand.u32 %v5918, 4294901760
  %10676 = vmatmul.mubr.f32.gmra.mrb[0].mxu0 %v10675
  %v10677 = vpop.f32.mrb[0].mxu0
  %v10678 = vadd.f32 %v10311, %v10677
  %v10679 = vpop.f32.mrb[0].mxu0
  %10680 = vmatprep.mubr.f32.mxu0 0.0
  %v10681 = vand.u32 %v6022, 4294901760
  %10682 = vmatmul.mubr.f32.gmra.mrb[0].mxu0 %v10681
  %v10683 = vpop.f32.mrb[0].mxu0
  %v10684 = vadd.f32 %v10319, %v10683
  %v10685 = vpop.f32.mrb[0].mxu0
  %10686 = vmatprep.mubr.f32.mxu0 0.0
  %v10687 = vand.u32 %v6126, 4294901760
  %10688 = vmatmul.mubr.f32.gmra.mrb[0].mxu0 %v10687
  %v10689 = vpop.f32.mrb[0].mxu0
  %v10690 = vadd.f32 %v10327, %v10689
  %v10691 = vpop.f32.mrb[0].mxu0
  %10692 = vmatprep.mubr.f32.mxu0 0.0
  %v10693 = vand.u32 %v6230, 4294901760
  %10694 = vmatmul.mubr.f32.gmra.mrb[0].mxu0 %v10693
  %v10695 = vpop.f32.mrb[0].mxu0
  %v10696 = vadd.f32 %v10335, %v10695
  %v10697 = vpop.f32.mrb[0].mxu0
  %10698 = vmatprep.mubr.f32.mxu0 0.0
  %v10699 = vand.u32 %v6334, 4294901760
  %10700 = vmatmul.mubr.f32.gmra.mrb[0].mxu0 %v10699
  %v10701 = vpop.f32.mrb[0].mxu0
  %v10702 = vadd.f32 %v10343, %v10701
  %v10703 = vpop.f32.mrb[0].mxu0
  %10704 = vmatprep.mubr.f32.mxu0 0.0
  %v10705 = vand.u32 %v6438, 4294901760
  %10706 = vmatmul.mubr.f32.gmra.mrb[0].mxu0 %v10705
  %v10707 = vpop.f32.mrb[0].mxu0
  %v10708 = vadd.f32 %v10351, %v10707
  %v10709 = vpop.f32.mrb[0].mxu0
  %10710 = vmatprep.mubr.f32.mxu0 0.0
  %v10711 = vand.u32 %v6542, 4294901760
  %10712 = vmatmul.mubr.f32.gmra.mrb[0].mxu0 %v10711
  %v10713 = vpop.f32.mrb[0].mxu0
  %v10714 = vadd.f32 %v10359, %v10713
  %v10715 = vpop.f32.mrb[0].mxu0
  %10716 = vmatprep.mubr.f32.mxu0 0.0
  %v10717 = vand.u32 %v6646, 4294901760
  %10718 = vmatmul.mubr.f32.gmra.mrb[0].mxu0 %v10717
  %v10719 = vpop.f32.mrb[0].mxu0
  %v10720 = vadd.f32 %v10367, %v10719
  %v10721 = vpop.f32.mrb[0].mxu0
  %10722 = vmatprep.mubr.f32.mxu0 0.0
  %v10723 = vand.u32 %v6750, 4294901760
  %10724 = vmatmul.mubr.f32.gmra.mrb[0].mxu0 %v10723
  %v10725 = vpop.f32.mrb[0].mxu0
  %v10726 = vadd.f32 %v10375, %v10725
  %v10727 = vpop.f32.mrb[0].mxu0
  %10728 = vmatprep.mubr.f32.mxu0 0.0
  %v10729 = vand.u32 %v6854, 4294901760
  %10730 = vmatmul.mubr.f32.gmra.mrb[0].mxu0 %v10729
  %v10731 = vpop.f32.mrb[0].mxu0
  %v10732 = vadd.f32 %v10383, %v10731
  %v10733 = vpop.f32.mrb[0].mxu0
  %10734 = vmatprep.mubr.f32.mxu0 0.0
  %v10735 = vand.u32 %v6958, 4294901760
  %10736 = vmatmul.mubr.f32.gmra.mrb[0].mxu0 %v10735
  %v10737 = vpop.f32.mrb[0].mxu0
  %v10738 = vadd.f32 %v10391, %v10737
  %v10739 = vpop.f32.mrb[0].mxu0
  %10740 = vmatprep.mubr.f32.mxu0 0.0
  %v10741 = vand.u32 %v7062, 4294901760
  %10742 = vmatmul.mubr.f32.gmra.mrb[0].mxu0 %v10741
  %v10743 = vpop.f32.mrb[0].mxu0
  %v10744 = vadd.f32 %v10399, %v10743
  %v10745 = vpop.f32.mrb[0].mxu0
  %10746 = vmatprep.mubr.f32.mxu0 0.0
  %v10747 = vand.u32 %v7166, 4294901760
  %10748 = vmatmul.mubr.f32.gmra.mrb[0].mxu0 %v10747
  %v10749 = vpop.f32.mrb[0].mxu0
  %v10750 = vadd.f32 %v10407, %v10749
  %v10751 = vpop.f32.mrb[0].mxu0
  %10752 = vmatprep.mubr.f32.mxu0 0.0
  %v10753 = vand.u32 %v7270, 4294901760
  %10754 = vmatmul.mubr.f32.gmra.mrb[0].mxu0 %v10753
  %v10755 = vpop.f32.mrb[0].mxu0
  %v10756 = vadd.f32 %v10415, %v10755
  %v10757 = vpop.f32.mrb[0].mxu0
  %10758 = vmatprep.mubr.f32.mxu0 0.0
  %v10759 = vand.u32 %v7374, 4294901760
  %10760 = vmatmul.mubr.f32.gmra.mrb[0].mxu0 %v10759
  %v10761 = vpop.f32.mrb[0].mxu0
  %v10762 = vadd.f32 %v10423, %v10761
  %v10763 = vpop.f32.mrb[0].mxu0
  %10764 = vmatprep.mubr.f32.mxu0 0.0
  %v10765 = vand.u32 %v7478, 4294901760
  %10766 = vmatmul.mubr.f32.gmra.mrb[0].mxu0 %v10765
  %v10767 = vpop.f32.mrb[0].mxu0
  %v10768 = vadd.f32 %v10431, %v10767
  %v10769 = vpop.f32.mrb[0].mxu0
  %10770 = vmatprep.mubr.f32.mxu0 0.0
  %v10771 = vand.u32 %v7582, 4294901760
  %10772 = vmatmul.mubr.f32.gmra.mrb[0].mxu0 %v10771
  %v10773 = vpop.f32.mrb[0].mxu0
  %v10774 = vadd.f32 %v10439, %v10773
  %v10775 = vpop.f32.mrb[0].mxu0
  %10776 = vmatprep.mubr.f32.mxu0 0.0
  %v10777 = vand.u32 %v7686, 4294901760
  %10778 = vmatmul.mubr.f32.gmra.mrb[0].mxu0 %v10777
  %v10779 = vpop.f32.mrb[0].mxu0
  %v10780 = vadd.f32 %v10447, %v10779
  %v10781 = vpop.f32.mrb[0].mxu0
  %10782 = vmatprep.mubr.f32.mxu0 0.0
  %v10783 = vand.u32 %v7790, 4294901760
  %10784 = vmatmul.mubr.f32.gmra.mrb[0].mxu0 %v10783
  %v10785 = vpop.f32.mrb[0].mxu0
  %v10786 = vadd.f32 %v10455, %v10785
  %v10787 = vpop.f32.mrb[0].mxu0
  %10788 = vmatprep.mubr.f32.mxu0 0.0
  %v10789 = vand.u32 %v7894, 4294901760
  %10790 = vmatmul.mubr.f32.gmra.mrb[0].mxu0 %v10789
  %v10791 = vpop.f32.mrb[0].mxu0
  %v10792 = vadd.f32 %v10463, %v10791
  %v10793 = vpop.f32.mrb[0].mxu0
  %10794 = vmatprep.mubr.f32.mxu0 0.0
  %v10795 = vand.u32 %v7998, 4294901760
  %10796 = vmatmul.mubr.f32.gmra.mrb[0].mxu0 %v10795
  %v10797 = vpop.f32.mrb[0].mxu0
  %v10798 = vadd.f32 %v10471, %v10797
  %v10799 = vpop.f32.mrb[0].mxu0
  %10800 = vmatprep.mubr.f32.mxu0 0.0
  %v10801 = vand.u32 %v8102, 4294901760
  %10802 = vmatmul.mubr.f32.gmra.mrb[0].mxu0 %v10801
  %v10803 = vpop.f32.mrb[0].mxu0
  %v10804 = vadd.f32 %v10479, %v10803
  %v10805 = vpop.f32.mrb[0].mxu0
  %10806 = vmatprep.mubr.f32.mxu0 0.0
  %v10807 = vand.u32 %v8206, 4294901760
  %10808 = vmatmul.mubr.f32.gmra.mrb[0].mxu0 %v10807
  %v10809 = vpop.f32.mrb[0].mxu0
  %v10810 = vadd.f32 %v10487, %v10809
  %v10811 = vpop.f32.mrb[0].mxu0
  %10812 = vmatprep.mubr.f32.mxu0 0.0
  %v10813 = vand.u32 %v8310, 4294901760
  %10814 = vmatmul.mubr.f32.gmra.mrb[0].mxu0 %v10813
  %v10815 = vpop.f32.mrb[0].mxu0
  %v10816 = vadd.f32 %v10495, %v10815
  %v10817 = vpop.f32.mrb[0].mxu0
  %10818 = vmatprep.mubr.f32.mxu0 0.0
  %v10819 = vand.u32 %v8414, 4294901760
  %10820 = vmatmul.mubr.f32.gmra.mrb[0].mxu0 %v10819
  %v10821 = vpop.f32.mrb[0].mxu0
  %v10822 = vadd.f32 %v10503, %v10821
  %v10823 = vpop.f32.mrb[0].mxu0
  %10824 = vmatprep.mubr.f32.mxu0 0.0
  %v10825 = vand.u32 %v8518, 4294901760
  %10826 = vmatmul.mubr.f32.gmra.mrb[0].mxu0 %v10825
  %v10827 = vpop.f32.mrb[0].mxu0
  %v10828 = vadd.f32 %v10511, %v10827
  %v10829 = vpop.f32.mrb[0].mxu0
  %10830 = vmatprep.mubr.f32.mxu0 0.0
  %v10831 = vand.u32 %v8622, 4294901760
  %10832 = vmatmul.mubr.f32.gmra.mrb[0].mxu0 %v10831
  %v10833 = vpop.f32.mrb[0].mxu0
  %v10834 = vadd.f32 %v10519, %v10833
  %v10835 = vpop.f32.mrb[0].mxu0
  %10836 = vmatprep.mubr.f32.mxu0 0.0
  %v10837 = vand.u32 %v8726, 4294901760
  %10838 = vmatmul.mubr.f32.gmra.mrb[0].mxu0 %v10837
  %v10839 = vpop.f32.mrb[0].mxu0
  %v10840 = vadd.f32 %v10527, %v10839
  %v10841 = vpop.f32.mrb[0].mxu0
  %10842 = vmatprep.mubr.f32.mxu0 0.0
  %v10843 = vand.u32 %v8830, 4294901760
  %10844 = vmatmul.mubr.f32.gmra.mrb[0].mxu0 %v10843
  %v10845 = vpop.f32.mrb[0].mxu0
  %v10846 = vadd.f32 %v10535, %v10845
  %v10847 = vpop.f32.mrb[0].mxu0
  %10848 = vmatprep.mubr.f32.mxu0 0.0
  %v10849 = vand.u32 %v8934, 4294901760
  %10850 = vmatmul.mubr.f32.gmra.mrb[0].mxu0 %v10849
  %v10851 = vpop.f32.mrb[0].mxu0
  %v10852 = vadd.f32 %v10543, %v10851
  %v10853 = vpop.f32.mrb[0].mxu0
  %10854 = vmatprep.mubr.f32.mxu0 0.0
  %v10855 = vand.u32 %v9038, 4294901760
  %10856 = vmatmul.mubr.f32.gmra.mrb[0].mxu0 %v10855
  %v10857 = vpop.f32.mrb[0].mxu0
  %v10858 = vadd.f32 %v10551, %v10857
  %v10859 = vpop.f32.mrb[0].mxu0
  %10860 = vmatprep.mubr.f32.mxu0 0.0
  %v10861 = vand.u32 %v9142, 4294901760
  %10862 = vmatmul.mubr.f32.gmra.mrb[0].mxu0 %v10861
  %v10863 = vpop.f32.mrb[0].mxu0
  %v10864 = vadd.f32 %v10559, %v10863
  %v10865 = vpop.f32.mrb[0].mxu0
  %10866 = vdwg.mxu0
  %10867 = vmatprep.subr.mxu0 0.0
  %v10868 = vand.u32 %v9143, 4294901760
  %10869 = vmatpush1.msra.mxu0 %v10868
  %10870 = vmatprep.subr.mxu0 0.0
  %v10871 = vand.u32 %v9144, 4294901760
  %10872 = vmatpush1.msra.mxu0 %v10871
  %10873 = vmatprep.subr.mxu0 0.0
  %v10874 = vand.u32 %v9145, 4294901760
  %10875 = vmatpush1.msra.mxu0 %v10874
  %10876 = vmatprep.subr.mxu0 0.0
  %v10877 = vand.u32 %v9146, 4294901760
  %10878 = vmatpush1.msra.mxu0 %v10877
  %10879 = vmatprep.subr.mxu0 0.0
  %v10880 = vand.u32 %v9147, 4294901760
  %10881 = vmatpush1.msra.mxu0 %v10880
  %10882 = vmatprep.subr.mxu0 0.0
  %v10883 = vand.u32 %v9148, 4294901760
  %10884 = vmatpush1.msra.mxu0 %v10883
  %10885 = vmatprep.subr.mxu0 0.0
  %v10886 = vand.u32 %v9149, 4294901760
  %10887 = vmatpush1.msra.mxu0 %v10886
  %10888 = vmatprep.subr.mxu0 0.0
  %v10889 = vand.u32 %v9150, 4294901760
  %10890 = vmatpush1.msra.mxu0 %v10889
  %10891 = vmatprep.subr.mxu0 0.0
  %v10892 = vand.u32 %v9151, 4294901760
  %10893 = vmatpush1.msra.mxu0 %v10892
  %10894 = vmatprep.subr.mxu0 0.0
  %v10895 = vand.u32 %v9152, 4294901760
  %10896 = vmatpush1.msra.mxu0 %v10895
  %10897 = vmatprep.subr.mxu0 0.0
  %v10898 = vand.u32 %v9153, 4294901760
  %10899 = vmatpush1.msra.mxu0 %v10898
  %10900 = vmatprep.subr.mxu0 0.0
  %v10901 = vand.u32 %v9154, 4294901760
  %10902 = vmatpush1.msra.mxu0 %v10901
  %10903 = vmatprep.subr.mxu0 0.0
  %v10904 = vand.u32 %v9155, 4294901760
  %10905 = vmatpush1.msra.mxu0 %v10904
  %10906 = vmatprep.subr.mxu0 0.0
  %v10907 = vand.u32 %v9156, 4294901760
  %10908 = vmatpush1.msra.mxu0 %v10907
  %10909 = vmatprep.subr.mxu0 0.0
  %v10910 = vand.u32 %v9157, 4294901760
  %10911 = vmatpush1.msra.mxu0 %v10910
  %10912 = vmatprep.subr.mxu0 0.0
  %v10913 = vand.u32 %v9158, 4294901760
  %10914 = vmatpush1.msra.mxu0 %v10913
  %10915 = vmatprep.subr.mxu0 0.0
  %10916 = vmatpush1.msra.mxu0 0.0
  %10917 = vmatprep.subr.mxu0 0.0
  %10918 = vmatpush1.msra.mxu0 0.0
  %10919 = vmatprep.subr.mxu0 0.0
  %10920 = vmatpush1.msra.mxu0 0.0
  %10921 = vmatprep.subr.mxu0 0.0
  %10922 = vmatpush1.msra.mxu0 0.0
  %10923 = vmatprep.subr.mxu0 0.0
  %10924 = vmatpush1.msra.mxu0 0.0
  %10925 = vmatprep.subr.mxu0 0.0
  %10926 = vmatpush1.msra.mxu0 0.0
  %10927 = vmatprep.subr.mxu0 0.0
  %10928 = vmatpush1.msra.mxu0 0.0
  %10929 = vmatprep.subr.mxu0 0.0
  %10930 = vmatpush1.msra.mxu0 0.0
  %10931 = vmatprep.subr.mxu0 0.0
  %10932 = vmatpush1.msra.mxu0 0.0
  %10933 = vmatprep.subr.mxu0 0.0
  %10934 = vmatpush1.msra.mxu0 0.0
  %10935 = vmatprep.subr.mxu0 0.0
  %10936 = vmatpush1.msra.mxu0 0.0
  %10937 = vmatprep.subr.mxu0 0.0
  %10938 = vmatpush1.msra.mxu0 0.0
  %10939 = vmatprep.subr.mxu0 0.0
  %10940 = vmatpush1.msra.mxu0 0.0
  %10941 = vmatprep.subr.mxu0 0.0
  %10942 = vmatpush1.msra.mxu0 0.0
  %10943 = vmatprep.subr.mxu0 0.0
  %10944 = vmatpush1.msra.mxu0 0.0
  %10945 = vmatprep.subr.mxu0 0.0
  %10946 = vmatpush1.msra.mxu0 0.0
  %10947 = vmatprep.mubr.f32.mxu0 0.0
  %v10948 = vand.u32 %v5918, 4294901760
  %10949 = vmatmul.mubr.f32.gmra.mrb[0].mxu0 %v10948
  %v10950 = vpop.f32.mrb[0].mxu0
  %v10951 = vadd.f32 %v10678, %v10950
  %v10952 = vpop.f32.mrb[0].mxu0
  %10953 = vmatprep.mubr.f32.mxu0 0.0
  %v10954 = vand.u32 %v6022, 4294901760
  %10955 = vmatmul.mubr.f32.gmra.mrb[0].mxu0 %v10954
  %v10956 = vpop.f32.mrb[0].mxu0
  %v10957 = vadd.f32 %v10684, %v10956
  %v10958 = vpop.f32.mrb[0].mxu0
  %10959 = vmatprep.mubr.f32.mxu0 0.0
  %v10960 = vand.u32 %v6126, 4294901760
  %10961 = vmatmul.mubr.f32.gmra.mrb[0].mxu0 %v10960
  %v10962 = vpop.f32.mrb[0].mxu0
  %v10963 = vadd.f32 %v10690, %v10962
  %v10964 = vpop.f32.mrb[0].mxu0
  %10965 = vmatprep.mubr.f32.mxu0 0.0
  %v10966 = vand.u32 %v6230, 4294901760
  %10967 = vmatmul.mubr.f32.gmra.mrb[0].mxu0 %v10966
  %v10968 = vpop.f32.mrb[0].mxu0
  %v10969 = vadd.f32 %v10696, %v10968
  %v10970 = vpop.f32.mrb[0].mxu0
  %10971 = vmatprep.mubr.f32.mxu0 0.0
  %v10972 = vand.u32 %v6334, 4294901760
  %10973 = vmatmul.mubr.f32.gmra.mrb[0].mxu0 %v10972
  %v10974 = vpop.f32.mrb[0].mxu0
  %v10975 = vadd.f32 %v10702, %v10974
  %v10976 = vpop.f32.mrb[0].mxu0
  %10977 = vmatprep.mubr.f32.mxu0 0.0
  %v10978 = vand.u32 %v6438, 4294901760
  %10979 = vmatmul.mubr.f32.gmra.mrb[0].mxu0 %v10978
  %v10980 = vpop.f32.mrb[0].mxu0
  %v10981 = vadd.f32 %v10708, %v10980
  %v10982 = vpop.f32.mrb[0].mxu0
  %10983 = vmatprep.mubr.f32.mxu0 0.0
  %v10984 = vand.u32 %v6542, 4294901760
  %10985 = vmatmul.mubr.f32.gmra.mrb[0].mxu0 %v10984
  %v10986 = vpop.f32.mrb[0].mxu0
  %v10987 = vadd.f32 %v10714, %v10986
  %v10988 = vpop.f32.mrb[0].mxu0
  %10989 = vmatprep.mubr.f32.mxu0 0.0
  %v10990 = vand.u32 %v6646, 4294901760
  %10991 = vmatmul.mubr.f32.gmra.mrb[0].mxu0 %v10990
  %v10992 = vpop.f32.mrb[0].mxu0
  %v10993 = vadd.f32 %v10720, %v10992
  %v10994 = vpop.f32.mrb[0].mxu0
  %10995 = vmatprep.mubr.f32.mxu0 0.0
  %v10996 = vand.u32 %v6750, 4294901760
  %10997 = vmatmul.mubr.f32.gmra.mrb[0].mxu0 %v10996
  %v10998 = vpop.f32.mrb[0].mxu0
  %v10999 = vadd.f32 %v10726, %v10998
  %v11000 = vpop.f32.mrb[0].mxu0
  %11001 = vmatprep.mubr.f32.mxu0 0.0
  %v11002 = vand.u32 %v6854, 4294901760
  %11003 = vmatmul.mubr.f32.gmra.mrb[0].mxu0 %v11002
  %v11004 = vpop.f32.mrb[0].mxu0
  %v11005 = vadd.f32 %v10732, %v11004
  %v11006 = vpop.f32.mrb[0].mxu0
  %11007 = vmatprep.mubr.f32.mxu0 0.0
  %v11008 = vand.u32 %v6958, 4294901760
  %11009 = vmatmul.mubr.f32.gmra.mrb[0].mxu0 %v11008
  %v11010 = vpop.f32.mrb[0].mxu0
  %v11011 = vadd.f32 %v10738, %v11010
  %v11012 = vpop.f32.mrb[0].mxu0
  %11013 = vmatprep.mubr.f32.mxu0 0.0
  %v11014 = vand.u32 %v7062, 4294901760
  %11015 = vmatmul.mubr.f32.gmra.mrb[0].mxu0 %v11014
  %v11016 = vpop.f32.mrb[0].mxu0
  %v11017 = vadd.f32 %v10744, %v11016
  %v11018 = vpop.f32.mrb[0].mxu0
  %11019 = vmatprep.mubr.f32.mxu0 0.0
  %v11020 = vand.u32 %v7166, 4294901760
  %11021 = vmatmul.mubr.f32.gmra.mrb[0].mxu0 %v11020
  %v11022 = vpop.f32.mrb[0].mxu0
  %v11023 = vadd.f32 %v10750, %v11022
  %v11024 = vpop.f32.mrb[0].mxu0
  %11025 = vmatprep.mubr.f32.mxu0 0.0
  %v11026 = vand.u32 %v7270, 4294901760
  %11027 = vmatmul.mubr.f32.gmra.mrb[0].mxu0 %v11026
  %v11028 = vpop.f32.mrb[0].mxu0
  %v11029 = vadd.f32 %v10756, %v11028
  %v11030 = vpop.f32.mrb[0].mxu0
  %11031 = vmatprep.mubr.f32.mxu0 0.0
  %v11032 = vand.u32 %v7374, 4294901760
  %11033 = vmatmul.mubr.f32.gmra.mrb[0].mxu0 %v11032
  %v11034 = vpop.f32.mrb[0].mxu0
  %v11035 = vadd.f32 %v10762, %v11034
  %v11036 = vpop.f32.mrb[0].mxu0
  %11037 = vmatprep.mubr.f32.mxu0 0.0
  %v11038 = vand.u32 %v7478, 4294901760
  %11039 = vmatmul.mubr.f32.gmra.mrb[0].mxu0 %v11038
  %v11040 = vpop.f32.mrb[0].mxu0
  %v11041 = vadd.f32 %v10768, %v11040
  %v11042 = vpop.f32.mrb[0].mxu0
  %11043 = vmatprep.mubr.f32.mxu0 0.0
  %v11044 = vand.u32 %v7582, 4294901760
  %11045 = vmatmul.mubr.f32.gmra.mrb[0].mxu0 %v11044
  %v11046 = vpop.f32.mrb[0].mxu0
  %v11047 = vadd.f32 %v10774, %v11046
  %v11048 = vpop.f32.mrb[0].mxu0
  %11049 = vmatprep.mubr.f32.mxu0 0.0
  %v11050 = vand.u32 %v7686, 4294901760
  %11051 = vmatmul.mubr.f32.gmra.mrb[0].mxu0 %v11050
  %v11052 = vpop.f32.mrb[0].mxu0
  %v11053 = vadd.f32 %v10780, %v11052
  %v11054 = vpop.f32.mrb[0].mxu0
  %11055 = vmatprep.mubr.f32.mxu0 0.0
  %v11056 = vand.u32 %v7790, 4294901760
  %11057 = vmatmul.mubr.f32.gmra.mrb[0].mxu0 %v11056
  %v11058 = vpop.f32.mrb[0].mxu0
  %v11059 = vadd.f32 %v10786, %v11058
  %v11060 = vpop.f32.mrb[0].mxu0
  %11061 = vmatprep.mubr.f32.mxu0 0.0
  %v11062 = vand.u32 %v7894, 4294901760
  %11063 = vmatmul.mubr.f32.gmra.mrb[0].mxu0 %v11062
  %v11064 = vpop.f32.mrb[0].mxu0
  %v11065 = vadd.f32 %v10792, %v11064
  %v11066 = vpop.f32.mrb[0].mxu0
  %11067 = vmatprep.mubr.f32.mxu0 0.0
  %v11068 = vand.u32 %v7998, 4294901760
  %11069 = vmatmul.mubr.f32.gmra.mrb[0].mxu0 %v11068
  %v11070 = vpop.f32.mrb[0].mxu0
  %v11071 = vadd.f32 %v10798, %v11070
  %v11072 = vpop.f32.mrb[0].mxu0
  %11073 = vmatprep.mubr.f32.mxu0 0.0
  %v11074 = vand.u32 %v8102, 4294901760
  %11075 = vmatmul.mubr.f32.gmra.mrb[0].mxu0 %v11074
  %v11076 = vpop.f32.mrb[0].mxu0
  %v11077 = vadd.f32 %v10804, %v11076
  %v11078 = vpop.f32.mrb[0].mxu0
  %11079 = vmatprep.mubr.f32.mxu0 0.0
  %v11080 = vand.u32 %v8206, 4294901760
  %11081 = vmatmul.mubr.f32.gmra.mrb[0].mxu0 %v11080
  %v11082 = vpop.f32.mrb[0].mxu0
  %v11083 = vadd.f32 %v10810, %v11082
  %v11084 = vpop.f32.mrb[0].mxu0
  %11085 = vmatprep.mubr.f32.mxu0 0.0
  %v11086 = vand.u32 %v8310, 4294901760
  %11087 = vmatmul.mubr.f32.gmra.mrb[0].mxu0 %v11086
  %v11088 = vpop.f32.mrb[0].mxu0
  %v11089 = vadd.f32 %v10816, %v11088
  %v11090 = vpop.f32.mrb[0].mxu0
  %11091 = vmatprep.mubr.f32.mxu0 0.0
  %v11092 = vand.u32 %v8414, 4294901760
  %11093 = vmatmul.mubr.f32.gmra.mrb[0].mxu0 %v11092
  %v11094 = vpop.f32.mrb[0].mxu0
  %v11095 = vadd.f32 %v10822, %v11094
  %v11096 = vpop.f32.mrb[0].mxu0
  %11097 = vmatprep.mubr.f32.mxu0 0.0
  %v11098 = vand.u32 %v8518, 4294901760
  %11099 = vmatmul.mubr.f32.gmra.mrb[0].mxu0 %v11098
  %v11100 = vpop.f32.mrb[0].mxu0
  %v11101 = vadd.f32 %v10828, %v11100
  %v11102 = vpop.f32.mrb[0].mxu0
  %11103 = vmatprep.mubr.f32.mxu0 0.0
  %v11104 = vand.u32 %v8622, 4294901760
  %11105 = vmatmul.mubr.f32.gmra.mrb[0].mxu0 %v11104
  %v11106 = vpop.f32.mrb[0].mxu0
  %v11107 = vadd.f32 %v10834, %v11106
  %v11108 = vpop.f32.mrb[0].mxu0
  %11109 = vmatprep.mubr.f32.mxu0 0.0
  %v11110 = vand.u32 %v8726, 4294901760
  %11111 = vmatmul.mubr.f32.gmra.mrb[0].mxu0 %v11110
  %v11112 = vpop.f32.mrb[0].mxu0
  %v11113 = vadd.f32 %v10840, %v11112
  %v11114 = vpop.f32.mrb[0].mxu0
  %11115 = vmatprep.mubr.f32.mxu0 0.0
  %v11116 = vand.u32 %v8830, 4294901760
  %11117 = vmatmul.mubr.f32.gmra.mrb[0].mxu0 %v11116
  %v11118 = vpop.f32.mrb[0].mxu0
  %v11119 = vadd.f32 %v10846, %v11118
  %v11120 = vpop.f32.mrb[0].mxu0
  %11121 = vmatprep.mubr.f32.mxu0 0.0
  %v11122 = vand.u32 %v8934, 4294901760
  %11123 = vmatmul.mubr.f32.gmra.mrb[0].mxu0 %v11122
  %v11124 = vpop.f32.mrb[0].mxu0
  %v11125 = vadd.f32 %v10852, %v11124
  %v11126 = vpop.f32.mrb[0].mxu0
  %11127 = vmatprep.mubr.f32.mxu0 0.0
  %v11128 = vand.u32 %v9038, 4294901760
  %11129 = vmatmul.mubr.f32.gmra.mrb[0].mxu0 %v11128
  %v11130 = vpop.f32.mrb[0].mxu0
  %v11131 = vadd.f32 %v10858, %v11130
  %v11132 = vpop.f32.mrb[0].mxu0
  %11133 = vmatprep.mubr.f32.mxu0 0.0
  %v11134 = vand.u32 %v9142, 4294901760
  %11135 = vmatmul.mubr.f32.gmra.mrb[0].mxu0 %v11134
  %v11136 = vpop.f32.mrb[0].mxu0
  %v11137 = vadd.f32 %v10864, %v11136
  %v11138 = vpop.f32.mrb[0].mxu0
  %11139 = vdwg.mxu0
  %vm11140 = vcmask 130048
  %11141 = vst.msk [vmem:[%s7] sm:$0xff] %vm11140, %v10951
  %11142 = vst.msk [vmem:[%s7 + $0x8] sm:$0xff] %vm11140, %v10957
  %11143 = vst.msk [vmem:[%s7 + $0x10] sm:$0xff] %vm11140, %v10963
  %11144 = vst.msk [vmem:[%s7 + $0x18] sm:$0xff] %vm11140, %v10969
  %11145 = vst.msk [vmem:[%s7 + $0x20] sm:$0xff] %vm11140, %v10975
  %11146 = vst.msk [vmem:[%s7 + $0x28] sm:$0xff] %vm11140, %v10981
  %11147 = vst.msk [vmem:[%s7 + $0x30] sm:$0xff] %vm11140, %v10987
  %11148 = vst.msk [vmem:[%s7 + $0x38] sm:$0xff] %vm11140, %v10993
  %11149 = vst.msk [vmem:[%s7 + $0x40] sm:$0xff] %vm11140, %v10999
  %11150 = vst.msk [vmem:[%s7 + $0x48] sm:$0xff] %vm11140, %v11005
  %11151 = vst.msk [vmem:[%s7 + $0x50] sm:$0xff] %vm11140, %v11011
  %11152 = vst.msk [vmem:[%s7 + $0x58] sm:$0xff] %vm11140, %v11017
  %11153 = vst.msk [vmem:[%s7 + $0x60] sm:$0xff] %vm11140, %v11023
  %11154 = vst.msk [vmem:[%s7 + $0x68] sm:$0xff] %vm11140, %v11029
  %11155 = vst.msk [vmem:[%s7 + $0x70] sm:$0xff] %vm11140, %v11035
  %11156 = vst.msk [vmem:[%s7 + $0x78] sm:$0xff] %vm11140, %v11041
  %11157 = vst.msk [vmem:[%s7 + $0x80] sm:$0xff] %vm11140, %v11047
  %11158 = vst.msk [vmem:[%s7 + $0x88] sm:$0xff] %vm11140, %v11053
  %11159 = vst.msk [vmem:[%s7 + $0x90] sm:$0xff] %vm11140, %v11059
  %11160 = vst.msk [vmem:[%s7 + $0x98] sm:$0xff] %vm11140, %v11065
  %11161 = vst.msk [vmem:[%s7 + $0xa0] sm:$0xff] %vm11140, %v11071
  %11162 = vst.msk [vmem:[%s7 + $0xa8] sm:$0xff] %vm11140, %v11077
  %11163 = vst.msk [vmem:[%s7 + $0xb0] sm:$0xff] %vm11140, %v11083
  %11164 = vst.msk [vmem:[%s7 + $0xb8] sm:$0xff] %vm11140, %v11089
  %11165 = vst.msk [vmem:[%s7 + $0xc0] sm:$0xff] %vm11140, %v11095
  %11166 = vst.msk [vmem:[%s7 + $0xc8] sm:$0xff] %vm11140, %v11101
  %11167 = vst.msk [vmem:[%s7 + $0xd0] sm:$0xff] %vm11140, %v11107
  %11168 = vst.msk [vmem:[%s7 + $0xd8] sm:$0xff] %vm11140, %v11113
  %11169 = vst.msk [vmem:[%s7 + $0xe0] sm:$0xff] %vm11140, %v11119
  %11170 = vst.msk [vmem:[%s7 + $0xe8] sm:$0xff] %vm11140, %v11125
  %11171 = vst.msk [vmem:[%s7 + $0xf0] sm:$0xff] %vm11140, %v11131
  %11172 = vst.msk [vmem:[%s7 + $0xf8] sm:$0xff] %vm11140, %v11137
  // Predicated region
  $region30: #{tpu_custom_call.1} parent=0 // pred_check
    _
  $region31: #{tpu_custom_call.1} parent=0 // pred_check_branch
    %11174 = sbr.rel (0) target = $region33
  $region32: #{tpu_custom_call.1} parent=0 // pred_region
    _
  $region33: #{tpu_custom_call.1} parent=0 // pred_fallthru
    _
  // Predicated region
  $region34: #{tpu_custom_call.1} parent=0 // pred_check
    _
  $region35: #{tpu_custom_call.1} parent=0 // pred_check_branch
    %11176 = sbr.rel (0) target = $region37
  $region36: #{tpu_custom_call.1} parent=0 // pred_region
    _
  $region37: #{tpu_custom_call.1} parent=0 // pred_fallthru
    _

</llo_original>
